<compile_context>
chip_gen: v7x
topology: tpu7x:2x2x1
jax: 0.10.0
libtpu: 0.0.40
codegen_flags: <defaults>
</compile_context>

<pallas_src>
import jax
import jax.numpy as jnp
from jax.experimental import pallas as pl
from jax.experimental.pallas import tpu as pltpu

# LeNet geometry (fixed by the module: 3x32x32 input).
H0, W0, CIN = 32, 32, 3          # input height / width / channels
K = 5                            # conv kernel size
C1, H1, P1 = 6, 28, 14           # conv1: channels, conv output size, pooled size
C2, H2, P2 = 16, 10, 5           # conv2: channels, conv output size, pooled size
FDIM = P2 * P2 * C2              # 400 flattened features (h, w, c order)
LANE = 128                       # padded MLP width / logits lane width

_VMEM_LIMIT = 48 * 1024 * 1024   # <= v7x's 64 MiB physical VMEM per TensorCore


def _round_up(x, m):
    return (x + m - 1) // m * m


# ---------------------------------------------------------------------------
# Fused LeNet kernel: conv1 -> ReLU -> pool -> conv2 -> ReLU -> pool -> MLP
# ---------------------------------------------------------------------------
def _lenet_kernel(x_ref, w1_ref, b1_ref, w2_ref, b2_ref,
                  fw1_ref, fb1_ref, fw2_ref, fb2_ref, fw3_ref, fb3_ref,
                  o_ref, a1_ref):
    """One batch block.

    x_ref  : (BB, 32, 96)  bf16  input rows, lane = w*3 + cin
    w1_ref : (480, 168)    bf16  lowered conv1 weights [kh*96 + w*3 + ci, j*6 + co]
    b1_ref : (1, 168)      f32   conv1 bias tiled over the 28 output columns
    w2_ref : (420, 160)    bf16  lowered conv2 weights [kh*84 + w*6 + ci, j*16 + co]
    b2_ref : (1, 160)      f32
    fw*_ref: (400/128,128) bf16  fc weights, zero-padded to 128 output lanes
    fb*_ref: (1, 128)      f32
    o_ref  : (BB, 128)     f32   logits (first 10 lanes valid)
    a1_ref : (BB, 14, 84)  bf16  VMEM scratch: pooled conv1 activations
    """
    bb = x_ref.shape[0]
    x = x_ref[...]                                               # (BB, 32, 96) bf16

    # -------- conv1 as ONE matmul, contraction K = 5*96 = 480 --------
    p1 = jnp.concatenate([x[:, kh:kh + H1, :] for kh in range(K)], axis=-1)
    p1 = p1.reshape(bb * H1, K * W0 * CIN)                       # (BB*28, 480)
    y1 = jnp.dot(p1, w1_ref[...], preferred_element_type=jnp.float32)
    y1 = jnp.maximum(y1 + b1_ref[...], 0.0)                      # (BB*28, 168)
    y1 = y1.reshape(bb, H1, H1 * C1)                             # lane = j*6 + co

    # -------- maxpool 2x2: width pairs on lanes, height pairs on sublanes ----
    wp1 = jnp.concatenate(
        [jnp.maximum(y1[:, :, 2 * q * C1:(2 * q + 1) * C1],
                     y1[:, :, (2 * q + 1) * C1:(2 * q + 2) * C1])
         for q in range(P1)], axis=-1)                           # (BB, 28, 84)
    for p in range(P1):
        a1_ref[:, p:p + 1, :] = jnp.maximum(
            wp1[:, 2 * p:2 * p + 1, :],
            wp1[:, 2 * p + 1:2 * p + 2, :]).astype(a1_ref.dtype)  # (BB, 14, 84)

    # -------- conv2 as ONE matmul, contraction K = 5*84 = 420 --------
    p2 = jnp.concatenate([a1_ref[:, kh:kh + H2, :] for kh in range(K)], axis=-1)
    p2 = p2.reshape(bb * H2, K * P1 * C1)                        # (BB*10, 420)
    y2 = jnp.dot(p2, w2_ref[...], preferred_element_type=jnp.float32)
    y2 = jnp.maximum(y2 + b2_ref[...], 0.0)                      # (BB*10, 160)
    y2 = y2.reshape(bb, H2, H2 * C2)                             # lane = j*16 + co

    # -------- maxpool 2x2 + flatten directly to (h, w, c) lane order --------
    wp2 = jnp.concatenate(
        [jnp.maximum(y2[:, :, 2 * q * C2:(2 * q + 1) * C2],
                     y2[:, :, (2 * q + 1) * C2:(2 * q + 2) * C2])
         for q in range(P2)], axis=-1)                           # (BB, 10, 80)
    feat = jnp.concatenate(
        [jnp.maximum(wp2[:, 2 * p:2 * p + 1, :], wp2[:, 2 * p + 1:2 * p + 2, :])
         for p in range(P2)], axis=-1)                           # (BB, 1, 400)
    feat = feat.reshape(bb, FDIM).astype(jnp.bfloat16)           # lane = h*80+w*16+c

    # -------- fc1 -> ReLU -> fc2 -> ReLU -> fc3 (all 128-lane padded) --------
    h = jnp.dot(feat, fw1_ref[...], preferred_element_type=jnp.float32) + fb1_ref[...]
    h = jnp.maximum(h, 0.0).astype(jnp.bfloat16)
    h = jnp.dot(h, fw2_ref[...], preferred_element_type=jnp.float32) + fb2_ref[...]
    h = jnp.maximum(h, 0.0).astype(jnp.bfloat16)
    out = jnp.dot(h, fw3_ref[...], preferred_element_type=jnp.float32) + fb3_ref[...]
    o_ref[...] = out.astype(o_ref.dtype)


# ---------------------------------------------------------------------------
# Host-side parameter lowering (tiny, runs once per forward)
# ---------------------------------------------------------------------------
def _lower_conv(w, b, in_w, out_w):
    """Lower a KxK 'valid' conv to a banded matmul over the (width*Cin) lanes.

    W_low[kh*in_w*Cin + w*Cin + ci, j*Cout + co] = w[co, ci, kh, w - j]
    (zero outside 0 <= w - j < K); bias tiled over the out_w output columns.
    """
    cout, cin, k, _ = w.shape
    wt = jnp.transpose(w, (2, 3, 1, 0)).astype(jnp.float32)       # (kh, kw, ci, co)
    sel = (jnp.arange(in_w)[:, None, None] ==
           jnp.arange(out_w)[None, :, None] + jnp.arange(k)[None, None, :]
           ).astype(jnp.float32)                                  # (w, j, kw)
    w_low = jnp.einsum('wjk,hkcd->hwcjd', sel, wt)                # (kh, w, ci, j, co)
    w_low = w_low.reshape(k * in_w * cin, out_w * cout).astype(jnp.bfloat16)
    b_low = jnp.tile(b.astype(jnp.float32), out_w).reshape(1, out_w * cout)
    return w_low, b_low


def _pad_fc(w, b, in_dim, out_dim):
    """PyTorch (out, in) linear -> zero-padded (in_dim, out_dim) bf16 + bias."""
    o, i = w.shape
    w_p = jnp.zeros((in_dim, out_dim), jnp.float32).at[:i, :o].set(
        w.T.astype(jnp.float32))
    b_p = jnp.zeros((1, out_dim), jnp.float32).at[0, :o].set(b.astype(jnp.float32))
    return w_p.astype(jnp.bfloat16), b_p


# ---------------------------------------------------------------------------
# Forward pass (mirrors Net.forward): ONE Pallas dispatch
# ---------------------------------------------------------------------------
def net_forward(params, x):
    """x: (N, 3, 32, 32) f32 NCHW (PyTorch convention). Returns (N, 10) f32."""
    n = x.shape[0]

    # Layout prep on the host: NCHW -> NHWC -> (N, H, W*C) rows, cast bf16 once.
    xr = jnp.transpose(x, (0, 2, 3, 1)).reshape(n, H0, W0 * CIN).astype(jnp.bfloat16)

    # Batch block: big enough to amortize per-step overhead / fill the MXU M
    # dim, small enough to keep the fused working set well under v7x VMEM.
    bb = min(64, _round_up(n, 8))
    nb = pl.cdiv(n, bb)
    n_pad = nb * bb
    if n_pad != n:
        xr = jnp.pad(xr, ((0, n_pad - n), (0, 0), (0, 0)))

    # Weight lowering (all tiny; lands in VMEM once and stays resident).
    w1l, b1l = _lower_conv(params["conv1_w"], params["conv1_b"], W0, H1)
    w2l, b2l = _lower_conv(params["conv2_w"], params["conv2_b"], P1, H2)
    # fc1 columns: PyTorch flattens (c, h, w); the kernel flattens (h, w, c).
    fc1 = params["fc1_w"].reshape(120, C2, P2, P2).transpose(0, 2, 3, 1).reshape(120, FDIM)
    fw1, fb1 = _pad_fc(fc1, params["fc1_b"], FDIM, LANE)
    fw2, fb2 = _pad_fc(params["fc2_w"], params["fc2_b"], LANE, LANE)
    fw3, fb3 = _pad_fc(params["fc3_w"], params["fc3_b"], LANE, LANE)

    const = lambda i: (0, 0)
    out = pl.pallas_call(
        _lenet_kernel,
        out_shape=jax.ShapeDtypeStruct((n_pad, LANE), jnp.float32),
        grid=(nb,),
        in_specs=[
            pl.BlockSpec((bb, H0, W0 * CIN), lambda i: (i, 0, 0)),
            pl.BlockSpec(w1l.shape, const),
            pl.BlockSpec(b1l.shape, const),
            pl.BlockSpec(w2l.shape, const),
            pl.BlockSpec(b2l.shape, const),
            pl.BlockSpec(fw1.shape, const),
            pl.BlockSpec(fb1.shape, const),
            pl.BlockSpec(fw2.shape, const),
            pl.BlockSpec(fb2.shape, const),
            pl.BlockSpec(fw3.shape, const),
            pl.BlockSpec(fb3.shape, const),
        ],
        out_specs=pl.BlockSpec((bb, LANE), lambda i: (i, 0)),
        scratch_shapes=[pltpu.VMEM((bb, P1, P1 * C1), jnp.bfloat16)],
        compiler_params=pltpu.CompilerParams(
            dimension_semantics=("parallel",),
            vmem_limit_bytes=_VMEM_LIMIT),
    )(xr, w1l, b1l, w2l, b2l, fw1, fb1, fw2, fb2, fw3, fb3)
    return out[:n, :10]


# ---------------------------------------------------------------------------
# Parameters (deterministic, PyTorch-default-style uniform init)
# ---------------------------------------------------------------------------
def init_params(key):
    def uniform(k, shape, fan_in):
        bound = 1.0 / jnp.sqrt(float(fan_in))
        return jax.random.uniform(k, shape, jnp.float32, -bound, bound)

    keys = jax.random.split(key, 10)
    return {
        "conv1_w": uniform(keys[0], (6, 3, 5, 5), 3 * 5 * 5),
        "conv1_b": uniform(keys[1], (6,), 3 * 5 * 5),
        "conv2_w": uniform(keys[2], (16, 6, 5, 5), 6 * 5 * 5),
        "conv2_b": uniform(keys[3], (16,), 6 * 5 * 5),
        "fc1_w": uniform(keys[4], (120, 16 * 5 * 5), 16 * 5 * 5),
        "fc1_b": uniform(keys[5], (120,), 16 * 5 * 5),
        "fc2_w": uniform(keys[6], (84, 120), 120),
        "fc2_b": uniform(keys[7], (84,), 120),
        "fc3_w": uniform(keys[8], (10, 84), 84),
        "fc3_b": uniform(keys[9], (10,), 84),
    }


if __name__ == "__main__":
    key = jax.random.PRNGKey(0)
    pkey, xkey = jax.random.split(key)
    params = init_params(pkey)
    # LeNet geometry requires 3x32x32 inputs (32 -> 28 -> 14 -> 10 -> 5).
    x = jax.random.normal(xkey, (2, 3, 32, 32), jnp.float32)
    out = jax.jit(net_forward)(params, x)
    out = jax.block_until_ready(out)
    assert out.shape == (2, 10) and out.dtype == jnp.float32
    print("KERNEL_OK")
</pallas_src>

<mosaic_0001>
module attributes {stable_mosaic.version = 11 : i64} {
  func.func @_lenet_kernel(%arg0: i32, %arg1: memref<8x32x96xbf16, #tpu.memory_space<vmem>>, %arg2: memref<480x168xbf16, #tpu.memory_space<vmem>>, %arg3: memref<1x168xf32, #tpu.memory_space<vmem>>, %arg4: memref<420x160xbf16, #tpu.memory_space<vmem>>, %arg5: memref<1x160xf32, #tpu.memory_space<vmem>>, %arg6: memref<400x128xbf16, #tpu.memory_space<vmem>>, %arg7: memref<1x128xf32, #tpu.memory_space<vmem>>, %arg8: memref<128x128xbf16, #tpu.memory_space<vmem>>, %arg9: memref<1x128xf32, #tpu.memory_space<vmem>>, %arg10: memref<128x128xbf16, #tpu.memory_space<vmem>>, %arg11: memref<1x128xf32, #tpu.memory_space<vmem>>, %arg12: memref<8x128xf32, #tpu.memory_space<vmem>>, %arg13: memref<8x14x84xbf16, #tpu.memory_space<vmem>>) attributes {dimension_semantics = [#tpu.dimension_semantics<parallel>], iteration_bounds = array<i64: 1>, scalar_prefetch = 0 : i64, scratch_operands = 1 : i64, tpu.core_type = #tpu.core_type<tc>, window_params = [{transform_indices = @transform_0, window_bounds = array<i64: 8, 32, 96>}, {pipeline_mode = #tpu.pipeline_mode<synchronous>, transform_indices = @transform_1, window_bounds = array<i64: 480, 168>}, {pipeline_mode = #tpu.pipeline_mode<synchronous>, transform_indices = @transform_2, window_bounds = array<i64: 1, 168>}, {pipeline_mode = #tpu.pipeline_mode<synchronous>, transform_indices = @transform_3, window_bounds = array<i64: 420, 160>}, {pipeline_mode = #tpu.pipeline_mode<synchronous>, transform_indices = @transform_4, window_bounds = array<i64: 1, 160>}, {pipeline_mode = #tpu.pipeline_mode<synchronous>, transform_indices = @transform_5, window_bounds = array<i64: 400, 128>}, {pipeline_mode = #tpu.pipeline_mode<synchronous>, transform_indices = @transform_6, window_bounds = array<i64: 1, 128>}, {pipeline_mode = #tpu.pipeline_mode<synchronous>, transform_indices = @transform_7, window_bounds = array<i64: 128, 128>}, {pipeline_mode = #tpu.pipeline_mode<synchronous>, transform_indices = @transform_8, window_bounds = array<i64: 1, 128>}, {pipeline_mode = #tpu.pipeline_mode<synchronous>, transform_indices = @transform_9, window_bounds = array<i64: 128, 128>}, {pipeline_mode = #tpu.pipeline_mode<synchronous>, transform_indices = @transform_10, window_bounds = array<i64: 1, 128>}, {transform_indices = @transform_11, window_bounds = array<i64: 8, 128>}]} {
    %c0 = arith.constant 0 : index
    %c0_0 = arith.constant 0 : index
    %c0_1 = arith.constant 0 : index
    %0 = vector.load %arg1[%c0, %c0_0, %c0_1] : memref<8x32x96xbf16, #tpu.memory_space<vmem>>, vector<8x32x96xbf16>
    %1 = vector.extract_strided_slice %0 {offsets = [0, 0, 0], sizes = [8, 28, 96], strides = [1, 1, 1]} : vector<8x32x96xbf16> to vector<8x28x96xbf16>
    %2 = vector.extract_strided_slice %0 {offsets = [0, 1, 0], sizes = [8, 28, 96], strides = [1, 1, 1]} : vector<8x32x96xbf16> to vector<8x28x96xbf16>
    %3 = vector.extract_strided_slice %0 {offsets = [0, 2, 0], sizes = [8, 28, 96], strides = [1, 1, 1]} : vector<8x32x96xbf16> to vector<8x28x96xbf16>
    %4 = vector.extract_strided_slice %0 {offsets = [0, 3, 0], sizes = [8, 28, 96], strides = [1, 1, 1]} : vector<8x32x96xbf16> to vector<8x28x96xbf16>
    %5 = vector.extract_strided_slice %0 {offsets = [0, 4, 0], sizes = [8, 28, 96], strides = [1, 1, 1]} : vector<8x32x96xbf16> to vector<8x28x96xbf16>
    %6 = tpu.concatenate %1, %2, %3, %4, %5 in 2 : vector<8x28x96xbf16>, vector<8x28x96xbf16>, vector<8x28x96xbf16>, vector<8x28x96xbf16>, vector<8x28x96xbf16> -> vector<8x28x480xbf16>
    %7 = vector.shape_cast %6 : vector<8x28x480xbf16> to vector<224x480xbf16>
    %c0_2 = arith.constant 0 : index
    %c0_3 = arith.constant 0 : index
    %8 = vector.load %arg2[%c0_2, %c0_3] : memref<480x168xbf16, #tpu.memory_space<vmem>>, vector<480x168xbf16>
    %cst = arith.constant dense<0.000000e+00> : vector<224x168xf32>
    %9 = tpu.matmul %7, %8, %cst {dimension_numbers = #tpu.dot_dimension_numbers<[1], [0], [0], [1], [0, 0, 1, 1], [], []>} : vector<224x480xbf16>, vector<480x168xbf16>, vector<224x168xf32> -> vector<224x168xf32>
    %c0_4 = arith.constant 0 : index
    %c0_5 = arith.constant 0 : index
    %10 = vector.load %arg3[%c0_4, %c0_5] : memref<1x168xf32, #tpu.memory_space<vmem>>, vector<1x168xf32>
    %11 = vector.broadcast %10 : vector<1x168xf32> to vector<224x168xf32>
    %12 = arith.addf %9, %11 : vector<224x168xf32>
    %cst_6 = arith.constant 0.000000e+00 : f32
    %13 = vector.broadcast %cst_6 : f32 to vector<224x168xf32>
    %14 = arith.maximumf %12, %13 : vector<224x168xf32>
    %15 = vector.shape_cast %14 : vector<224x168xf32> to vector<8x28x168xf32>
    %16 = vector.extract_strided_slice %15 {offsets = [0, 0, 0], sizes = [8, 28, 6], strides = [1, 1, 1]} : vector<8x28x168xf32> to vector<8x28x6xf32>
    %17 = vector.extract_strided_slice %15 {offsets = [0, 0, 6], sizes = [8, 28, 6], strides = [1, 1, 1]} : vector<8x28x168xf32> to vector<8x28x6xf32>
    %18 = arith.maximumf %16, %17 : vector<8x28x6xf32>
    %19 = vector.extract_strided_slice %15 {offsets = [0, 0, 12], sizes = [8, 28, 6], strides = [1, 1, 1]} : vector<8x28x168xf32> to vector<8x28x6xf32>
    %20 = vector.extract_strided_slice %15 {offsets = [0, 0, 18], sizes = [8, 28, 6], strides = [1, 1, 1]} : vector<8x28x168xf32> to vector<8x28x6xf32>
    %21 = arith.maximumf %19, %20 : vector<8x28x6xf32>
    %22 = vector.extract_strided_slice %15 {offsets = [0, 0, 24], sizes = [8, 28, 6], strides = [1, 1, 1]} : vector<8x28x168xf32> to vector<8x28x6xf32>
    %23 = vector.extract_strided_slice %15 {offsets = [0, 0, 30], sizes = [8, 28, 6], strides = [1, 1, 1]} : vector<8x28x168xf32> to vector<8x28x6xf32>
    %24 = arith.maximumf %22, %23 : vector<8x28x6xf32>
    %25 = vector.extract_strided_slice %15 {offsets = [0, 0, 36], sizes = [8, 28, 6], strides = [1, 1, 1]} : vector<8x28x168xf32> to vector<8x28x6xf32>
    %26 = vector.extract_strided_slice %15 {offsets = [0, 0, 42], sizes = [8, 28, 6], strides = [1, 1, 1]} : vector<8x28x168xf32> to vector<8x28x6xf32>
    %27 = arith.maximumf %25, %26 : vector<8x28x6xf32>
    %28 = vector.extract_strided_slice %15 {offsets = [0, 0, 48], sizes = [8, 28, 6], strides = [1, 1, 1]} : vector<8x28x168xf32> to vector<8x28x6xf32>
    %29 = vector.extract_strided_slice %15 {offsets = [0, 0, 54], sizes = [8, 28, 6], strides = [1, 1, 1]} : vector<8x28x168xf32> to vector<8x28x6xf32>
    %30 = arith.maximumf %28, %29 : vector<8x28x6xf32>
    %31 = vector.extract_strided_slice %15 {offsets = [0, 0, 60], sizes = [8, 28, 6], strides = [1, 1, 1]} : vector<8x28x168xf32> to vector<8x28x6xf32>
    %32 = vector.extract_strided_slice %15 {offsets = [0, 0, 66], sizes = [8, 28, 6], strides = [1, 1, 1]} : vector<8x28x168xf32> to vector<8x28x6xf32>
    %33 = arith.maximumf %31, %32 : vector<8x28x6xf32>
    %34 = vector.extract_strided_slice %15 {offsets = [0, 0, 72], sizes = [8, 28, 6], strides = [1, 1, 1]} : vector<8x28x168xf32> to vector<8x28x6xf32>
    %35 = vector.extract_strided_slice %15 {offsets = [0, 0, 78], sizes = [8, 28, 6], strides = [1, 1, 1]} : vector<8x28x168xf32> to vector<8x28x6xf32>
    %36 = arith.maximumf %34, %35 : vector<8x28x6xf32>
    %37 = vector.extract_strided_slice %15 {offsets = [0, 0, 84], sizes = [8, 28, 6], strides = [1, 1, 1]} : vector<8x28x168xf32> to vector<8x28x6xf32>
    %38 = vector.extract_strided_slice %15 {offsets = [0, 0, 90], sizes = [8, 28, 6], strides = [1, 1, 1]} : vector<8x28x168xf32> to vector<8x28x6xf32>
    %39 = arith.maximumf %37, %38 : vector<8x28x6xf32>
    %40 = vector.extract_strided_slice %15 {offsets = [0, 0, 96], sizes = [8, 28, 6], strides = [1, 1, 1]} : vector<8x28x168xf32> to vector<8x28x6xf32>
    %41 = vector.extract_strided_slice %15 {offsets = [0, 0, 102], sizes = [8, 28, 6], strides = [1, 1, 1]} : vector<8x28x168xf32> to vector<8x28x6xf32>
    %42 = arith.maximumf %40, %41 : vector<8x28x6xf32>
    %43 = vector.extract_strided_slice %15 {offsets = [0, 0, 108], sizes = [8, 28, 6], strides = [1, 1, 1]} : vector<8x28x168xf32> to vector<8x28x6xf32>
    %44 = vector.extract_strided_slice %15 {offsets = [0, 0, 114], sizes = [8, 28, 6], strides = [1, 1, 1]} : vector<8x28x168xf32> to vector<8x28x6xf32>
    %45 = arith.maximumf %43, %44 : vector<8x28x6xf32>
    %46 = vector.extract_strided_slice %15 {offsets = [0, 0, 120], sizes = [8, 28, 6], strides = [1, 1, 1]} : vector<8x28x168xf32> to vector<8x28x6xf32>
    %47 = vector.extract_strided_slice %15 {offsets = [0, 0, 126], sizes = [8, 28, 6], strides = [1, 1, 1]} : vector<8x28x168xf32> to vector<8x28x6xf32>
    %48 = arith.maximumf %46, %47 : vector<8x28x6xf32>
    %49 = vector.extract_strided_slice %15 {offsets = [0, 0, 132], sizes = [8, 28, 6], strides = [1, 1, 1]} : vector<8x28x168xf32> to vector<8x28x6xf32>
    %50 = vector.extract_strided_slice %15 {offsets = [0, 0, 138], sizes = [8, 28, 6], strides = [1, 1, 1]} : vector<8x28x168xf32> to vector<8x28x6xf32>
    %51 = arith.maximumf %49, %50 : vector<8x28x6xf32>
    %52 = vector.extract_strided_slice %15 {offsets = [0, 0, 144], sizes = [8, 28, 6], strides = [1, 1, 1]} : vector<8x28x168xf32> to vector<8x28x6xf32>
    %53 = vector.extract_strided_slice %15 {offsets = [0, 0, 150], sizes = [8, 28, 6], strides = [1, 1, 1]} : vector<8x28x168xf32> to vector<8x28x6xf32>
    %54 = arith.maximumf %52, %53 : vector<8x28x6xf32>
    %55 = vector.extract_strided_slice %15 {offsets = [0, 0, 156], sizes = [8, 28, 6], strides = [1, 1, 1]} : vector<8x28x168xf32> to vector<8x28x6xf32>
    %56 = vector.extract_strided_slice %15 {offsets = [0, 0, 162], sizes = [8, 28, 6], strides = [1, 1, 1]} : vector<8x28x168xf32> to vector<8x28x6xf32>
    %57 = arith.maximumf %55, %56 : vector<8x28x6xf32>
    %58 = tpu.concatenate %18, %21, %24, %27, %30, %33, %36, %39, %42, %45, %48, %51, %54, %57 in 2 : vector<8x28x6xf32>, vector<8x28x6xf32>, vector<8x28x6xf32>, vector<8x28x6xf32>, vector<8x28x6xf32>, vector<8x28x6xf32>, vector<8x28x6xf32>, vector<8x28x6xf32>, vector<8x28x6xf32>, vector<8x28x6xf32>, vector<8x28x6xf32>, vector<8x28x6xf32>, vector<8x28x6xf32>, vector<8x28x6xf32> -> vector<8x28x84xf32>
    %59 = vector.extract_strided_slice %58 {offsets = [0, 0, 0], sizes = [8, 1, 84], strides = [1, 1, 1]} : vector<8x28x84xf32> to vector<8x1x84xf32>
    %60 = vector.extract_strided_slice %58 {offsets = [0, 1, 0], sizes = [8, 1, 84], strides = [1, 1, 1]} : vector<8x28x84xf32> to vector<8x1x84xf32>
    %61 = arith.maximumf %59, %60 : vector<8x1x84xf32>
    %62 = arith.truncf %61 : vector<8x1x84xf32> to vector<8x1x84xbf16>
    %c0_7 = arith.constant 0 : index
    %c0_8 = arith.constant 0 : index
    %c0_9 = arith.constant 0 : index
    %63 = vector.load %arg13[%c0_7, %c0_8, %c0_9] : memref<8x14x84xbf16, #tpu.memory_space<vmem>>, vector<8x1x84xbf16>
    tpu.vector_store %arg13[%c0_7, %c0_8, %c0_9], %62 {strides = array<i32>} : memref<8x14x84xbf16, #tpu.memory_space<vmem>>, vector<8x1x84xbf16>,
    %64 = vector.extract_strided_slice %58 {offsets = [0, 2, 0], sizes = [8, 1, 84], strides = [1, 1, 1]} : vector<8x28x84xf32> to vector<8x1x84xf32>
    %65 = vector.extract_strided_slice %58 {offsets = [0, 3, 0], sizes = [8, 1, 84], strides = [1, 1, 1]} : vector<8x28x84xf32> to vector<8x1x84xf32>
    %66 = arith.maximumf %64, %65 : vector<8x1x84xf32>
    %67 = arith.truncf %66 : vector<8x1x84xf32> to vector<8x1x84xbf16>
    %c0_10 = arith.constant 0 : index
    %c1 = arith.constant 1 : index
    %c0_11 = arith.constant 0 : index
    %68 = vector.load %arg13[%c0_10, %c1, %c0_11] : memref<8x14x84xbf16, #tpu.memory_space<vmem>>, vector<8x1x84xbf16>
    tpu.vector_store %arg13[%c0_10, %c1, %c0_11], %67 {strides = array<i32>} : memref<8x14x84xbf16, #tpu.memory_space<vmem>>, vector<8x1x84xbf16>,
    %69 = vector.extract_strided_slice %58 {offsets = [0, 4, 0], sizes = [8, 1, 84], strides = [1, 1, 1]} : vector<8x28x84xf32> to vector<8x1x84xf32>
    %70 = vector.extract_strided_slice %58 {offsets = [0, 5, 0], sizes = [8, 1, 84], strides = [1, 1, 1]} : vector<8x28x84xf32> to vector<8x1x84xf32>
    %71 = arith.maximumf %69, %70 : vector<8x1x84xf32>
    %72 = arith.truncf %71 : vector<8x1x84xf32> to vector<8x1x84xbf16>
    %c0_12 = arith.constant 0 : index
    %c2 = arith.constant 2 : index
    %c0_13 = arith.constant 0 : index
    %73 = vector.load %arg13[%c0_12, %c2, %c0_13] : memref<8x14x84xbf16, #tpu.memory_space<vmem>>, vector<8x1x84xbf16>
    tpu.vector_store %arg13[%c0_12, %c2, %c0_13], %72 {strides = array<i32>} : memref<8x14x84xbf16, #tpu.memory_space<vmem>>, vector<8x1x84xbf16>,
    %74 = vector.extract_strided_slice %58 {offsets = [0, 6, 0], sizes = [8, 1, 84], strides = [1, 1, 1]} : vector<8x28x84xf32> to vector<8x1x84xf32>
    %75 = vector.extract_strided_slice %58 {offsets = [0, 7, 0], sizes = [8, 1, 84], strides = [1, 1, 1]} : vector<8x28x84xf32> to vector<8x1x84xf32>
    %76 = arith.maximumf %74, %75 : vector<8x1x84xf32>
    %77 = arith.truncf %76 : vector<8x1x84xf32> to vector<8x1x84xbf16>
    %c0_14 = arith.constant 0 : index
    %c3 = arith.constant 3 : index
    %c0_15 = arith.constant 0 : index
    %78 = vector.load %arg13[%c0_14, %c3, %c0_15] : memref<8x14x84xbf16, #tpu.memory_space<vmem>>, vector<8x1x84xbf16>
    tpu.vector_store %arg13[%c0_14, %c3, %c0_15], %77 {strides = array<i32>} : memref<8x14x84xbf16, #tpu.memory_space<vmem>>, vector<8x1x84xbf16>,
    %79 = vector.extract_strided_slice %58 {offsets = [0, 8, 0], sizes = [8, 1, 84], strides = [1, 1, 1]} : vector<8x28x84xf32> to vector<8x1x84xf32>
    %80 = vector.extract_strided_slice %58 {offsets = [0, 9, 0], sizes = [8, 1, 84], strides = [1, 1, 1]} : vector<8x28x84xf32> to vector<8x1x84xf32>
    %81 = arith.maximumf %79, %80 : vector<8x1x84xf32>
    %82 = arith.truncf %81 : vector<8x1x84xf32> to vector<8x1x84xbf16>
    %c0_16 = arith.constant 0 : index
    %c4 = arith.constant 4 : index
    %c0_17 = arith.constant 0 : index
    %83 = vector.load %arg13[%c0_16, %c4, %c0_17] : memref<8x14x84xbf16, #tpu.memory_space<vmem>>, vector<8x1x84xbf16>
    tpu.vector_store %arg13[%c0_16, %c4, %c0_17], %82 {strides = array<i32>} : memref<8x14x84xbf16, #tpu.memory_space<vmem>>, vector<8x1x84xbf16>,
    %84 = vector.extract_strided_slice %58 {offsets = [0, 10, 0], sizes = [8, 1, 84], strides = [1, 1, 1]} : vector<8x28x84xf32> to vector<8x1x84xf32>
    %85 = vector.extract_strided_slice %58 {offsets = [0, 11, 0], sizes = [8, 1, 84], strides = [1, 1, 1]} : vector<8x28x84xf32> to vector<8x1x84xf32>
    %86 = arith.maximumf %84, %85 : vector<8x1x84xf32>
    %87 = arith.truncf %86 : vector<8x1x84xf32> to vector<8x1x84xbf16>
    %c0_18 = arith.constant 0 : index
    %c5 = arith.constant 5 : index
    %c0_19 = arith.constant 0 : index
    %88 = vector.load %arg13[%c0_18, %c5, %c0_19] : memref<8x14x84xbf16, #tpu.memory_space<vmem>>, vector<8x1x84xbf16>
    tpu.vector_store %arg13[%c0_18, %c5, %c0_19], %87 {strides = array<i32>} : memref<8x14x84xbf16, #tpu.memory_space<vmem>>, vector<8x1x84xbf16>,
    %89 = vector.extract_strided_slice %58 {offsets = [0, 12, 0], sizes = [8, 1, 84], strides = [1, 1, 1]} : vector<8x28x84xf32> to vector<8x1x84xf32>
    %90 = vector.extract_strided_slice %58 {offsets = [0, 13, 0], sizes = [8, 1, 84], strides = [1, 1, 1]} : vector<8x28x84xf32> to vector<8x1x84xf32>
    %91 = arith.maximumf %89, %90 : vector<8x1x84xf32>
    %92 = arith.truncf %91 : vector<8x1x84xf32> to vector<8x1x84xbf16>
    %c0_20 = arith.constant 0 : index
    %c6 = arith.constant 6 : index
    %c0_21 = arith.constant 0 : index
    %93 = vector.load %arg13[%c0_20, %c6, %c0_21] : memref<8x14x84xbf16, #tpu.memory_space<vmem>>, vector<8x1x84xbf16>
    tpu.vector_store %arg13[%c0_20, %c6, %c0_21], %92 {strides = array<i32>} : memref<8x14x84xbf16, #tpu.memory_space<vmem>>, vector<8x1x84xbf16>,
    %94 = vector.extract_strided_slice %58 {offsets = [0, 14, 0], sizes = [8, 1, 84], strides = [1, 1, 1]} : vector<8x28x84xf32> to vector<8x1x84xf32>
    %95 = vector.extract_strided_slice %58 {offsets = [0, 15, 0], sizes = [8, 1, 84], strides = [1, 1, 1]} : vector<8x28x84xf32> to vector<8x1x84xf32>
    %96 = arith.maximumf %94, %95 : vector<8x1x84xf32>
    %97 = arith.truncf %96 : vector<8x1x84xf32> to vector<8x1x84xbf16>
    %c0_22 = arith.constant 0 : index
    %c7 = arith.constant 7 : index
    %c0_23 = arith.constant 0 : index
    %98 = vector.load %arg13[%c0_22, %c7, %c0_23] : memref<8x14x84xbf16, #tpu.memory_space<vmem>>, vector<8x1x84xbf16>
    tpu.vector_store %arg13[%c0_22, %c7, %c0_23], %97 {strides = array<i32>} : memref<8x14x84xbf16, #tpu.memory_space<vmem>>, vector<8x1x84xbf16>,
    %99 = vector.extract_strided_slice %58 {offsets = [0, 16, 0], sizes = [8, 1, 84], strides = [1, 1, 1]} : vector<8x28x84xf32> to vector<8x1x84xf32>
    %100 = vector.extract_strided_slice %58 {offsets = [0, 17, 0], sizes = [8, 1, 84], strides = [1, 1, 1]} : vector<8x28x84xf32> to vector<8x1x84xf32>
    %101 = arith.maximumf %99, %100 : vector<8x1x84xf32>
    %102 = arith.truncf %101 : vector<8x1x84xf32> to vector<8x1x84xbf16>
    %c0_24 = arith.constant 0 : index
    %c8 = arith.constant 8 : index
    %c0_25 = arith.constant 0 : index
    %103 = vector.load %arg13[%c0_24, %c8, %c0_25] : memref<8x14x84xbf16, #tpu.memory_space<vmem>>, vector<8x1x84xbf16>
    tpu.vector_store %arg13[%c0_24, %c8, %c0_25], %102 {strides = array<i32>} : memref<8x14x84xbf16, #tpu.memory_space<vmem>>, vector<8x1x84xbf16>,
    %104 = vector.extract_strided_slice %58 {offsets = [0, 18, 0], sizes = [8, 1, 84], strides = [1, 1, 1]} : vector<8x28x84xf32> to vector<8x1x84xf32>
    %105 = vector.extract_strided_slice %58 {offsets = [0, 19, 0], sizes = [8, 1, 84], strides = [1, 1, 1]} : vector<8x28x84xf32> to vector<8x1x84xf32>
    %106 = arith.maximumf %104, %105 : vector<8x1x84xf32>
    %107 = arith.truncf %106 : vector<8x1x84xf32> to vector<8x1x84xbf16>
    %c0_26 = arith.constant 0 : index
    %c9 = arith.constant 9 : index
    %c0_27 = arith.constant 0 : index
    %108 = vector.load %arg13[%c0_26, %c9, %c0_27] : memref<8x14x84xbf16, #tpu.memory_space<vmem>>, vector<8x1x84xbf16>
    tpu.vector_store %arg13[%c0_26, %c9, %c0_27], %107 {strides = array<i32>} : memref<8x14x84xbf16, #tpu.memory_space<vmem>>, vector<8x1x84xbf16>,
    %109 = vector.extract_strided_slice %58 {offsets = [0, 20, 0], sizes = [8, 1, 84], strides = [1, 1, 1]} : vector<8x28x84xf32> to vector<8x1x84xf32>
    %110 = vector.extract_strided_slice %58 {offsets = [0, 21, 0], sizes = [8, 1, 84], strides = [1, 1, 1]} : vector<8x28x84xf32> to vector<8x1x84xf32>
    %111 = arith.maximumf %109, %110 : vector<8x1x84xf32>
    %112 = arith.truncf %111 : vector<8x1x84xf32> to vector<8x1x84xbf16>
    %c0_28 = arith.constant 0 : index
    %c10 = arith.constant 10 : index
    %c0_29 = arith.constant 0 : index
    %113 = vector.load %arg13[%c0_28, %c10, %c0_29] : memref<8x14x84xbf16, #tpu.memory_space<vmem>>, vector<8x1x84xbf16>
    tpu.vector_store %arg13[%c0_28, %c10, %c0_29], %112 {strides = array<i32>} : memref<8x14x84xbf16, #tpu.memory_space<vmem>>, vector<8x1x84xbf16>,
    %114 = vector.extract_strided_slice %58 {offsets = [0, 22, 0], sizes = [8, 1, 84], strides = [1, 1, 1]} : vector<8x28x84xf32> to vector<8x1x84xf32>
    %115 = vector.extract_strided_slice %58 {offsets = [0, 23, 0], sizes = [8, 1, 84], strides = [1, 1, 1]} : vector<8x28x84xf32> to vector<8x1x84xf32>
    %116 = arith.maximumf %114, %115 : vector<8x1x84xf32>
    %117 = arith.truncf %116 : vector<8x1x84xf32> to vector<8x1x84xbf16>
    %c0_30 = arith.constant 0 : index
    %c11 = arith.constant 11 : index
    %c0_31 = arith.constant 0 : index
    %118 = vector.load %arg13[%c0_30, %c11, %c0_31] : memref<8x14x84xbf16, #tpu.memory_space<vmem>>, vector<8x1x84xbf16>
    tpu.vector_store %arg13[%c0_30, %c11, %c0_31], %117 {strides = array<i32>} : memref<8x14x84xbf16, #tpu.memory_space<vmem>>, vector<8x1x84xbf16>,
    %119 = vector.extract_strided_slice %58 {offsets = [0, 24, 0], sizes = [8, 1, 84], strides = [1, 1, 1]} : vector<8x28x84xf32> to vector<8x1x84xf32>
    %120 = vector.extract_strided_slice %58 {offsets = [0, 25, 0], sizes = [8, 1, 84], strides = [1, 1, 1]} : vector<8x28x84xf32> to vector<8x1x84xf32>
    %121 = arith.maximumf %119, %120 : vector<8x1x84xf32>
    %122 = arith.truncf %121 : vector<8x1x84xf32> to vector<8x1x84xbf16>
    %c0_32 = arith.constant 0 : index
    %c12 = arith.constant 12 : index
    %c0_33 = arith.constant 0 : index
    %123 = vector.load %arg13[%c0_32, %c12, %c0_33] : memref<8x14x84xbf16, #tpu.memory_space<vmem>>, vector<8x1x84xbf16>
    tpu.vector_store %arg13[%c0_32, %c12, %c0_33], %122 {strides = array<i32>} : memref<8x14x84xbf16, #tpu.memory_space<vmem>>, vector<8x1x84xbf16>,
    %124 = vector.extract_strided_slice %58 {offsets = [0, 26, 0], sizes = [8, 1, 84], strides = [1, 1, 1]} : vector<8x28x84xf32> to vector<8x1x84xf32>
    %125 = vector.extract_strided_slice %58 {offsets = [0, 27, 0], sizes = [8, 1, 84], strides = [1, 1, 1]} : vector<8x28x84xf32> to vector<8x1x84xf32>
    %126 = arith.maximumf %124, %125 : vector<8x1x84xf32>
    %127 = arith.truncf %126 : vector<8x1x84xf32> to vector<8x1x84xbf16>
    %c0_34 = arith.constant 0 : index
    %c13 = arith.constant 13 : index
    %c0_35 = arith.constant 0 : index
    %128 = vector.load %arg13[%c0_34, %c13, %c0_35] : memref<8x14x84xbf16, #tpu.memory_space<vmem>>, vector<8x1x84xbf16>
    tpu.vector_store %arg13[%c0_34, %c13, %c0_35], %127 {strides = array<i32>} : memref<8x14x84xbf16, #tpu.memory_space<vmem>>, vector<8x1x84xbf16>,
    %c0_36 = arith.constant 0 : index
    %c0_37 = arith.constant 0 : index
    %c0_38 = arith.constant 0 : index
    %129 = vector.load %arg13[%c0_36, %c0_37, %c0_38] : memref<8x14x84xbf16, #tpu.memory_space<vmem>>, vector<8x10x84xbf16>
    %c0_39 = arith.constant 0 : index
    %c1_40 = arith.constant 1 : index
    %c0_41 = arith.constant 0 : index
    %130 = vector.load %arg13[%c0_39, %c1_40, %c0_41] : memref<8x14x84xbf16, #tpu.memory_space<vmem>>, vector<8x10x84xbf16>
    %c0_42 = arith.constant 0 : index
    %c2_43 = arith.constant 2 : index
    %c0_44 = arith.constant 0 : index
    %131 = vector.load %arg13[%c0_42, %c2_43, %c0_44] : memref<8x14x84xbf16, #tpu.memory_space<vmem>>, vector<8x10x84xbf16>
    %c0_45 = arith.constant 0 : index
    %c3_46 = arith.constant 3 : index
    %c0_47 = arith.constant 0 : index
    %132 = vector.load %arg13[%c0_45, %c3_46, %c0_47] : memref<8x14x84xbf16, #tpu.memory_space<vmem>>, vector<8x10x84xbf16>
    %c0_48 = arith.constant 0 : index
    %c4_49 = arith.constant 4 : index
    %c0_50 = arith.constant 0 : index
    %133 = vector.load %arg13[%c0_48, %c4_49, %c0_50] : memref<8x14x84xbf16, #tpu.memory_space<vmem>>, vector<8x10x84xbf16>
    %134 = tpu.concatenate %129, %130, %131, %132, %133 in 2 : vector<8x10x84xbf16>, vector<8x10x84xbf16>, vector<8x10x84xbf16>, vector<8x10x84xbf16>, vector<8x10x84xbf16> -> vector<8x10x420xbf16>
    %135 = vector.shape_cast %134 : vector<8x10x420xbf16> to vector<80x420xbf16>
    %c0_51 = arith.constant 0 : index
    %c0_52 = arith.constant 0 : index
    %136 = vector.load %arg4[%c0_51, %c0_52] : memref<420x160xbf16, #tpu.memory_space<vmem>>, vector<420x160xbf16>
    %cst_53 = arith.constant dense<0.000000e+00> : vector<80x160xf32>
    %137 = tpu.matmul %135, %136, %cst_53 {dimension_numbers = #tpu.dot_dimension_numbers<[1], [0], [0], [1], [0, 0, 1, 1], [], []>} : vector<80x420xbf16>, vector<420x160xbf16>, vector<80x160xf32> -> vector<80x160xf32>
    %c0_54 = arith.constant 0 : index
    %c0_55 = arith.constant 0 : index
    %138 = vector.load %arg5[%c0_54, %c0_55] : memref<1x160xf32, #tpu.memory_space<vmem>>, vector<1x160xf32>
    %139 = vector.broadcast %138 : vector<1x160xf32> to vector<80x160xf32>
    %140 = arith.addf %137, %139 : vector<80x160xf32>
    %cst_56 = arith.constant 0.000000e+00 : f32
    %141 = vector.broadcast %cst_56 : f32 to vector<80x160xf32>
    %142 = arith.maximumf %140, %141 : vector<80x160xf32>
    %143 = vector.shape_cast %142 : vector<80x160xf32> to vector<8x10x160xf32>
    %144 = vector.extract_strided_slice %143 {offsets = [0, 0, 0], sizes = [8, 10, 16], strides = [1, 1, 1]} : vector<8x10x160xf32> to vector<8x10x16xf32>
    %145 = vector.extract_strided_slice %143 {offsets = [0, 0, 16], sizes = [8, 10, 16], strides = [1, 1, 1]} : vector<8x10x160xf32> to vector<8x10x16xf32>
    %146 = arith.maximumf %144, %145 : vector<8x10x16xf32>
    %147 = vector.extract_strided_slice %143 {offsets = [0, 0, 32], sizes = [8, 10, 16], strides = [1, 1, 1]} : vector<8x10x160xf32> to vector<8x10x16xf32>
    %148 = vector.extract_strided_slice %143 {offsets = [0, 0, 48], sizes = [8, 10, 16], strides = [1, 1, 1]} : vector<8x10x160xf32> to vector<8x10x16xf32>
    %149 = arith.maximumf %147, %148 : vector<8x10x16xf32>
    %150 = vector.extract_strided_slice %143 {offsets = [0, 0, 64], sizes = [8, 10, 16], strides = [1, 1, 1]} : vector<8x10x160xf32> to vector<8x10x16xf32>
    %151 = vector.extract_strided_slice %143 {offsets = [0, 0, 80], sizes = [8, 10, 16], strides = [1, 1, 1]} : vector<8x10x160xf32> to vector<8x10x16xf32>
    %152 = arith.maximumf %150, %151 : vector<8x10x16xf32>
    %153 = vector.extract_strided_slice %143 {offsets = [0, 0, 96], sizes = [8, 10, 16], strides = [1, 1, 1]} : vector<8x10x160xf32> to vector<8x10x16xf32>
    %154 = vector.extract_strided_slice %143 {offsets = [0, 0, 112], sizes = [8, 10, 16], strides = [1, 1, 1]} : vector<8x10x160xf32> to vector<8x10x16xf32>
    %155 = arith.maximumf %153, %154 : vector<8x10x16xf32>
    %156 = vector.extract_strided_slice %143 {offsets = [0, 0, 128], sizes = [8, 10, 16], strides = [1, 1, 1]} : vector<8x10x160xf32> to vector<8x10x16xf32>
    %157 = vector.extract_strided_slice %143 {offsets = [0, 0, 144], sizes = [8, 10, 16], strides = [1, 1, 1]} : vector<8x10x160xf32> to vector<8x10x16xf32>
    %158 = arith.maximumf %156, %157 : vector<8x10x16xf32>
    %159 = tpu.concatenate %146, %149, %152, %155, %158 in 2 : vector<8x10x16xf32>, vector<8x10x16xf32>, vector<8x10x16xf32>, vector<8x10x16xf32>, vector<8x10x16xf32> -> vector<8x10x80xf32>
    %160 = vector.extract_strided_slice %159 {offsets = [0, 0, 0], sizes = [8, 1, 80], strides = [1, 1, 1]} : vector<8x10x80xf32> to vector<8x1x80xf32>
    %161 = vector.extract_strided_slice %159 {offsets = [0, 1, 0], sizes = [8, 1, 80], strides = [1, 1, 1]} : vector<8x10x80xf32> to vector<8x1x80xf32>
    %162 = arith.maximumf %160, %161 : vector<8x1x80xf32>
    %163 = vector.extract_strided_slice %159 {offsets = [0, 2, 0], sizes = [8, 1, 80], strides = [1, 1, 1]} : vector<8x10x80xf32> to vector<8x1x80xf32>
    %164 = vector.extract_strided_slice %159 {offsets = [0, 3, 0], sizes = [8, 1, 80], strides = [1, 1, 1]} : vector<8x10x80xf32> to vector<8x1x80xf32>
    %165 = arith.maximumf %163, %164 : vector<8x1x80xf32>
    %166 = vector.extract_strided_slice %159 {offsets = [0, 4, 0], sizes = [8, 1, 80], strides = [1, 1, 1]} : vector<8x10x80xf32> to vector<8x1x80xf32>
    %167 = vector.extract_strided_slice %159 {offsets = [0, 5, 0], sizes = [8, 1, 80], strides = [1, 1, 1]} : vector<8x10x80xf32> to vector<8x1x80xf32>
    %168 = arith.maximumf %166, %167 : vector<8x1x80xf32>
    %169 = vector.extract_strided_slice %159 {offsets = [0, 6, 0], sizes = [8, 1, 80], strides = [1, 1, 1]} : vector<8x10x80xf32> to vector<8x1x80xf32>
    %170 = vector.extract_strided_slice %159 {offsets = [0, 7, 0], sizes = [8, 1, 80], strides = [1, 1, 1]} : vector<8x10x80xf32> to vector<8x1x80xf32>
    %171 = arith.maximumf %169, %170 : vector<8x1x80xf32>
    %172 = vector.extract_strided_slice %159 {offsets = [0, 8, 0], sizes = [8, 1, 80], strides = [1, 1, 1]} : vector<8x10x80xf32> to vector<8x1x80xf32>
    %173 = vector.extract_strided_slice %159 {offsets = [0, 9, 0], sizes = [8, 1, 80], strides = [1, 1, 1]} : vector<8x10x80xf32> to vector<8x1x80xf32>
    %174 = arith.maximumf %172, %173 : vector<8x1x80xf32>
    %175 = tpu.concatenate %162, %165, %168, %171, %174 in 2 : vector<8x1x80xf32>, vector<8x1x80xf32>, vector<8x1x80xf32>, vector<8x1x80xf32>, vector<8x1x80xf32> -> vector<8x1x400xf32>
    %176 = vector.shape_cast %175 : vector<8x1x400xf32> to vector<8x400xf32>
    %177 = arith.truncf %176 : vector<8x400xf32> to vector<8x400xbf16>
    %c0_57 = arith.constant 0 : index
    %c0_58 = arith.constant 0 : index
    %178 = vector.load %arg6[%c0_57, %c0_58] : memref<400x128xbf16, #tpu.memory_space<vmem>>, vector<400x128xbf16>
    %cst_59 = arith.constant dense<0.000000e+00> : vector<8x128xf32>
    %179 = tpu.matmul %177, %178, %cst_59 {dimension_numbers = #tpu.dot_dimension_numbers<[1], [0], [0], [1], [0, 0, 1, 1], [], []>} : vector<8x400xbf16>, vector<400x128xbf16>, vector<8x128xf32> -> vector<8x128xf32>
    %c0_60 = arith.constant 0 : index
    %c0_61 = arith.constant 0 : index
    %180 = vector.load %arg7[%c0_60, %c0_61] : memref<1x128xf32, #tpu.memory_space<vmem>>, vector<1x128xf32>
    %181 = vector.broadcast %180 : vector<1x128xf32> to vector<8x128xf32>
    %182 = arith.addf %179, %181 : vector<8x128xf32>
    %cst_62 = arith.constant 0.000000e+00 : f32
    %183 = vector.broadcast %cst_62 : f32 to vector<8x128xf32>
    %184 = arith.maximumf %182, %183 : vector<8x128xf32>
    %185 = arith.truncf %184 : vector<8x128xf32> to vector<8x128xbf16>
    %c0_63 = arith.constant 0 : index
    %c0_64 = arith.constant 0 : index
    %186 = vector.load %arg8[%c0_63, %c0_64] : memref<128x128xbf16, #tpu.memory_space<vmem>>, vector<128x128xbf16>
    %cst_65 = arith.constant dense<0.000000e+00> : vector<8x128xf32>
    %187 = tpu.matmul %185, %186, %cst_65 {dimension_numbers = #tpu.dot_dimension_numbers<[1], [0], [0], [1], [0, 0, 1, 1], [], []>} : vector<8x128xbf16>, vector<128x128xbf16>, vector<8x128xf32> -> vector<8x128xf32>
    %c0_66 = arith.constant 0 : index
    %c0_67 = arith.constant 0 : index
    %188 = vector.load %arg9[%c0_66, %c0_67] : memref<1x128xf32, #tpu.memory_space<vmem>>, vector<1x128xf32>
    %189 = vector.broadcast %188 : vector<1x128xf32> to vector<8x128xf32>
    %190 = arith.addf %187, %189 : vector<8x128xf32>
    %cst_68 = arith.constant 0.000000e+00 : f32
    %191 = vector.broadcast %cst_68 : f32 to vector<8x128xf32>
    %192 = arith.maximumf %190, %191 : vector<8x128xf32>
    %193 = arith.truncf %192 : vector<8x128xf32> to vector<8x128xbf16>
    %c0_69 = arith.constant 0 : index
    %c0_70 = arith.constant 0 : index
    %194 = vector.load %arg10[%c0_69, %c0_70] : memref<128x128xbf16, #tpu.memory_space<vmem>>, vector<128x128xbf16>
    %cst_71 = arith.constant dense<0.000000e+00> : vector<8x128xf32>
    %195 = tpu.matmul %193, %194, %cst_71 {dimension_numbers = #tpu.dot_dimension_numbers<[1], [0], [0], [1], [0, 0, 1, 1], [], []>} : vector<8x128xbf16>, vector<128x128xbf16>, vector<8x128xf32> -> vector<8x128xf32>
    %c0_72 = arith.constant 0 : index
    %c0_73 = arith.constant 0 : index
    %196 = vector.load %arg11[%c0_72, %c0_73] : memref<1x128xf32, #tpu.memory_space<vmem>>, vector<1x128xf32>
    %197 = vector.broadcast %196 : vector<1x128xf32> to vector<8x128xf32>
    %198 = arith.addf %195, %197 : vector<8x128xf32>
    %c0_74 = arith.constant 0 : index
    %c0_75 = arith.constant 0 : index
    %199 = vector.load %arg12[%c0_74, %c0_75] : memref<8x128xf32, #tpu.memory_space<vmem>>, vector<8x128xf32>
    tpu.vector_store %arg12[%c0_74, %c0_75], %198 {strides = array<i32>} : memref<8x128xf32, #tpu.memory_space<vmem>>, vector<8x128xf32>,
    return
  }
  func.func @transform_0(%arg0: i32) -> (i32, i32, i32) {
    %c0_i32 = arith.constant 0 : i32
    %c0_i32_0 = arith.constant 0 : i32
    %c0_i32_1 = arith.constant 0 : i32
    return %arg0, %c0_i32, %c0_i32_0 : i32, i32, i32
  }
  func.func @transform_1(%arg0: i32) -> (i32, i32) {
    %c0_i32 = arith.constant 0 : i32
    %c0_i32_0 = arith.constant 0 : i32
    %c0_i32_1 = arith.constant 0 : i32
    return %c0_i32, %c0_i32_0 : i32, i32
  }
  func.func @transform_2(%arg0: i32) -> (i32, i32) {
    %c0_i32 = arith.constant 0 : i32
    %c0_i32_0 = arith.constant 0 : i32
    %c0_i32_1 = arith.constant 0 : i32
    return %c0_i32, %c0_i32_0 : i32, i32
  }
  func.func @transform_3(%arg0: i32) -> (i32, i32) {
    %c0_i32 = arith.constant 0 : i32
    %c0_i32_0 = arith.constant 0 : i32
    %c0_i32_1 = arith.constant 0 : i32
    return %c0_i32, %c0_i32_0 : i32, i32
  }
  func.func @transform_4(%arg0: i32) -> (i32, i32) {
    %c0_i32 = arith.constant 0 : i32
    %c0_i32_0 = arith.constant 0 : i32
    %c0_i32_1 = arith.constant 0 : i32
    return %c0_i32, %c0_i32_0 : i32, i32
  }
  func.func @transform_5(%arg0: i32) -> (i32, i32) {
    %c0_i32 = arith.constant 0 : i32
    %c0_i32_0 = arith.constant 0 : i32
    %c0_i32_1 = arith.constant 0 : i32
    return %c0_i32, %c0_i32_0 : i32, i32
  }
  func.func @transform_6(%arg0: i32) -> (i32, i32) {
    %c0_i32 = arith.constant 0 : i32
    %c0_i32_0 = arith.constant 0 : i32
    %c0_i32_1 = arith.constant 0 : i32
    return %c0_i32, %c0_i32_0 : i32, i32
  }
  func.func @transform_7(%arg0: i32) -> (i32, i32) {
    %c0_i32 = arith.constant 0 : i32
    %c0_i32_0 = arith.constant 0 : i32
    %c0_i32_1 = arith.constant 0 : i32
    return %c0_i32, %c0_i32_0 : i32, i32
  }
  func.func @transform_8(%arg0: i32) -> (i32, i32) {
    %c0_i32 = arith.constant 0 : i32
    %c0_i32_0 = arith.constant 0 : i32
    %c0_i32_1 = arith.constant 0 : i32
    return %c0_i32, %c0_i32_0 : i32, i32
  }
  func.func @transform_9(%arg0: i32) -> (i32, i32) {
    %c0_i32 = arith.constant 0 : i32
    %c0_i32_0 = arith.constant 0 : i32
    %c0_i32_1 = arith.constant 0 : i32
    return %c0_i32, %c0_i32_0 : i32, i32
  }
  func.func @transform_10(%arg0: i32) -> (i32, i32) {
    %c0_i32 = arith.constant 0 : i32
    %c0_i32_0 = arith.constant 0 : i32
    %c0_i32_1 = arith.constant 0 : i32
    return %c0_i32, %c0_i32_0 : i32, i32
  }
  func.func @transform_11(%arg0: i32) -> (i32, i32) {
    %c0_i32 = arith.constant 0 : i32
    %c0_i32_0 = arith.constant 0 : i32
    return %arg0, %c0_i32 : i32, i32
  }
}

</mosaic_0001>

<llo_original>
// kernel: tile.13
$region0: #{tile.13}
  #allocation0 [shape = 's32[1]{0}', space=sflag, size = 0x4, scoped, tag = 'scoped memory for tile.13']
  %s0 = inlined_call_operand.vmem [shape: f32[6], index: 0, kind: input, shape index: {}]
  %s1 = inlined_call_operand.vmem [shape: f32[28,6], index: 1, kind: output, shape index: {}]
  // Predicated region
  $region2: #{tile.13} parent=0 // pred_check
    _
  $region3: #{tile.13} parent=0 // pred_check_branch
    %3 = sbr.rel (0) target = $region5
  $region4: #{tile.13} parent=0 // pred_region
    _
  $region5: #{tile.13} parent=0 // pred_fallthru
    _
  %v4 = vld [vmem:[%s0] ss:$0 sm:$0xff]
  %5 = vst [vmem:[%s1] sm:$0xff] %v4
  %s6 = scalar_lea.vmem %s1, 8
  %7 = vst [vmem:[%s6] sm:$0xff] %v4
  %s8 = scalar_lea.vmem %s1, 16
  %9 = vst [vmem:[%s8] sm:$0xff] %v4
  %s10 = scalar_lea.vmem %s1, 24
  %11 = vst [vmem:[%s10] sm:$0xff] %v4

// kernel: tile.14
$region0: #{tile.14}
  %s0 = inlined_call_operand.vmem [shape: f32[28,6], index: 0, kind: input, shape index: {}]
  %s1 = inlined_call_operand.vmem [shape: f32[1,168], index: 1, kind: output, shape index: {}]
  $region1: #{tile.14} parent=0
    #allocation0 [shape = 'u8[8192]{0}', space=vmem, size = 0x2000, scoped, tag = 'scoped mem for output reshape']
    %v2 = vld [vmem:[%s0] sm:$0x1]
    %vm3 = vcmask 48128
    %4 = vst.msk [vmem:[#allocation0] sm:$0x1] %vm3, %v2
    %s5 = scalar_lea.vmem %s0, 21
    %v6 = vld [vmem:[%s5] sm:$0x1]
    %s7 = scalar_lea.vmem %s0, 21
    %v8 = vld [vmem:[%s7] sm:$0x1]
    %vm9 = vcmask 15360
    %v10 = vsel %vm9, %v8, %v6
    %11 = vrot.lane.b32.xlu0 %v10, 126
    %v12 = vpop.permute.xlu0 %11
    %vm13 = vcmask 31744
    %s14 = scalar_lea.vmem [#allocation0], 8
    %15 = vst.msk [vmem:[%s14] sm:$0x1] %vm13, %v12
    %vm16 = vcmask 1048560
    %17 = vst.msk [vmem:[#allocation0] sm:$0x1] %vm16, %v12
    %s18 = scalar_lea.vmem %s0, 20
    %v19 = vld [vmem:[%s18] sm:$0x1]
    %20 = vrot.lane.b32.xlu0 %v19, 120
    %v21 = vpop.permute.xlu0 %20
    %vm22 = vcmask 1032128
    %23 = vst.msk [vmem:[#allocation0] sm:$0x1] %vm22, %v21
    %s24 = scalar_lea.vmem %s0, 19
    %v25 = vld [vmem:[%s24] sm:$0x1]
    %26 = vrot.lane.b32.xlu0 %v25, 114
    %v27 = vpop.permute.xlu0 %26
    %vm28 = vcmask 982928
    %29 = vst.msk [vmem:[#allocation0] sm:$0x1] %vm28, %v27
    %s30 = scalar_lea.vmem %s0, 18
    %v31 = vld [vmem:[%s30] sm:$0x1]
    %32 = vrot.lane.b32.xlu0 %v31, 108
    %v33 = vpop.permute.xlu0 %32
    %vm34 = vcmask 933728
    %35 = vst.msk [vmem:[#allocation0] sm:$0x1] %vm34, %v33
    %s36 = scalar_lea.vmem %s0, 17
    %v37 = vld [vmem:[%s36] sm:$0x1]
    %38 = vrot.lane.b32.xlu0 %v37, 102
    %v39 = vpop.permute.xlu0 %38
    %vm40 = vcmask 884528
    %41 = vst.msk [vmem:[#allocation0] sm:$0x1] %vm40, %v39
    %s42 = scalar_lea.vmem %s0, 16
    %v43 = vld [vmem:[%s42] sm:$0x1]
    %44 = vrot.lane.b32.xlu0 %v43, 96
    %v45 = vpop.permute.xlu0 %44
    %vm46 = vcmask 835328
    %47 = vst.msk [vmem:[#allocation0] sm:$0x1] %vm46, %v45
    %s48 = scalar_lea.vmem %s0, 15
    %v49 = vld [vmem:[%s48] sm:$0x1]
    %50 = vrot.lane.b32.xlu0 %v49, 90
    %v51 = vpop.permute.xlu0 %50
    %vm52 = vcmask 786128
    %53 = vst.msk [vmem:[#allocation0] sm:$0x1] %vm52, %v51
    %s54 = scalar_lea.vmem %s0, 14
    %v55 = vld [vmem:[%s54] sm:$0x1]
    %56 = vrot.lane.b32.xlu0 %v55, 84
    %v57 = vpop.permute.xlu0 %56
    %vm58 = vcmask 736928
    %59 = vst.msk [vmem:[#allocation0] sm:$0x1] %vm58, %v57
    %s60 = scalar_lea.vmem %s0, 13
    %v61 = vld [vmem:[%s60] sm:$0x1]
    %62 = vrot.lane.b32.xlu0 %v61, 78
    %v63 = vpop.permute.xlu0 %62
    %vm64 = vcmask 687728
    %65 = vst.msk [vmem:[#allocation0] sm:$0x1] %vm64, %v63
    %s66 = scalar_lea.vmem %s0, 12
    %v67 = vld [vmem:[%s66] sm:$0x1]
    %68 = vrot.lane.b32.xlu0 %v67, 72
    %v69 = vpop.permute.xlu0 %68
    %vm70 = vcmask 638528
    %71 = vst.msk [vmem:[#allocation0] sm:$0x1] %vm70, %v69
    %s72 = scalar_lea.vmem %s0, 11
    %v73 = vld [vmem:[%s72] sm:$0x1]
    %74 = vrot.lane.b32.xlu0 %v73, 66
    %v75 = vpop.permute.xlu0 %74
    %vm76 = vcmask 589328
    %77 = vst.msk [vmem:[#allocation0] sm:$0x1] %vm76, %v75
    %s78 = scalar_lea.vmem %s0, 10
    %v79 = vld [vmem:[%s78] sm:$0x1]
    %80 = vrot.lane.b32.xlu0 %v79, 60
    %v81 = vpop.permute.xlu0 %80
    %vm82 = vcmask 540128
    %83 = vst.msk [vmem:[#allocation0] sm:$0x1] %vm82, %v81
    %s84 = scalar_lea.vmem %s0, 9
    %v85 = vld [vmem:[%s84] sm:$0x1]
    %86 = vrot.lane.b32.xlu0 %v85, 54
    %v87 = vpop.permute.xlu0 %86
    %vm88 = vcmask 490928
    %89 = vst.msk [vmem:[#allocation0] sm:$0x1] %vm88, %v87
    %s90 = scalar_lea.vmem %s0, 8
    %v91 = vld [vmem:[%s90] sm:$0x1]
    %92 = vrot.lane.b32.xlu0 %v91, 48
    %v93 = vpop.permute.xlu0 %92
    %vm94 = vcmask 441728
    %95 = vst.msk [vmem:[#allocation0] sm:$0x1] %vm94, %v93
    %s96 = scalar_lea.vmem %s0, 7
    %v97 = vld [vmem:[%s96] sm:$0x1]
    %98 = vrot.lane.b32.xlu0 %v97, 42
    %v99 = vpop.permute.xlu0 %98
    %vm100 = vcmask 392528
    %101 = vst.msk [vmem:[#allocation0] sm:$0x1] %vm100, %v99
    %s102 = scalar_lea.vmem %s0, 6
    %v103 = vld [vmem:[%s102] sm:$0x1]
    %104 = vrot.lane.b32.xlu0 %v103, 36
    %v105 = vpop.permute.xlu0 %104
    %vm106 = vcmask 343328
    %107 = vst.msk [vmem:[#allocation0] sm:$0x1] %vm106, %v105
    %s108 = scalar_lea.vmem %s0, 27
    %v109 = vld [vmem:[%s108] sm:$0x1]
    %110 = vrot.lane.b32.xlu0 %v109, 34
    %v111 = vpop.permute.xlu0 %110
    %vm112 = vcmask 326928
    %s113 = scalar_lea.vmem [#allocation0], 8
    %114 = vst.msk [vmem:[%s113] sm:$0x1] %vm112, %v111
    %s115 = scalar_lea.vmem %s0, 5
    %v116 = vld [vmem:[%s115] sm:$0x1]
    %117 = vrot.lane.b32.xlu0 %v116, 30
    %v118 = vpop.permute.xlu0 %117
    %vm119 = vcmask 294128
    %120 = vst.msk [vmem:[#allocation0] sm:$0x1] %vm119, %v118
    %s121 = scalar_lea.vmem %s0, 26
    %v122 = vld [vmem:[%s121] sm:$0x1]
    %123 = vrot.lane.b32.xlu0 %v122, 28
    %v124 = vpop.permute.xlu0 %123
    %vm125 = vcmask 277728
    %s126 = scalar_lea.vmem [#allocation0], 8
    %127 = vst.msk [vmem:[%s126] sm:$0x1] %vm125, %v124
    %s128 = scalar_lea.vmem %s0, 4
    %v129 = vld [vmem:[%s128] sm:$0x1]
    %130 = vrot.lane.b32.xlu0 %v129, 24
    %v131 = vpop.permute.xlu0 %130
    %vm132 = vcmask 244928
    %133 = vst.msk [vmem:[#allocation0] sm:$0x1] %vm132, %v131
    %s134 = scalar_lea.vmem %s0, 25
    %v135 = vld [vmem:[%s134] sm:$0x1]
    %136 = vrot.lane.b32.xlu0 %v135, 22
    %v137 = vpop.permute.xlu0 %136
    %vm138 = vcmask 228528
    %s139 = scalar_lea.vmem [#allocation0], 8
    %140 = vst.msk [vmem:[%s139] sm:$0x1] %vm138, %v137
    %s141 = scalar_lea.vmem %s0, 3
    %v142 = vld [vmem:[%s141] sm:$0x1]
    %143 = vrot.lane.b32.xlu0 %v142, 18
    %v144 = vpop.permute.xlu0 %143
    %vm145 = vcmask 195728
    %146 = vst.msk [vmem:[#allocation0] sm:$0x1] %vm145, %v144
    %s147 = scalar_lea.vmem %s0, 24
    %v148 = vld [vmem:[%s147] sm:$0x1]
    %149 = vrot.lane.b32.xlu0 %v148, 16
    %v150 = vpop.permute.xlu0 %149
    %vm151 = vcmask 179328
    %s152 = scalar_lea.vmem [#allocation0], 8
    %153 = vst.msk [vmem:[%s152] sm:$0x1] %vm151, %v150
    %s154 = scalar_lea.vmem %s0, 2
    %v155 = vld [vmem:[%s154] sm:$0x1]
    %156 = vrot.lane.b32.xlu0 %v155, 12
    %v157 = vpop.permute.xlu0 %156
    %vm158 = vcmask 146528
    %159 = vst.msk [vmem:[#allocation0] sm:$0x1] %vm158, %v157
    %s160 = scalar_lea.vmem %s0, 23
    %v161 = vld [vmem:[%s160] sm:$0x1]
    %162 = vrot.lane.b32.xlu0 %v161, 10
    %v163 = vpop.permute.xlu0 %162
    %vm164 = vcmask 130128
    %s165 = scalar_lea.vmem [#allocation0], 8
    %166 = vst.msk [vmem:[%s165] sm:$0x1] %vm164, %v163
    %s167 = scalar_lea.vmem %s0, 1
    %v168 = vld [vmem:[%s167] sm:$0x1]
    %169 = vrot.lane.b32.xlu0 %v168, 6
    %v170 = vpop.permute.xlu0 %169
    %vm171 = vcmask 97328
    %172 = vst.msk [vmem:[#allocation0] sm:$0x1] %vm171, %v170
    %s173 = scalar_lea.vmem %s0, 22
    %v174 = vld [vmem:[%s173] sm:$0x1]
    %175 = vrot.lane.b32.xlu0 %v174, 4
    %v176 = vpop.permute.xlu0 %175
    %vm177 = vcmask 80928
    %s178 = scalar_lea.vmem [#allocation0], 8
    %179 = vst.msk [vmem:[%s178] sm:$0x1] %vm177, %v176
    %s181 = sshllo.u32 0, 1
    %v183 = vld [vmem:[#allocation0] sm:%s181]
    %s184 = sshllo.u32 0, 1
    %185 = vst [vmem:[%s1] sm:%s184] %v183
    %s186 = scalar_lea.vmem [#allocation0], 8
    %v187 = vld [vmem:[%s186] sm:%s181]
    %s188 = sshllo.u32 0, 1
    %s189 = scalar_lea.vmem %s1, 1
    %190 = vst [vmem:[%s189] sm:%s188] %v187

// kernel: tile.18
$region0: #{tile.18}
  #allocation0 [shape = 's32[1]{0}', space=sflag, size = 0x4, scoped, tag = 'scoped memory for tile.18']
  %s0 = inlined_call_operand.vmem [shape: f32[16], index: 0, kind: input, shape index: {}]
  %s1 = inlined_call_operand.vmem [shape: f32[10,16], index: 1, kind: output, shape index: {}]
  // Predicated region
  $region2: #{tile.18} parent=0 // pred_check
    _
  $region3: #{tile.18} parent=0 // pred_check_branch
    %3 = sbr.rel (0) target = $region5
  $region4: #{tile.18} parent=0 // pred_region
    _
  $region5: #{tile.18} parent=0 // pred_fallthru
    _
  %v4 = vld [vmem:[%s0] ss:$0 sm:$0xff]
  %5 = vst [vmem:[%s1] sm:$0xff] %v4
  %s6 = scalar_lea.vmem %s1, 8
  %7 = vst [vmem:[%s6] sm:$0xff] %v4

// kernel: tile.19
$region0: #{tile.19}
  %s0 = inlined_call_operand.vmem [shape: f32[10,16], index: 0, kind: input, shape index: {}]
  %s1 = inlined_call_operand.vmem [shape: f32[1,160], index: 1, kind: output, shape index: {}]
  $region1: #{tile.19} parent=0
    #allocation0 [shape = 'u8[8192]{0}', space=vmem, size = 0x2000, scoped, tag = 'scoped mem for output reshape']
    %s2 = smov 3
    %v3 = vld [vmem:[%s0] ss:$8 sm:%s2]
    %vm4 = vcmask 130048
    %5 = vst.msk [vmem:[#allocation0] ss:$8 sm:$0x3] %vm4, %v3
    %s6 = scalar_lea.vmem %s0, 7
    %v7 = vld [vmem:[%s6] sm:$0x1]
    %8 = vrot.lane.b32.xlu0 %v7, 112
    %v9 = vpop.permute.xlu0 %8
    %vm10 = vcmask 1048448
    %11 = vst.msk [vmem:[#allocation0] sm:$0x1] %vm10, %v9
    %s12 = scalar_lea.vmem %s0, 6
    %v13 = vld [vmem:[%s12] sm:$0x1]
    %14 = vrot.lane.b32.xlu0 %v13, 96
    %v15 = vpop.permute.xlu0 %14
    %vm16 = vcmask 917248
    %17 = vst.msk [vmem:[#allocation0] sm:$0x1] %vm16, %v15
    %s18 = scalar_lea.vmem %s0, 5
    %v19 = vld [vmem:[%s18] sm:$0x1]
    %20 = vrot.lane.b32.xlu0 %v19, 80
    %v21 = vpop.permute.xlu0 %20
    %vm22 = vcmask 786048
    %23 = vst.msk [vmem:[#allocation0] sm:$0x1] %vm22, %v21
    %s24 = scalar_lea.vmem %s0, 4
    %v25 = vld [vmem:[%s24] sm:$0x1]
    %26 = vrot.lane.b32.xlu0 %v25, 64
    %v27 = vpop.permute.xlu0 %26
    %vm28 = vcmask 654848
    %29 = vst.msk [vmem:[#allocation0] sm:$0x1] %vm28, %v27
    %s30 = scalar_lea.vmem %s0, 3
    %v31 = vld [vmem:[%s30] sm:$0x1]
    %32 = vrot.lane.b32.xlu0 %v31, 48
    %v33 = vpop.permute.xlu0 %32
    %vm34 = vcmask 523648
    %35 = vst.msk [vmem:[#allocation0] sm:$0x1] %vm34, %v33
    %s36 = scalar_lea.vmem %s0, 2
    %v37 = vld [vmem:[%s36] sm:$0x1]
    %38 = vrot.lane.b32.xlu0 %v37, 32
    %v39 = vpop.permute.xlu0 %38
    %vm40 = vcmask 392448
    %41 = vst.msk [vmem:[#allocation0] sm:$0x1] %vm40, %v39
    %s42 = scalar_lea.vmem %s0, 1
    %s43 = smov 3
    %v44 = vld [vmem:[%s42] ss:$8 sm:%s43]
    %45 = vrot.lane.b32.xlu0 %v44, 16
    %v46 = vpop.permute.xlu0 %45
    %vm47 = vcmask 261248
    %48 = vst.msk [vmem:[#allocation0] ss:$8 sm:$0x3] %vm47, %v46
    %s50 = sshllo.u32 0, 1
    %v52 = vld [vmem:[#allocation0] sm:%s50]
    %s53 = sshllo.u32 0, 1
    %54 = vst [vmem:[%s1] sm:%s53] %v52
    %s55 = scalar_lea.vmem [#allocation0], 8
    %v56 = vld [vmem:[%s55] sm:%s50]
    %s57 = sshllo.u32 0, 1
    %s58 = scalar_lea.vmem %s1, 1
    %59 = vst [vmem:[%s58] sm:%s57] %v56

// kernel: net_forward.1
$region0: #{net_forward.1}
  #allocation0 [shape = 'u32[]', space=smem, size = 0x4, offset = 0x4, fixed_abs, tag = 'smem constant byte address 0x4 - core index']
  #allocation1 [shape = 'u32[144,128]{1,0:T(1,128)}', space=vmem, size = 0x12000, scoped, tag = 'internal scratch']
  #allocation2 [shape = 'bf16[8,14,84]{2,1,0:T(8,128)(2,1)}', space=vmem, size = 0x8000, scoped, tag = 'scratch operand']
  %s0 = inlined_call_operand.vmem [shape: bf16[8,32,96], index: 0, kind: input, shape index: {}]
  %s1 = inlined_call_operand.vmem [shape: bf16[480,168], index: 1, kind: input, shape index: {}]
  %s2 = inlined_call_operand.vmem [shape: f32[1,168], index: 2, kind: input, shape index: {}]
  %s3 = inlined_call_operand.vmem [shape: bf16[420,160], index: 3, kind: input, shape index: {}]
  %s4 = inlined_call_operand.vmem [shape: f32[1,160], index: 4, kind: input, shape index: {}]
  %s5 = inlined_call_operand.vmem [shape: bf16[400,128], index: 5, kind: input, shape index: {}]
  %s6 = inlined_call_operand.vmem [shape: f32[1,128], index: 6, kind: input, shape index: {}]
  %s7 = inlined_call_operand.vmem [shape: bf16[128,128], index: 7, kind: input, shape index: {}]
  %s8 = inlined_call_operand.vmem [shape: f32[1,128], index: 8, kind: input, shape index: {}]
  %s9 = inlined_call_operand.vmem [shape: bf16[128,128], index: 9, kind: input, shape index: {}]
  %s10 = inlined_call_operand.vmem [shape: f32[1,128], index: 10, kind: input, shape index: {}]
  %s11 = inlined_call_operand.vmem [shape: f32[8,128], index: 11, kind: output, shape index: {}]
  %s12 = sld [smem:[#allocation0]]
  $region54: #{net_forward.1} parent=0
    _
  %s14 = ssub.s32 1, %s12
  %s15 = scalar_select 0, %s14, %s12
  // Predicated region
  $region2: #{net_forward.1} parent=0 // pred_check
    _
  $region3: #{net_forward.1} parent=0 // pred_check_branch
    %17 = sbr.rel (0) target = $region5
  $region4: #{net_forward.1} parent=0 // pred_region
    _
  $region5: #{net_forward.1} parent=0 // pred_fallthru
    _
  // Predicated region
  $region6: #{net_forward.1} parent=0 // pred_check
    _
  $region7: #{net_forward.1} parent=0 // pred_check_branch
    %19 = sbr.rel (0) target = $region9
  $region8: #{net_forward.1} parent=0 // pred_region
    _
  $region9: #{net_forward.1} parent=0 // pred_fallthru
    _
  // Predicated region
  $region10: #{net_forward.1} parent=0 // pred_check
    _
  $region11: #{net_forward.1} parent=0 // pred_check_branch
    %21 = sbr.rel (0) target = $region13
  $region12: #{net_forward.1} parent=0 // pred_region
    _
  $region13: #{net_forward.1} parent=0 // pred_fallthru
    _
  // Predicated region
  $region14: #{net_forward.1} parent=0 // pred_check
    _
  $region15: #{net_forward.1} parent=0 // pred_check_branch
    %23 = sbr.rel (0) target = $region17
  $region16: #{net_forward.1} parent=0 // pred_region
    _
  $region17: #{net_forward.1} parent=0 // pred_fallthru
    _
  // Predicated region
  $region18: #{net_forward.1} parent=0 // pred_check
    _
  $region19: #{net_forward.1} parent=0 // pred_check_branch
    %25 = sbr.rel (0) target = $region21
  $region20: #{net_forward.1} parent=0 // pred_region
    _
  $region21: #{net_forward.1} parent=0 // pred_fallthru
    _
  // Predicated region
  $region22: #{net_forward.1} parent=0 // pred_check
    _
  $region23: #{net_forward.1} parent=0 // pred_check_branch
    %27 = sbr.rel (0) target = $region25
  $region24: #{net_forward.1} parent=0 // pred_region
    _
  $region25: #{net_forward.1} parent=0 // pred_fallthru
    _
  // Predicated region
  $region26: #{net_forward.1} parent=0 // pred_check
    _
  $region27: #{net_forward.1} parent=0 // pred_check_branch
    %29 = sbr.rel (0) target = $region29
  $region28: #{net_forward.1} parent=0 // pred_region
    _
  $region29: #{net_forward.1} parent=0 // pred_fallthru
    _
  // Predicated region
  $region30: #{net_forward.1} parent=0 // pred_check
    _
  $region31: #{net_forward.1} parent=0 // pred_check_branch
    %31 = sbr.rel (0) target = $region33
  $region32: #{net_forward.1} parent=0 // pred_region
    _
  $region33: #{net_forward.1} parent=0 // pred_fallthru
    _
  // Predicated region
  $region34: #{net_forward.1} parent=0 // pred_check
    _
  $region35: #{net_forward.1} parent=0 // pred_check_branch
    %33 = sbr.rel (0) target = $region37
  $region36: #{net_forward.1} parent=0 // pred_region
    _
  $region37: #{net_forward.1} parent=0 // pred_fallthru
    _
  // Predicated region
  $region38: #{net_forward.1} parent=0 // pred_check
    _
  $region39: #{net_forward.1} parent=0 // pred_check_branch
    %35 = sbr.rel (0) target = $region41
  $region40: #{net_forward.1} parent=0 // pred_region
    _
  $region41: #{net_forward.1} parent=0 // pred_fallthru
    _
  // Predicated region
  $region42: #{net_forward.1} parent=0 // pred_check
    _
  $region43: #{net_forward.1} parent=0 // pred_check_branch
    %37 = sbr.rel (0) target = $region45
  $region44: #{net_forward.1} parent=0 // pred_region
    _
  $region45: #{net_forward.1} parent=0 // pred_fallthru
    _
  %v39 = vld [vmem:[%s0] sm:$0xf]
  %v40 = vld [vmem:[%s0 + $0x4] sm:$0xf]
  %v41 = vld [vmem:[%s0 + $0x8] sm:$0xf]
  %v42 = vld [vmem:[%s0 + $0xc] sm:$0xf]
  %v43 = vld [vmem:[%s0 + $0x10] sm:$0xf]
  %v44 = vld [vmem:[%s0 + $0x14] sm:$0xf]
  %v45 = vld [vmem:[%s0 + $0x18] sm:$0xf]
  %v46 = vld [vmem:[%s0 + $0x1c] sm:$0xf]
  %v47 = vld [vmem:[%s0 + $0x20] sm:$0xf]
  %v48 = vld [vmem:[%s0 + $0x24] sm:$0xf]
  %v49 = vld [vmem:[%s0 + $0x28] sm:$0xf]
  %v50 = vld [vmem:[%s0 + $0x2c] sm:$0xf]
  %v51 = vld [vmem:[%s0 + $0x30] sm:$0xf]
  %v52 = vld [vmem:[%s0 + $0x34] sm:$0xf]
  %v53 = vld [vmem:[%s0 + $0x38] sm:$0xf]
  %v54 = vld [vmem:[%s0 + $0x3c] sm:$0xf]
  %v55 = vld [vmem:[%s0 + $0x40] sm:$0xf]
  %v56 = vld [vmem:[%s0 + $0x44] sm:$0xf]
  %v57 = vld [vmem:[%s0 + $0x48] sm:$0xf]
  %v58 = vld [vmem:[%s0 + $0x4c] sm:$0xf]
  %v59 = vld [vmem:[%s0 + $0x50] sm:$0xf]
  %v60 = vld [vmem:[%s0 + $0x54] sm:$0xf]
  %v61 = vld [vmem:[%s0 + $0x58] sm:$0xf]
  %v62 = vld [vmem:[%s0 + $0x5c] sm:$0xf]
  %v63 = vld [vmem:[%s0 + $0x60] sm:$0xf]
  %v64 = vld [vmem:[%s0 + $0x64] sm:$0xf]
  %v65 = vld [vmem:[%s0 + $0x68] sm:$0xf]
  %v66 = vld [vmem:[%s0 + $0x6c] sm:$0xf]
  %v67 = vld [vmem:[%s0 + $0x70] sm:$0xf]
  %v68 = vld [vmem:[%s0 + $0x74] sm:$0xf]
  %v69 = vld [vmem:[%s0 + $0x78] sm:$0xf]
  %v70 = vld [vmem:[%s0 + $0x7c] sm:$0xf]
  %v103 = vunpack.c.l.b16 %v39
  %v104 = vunpack.c.l.b16 %v40
  %v105 = vunpack.c.l.b16 %v41
  %v106 = vunpack.c.l.b16 %v42
  %v107 = vunpack.c.l.b16 %v43
  %v108 = vunpack.c.l.b16 %v44
  %v109 = vunpack.c.l.b16 %v45
  %v110 = vunpack.c.l.b16 %v46
  %v111 = vunpack.c.l.b16 %v47
  %v112 = vunpack.c.l.b16 %v48
  %v113 = vunpack.c.l.b16 %v49
  %v114 = vunpack.c.l.b16 %v50
  %v115 = vunpack.c.l.b16 %v51
  %v116 = vunpack.c.l.b16 %v52
  %v117 = vunpack.c.l.b16 %v53
  %v118 = vunpack.c.l.b16 %v54
  %v119 = vunpack.c.l.b16 %v55
  %v120 = vunpack.c.l.b16 %v56
  %v121 = vunpack.c.l.b16 %v57
  %v122 = vunpack.c.l.b16 %v58
  %v123 = vunpack.c.l.b16 %v59
  %v124 = vunpack.c.l.b16 %v60
  %v125 = vunpack.c.l.b16 %v61
  %v126 = vunpack.c.l.b16 %v62
  %v127 = vunpack.c.l.b16 %v63
  %v128 = vunpack.c.l.b16 %v64
  %v129 = vunpack.c.l.b16 %v65
  %v130 = vunpack.c.l.b16 %v66
  %v131 = vunpack.c.l.b16 %v67
  %v132 = vunpack.c.l.b16 %v68
  %v133 = vunpack.c.l.b16 %v69
  %v134 = vunpack.c.l.b16 %v70
  %v135 = vpack.c.b16 %v104, %v103
  %v136 = vpack.c.b16 %v106, %v105
  %v137 = vpack.c.b16 %v108, %v107
  %v138 = vpack.c.b16 %v110, %v109
  %v139 = vpack.c.b16 %v112, %v111
  %v140 = vpack.c.b16 %v114, %v113
  %v141 = vpack.c.b16 %v116, %v115
  %v142 = vpack.c.b16 %v118, %v117
  %v143 = vpack.c.b16 %v120, %v119
  %v144 = vpack.c.b16 %v122, %v121
  %v145 = vpack.c.b16 %v124, %v123
  %v146 = vpack.c.b16 %v126, %v125
  %v147 = vpack.c.b16 %v128, %v127
  %v148 = vpack.c.b16 %v130, %v129
  %v149 = vpack.c.b16 %v132, %v131
  %v150 = vpack.c.b16 %v134, %v133
  %vm151 = vsmask.f32 7424
  %v153 = vshrl.u32 %v135, 16
  %v155 = vshll.u32 %v135, 16
  %v157 = vrot.slane %v155, 1
  %v158 = vor.u32 %v153, %v157
  %v160 = vshll.u32 %v136, 16
  %v162 = vrot.slane %v160, 1
  %v163 = vsel %vm151, %v158, %v162
  %v164 = vshrl.u32 %v136, 16
  %v166 = vor.u32 %v164, %v162
  %v168 = vshrl.u32 %v137, 16
  %v170 = vshll.u32 %v137, 16
  %v172 = vrot.slane %v170, 1
  %v173 = vor.u32 %v168, %v172
  %v175 = vshll.u32 %v138, 16
  %v177 = vrot.slane %v175, 1
  %v178 = vsel %vm151, %v173, %v177
  %v179 = vshrl.u32 %v138, 16
  %v181 = vor.u32 %v179, %v177
  %v183 = vshrl.u32 %v139, 16
  %v185 = vshll.u32 %v139, 16
  %v187 = vrot.slane %v185, 1
  %v188 = vor.u32 %v183, %v187
  %v190 = vshll.u32 %v140, 16
  %v192 = vrot.slane %v190, 1
  %v193 = vsel %vm151, %v188, %v192
  %v194 = vshrl.u32 %v140, 16
  %v196 = vor.u32 %v194, %v192
  %v198 = vshrl.u32 %v141, 16
  %v200 = vshll.u32 %v141, 16
  %v202 = vrot.slane %v200, 1
  %v203 = vor.u32 %v198, %v202
  %v205 = vshll.u32 %v142, 16
  %v207 = vrot.slane %v205, 1
  %v208 = vsel %vm151, %v203, %v207
  %v209 = vshrl.u32 %v142, 16
  %v211 = vor.u32 %v209, %v207
  %v213 = vshrl.u32 %v143, 16
  %v215 = vshll.u32 %v143, 16
  %v217 = vrot.slane %v215, 1
  %v218 = vor.u32 %v213, %v217
  %v220 = vshll.u32 %v144, 16
  %v222 = vrot.slane %v220, 1
  %v223 = vsel %vm151, %v218, %v222
  %v224 = vshrl.u32 %v144, 16
  %v226 = vor.u32 %v224, %v222
  %v228 = vshrl.u32 %v145, 16
  %v230 = vshll.u32 %v145, 16
  %v232 = vrot.slane %v230, 1
  %v233 = vor.u32 %v228, %v232
  %v235 = vshll.u32 %v146, 16
  %v237 = vrot.slane %v235, 1
  %v238 = vsel %vm151, %v233, %v237
  %v239 = vshrl.u32 %v146, 16
  %v241 = vor.u32 %v239, %v237
  %v243 = vshrl.u32 %v147, 16
  %v245 = vshll.u32 %v147, 16
  %v247 = vrot.slane %v245, 1
  %v248 = vor.u32 %v243, %v247
  %v250 = vshll.u32 %v148, 16
  %v252 = vrot.slane %v250, 1
  %v253 = vsel %vm151, %v248, %v252
  %v254 = vshrl.u32 %v148, 16
  %v256 = vor.u32 %v254, %v252
  %v258 = vshrl.u32 %v149, 16
  %v260 = vshll.u32 %v149, 16
  %v262 = vrot.slane %v260, 1
  %v263 = vor.u32 %v258, %v262
  %v265 = vshll.u32 %v150, 16
  %v267 = vrot.slane %v265, 1
  %v268 = vsel %vm151, %v263, %v267
  %v269 = vshrl.u32 %v150, 16
  %v271 = vor.u32 %v269, %v267
  %272 = vrot.lane.b32.xlu0 %v163, 96
  %v273 = vpop.permute.xlu0 %272
  %274 = vrot.lane.b32.xlu0 %v166, 96
  %v275 = vpop.permute.xlu0 %274
  %276 = vrot.lane.b32.xlu0 %v178, 96
  %v277 = vpop.permute.xlu0 %276
  %278 = vrot.lane.b32.xlu0 %v181, 96
  %v279 = vpop.permute.xlu0 %278
  %280 = vrot.lane.b32.xlu0 %v193, 96
  %v281 = vpop.permute.xlu0 %280
  %282 = vrot.lane.b32.xlu0 %v196, 96
  %v283 = vpop.permute.xlu0 %282
  %284 = vrot.lane.b32.xlu0 %v208, 96
  %v285 = vpop.permute.xlu0 %284
  %286 = vrot.lane.b32.xlu0 %v211, 96
  %v287 = vpop.permute.xlu0 %286
  %288 = vrot.lane.b32.xlu0 %v223, 96
  %v289 = vpop.permute.xlu0 %288
  %290 = vrot.lane.b32.xlu0 %v226, 96
  %v291 = vpop.permute.xlu0 %290
  %292 = vrot.lane.b32.xlu0 %v238, 96
  %v293 = vpop.permute.xlu0 %292
  %294 = vrot.lane.b32.xlu0 %v241, 96
  %v295 = vpop.permute.xlu0 %294
  %296 = vrot.lane.b32.xlu0 %v253, 96
  %v297 = vpop.permute.xlu0 %296
  %298 = vrot.lane.b32.xlu0 %v256, 96
  %v299 = vpop.permute.xlu0 %298
  %300 = vrot.lane.b32.xlu0 %v268, 96
  %v301 = vpop.permute.xlu0 %300
  %302 = vrot.lane.b32.xlu0 %v271, 96
  %v303 = vpop.permute.xlu0 %302
  %vm304 = vcmask 1046528
  %v305 = vrot.slane %v135, 1
  %v306 = vrot.slane %v136, 1
  %v307 = vsel %vm304, %v305, %v306
  %v308 = vrot.slane %v137, 1
  %v309 = vrot.slane %v138, 1
  %v310 = vsel %vm304, %v308, %v309
  %v311 = vrot.slane %v139, 1
  %v312 = vrot.slane %v140, 1
  %v313 = vsel %vm304, %v311, %v312
  %v314 = vrot.slane %v141, 1
  %v315 = vrot.slane %v142, 1
  %v316 = vsel %vm304, %v314, %v315
  %v317 = vrot.slane %v143, 1
  %v318 = vrot.slane %v144, 1
  %v319 = vsel %vm304, %v317, %v318
  %v320 = vrot.slane %v145, 1
  %v321 = vrot.slane %v146, 1
  %v322 = vsel %vm304, %v320, %v321
  %v323 = vrot.slane %v147, 1
  %v324 = vrot.slane %v148, 1
  %v325 = vsel %vm304, %v323, %v324
  %v326 = vrot.slane %v149, 1
  %v327 = vrot.slane %v150, 1
  %v328 = vsel %vm304, %v326, %v327
  %329 = vrot.lane.b32.xlu0 %v307, 64
  %v330 = vpop.permute.xlu0 %329
  %331 = vrot.lane.b32.xlu0 %v306, 64
  %v332 = vpop.permute.xlu0 %331
  %333 = vrot.lane.b32.xlu0 %v310, 64
  %v334 = vpop.permute.xlu0 %333
  %335 = vrot.lane.b32.xlu0 %v309, 64
  %v336 = vpop.permute.xlu0 %335
  %337 = vrot.lane.b32.xlu0 %v313, 64
  %v338 = vpop.permute.xlu0 %337
  %339 = vrot.lane.b32.xlu0 %v312, 64
  %v340 = vpop.permute.xlu0 %339
  %341 = vrot.lane.b32.xlu0 %v316, 64
  %v342 = vpop.permute.xlu0 %341
  %343 = vrot.lane.b32.xlu0 %v315, 64
  %v344 = vpop.permute.xlu0 %343
  %345 = vrot.lane.b32.xlu0 %v319, 64
  %v346 = vpop.permute.xlu0 %345
  %347 = vrot.lane.b32.xlu0 %v318, 64
  %v348 = vpop.permute.xlu0 %347
  %349 = vrot.lane.b32.xlu0 %v322, 64
  %v350 = vpop.permute.xlu0 %349
  %351 = vrot.lane.b32.xlu0 %v321, 64
  %v352 = vpop.permute.xlu0 %351
  %353 = vrot.lane.b32.xlu0 %v325, 64
  %v354 = vpop.permute.xlu0 %353
  %355 = vrot.lane.b32.xlu0 %v324, 64
  %v356 = vpop.permute.xlu0 %355
  %357 = vrot.lane.b32.xlu0 %v328, 64
  %v358 = vpop.permute.xlu0 %357
  %359 = vrot.lane.b32.xlu0 %v327, 64
  %v360 = vpop.permute.xlu0 %359
  %vm361 = vsmask.f32 6400
  %v362 = vrot.slane %v153, 1
  %v363 = vrot.slane %v155, 2
  %v364 = vor.u32 %v362, %v363
  %v365 = vrot.slane %v164, 1
  %v366 = vrot.slane %v160, 2
  %v367 = vor.u32 %v365, %v366
  %v368 = vsel %vm361, %v364, %v367
  %v369 = vrot.slane %v168, 1
  %v370 = vrot.slane %v170, 2
  %v371 = vor.u32 %v369, %v370
  %v372 = vrot.slane %v179, 1
  %v373 = vrot.slane %v175, 2
  %v374 = vor.u32 %v372, %v373
  %v375 = vsel %vm361, %v371, %v374
  %v376 = vrot.slane %v183, 1
  %v377 = vrot.slane %v185, 2
  %v378 = vor.u32 %v376, %v377
  %v379 = vrot.slane %v194, 1
  %v380 = vrot.slane %v190, 2
  %v381 = vor.u32 %v379, %v380
  %v382 = vsel %vm361, %v378, %v381
  %v383 = vrot.slane %v198, 1
  %v384 = vrot.slane %v200, 2
  %v385 = vor.u32 %v383, %v384
  %v386 = vrot.slane %v209, 1
  %v387 = vrot.slane %v205, 2
  %v388 = vor.u32 %v386, %v387
  %v389 = vsel %vm361, %v385, %v388
  %v390 = vrot.slane %v213, 1
  %v391 = vrot.slane %v215, 2
  %v392 = vor.u32 %v390, %v391
  %v393 = vrot.slane %v224, 1
  %v394 = vrot.slane %v220, 2
  %v395 = vor.u32 %v393, %v394
  %v396 = vsel %vm361, %v392, %v395
  %v397 = vrot.slane %v228, 1
  %v398 = vrot.slane %v230, 2
  %v399 = vor.u32 %v397, %v398
  %v400 = vrot.slane %v239, 1
  %v401 = vrot.slane %v235, 2
  %v402 = vor.u32 %v400, %v401
  %v403 = vsel %vm361, %v399, %v402
  %v404 = vrot.slane %v243, 1
  %v405 = vrot.slane %v245, 2
  %v406 = vor.u32 %v404, %v405
  %v407 = vrot.slane %v254, 1
  %v408 = vrot.slane %v250, 2
  %v409 = vor.u32 %v407, %v408
  %v410 = vsel %vm361, %v406, %v409
  %v411 = vrot.slane %v258, 1
  %v412 = vrot.slane %v260, 2
  %v413 = vor.u32 %v411, %v412
  %v414 = vrot.slane %v269, 1
  %v415 = vrot.slane %v265, 2
  %v416 = vor.u32 %v414, %v415
  %v417 = vsel %vm361, %v413, %v416
  %418 = vrot.lane.b32.xlu0 %v368, 32
  %v419 = vpop.permute.xlu0 %418
  %420 = vrot.lane.b32.xlu0 %v367, 32
  %v421 = vpop.permute.xlu0 %420
  %422 = vrot.lane.b32.xlu0 %v375, 32
  %v423 = vpop.permute.xlu0 %422
  %424 = vrot.lane.b32.xlu0 %v374, 32
  %v425 = vpop.permute.xlu0 %424
  %426 = vrot.lane.b32.xlu0 %v382, 32
  %v427 = vpop.permute.xlu0 %426
  %428 = vrot.lane.b32.xlu0 %v381, 32
  %v429 = vpop.permute.xlu0 %428
  %430 = vrot.lane.b32.xlu0 %v389, 32
  %v431 = vpop.permute.xlu0 %430
  %432 = vrot.lane.b32.xlu0 %v388, 32
  %v433 = vpop.permute.xlu0 %432
  %434 = vrot.lane.b32.xlu0 %v396, 32
  %v435 = vpop.permute.xlu0 %434
  %436 = vrot.lane.b32.xlu0 %v395, 32
  %v437 = vpop.permute.xlu0 %436
  %438 = vrot.lane.b32.xlu0 %v403, 32
  %v439 = vpop.permute.xlu0 %438
  %440 = vrot.lane.b32.xlu0 %v402, 32
  %v441 = vpop.permute.xlu0 %440
  %442 = vrot.lane.b32.xlu0 %v410, 32
  %v443 = vpop.permute.xlu0 %442
  %444 = vrot.lane.b32.xlu0 %v409, 32
  %v445 = vpop.permute.xlu0 %444
  %446 = vrot.lane.b32.xlu0 %v417, 32
  %v447 = vpop.permute.xlu0 %446
  %448 = vrot.lane.b32.xlu0 %v416, 32
  %v449 = vpop.permute.xlu0 %448
  %vm450 = vcmask 1045504
  %v451 = vrot.slane %v135, 2
  %v452 = vrot.slane %v136, 2
  %v453 = vsel %vm450, %v451, %v452
  %v454 = vrot.slane %v137, 2
  %v455 = vrot.slane %v138, 2
  %v456 = vsel %vm450, %v454, %v455
  %v457 = vrot.slane %v139, 2
  %v458 = vrot.slane %v140, 2
  %v459 = vsel %vm450, %v457, %v458
  %v460 = vrot.slane %v141, 2
  %v461 = vrot.slane %v142, 2
  %v462 = vsel %vm450, %v460, %v461
  %v463 = vrot.slane %v143, 2
  %v464 = vrot.slane %v144, 2
  %v465 = vsel %vm450, %v463, %v464
  %v466 = vrot.slane %v145, 2
  %v467 = vrot.slane %v146, 2
  %v468 = vsel %vm450, %v466, %v467
  %v469 = vrot.slane %v147, 2
  %v470 = vrot.slane %v148, 2
  %v471 = vsel %vm450, %v469, %v470
  %v472 = vrot.slane %v149, 2
  %v473 = vrot.slane %v150, 2
  %v474 = vsel %vm450, %v472, %v473
  %vm475 = vcmask 785408
  %v477 = vsel %vm475, %v135, %v273
  %v479 = vsel %vm475, %v136, %v275
  %v481 = vsel %vm475, %v137, %v277
  %v483 = vsel %vm475, %v138, %v279
  %v485 = vsel %vm475, %v139, %v281
  %v487 = vsel %vm475, %v140, %v283
  %v489 = vsel %vm475, %v141, %v285
  %v491 = vsel %vm475, %v142, %v287
  %v493 = vsel %vm475, %v143, %v289
  %v495 = vsel %vm475, %v144, %v291
  %v497 = vsel %vm475, %v145, %v293
  %v499 = vsel %vm475, %v146, %v295
  %v501 = vsel %vm475, %v147, %v297
  %v503 = vsel %vm475, %v148, %v299
  %v505 = vsel %vm475, %v149, %v301
  %v507 = vsel %vm475, %v150, %v303
  %vm508 = vcmask 523264
  %v510 = vsel %vm508, %v273, %v330
  %v512 = vsel %vm508, %v275, %v332
  %v514 = vsel %vm508, %v277, %v334
  %v516 = vsel %vm508, %v279, %v336
  %v518 = vsel %vm508, %v281, %v338
  %v520 = vsel %vm508, %v283, %v340
  %v522 = vsel %vm508, %v285, %v342
  %v524 = vsel %vm508, %v287, %v344
  %v526 = vsel %vm508, %v289, %v346
  %v528 = vsel %vm508, %v291, %v348
  %v530 = vsel %vm508, %v293, %v350
  %v532 = vsel %vm508, %v295, %v352
  %v534 = vsel %vm508, %v297, %v354
  %v536 = vsel %vm508, %v299, %v356
  %v538 = vsel %vm508, %v301, %v358
  %v540 = vsel %vm508, %v303, %v360
  %vm541 = vcmask 261120
  %v543 = vsel %vm541, %v330, %v419
  %v545 = vsel %vm541, %v332, %v421
  %v547 = vsel %vm541, %v334, %v423
  %v549 = vsel %vm541, %v336, %v425
  %v551 = vsel %vm541, %v338, %v427
  %v553 = vsel %vm541, %v340, %v429
  %v555 = vsel %vm541, %v342, %v431
  %v557 = vsel %vm541, %v344, %v433
  %v559 = vsel %vm541, %v346, %v435
  %v561 = vsel %vm541, %v348, %v437
  %v563 = vsel %vm541, %v350, %v439
  %v565 = vsel %vm541, %v352, %v441
  %v567 = vsel %vm541, %v354, %v443
  %v569 = vsel %vm541, %v356, %v445
  %v571 = vsel %vm541, %v358, %v447
  %v573 = vsel %vm541, %v360, %v449
  %v622 = vcombine.low %v477, %v510
  %v623 = vcombine.high %v477, %v510
  %v624 = vcombine.low %v543, %v453
  %v625 = vcombine.high %v543, %v453
  %v627 = vunpack.c.l.s4 1983009808
  %v628 = vunpack.c.0.s8 %v627
  %v629 = vlaneseq
  %v630 = vshrl.u32 %v629, 7
  %v631 = vsub.s32 %v628, %v630
  %v632 = vrot.slane %v622, %v631
  %v634 = vunpack.c.l.s4 1983009808
  %v635 = vunpack.c.0.s8 %v634
  %v636 = vlaneseq
  %v637 = vshrl.u32 %v636, 7
  %v638 = vsub.s32 %v635, %v637
  %v639 = vrot.slane %v623, %v638
  %v641 = vunpack.c.l.s4 1983009808
  %v642 = vunpack.c.0.s8 %v641
  %v643 = vlaneseq
  %v644 = vshrl.u32 %v643, 7
  %v645 = vsub.s32 %v642, %v644
  %v646 = vrot.slane %v624, %v645
  %v648 = vunpack.c.l.s4 1983009808
  %v649 = vunpack.c.0.s8 %v648
  %v650 = vlaneseq
  %v651 = vshrl.u32 %v650, 7
  %v652 = vsub.s32 %v649, %v651
  %v653 = vrot.slane %v625, %v652
  %v654 = vcombine.low %v632, %v646
  %v655 = vcombine.high %v632, %v646
  %v656 = vcombine.low %v639, %v653
  %v657 = vcombine.high %v639, %v653
  %v658 = vcombine.low %v479, %v512
  %v659 = vcombine.high %v479, %v512
  %v660 = vcombine.low %v545, %v452
  %v661 = vcombine.high %v545, %v452
  %v663 = vunpack.c.l.s4 1983009808
  %v664 = vunpack.c.0.s8 %v663
  %v665 = vlaneseq
  %v666 = vshrl.u32 %v665, 7
  %v667 = vsub.s32 %v664, %v666
  %v668 = vrot.slane %v658, %v667
  %v670 = vunpack.c.l.s4 1983009808
  %v671 = vunpack.c.0.s8 %v670
  %v672 = vlaneseq
  %v673 = vshrl.u32 %v672, 7
  %v674 = vsub.s32 %v671, %v673
  %v675 = vrot.slane %v659, %v674
  %v677 = vunpack.c.l.s4 1983009808
  %v678 = vunpack.c.0.s8 %v677
  %v679 = vlaneseq
  %v680 = vshrl.u32 %v679, 7
  %v681 = vsub.s32 %v678, %v680
  %v682 = vrot.slane %v660, %v681
  %v684 = vunpack.c.l.s4 1983009808
  %v685 = vunpack.c.0.s8 %v684
  %v686 = vlaneseq
  %v687 = vshrl.u32 %v686, 7
  %v688 = vsub.s32 %v685, %v687
  %v689 = vrot.slane %v661, %v688
  %v690 = vcombine.low %v668, %v682
  %v691 = vcombine.high %v668, %v682
  %v692 = vcombine.low %v675, %v689
  %v693 = vcombine.low %v481, %v514
  %v694 = vcombine.high %v481, %v514
  %v695 = vcombine.low %v547, %v456
  %v696 = vcombine.high %v547, %v456
  %v698 = vunpack.c.l.s4 1983009808
  %v699 = vunpack.c.0.s8 %v698
  %v700 = vlaneseq
  %v701 = vshrl.u32 %v700, 7
  %v702 = vsub.s32 %v699, %v701
  %v703 = vrot.slane %v693, %v702
  %v705 = vunpack.c.l.s4 1983009808
  %v706 = vunpack.c.0.s8 %v705
  %v707 = vlaneseq
  %v708 = vshrl.u32 %v707, 7
  %v709 = vsub.s32 %v706, %v708
  %v710 = vrot.slane %v694, %v709
  %v712 = vunpack.c.l.s4 1983009808
  %v713 = vunpack.c.0.s8 %v712
  %v714 = vlaneseq
  %v715 = vshrl.u32 %v714, 7
  %v716 = vsub.s32 %v713, %v715
  %v717 = vrot.slane %v695, %v716
  %v719 = vunpack.c.l.s4 1983009808
  %v720 = vunpack.c.0.s8 %v719
  %v721 = vlaneseq
  %v722 = vshrl.u32 %v721, 7
  %v723 = vsub.s32 %v720, %v722
  %v724 = vrot.slane %v696, %v723
  %v725 = vcombine.low %v703, %v717
  %v726 = vcombine.high %v703, %v717
  %v727 = vcombine.low %v710, %v724
  %v728 = vcombine.high %v710, %v724
  %v729 = vcombine.low %v483, %v516
  %v730 = vcombine.high %v483, %v516
  %v731 = vcombine.low %v549, %v455
  %v732 = vcombine.high %v549, %v455
  %v734 = vunpack.c.l.s4 1983009808
  %v735 = vunpack.c.0.s8 %v734
  %v736 = vlaneseq
  %v737 = vshrl.u32 %v736, 7
  %v738 = vsub.s32 %v735, %v737
  %v739 = vrot.slane %v729, %v738
  %v741 = vunpack.c.l.s4 1983009808
  %v742 = vunpack.c.0.s8 %v741
  %v743 = vlaneseq
  %v744 = vshrl.u32 %v743, 7
  %v745 = vsub.s32 %v742, %v744
  %v746 = vrot.slane %v730, %v745
  %v748 = vunpack.c.l.s4 1983009808
  %v749 = vunpack.c.0.s8 %v748
  %v750 = vlaneseq
  %v751 = vshrl.u32 %v750, 7
  %v752 = vsub.s32 %v749, %v751
  %v753 = vrot.slane %v731, %v752
  %v755 = vunpack.c.l.s4 1983009808
  %v756 = vunpack.c.0.s8 %v755
  %v757 = vlaneseq
  %v758 = vshrl.u32 %v757, 7
  %v759 = vsub.s32 %v756, %v758
  %v760 = vrot.slane %v732, %v759
  %v761 = vcombine.low %v739, %v753
  %v762 = vcombine.high %v739, %v753
  %v763 = vcombine.low %v746, %v760
  %v764 = vcombine.low %v485, %v518
  %v765 = vcombine.high %v485, %v518
  %v766 = vcombine.low %v551, %v459
  %v767 = vcombine.high %v551, %v459
  %v769 = vunpack.c.l.s4 1983009808
  %v770 = vunpack.c.0.s8 %v769
  %v771 = vlaneseq
  %v772 = vshrl.u32 %v771, 7
  %v773 = vsub.s32 %v770, %v772
  %v774 = vrot.slane %v764, %v773
  %v776 = vunpack.c.l.s4 1983009808
  %v777 = vunpack.c.0.s8 %v776
  %v778 = vlaneseq
  %v779 = vshrl.u32 %v778, 7
  %v780 = vsub.s32 %v777, %v779
  %v781 = vrot.slane %v765, %v780
  %v783 = vunpack.c.l.s4 1983009808
  %v784 = vunpack.c.0.s8 %v783
  %v785 = vlaneseq
  %v786 = vshrl.u32 %v785, 7
  %v787 = vsub.s32 %v784, %v786
  %v788 = vrot.slane %v766, %v787
  %v790 = vunpack.c.l.s4 1983009808
  %v791 = vunpack.c.0.s8 %v790
  %v792 = vlaneseq
  %v793 = vshrl.u32 %v792, 7
  %v794 = vsub.s32 %v791, %v793
  %v795 = vrot.slane %v767, %v794
  %v796 = vcombine.low %v774, %v788
  %v797 = vcombine.high %v774, %v788
  %v798 = vcombine.low %v781, %v795
  %v799 = vcombine.high %v781, %v795
  %v800 = vcombine.low %v487, %v520
  %v801 = vcombine.high %v487, %v520
  %v802 = vcombine.low %v553, %v458
  %v803 = vcombine.high %v553, %v458
  %v805 = vunpack.c.l.s4 1983009808
  %v806 = vunpack.c.0.s8 %v805
  %v807 = vlaneseq
  %v808 = vshrl.u32 %v807, 7
  %v809 = vsub.s32 %v806, %v808
  %v810 = vrot.slane %v800, %v809
  %v812 = vunpack.c.l.s4 1983009808
  %v813 = vunpack.c.0.s8 %v812
  %v814 = vlaneseq
  %v815 = vshrl.u32 %v814, 7
  %v816 = vsub.s32 %v813, %v815
  %v817 = vrot.slane %v801, %v816
  %v819 = vunpack.c.l.s4 1983009808
  %v820 = vunpack.c.0.s8 %v819
  %v821 = vlaneseq
  %v822 = vshrl.u32 %v821, 7
  %v823 = vsub.s32 %v820, %v822
  %v824 = vrot.slane %v802, %v823
  %v826 = vunpack.c.l.s4 1983009808
  %v827 = vunpack.c.0.s8 %v826
  %v828 = vlaneseq
  %v829 = vshrl.u32 %v828, 7
  %v830 = vsub.s32 %v827, %v829
  %v831 = vrot.slane %v803, %v830
  %v832 = vcombine.low %v810, %v824
  %v833 = vcombine.high %v810, %v824
  %v834 = vcombine.low %v817, %v831
  %v835 = vcombine.low %v489, %v522
  %v836 = vcombine.high %v489, %v522
  %v837 = vcombine.low %v555, %v462
  %v838 = vcombine.high %v555, %v462
  %v840 = vunpack.c.l.s4 1983009808
  %v841 = vunpack.c.0.s8 %v840
  %v842 = vlaneseq
  %v843 = vshrl.u32 %v842, 7
  %v844 = vsub.s32 %v841, %v843
  %v845 = vrot.slane %v835, %v844
  %v847 = vunpack.c.l.s4 1983009808
  %v848 = vunpack.c.0.s8 %v847
  %v849 = vlaneseq
  %v850 = vshrl.u32 %v849, 7
  %v851 = vsub.s32 %v848, %v850
  %v852 = vrot.slane %v836, %v851
  %v854 = vunpack.c.l.s4 1983009808
  %v855 = vunpack.c.0.s8 %v854
  %v856 = vlaneseq
  %v857 = vshrl.u32 %v856, 7
  %v858 = vsub.s32 %v855, %v857
  %v859 = vrot.slane %v837, %v858
  %v861 = vunpack.c.l.s4 1983009808
  %v862 = vunpack.c.0.s8 %v861
  %v863 = vlaneseq
  %v864 = vshrl.u32 %v863, 7
  %v865 = vsub.s32 %v862, %v864
  %v866 = vrot.slane %v838, %v865
  %v867 = vcombine.low %v845, %v859
  %v868 = vcombine.high %v845, %v859
  %v869 = vcombine.low %v852, %v866
  %v870 = vcombine.high %v852, %v866
  %v871 = vcombine.low %v491, %v524
  %v872 = vcombine.high %v491, %v524
  %v873 = vcombine.low %v557, %v461
  %v874 = vcombine.high %v557, %v461
  %v876 = vunpack.c.l.s4 1983009808
  %v877 = vunpack.c.0.s8 %v876
  %v878 = vlaneseq
  %v879 = vshrl.u32 %v878, 7
  %v880 = vsub.s32 %v877, %v879
  %v881 = vrot.slane %v871, %v880
  %v883 = vunpack.c.l.s4 1983009808
  %v884 = vunpack.c.0.s8 %v883
  %v885 = vlaneseq
  %v886 = vshrl.u32 %v885, 7
  %v887 = vsub.s32 %v884, %v886
  %v888 = vrot.slane %v872, %v887
  %v890 = vunpack.c.l.s4 1983009808
  %v891 = vunpack.c.0.s8 %v890
  %v892 = vlaneseq
  %v893 = vshrl.u32 %v892, 7
  %v894 = vsub.s32 %v891, %v893
  %v895 = vrot.slane %v873, %v894
  %v897 = vunpack.c.l.s4 1983009808
  %v898 = vunpack.c.0.s8 %v897
  %v899 = vlaneseq
  %v900 = vshrl.u32 %v899, 7
  %v901 = vsub.s32 %v898, %v900
  %v902 = vrot.slane %v874, %v901
  %v903 = vcombine.low %v881, %v895
  %v904 = vcombine.high %v881, %v895
  %v905 = vcombine.low %v888, %v902
  %v906 = vcombine.low %v493, %v526
  %v907 = vcombine.high %v493, %v526
  %v908 = vcombine.low %v559, %v465
  %v909 = vcombine.high %v559, %v465
  %v911 = vunpack.c.l.s4 1983009808
  %v912 = vunpack.c.0.s8 %v911
  %v913 = vlaneseq
  %v914 = vshrl.u32 %v913, 7
  %v915 = vsub.s32 %v912, %v914
  %v916 = vrot.slane %v906, %v915
  %v918 = vunpack.c.l.s4 1983009808
  %v919 = vunpack.c.0.s8 %v918
  %v920 = vlaneseq
  %v921 = vshrl.u32 %v920, 7
  %v922 = vsub.s32 %v919, %v921
  %v923 = vrot.slane %v907, %v922
  %v925 = vunpack.c.l.s4 1983009808
  %v926 = vunpack.c.0.s8 %v925
  %v927 = vlaneseq
  %v928 = vshrl.u32 %v927, 7
  %v929 = vsub.s32 %v926, %v928
  %v930 = vrot.slane %v908, %v929
  %v932 = vunpack.c.l.s4 1983009808
  %v933 = vunpack.c.0.s8 %v932
  %v934 = vlaneseq
  %v935 = vshrl.u32 %v934, 7
  %v936 = vsub.s32 %v933, %v935
  %v937 = vrot.slane %v909, %v936
  %v938 = vcombine.low %v916, %v930
  %v939 = vcombine.high %v916, %v930
  %v940 = vcombine.low %v923, %v937
  %v941 = vcombine.high %v923, %v937
  %v942 = vcombine.low %v495, %v528
  %v943 = vcombine.high %v495, %v528
  %v944 = vcombine.low %v561, %v464
  %v945 = vcombine.high %v561, %v464
  %v947 = vunpack.c.l.s4 1983009808
  %v948 = vunpack.c.0.s8 %v947
  %v949 = vlaneseq
  %v950 = vshrl.u32 %v949, 7
  %v951 = vsub.s32 %v948, %v950
  %v952 = vrot.slane %v942, %v951
  %v954 = vunpack.c.l.s4 1983009808
  %v955 = vunpack.c.0.s8 %v954
  %v956 = vlaneseq
  %v957 = vshrl.u32 %v956, 7
  %v958 = vsub.s32 %v955, %v957
  %v959 = vrot.slane %v943, %v958
  %v961 = vunpack.c.l.s4 1983009808
  %v962 = vunpack.c.0.s8 %v961
  %v963 = vlaneseq
  %v964 = vshrl.u32 %v963, 7
  %v965 = vsub.s32 %v962, %v964
  %v966 = vrot.slane %v944, %v965
  %v968 = vunpack.c.l.s4 1983009808
  %v969 = vunpack.c.0.s8 %v968
  %v970 = vlaneseq
  %v971 = vshrl.u32 %v970, 7
  %v972 = vsub.s32 %v969, %v971
  %v973 = vrot.slane %v945, %v972
  %v974 = vcombine.low %v952, %v966
  %v975 = vcombine.high %v952, %v966
  %v976 = vcombine.low %v959, %v973
  %v977 = vcombine.low %v497, %v530
  %v978 = vcombine.high %v497, %v530
  %v979 = vcombine.low %v563, %v468
  %v980 = vcombine.high %v563, %v468
  %v982 = vunpack.c.l.s4 1983009808
  %v983 = vunpack.c.0.s8 %v982
  %v984 = vlaneseq
  %v985 = vshrl.u32 %v984, 7
  %v986 = vsub.s32 %v983, %v985
  %v987 = vrot.slane %v977, %v986
  %v989 = vunpack.c.l.s4 1983009808
  %v990 = vunpack.c.0.s8 %v989
  %v991 = vlaneseq
  %v992 = vshrl.u32 %v991, 7
  %v993 = vsub.s32 %v990, %v992
  %v994 = vrot.slane %v978, %v993
  %v996 = vunpack.c.l.s4 1983009808
  %v997 = vunpack.c.0.s8 %v996
  %v998 = vlaneseq
  %v999 = vshrl.u32 %v998, 7
  %v1000 = vsub.s32 %v997, %v999
  %v1001 = vrot.slane %v979, %v1000
  %v1003 = vunpack.c.l.s4 1983009808
  %v1004 = vunpack.c.0.s8 %v1003
  %v1005 = vlaneseq
  %v1006 = vshrl.u32 %v1005, 7
  %v1007 = vsub.s32 %v1004, %v1006
  %v1008 = vrot.slane %v980, %v1007
  %v1009 = vcombine.low %v987, %v1001
  %v1010 = vcombine.high %v987, %v1001
  %v1011 = vcombine.low %v994, %v1008
  %v1012 = vcombine.high %v994, %v1008
  %v1013 = vcombine.low %v499, %v532
  %v1014 = vcombine.high %v499, %v532
  %v1015 = vcombine.low %v565, %v467
  %v1016 = vcombine.high %v565, %v467
  %v1018 = vunpack.c.l.s4 1983009808
  %v1019 = vunpack.c.0.s8 %v1018
  %v1020 = vlaneseq
  %v1021 = vshrl.u32 %v1020, 7
  %v1022 = vsub.s32 %v1019, %v1021
  %v1023 = vrot.slane %v1013, %v1022
  %v1025 = vunpack.c.l.s4 1983009808
  %v1026 = vunpack.c.0.s8 %v1025
  %v1027 = vlaneseq
  %v1028 = vshrl.u32 %v1027, 7
  %v1029 = vsub.s32 %v1026, %v1028
  %v1030 = vrot.slane %v1014, %v1029
  %v1032 = vunpack.c.l.s4 1983009808
  %v1033 = vunpack.c.0.s8 %v1032
  %v1034 = vlaneseq
  %v1035 = vshrl.u32 %v1034, 7
  %v1036 = vsub.s32 %v1033, %v1035
  %v1037 = vrot.slane %v1015, %v1036
  %v1039 = vunpack.c.l.s4 1983009808
  %v1040 = vunpack.c.0.s8 %v1039
  %v1041 = vlaneseq
  %v1042 = vshrl.u32 %v1041, 7
  %v1043 = vsub.s32 %v1040, %v1042
  %v1044 = vrot.slane %v1016, %v1043
  %v1045 = vcombine.low %v1023, %v1037
  %v1046 = vcombine.high %v1023, %v1037
  %v1047 = vcombine.low %v1030, %v1044
  %v1048 = vcombine.low %v501, %v534
  %v1049 = vcombine.high %v501, %v534
  %v1050 = vcombine.low %v567, %v471
  %v1051 = vcombine.high %v567, %v471
  %v1053 = vunpack.c.l.s4 1983009808
  %v1054 = vunpack.c.0.s8 %v1053
  %v1055 = vlaneseq
  %v1056 = vshrl.u32 %v1055, 7
  %v1057 = vsub.s32 %v1054, %v1056
  %v1058 = vrot.slane %v1048, %v1057
  %v1060 = vunpack.c.l.s4 1983009808
  %v1061 = vunpack.c.0.s8 %v1060
  %v1062 = vlaneseq
  %v1063 = vshrl.u32 %v1062, 7
  %v1064 = vsub.s32 %v1061, %v1063
  %v1065 = vrot.slane %v1049, %v1064
  %v1067 = vunpack.c.l.s4 1983009808
  %v1068 = vunpack.c.0.s8 %v1067
  %v1069 = vlaneseq
  %v1070 = vshrl.u32 %v1069, 7
  %v1071 = vsub.s32 %v1068, %v1070
  %v1072 = vrot.slane %v1050, %v1071
  %v1074 = vunpack.c.l.s4 1983009808
  %v1075 = vunpack.c.0.s8 %v1074
  %v1076 = vlaneseq
  %v1077 = vshrl.u32 %v1076, 7
  %v1078 = vsub.s32 %v1075, %v1077
  %v1079 = vrot.slane %v1051, %v1078
  %v1080 = vcombine.low %v1058, %v1072
  %v1081 = vcombine.high %v1058, %v1072
  %v1082 = vcombine.low %v1065, %v1079
  %v1083 = vcombine.high %v1065, %v1079
  %v1084 = vcombine.low %v503, %v536
  %v1085 = vcombine.high %v503, %v536
  %v1086 = vcombine.low %v569, %v470
  %v1087 = vcombine.high %v569, %v470
  %v1089 = vunpack.c.l.s4 1983009808
  %v1090 = vunpack.c.0.s8 %v1089
  %v1091 = vlaneseq
  %v1092 = vshrl.u32 %v1091, 7
  %v1093 = vsub.s32 %v1090, %v1092
  %v1094 = vrot.slane %v1084, %v1093
  %v1096 = vunpack.c.l.s4 1983009808
  %v1097 = vunpack.c.0.s8 %v1096
  %v1098 = vlaneseq
  %v1099 = vshrl.u32 %v1098, 7
  %v1100 = vsub.s32 %v1097, %v1099
  %v1101 = vrot.slane %v1085, %v1100
  %v1103 = vunpack.c.l.s4 1983009808
  %v1104 = vunpack.c.0.s8 %v1103
  %v1105 = vlaneseq
  %v1106 = vshrl.u32 %v1105, 7
  %v1107 = vsub.s32 %v1104, %v1106
  %v1108 = vrot.slane %v1086, %v1107
  %v1110 = vunpack.c.l.s4 1983009808
  %v1111 = vunpack.c.0.s8 %v1110
  %v1112 = vlaneseq
  %v1113 = vshrl.u32 %v1112, 7
  %v1114 = vsub.s32 %v1111, %v1113
  %v1115 = vrot.slane %v1087, %v1114
  %v1116 = vcombine.low %v1094, %v1108
  %v1117 = vcombine.high %v1094, %v1108
  %v1118 = vcombine.low %v1101, %v1115
  %v1119 = vcombine.low %v505, %v538
  %v1120 = vcombine.high %v505, %v538
  %v1121 = vcombine.low %v571, %v474
  %v1122 = vcombine.high %v571, %v474
  %v1124 = vunpack.c.l.s4 1983009808
  %v1125 = vunpack.c.0.s8 %v1124
  %v1126 = vlaneseq
  %v1127 = vshrl.u32 %v1126, 7
  %v1128 = vsub.s32 %v1125, %v1127
  %v1129 = vrot.slane %v1119, %v1128
  %v1131 = vunpack.c.l.s4 1983009808
  %v1132 = vunpack.c.0.s8 %v1131
  %v1133 = vlaneseq
  %v1134 = vshrl.u32 %v1133, 7
  %v1135 = vsub.s32 %v1132, %v1134
  %v1136 = vrot.slane %v1120, %v1135
  %v1138 = vunpack.c.l.s4 1983009808
  %v1139 = vunpack.c.0.s8 %v1138
  %v1140 = vlaneseq
  %v1141 = vshrl.u32 %v1140, 7
  %v1142 = vsub.s32 %v1139, %v1141
  %v1143 = vrot.slane %v1121, %v1142
  %v1145 = vunpack.c.l.s4 1983009808
  %v1146 = vunpack.c.0.s8 %v1145
  %v1147 = vlaneseq
  %v1148 = vshrl.u32 %v1147, 7
  %v1149 = vsub.s32 %v1146, %v1148
  %v1150 = vrot.slane %v1122, %v1149
  %v1151 = vcombine.low %v1129, %v1143
  %v1152 = vcombine.high %v1129, %v1143
  %v1153 = vcombine.low %v1136, %v1150
  %v1154 = vcombine.high %v1136, %v1150
  %v1155 = vcombine.low %v507, %v540
  %v1156 = vcombine.high %v507, %v540
  %v1157 = vcombine.low %v573, %v473
  %v1158 = vcombine.high %v573, %v473
  %v1160 = vunpack.c.l.s4 1983009808
  %v1161 = vunpack.c.0.s8 %v1160
  %v1162 = vlaneseq
  %v1163 = vshrl.u32 %v1162, 7
  %v1164 = vsub.s32 %v1161, %v1163
  %v1165 = vrot.slane %v1155, %v1164
  %v1167 = vunpack.c.l.s4 1983009808
  %v1168 = vunpack.c.0.s8 %v1167
  %v1169 = vlaneseq
  %v1170 = vshrl.u32 %v1169, 7
  %v1171 = vsub.s32 %v1168, %v1170
  %v1172 = vrot.slane %v1156, %v1171
  %v1174 = vunpack.c.l.s4 1983009808
  %v1175 = vunpack.c.0.s8 %v1174
  %v1176 = vlaneseq
  %v1177 = vshrl.u32 %v1176, 7
  %v1178 = vsub.s32 %v1175, %v1177
  %v1179 = vrot.slane %v1157, %v1178
  %v1181 = vunpack.c.l.s4 1983009808
  %v1182 = vunpack.c.0.s8 %v1181
  %v1183 = vlaneseq
  %v1184 = vshrl.u32 %v1183, 7
  %v1185 = vsub.s32 %v1182, %v1184
  %v1186 = vrot.slane %v1158, %v1185
  %v1187 = vcombine.low %v1165, %v1179
  %v1188 = vcombine.high %v1165, %v1179
  %v1189 = vcombine.low %v1172, %v1186
  %v1190 = vld [vmem:[%s1] sm:$0xff]
  %v1191 = vld [vmem:[%s1 + $0x8] sm:$0xff]
  %v1192 = vld [vmem:[%s1 + $0x10] sm:$0xff]
  %v1193 = vld [vmem:[%s1 + $0x18] sm:$0xff]
  %v1194 = vld [vmem:[%s1 + $0x20] sm:$0xff]
  %v1195 = vld [vmem:[%s1 + $0x28] sm:$0xff]
  %v1196 = vld [vmem:[%s1 + $0x30] sm:$0xff]
  %v1197 = vld [vmem:[%s1 + $0x38] sm:$0xff]
  %v1198 = vld [vmem:[%s1 + $0x40] sm:$0xff]
  %v1199 = vld [vmem:[%s1 + $0x48] sm:$0xff]
  %v1200 = vld [vmem:[%s1 + $0x50] sm:$0xff]
  %v1201 = vld [vmem:[%s1 + $0x58] sm:$0xff]
  %v1202 = vld [vmem:[%s1 + $0x60] sm:$0xff]
  %v1203 = vld [vmem:[%s1 + $0x68] sm:$0xff]
  %v1204 = vld [vmem:[%s1 + $0x70] sm:$0xff]
  %v1205 = vld [vmem:[%s1 + $0x78] sm:$0xff]
  %v1206 = vld [vmem:[%s1 + $0x80] sm:$0xff]
  %v1207 = vld [vmem:[%s1 + $0x88] sm:$0xff]
  %v1208 = vld [vmem:[%s1 + $0x90] sm:$0xff]
  %v1209 = vld [vmem:[%s1 + $0x98] sm:$0xff]
  %v1210 = vld [vmem:[%s1 + $0xa0] sm:$0xff]
  %v1211 = vld [vmem:[%s1 + $0xa8] sm:$0xff]
  %v1212 = vld [vmem:[%s1 + $0xb0] sm:$0xff]
  %v1213 = vld [vmem:[%s1 + $0xb8] sm:$0xff]
  %v1214 = vld [vmem:[%s1 + $0xc0] sm:$0xff]
  %v1215 = vld [vmem:[%s1 + $0xc8] sm:$0xff]
  %v1216 = vld [vmem:[%s1 + $0xd0] sm:$0xff]
  %v1217 = vld [vmem:[%s1 + $0xd8] sm:$0xff]
  %v1218 = vld [vmem:[%s1 + $0xe0] sm:$0xff]
  %v1219 = vld [vmem:[%s1 + $0xe8] sm:$0xff]
  %v1220 = vld [vmem:[%s1 + $0xf0] sm:$0xff]
  %v1221 = vld [vmem:[%s1 + $0xf8] sm:$0xff]
  %v1222 = vld [vmem:[%s1 + $0x100] sm:$0xff]
  %v1223 = vld [vmem:[%s1 + $0x108] sm:$0xff]
  %v1224 = vld [vmem:[%s1 + $0x110] sm:$0xff]
  %v1225 = vld [vmem:[%s1 + $0x118] sm:$0xff]
  %v1226 = vld [vmem:[%s1 + $0x120] sm:$0xff]
  %v1227 = vld [vmem:[%s1 + $0x128] sm:$0xff]
  %v1228 = vld [vmem:[%s1 + $0x130] sm:$0xff]
  %v1229 = vld [vmem:[%s1 + $0x138] sm:$0xff]
  %v1230 = vld [vmem:[%s1 + $0x140] sm:$0xff]
  %v1231 = vld [vmem:[%s1 + $0x148] sm:$0xff]
  %v1232 = vld [vmem:[%s1 + $0x150] sm:$0xff]
  %v1233 = vld [vmem:[%s1 + $0x158] sm:$0xff]
  %v1234 = vld [vmem:[%s1 + $0x160] sm:$0xff]
  %v1235 = vld [vmem:[%s1 + $0x168] sm:$0xff]
  %v1236 = vld [vmem:[%s1 + $0x170] sm:$0xff]
  %v1237 = vld [vmem:[%s1 + $0x178] sm:$0xff]
  %v1238 = vld [vmem:[%s1 + $0x180] sm:$0xff]
  %v1239 = vld [vmem:[%s1 + $0x188] sm:$0xff]
  %v1240 = vld [vmem:[%s1 + $0x190] sm:$0xff]
  %v1241 = vld [vmem:[%s1 + $0x198] sm:$0xff]
  %v1242 = vld [vmem:[%s1 + $0x1a0] sm:$0xff]
  %v1243 = vld [vmem:[%s1 + $0x1a8] sm:$0xff]
  %v1244 = vld [vmem:[%s1 + $0x1b0] sm:$0xff]
  %v1245 = vld [vmem:[%s1 + $0x1b8] sm:$0xff]
  %v1246 = vld [vmem:[%s1 + $0x1c0] sm:$0xff]
  %v1247 = vld [vmem:[%s1 + $0x1c8] sm:$0xff]
  %v1248 = vld [vmem:[%s1 + $0x1d0] sm:$0xff]
  %v1249 = vld [vmem:[%s1 + $0x1d8] sm:$0xff]
  %v1250 = vld [vmem:[%s2] sm:$0x3]
  %v1252 = vlaneseq
  %v1253 = vshrl.u32 %v1252, 7
  %v1254 = vsub.s32 0, %v1253
  %v1255 = vrot.slane %v1250, %v1254
  %v1256 = vlaneseq
  %v1257 = vshrl.u32 %v1256, 7
  %v1258 = vsub.s32 1, %v1257
  %v1259 = vrot.slane %v1250, %v1258
  %v1262 = vcombine.low %v654, %v655
  %v1263 = vcombine.high %v654, %v655
  %v1264 = vcombine.low %v656, %v657
  %v1265 = vcombine.high %v656, %v657
  %v1267 = vunpack.c.l.s4 1983009808
  %v1268 = vunpack.c.0.s8 %v1267
  %v1269 = vlaneseq
  %v1270 = vshrl.u32 %v1269, 7
  %v1271 = vsub.s32 %v1268, %v1270
  %v1272 = vrot.slane %v1262, %v1271
  %v1274 = vunpack.c.l.s4 1983009808
  %v1275 = vunpack.c.0.s8 %v1274
  %v1276 = vlaneseq
  %v1277 = vshrl.u32 %v1276, 7
  %v1278 = vsub.s32 %v1275, %v1277
  %v1279 = vrot.slane %v1263, %v1278
  %v1281 = vunpack.c.l.s4 1983009808
  %v1282 = vunpack.c.0.s8 %v1281
  %v1283 = vlaneseq
  %v1284 = vshrl.u32 %v1283, 7
  %v1285 = vsub.s32 %v1282, %v1284
  %v1286 = vrot.slane %v1264, %v1285
  %v1288 = vunpack.c.l.s4 1983009808
  %v1289 = vunpack.c.0.s8 %v1288
  %v1290 = vlaneseq
  %v1291 = vshrl.u32 %v1290, 7
  %v1292 = vsub.s32 %v1289, %v1291
  %v1293 = vrot.slane %v1265, %v1292
  %v1294 = vcombine.low %v1272, %v1286
  %v1295 = vcombine.high %v1272, %v1286
  %v1296 = vcombine.low %v1279, %v1293
  %v1297 = vcombine.high %v1279, %v1293
  %v1298 = vcombine.low %v690, %v691
  %v1299 = vcombine.high %v690, %v691
  %v1300 = vcombine.low %v692, %v725
  %v1301 = vcombine.high %v692, %v725
  %v1303 = vunpack.c.l.s4 1983009808
  %v1304 = vunpack.c.0.s8 %v1303
  %v1305 = vlaneseq
  %v1306 = vshrl.u32 %v1305, 7
  %v1307 = vsub.s32 %v1304, %v1306
  %v1308 = vrot.slane %v1298, %v1307
  %v1310 = vunpack.c.l.s4 1983009808
  %v1311 = vunpack.c.0.s8 %v1310
  %v1312 = vlaneseq
  %v1313 = vshrl.u32 %v1312, 7
  %v1314 = vsub.s32 %v1311, %v1313
  %v1315 = vrot.slane %v1299, %v1314
  %v1317 = vunpack.c.l.s4 1983009808
  %v1318 = vunpack.c.0.s8 %v1317
  %v1319 = vlaneseq
  %v1320 = vshrl.u32 %v1319, 7
  %v1321 = vsub.s32 %v1318, %v1320
  %v1322 = vrot.slane %v1300, %v1321
  %v1324 = vunpack.c.l.s4 1983009808
  %v1325 = vunpack.c.0.s8 %v1324
  %v1326 = vlaneseq
  %v1327 = vshrl.u32 %v1326, 7
  %v1328 = vsub.s32 %v1325, %v1327
  %v1329 = vrot.slane %v1301, %v1328
  %v1330 = vcombine.low %v1308, %v1322
  %v1331 = vcombine.high %v1308, %v1322
  %v1332 = vcombine.low %v1315, %v1329
  %v1333 = vcombine.high %v1315, %v1329
  %v1334 = vcombine.low %v726, %v727
  %v1335 = vcombine.high %v726, %v727
  %v1336 = vcombine.low %v728, %v761
  %v1337 = vcombine.high %v728, %v761
  %v1339 = vunpack.c.l.s4 1983009808
  %v1340 = vunpack.c.0.s8 %v1339
  %v1341 = vlaneseq
  %v1342 = vshrl.u32 %v1341, 7
  %v1343 = vsub.s32 %v1340, %v1342
  %v1344 = vrot.slane %v1334, %v1343
  %v1346 = vunpack.c.l.s4 1983009808
  %v1347 = vunpack.c.0.s8 %v1346
  %v1348 = vlaneseq
  %v1349 = vshrl.u32 %v1348, 7
  %v1350 = vsub.s32 %v1347, %v1349
  %v1351 = vrot.slane %v1335, %v1350
  %v1353 = vunpack.c.l.s4 1983009808
  %v1354 = vunpack.c.0.s8 %v1353
  %v1355 = vlaneseq
  %v1356 = vshrl.u32 %v1355, 7
  %v1357 = vsub.s32 %v1354, %v1356
  %v1358 = vrot.slane %v1336, %v1357
  %v1360 = vunpack.c.l.s4 1983009808
  %v1361 = vunpack.c.0.s8 %v1360
  %v1362 = vlaneseq
  %v1363 = vshrl.u32 %v1362, 7
  %v1364 = vsub.s32 %v1361, %v1363
  %v1365 = vrot.slane %v1337, %v1364
  %v1366 = vcombine.low %v1344, %v1358
  %v1367 = vcombine.high %v1344, %v1358
  %v1368 = vcombine.low %v1351, %v1365
  %v1369 = vcombine.high %v1351, %v1365
  %v1370 = vcombine.low %v762, %v763
  %v1371 = vcombine.high %v762, %v763
  %v1372 = vcombine.low %v796, %v797
  %v1373 = vcombine.high %v796, %v797
  %v1375 = vunpack.c.l.s4 1983009808
  %v1376 = vunpack.c.0.s8 %v1375
  %v1377 = vlaneseq
  %v1378 = vshrl.u32 %v1377, 7
  %v1379 = vsub.s32 %v1376, %v1378
  %v1380 = vrot.slane %v1370, %v1379
  %v1382 = vunpack.c.l.s4 1983009808
  %v1383 = vunpack.c.0.s8 %v1382
  %v1384 = vlaneseq
  %v1385 = vshrl.u32 %v1384, 7
  %v1386 = vsub.s32 %v1383, %v1385
  %v1387 = vrot.slane %v1371, %v1386
  %v1389 = vunpack.c.l.s4 1983009808
  %v1390 = vunpack.c.0.s8 %v1389
  %v1391 = vlaneseq
  %v1392 = vshrl.u32 %v1391, 7
  %v1393 = vsub.s32 %v1390, %v1392
  %v1394 = vrot.slane %v1372, %v1393
  %v1396 = vunpack.c.l.s4 1983009808
  %v1397 = vunpack.c.0.s8 %v1396
  %v1398 = vlaneseq
  %v1399 = vshrl.u32 %v1398, 7
  %v1400 = vsub.s32 %v1397, %v1399
  %v1401 = vrot.slane %v1373, %v1400
  %v1402 = vcombine.low %v1380, %v1394
  %v1403 = vcombine.high %v1380, %v1394
  %v1404 = vcombine.low %v1387, %v1401
  %v1405 = vcombine.high %v1387, %v1401
  %v1406 = vcombine.low %v798, %v799
  %v1407 = vcombine.high %v798, %v799
  %v1408 = vcombine.low %v832, %v833
  %v1409 = vcombine.high %v832, %v833
  %v1411 = vunpack.c.l.s4 1983009808
  %v1412 = vunpack.c.0.s8 %v1411
  %v1413 = vlaneseq
  %v1414 = vshrl.u32 %v1413, 7
  %v1415 = vsub.s32 %v1412, %v1414
  %v1416 = vrot.slane %v1406, %v1415
  %v1418 = vunpack.c.l.s4 1983009808
  %v1419 = vunpack.c.0.s8 %v1418
  %v1420 = vlaneseq
  %v1421 = vshrl.u32 %v1420, 7
  %v1422 = vsub.s32 %v1419, %v1421
  %v1423 = vrot.slane %v1407, %v1422
  %v1425 = vunpack.c.l.s4 1983009808
  %v1426 = vunpack.c.0.s8 %v1425
  %v1427 = vlaneseq
  %v1428 = vshrl.u32 %v1427, 7
  %v1429 = vsub.s32 %v1426, %v1428
  %v1430 = vrot.slane %v1408, %v1429
  %v1432 = vunpack.c.l.s4 1983009808
  %v1433 = vunpack.c.0.s8 %v1432
  %v1434 = vlaneseq
  %v1435 = vshrl.u32 %v1434, 7
  %v1436 = vsub.s32 %v1433, %v1435
  %v1437 = vrot.slane %v1409, %v1436
  %v1438 = vcombine.low %v1416, %v1430
  %v1439 = vcombine.high %v1416, %v1430
  %v1440 = vcombine.low %v1423, %v1437
  %v1441 = vcombine.high %v1423, %v1437
  %v1442 = vcombine.low %v834, %v867
  %v1443 = vcombine.high %v834, %v867
  %v1444 = vcombine.low %v868, %v869
  %v1445 = vcombine.high %v868, %v869
  %v1447 = vunpack.c.l.s4 1983009808
  %v1448 = vunpack.c.0.s8 %v1447
  %v1449 = vlaneseq
  %v1450 = vshrl.u32 %v1449, 7
  %v1451 = vsub.s32 %v1448, %v1450
  %v1452 = vrot.slane %v1442, %v1451
  %v1454 = vunpack.c.l.s4 1983009808
  %v1455 = vunpack.c.0.s8 %v1454
  %v1456 = vlaneseq
  %v1457 = vshrl.u32 %v1456, 7
  %v1458 = vsub.s32 %v1455, %v1457
  %v1459 = vrot.slane %v1443, %v1458
  %v1461 = vunpack.c.l.s4 1983009808
  %v1462 = vunpack.c.0.s8 %v1461
  %v1463 = vlaneseq
  %v1464 = vshrl.u32 %v1463, 7
  %v1465 = vsub.s32 %v1462, %v1464
  %v1466 = vrot.slane %v1444, %v1465
  %v1468 = vunpack.c.l.s4 1983009808
  %v1469 = vunpack.c.0.s8 %v1468
  %v1470 = vlaneseq
  %v1471 = vshrl.u32 %v1470, 7
  %v1472 = vsub.s32 %v1469, %v1471
  %v1473 = vrot.slane %v1445, %v1472
  %v1474 = vcombine.low %v1452, %v1466
  %v1475 = vcombine.high %v1452, %v1466
  %v1476 = vcombine.low %v1459, %v1473
  %v1477 = vcombine.high %v1459, %v1473
  %v1478 = vcombine.low %v870, %v903
  %v1479 = vcombine.high %v870, %v903
  %v1480 = vcombine.low %v904, %v905
  %v1481 = vcombine.high %v904, %v905
  %v1483 = vunpack.c.l.s4 1983009808
  %v1484 = vunpack.c.0.s8 %v1483
  %v1485 = vlaneseq
  %v1486 = vshrl.u32 %v1485, 7
  %v1487 = vsub.s32 %v1484, %v1486
  %v1488 = vrot.slane %v1478, %v1487
  %v1490 = vunpack.c.l.s4 1983009808
  %v1491 = vunpack.c.0.s8 %v1490
  %v1492 = vlaneseq
  %v1493 = vshrl.u32 %v1492, 7
  %v1494 = vsub.s32 %v1491, %v1493
  %v1495 = vrot.slane %v1479, %v1494
  %v1497 = vunpack.c.l.s4 1983009808
  %v1498 = vunpack.c.0.s8 %v1497
  %v1499 = vlaneseq
  %v1500 = vshrl.u32 %v1499, 7
  %v1501 = vsub.s32 %v1498, %v1500
  %v1502 = vrot.slane %v1480, %v1501
  %v1504 = vunpack.c.l.s4 1983009808
  %v1505 = vunpack.c.0.s8 %v1504
  %v1506 = vlaneseq
  %v1507 = vshrl.u32 %v1506, 7
  %v1508 = vsub.s32 %v1505, %v1507
  %v1509 = vrot.slane %v1481, %v1508
  %v1510 = vcombine.low %v1488, %v1502
  %v1511 = vcombine.high %v1488, %v1502
  %v1512 = vcombine.low %v1495, %v1509
  %v1513 = vcombine.high %v1495, %v1509
  %v1514 = vcombine.low %v938, %v939
  %v1515 = vcombine.high %v938, %v939
  %v1516 = vcombine.low %v940, %v941
  %v1517 = vcombine.high %v940, %v941
  %v1519 = vunpack.c.l.s4 1983009808
  %v1520 = vunpack.c.0.s8 %v1519
  %v1521 = vlaneseq
  %v1522 = vshrl.u32 %v1521, 7
  %v1523 = vsub.s32 %v1520, %v1522
  %v1524 = vrot.slane %v1514, %v1523
  %v1526 = vunpack.c.l.s4 1983009808
  %v1527 = vunpack.c.0.s8 %v1526
  %v1528 = vlaneseq
  %v1529 = vshrl.u32 %v1528, 7
  %v1530 = vsub.s32 %v1527, %v1529
  %v1531 = vrot.slane %v1515, %v1530
  %v1533 = vunpack.c.l.s4 1983009808
  %v1534 = vunpack.c.0.s8 %v1533
  %v1535 = vlaneseq
  %v1536 = vshrl.u32 %v1535, 7
  %v1537 = vsub.s32 %v1534, %v1536
  %v1538 = vrot.slane %v1516, %v1537
  %v1540 = vunpack.c.l.s4 1983009808
  %v1541 = vunpack.c.0.s8 %v1540
  %v1542 = vlaneseq
  %v1543 = vshrl.u32 %v1542, 7
  %v1544 = vsub.s32 %v1541, %v1543
  %v1545 = vrot.slane %v1517, %v1544
  %v1546 = vcombine.low %v1524, %v1538
  %v1547 = vcombine.high %v1524, %v1538
  %v1548 = vcombine.low %v1531, %v1545
  %v1549 = vcombine.high %v1531, %v1545
  %v1550 = vcombine.low %v974, %v975
  %v1551 = vcombine.high %v974, %v975
  %v1552 = vcombine.low %v976, %v1009
  %v1553 = vcombine.high %v976, %v1009
  %v1555 = vunpack.c.l.s4 1983009808
  %v1556 = vunpack.c.0.s8 %v1555
  %v1557 = vlaneseq
  %v1558 = vshrl.u32 %v1557, 7
  %v1559 = vsub.s32 %v1556, %v1558
  %v1560 = vrot.slane %v1550, %v1559
  %v1562 = vunpack.c.l.s4 1983009808
  %v1563 = vunpack.c.0.s8 %v1562
  %v1564 = vlaneseq
  %v1565 = vshrl.u32 %v1564, 7
  %v1566 = vsub.s32 %v1563, %v1565
  %v1567 = vrot.slane %v1551, %v1566
  %v1569 = vunpack.c.l.s4 1983009808
  %v1570 = vunpack.c.0.s8 %v1569
  %v1571 = vlaneseq
  %v1572 = vshrl.u32 %v1571, 7
  %v1573 = vsub.s32 %v1570, %v1572
  %v1574 = vrot.slane %v1552, %v1573
  %v1576 = vunpack.c.l.s4 1983009808
  %v1577 = vunpack.c.0.s8 %v1576
  %v1578 = vlaneseq
  %v1579 = vshrl.u32 %v1578, 7
  %v1580 = vsub.s32 %v1577, %v1579
  %v1581 = vrot.slane %v1553, %v1580
  %v1582 = vcombine.low %v1560, %v1574
  %v1583 = vcombine.high %v1560, %v1574
  %v1584 = vcombine.low %v1567, %v1581
  %v1585 = vcombine.high %v1567, %v1581
  %v1586 = vcombine.low %v1010, %v1011
  %v1587 = vcombine.high %v1010, %v1011
  %v1588 = vcombine.low %v1012, %v1045
  %v1589 = vcombine.high %v1012, %v1045
  %v1591 = vunpack.c.l.s4 1983009808
  %v1592 = vunpack.c.0.s8 %v1591
  %v1593 = vlaneseq
  %v1594 = vshrl.u32 %v1593, 7
  %v1595 = vsub.s32 %v1592, %v1594
  %v1596 = vrot.slane %v1586, %v1595
  %v1598 = vunpack.c.l.s4 1983009808
  %v1599 = vunpack.c.0.s8 %v1598
  %v1600 = vlaneseq
  %v1601 = vshrl.u32 %v1600, 7
  %v1602 = vsub.s32 %v1599, %v1601
  %v1603 = vrot.slane %v1587, %v1602
  %v1605 = vunpack.c.l.s4 1983009808
  %v1606 = vunpack.c.0.s8 %v1605
  %v1607 = vlaneseq
  %v1608 = vshrl.u32 %v1607, 7
  %v1609 = vsub.s32 %v1606, %v1608
  %v1610 = vrot.slane %v1588, %v1609
  %v1612 = vunpack.c.l.s4 1983009808
  %v1613 = vunpack.c.0.s8 %v1612
  %v1614 = vlaneseq
  %v1615 = vshrl.u32 %v1614, 7
  %v1616 = vsub.s32 %v1613, %v1615
  %v1617 = vrot.slane %v1589, %v1616
  %v1618 = vcombine.low %v1596, %v1610
  %v1619 = vcombine.high %v1596, %v1610
  %v1620 = vcombine.low %v1603, %v1617
  %v1621 = vcombine.high %v1603, %v1617
  %v1622 = vcombine.low %v1046, %v1047
  %v1623 = vcombine.high %v1046, %v1047
  %v1624 = vcombine.low %v1080, %v1081
  %v1625 = vcombine.high %v1080, %v1081
  %v1627 = vunpack.c.l.s4 1983009808
  %v1628 = vunpack.c.0.s8 %v1627
  %v1629 = vlaneseq
  %v1630 = vshrl.u32 %v1629, 7
  %v1631 = vsub.s32 %v1628, %v1630
  %v1632 = vrot.slane %v1622, %v1631
  %v1634 = vunpack.c.l.s4 1983009808
  %v1635 = vunpack.c.0.s8 %v1634
  %v1636 = vlaneseq
  %v1637 = vshrl.u32 %v1636, 7
  %v1638 = vsub.s32 %v1635, %v1637
  %v1639 = vrot.slane %v1623, %v1638
  %v1641 = vunpack.c.l.s4 1983009808
  %v1642 = vunpack.c.0.s8 %v1641
  %v1643 = vlaneseq
  %v1644 = vshrl.u32 %v1643, 7
  %v1645 = vsub.s32 %v1642, %v1644
  %v1646 = vrot.slane %v1624, %v1645
  %v1648 = vunpack.c.l.s4 1983009808
  %v1649 = vunpack.c.0.s8 %v1648
  %v1650 = vlaneseq
  %v1651 = vshrl.u32 %v1650, 7
  %v1652 = vsub.s32 %v1649, %v1651
  %v1653 = vrot.slane %v1625, %v1652
  %v1654 = vcombine.low %v1632, %v1646
  %v1655 = vcombine.high %v1632, %v1646
  %v1656 = vcombine.low %v1639, %v1653
  %v1657 = vcombine.high %v1639, %v1653
  %v1658 = vcombine.low %v1082, %v1083
  %v1659 = vcombine.high %v1082, %v1083
  %v1660 = vcombine.low %v1116, %v1117
  %v1661 = vcombine.high %v1116, %v1117
  %v1663 = vunpack.c.l.s4 1983009808
  %v1664 = vunpack.c.0.s8 %v1663
  %v1665 = vlaneseq
  %v1666 = vshrl.u32 %v1665, 7
  %v1667 = vsub.s32 %v1664, %v1666
  %v1668 = vrot.slane %v1658, %v1667
  %v1670 = vunpack.c.l.s4 1983009808
  %v1671 = vunpack.c.0.s8 %v1670
  %v1672 = vlaneseq
  %v1673 = vshrl.u32 %v1672, 7
  %v1674 = vsub.s32 %v1671, %v1673
  %v1675 = vrot.slane %v1659, %v1674
  %v1677 = vunpack.c.l.s4 1983009808
  %v1678 = vunpack.c.0.s8 %v1677
  %v1679 = vlaneseq
  %v1680 = vshrl.u32 %v1679, 7
  %v1681 = vsub.s32 %v1678, %v1680
  %v1682 = vrot.slane %v1660, %v1681
  %v1684 = vunpack.c.l.s4 1983009808
  %v1685 = vunpack.c.0.s8 %v1684
  %v1686 = vlaneseq
  %v1687 = vshrl.u32 %v1686, 7
  %v1688 = vsub.s32 %v1685, %v1687
  %v1689 = vrot.slane %v1661, %v1688
  %v1690 = vcombine.low %v1668, %v1682
  %v1691 = vcombine.high %v1668, %v1682
  %v1692 = vcombine.low %v1675, %v1689
  %v1693 = vcombine.high %v1675, %v1689
  %v1694 = vcombine.low %v1118, %v1151
  %v1695 = vcombine.high %v1118, %v1151
  %v1696 = vcombine.low %v1152, %v1153
  %v1697 = vcombine.high %v1152, %v1153
  %v1699 = vunpack.c.l.s4 1983009808
  %v1700 = vunpack.c.0.s8 %v1699
  %v1701 = vlaneseq
  %v1702 = vshrl.u32 %v1701, 7
  %v1703 = vsub.s32 %v1700, %v1702
  %v1704 = vrot.slane %v1694, %v1703
  %v1706 = vunpack.c.l.s4 1983009808
  %v1707 = vunpack.c.0.s8 %v1706
  %v1708 = vlaneseq
  %v1709 = vshrl.u32 %v1708, 7
  %v1710 = vsub.s32 %v1707, %v1709
  %v1711 = vrot.slane %v1695, %v1710
  %v1713 = vunpack.c.l.s4 1983009808
  %v1714 = vunpack.c.0.s8 %v1713
  %v1715 = vlaneseq
  %v1716 = vshrl.u32 %v1715, 7
  %v1717 = vsub.s32 %v1714, %v1716
  %v1718 = vrot.slane %v1696, %v1717
  %v1720 = vunpack.c.l.s4 1983009808
  %v1721 = vunpack.c.0.s8 %v1720
  %v1722 = vlaneseq
  %v1723 = vshrl.u32 %v1722, 7
  %v1724 = vsub.s32 %v1721, %v1723
  %v1725 = vrot.slane %v1697, %v1724
  %v1726 = vcombine.low %v1704, %v1718
  %v1727 = vcombine.high %v1704, %v1718
  %v1728 = vcombine.low %v1711, %v1725
  %v1729 = vcombine.high %v1711, %v1725
  %v1730 = vcombine.low %v1154, %v1187
  %v1731 = vcombine.high %v1154, %v1187
  %v1732 = vcombine.low %v1188, %v1189
  %v1733 = vcombine.high %v1188, %v1189
  %v1735 = vunpack.c.l.s4 1983009808
  %v1736 = vunpack.c.0.s8 %v1735
  %v1737 = vlaneseq
  %v1738 = vshrl.u32 %v1737, 7
  %v1739 = vsub.s32 %v1736, %v1738
  %v1740 = vrot.slane %v1730, %v1739
  %v1742 = vunpack.c.l.s4 1983009808
  %v1743 = vunpack.c.0.s8 %v1742
  %v1744 = vlaneseq
  %v1745 = vshrl.u32 %v1744, 7
  %v1746 = vsub.s32 %v1743, %v1745
  %v1747 = vrot.slane %v1731, %v1746
  %v1749 = vunpack.c.l.s4 1983009808
  %v1750 = vunpack.c.0.s8 %v1749
  %v1751 = vlaneseq
  %v1752 = vshrl.u32 %v1751, 7
  %v1753 = vsub.s32 %v1750, %v1752
  %v1754 = vrot.slane %v1732, %v1753
  %v1756 = vunpack.c.l.s4 1983009808
  %v1757 = vunpack.c.0.s8 %v1756
  %v1758 = vlaneseq
  %v1759 = vshrl.u32 %v1758, 7
  %v1760 = vsub.s32 %v1757, %v1759
  %v1761 = vrot.slane %v1733, %v1760
  %v1762 = vcombine.low %v1740, %v1754
  %v1763 = vcombine.high %v1740, %v1754
  %v1764 = vcombine.low %v1747, %v1761
  %v1765 = vcombine.high %v1747, %v1761
  %v1868 = vunpack.c.l.b16 %v1190
  %v1869 = vunpack.c.h.b16 %v1190
  %v1870 = vunpack.c.l.b16 %v1191
  %v1871 = vunpack.c.h.b16 %v1191
  %v1872 = vunpack.c.l.b16 %v1192
  %v1873 = vunpack.c.h.b16 %v1192
  %v1874 = vunpack.c.l.b16 %v1193
  %v1875 = vunpack.c.h.b16 %v1193
  %v1876 = vunpack.c.l.b16 %v1194
  %v1877 = vunpack.c.h.b16 %v1194
  %v1878 = vunpack.c.l.b16 %v1195
  %v1879 = vunpack.c.h.b16 %v1195
  %v1880 = vunpack.c.l.b16 %v1196
  %v1881 = vunpack.c.h.b16 %v1196
  %v1882 = vunpack.c.l.b16 %v1197
  %v1883 = vunpack.c.h.b16 %v1197
  %v1884 = vunpack.c.l.b16 %v1198
  %v1885 = vunpack.c.h.b16 %v1198
  %v1886 = vunpack.c.l.b16 %v1199
  %v1887 = vunpack.c.h.b16 %v1199
  %v1888 = vunpack.c.l.b16 %v1200
  %v1889 = vunpack.c.h.b16 %v1200
  %v1890 = vunpack.c.l.b16 %v1201
  %v1891 = vunpack.c.h.b16 %v1201
  %v1892 = vunpack.c.l.b16 %v1202
  %v1893 = vunpack.c.h.b16 %v1202
  %v1894 = vunpack.c.l.b16 %v1203
  %v1895 = vunpack.c.h.b16 %v1203
  %v1896 = vunpack.c.l.b16 %v1204
  %v1897 = vunpack.c.h.b16 %v1204
  %v1898 = vunpack.c.l.b16 %v1205
  %v1899 = vunpack.c.h.b16 %v1205
  %v1900 = vunpack.c.l.b16 %v1206
  %v1901 = vunpack.c.h.b16 %v1206
  %v1902 = vunpack.c.l.b16 %v1207
  %v1903 = vunpack.c.h.b16 %v1207
  %v1904 = vunpack.c.l.b16 %v1208
  %v1905 = vunpack.c.h.b16 %v1208
  %v1906 = vunpack.c.l.b16 %v1209
  %v1907 = vunpack.c.h.b16 %v1209
  %v1908 = vunpack.c.l.b16 %v1210
  %v1909 = vunpack.c.h.b16 %v1210
  %v1910 = vunpack.c.l.b16 %v1211
  %v1911 = vunpack.c.h.b16 %v1211
  %v1912 = vunpack.c.l.b16 %v1212
  %v1913 = vunpack.c.h.b16 %v1212
  %v1914 = vunpack.c.l.b16 %v1213
  %v1915 = vunpack.c.h.b16 %v1213
  %v1916 = vunpack.c.l.b16 %v1214
  %v1917 = vunpack.c.h.b16 %v1214
  %v1918 = vunpack.c.l.b16 %v1215
  %v1919 = vunpack.c.h.b16 %v1215
  %v1920 = vunpack.c.l.b16 %v1216
  %v1921 = vunpack.c.h.b16 %v1216
  %v1922 = vunpack.c.l.b16 %v1217
  %v1923 = vunpack.c.h.b16 %v1217
  %v1924 = vunpack.c.l.b16 %v1218
  %v1925 = vunpack.c.h.b16 %v1218
  %v1926 = vunpack.c.l.b16 %v1219
  %v1927 = vunpack.c.h.b16 %v1219
  %v1928 = vunpack.c.l.b16 %v1220
  %v1929 = vunpack.c.h.b16 %v1220
  %v1930 = vunpack.c.l.b16 %v1221
  %v1931 = vunpack.c.h.b16 %v1221
  %v1932 = vunpack.c.l.b16 %v1222
  %v1933 = vunpack.c.h.b16 %v1222
  %v1934 = vunpack.c.l.b16 %v1223
  %v1935 = vunpack.c.h.b16 %v1223
  %v1936 = vunpack.c.l.b16 %v1224
  %v1937 = vunpack.c.h.b16 %v1224
  %v1938 = vunpack.c.l.b16 %v1225
  %v1939 = vunpack.c.h.b16 %v1225
  %v1940 = vunpack.c.l.b16 %v1226
  %v1941 = vunpack.c.h.b16 %v1226
  %v1942 = vunpack.c.l.b16 %v1227
  %v1943 = vunpack.c.h.b16 %v1227
  %v1944 = vunpack.c.l.b16 %v1228
  %v1945 = vunpack.c.h.b16 %v1228
  %v1946 = vunpack.c.l.b16 %v1229
  %v1947 = vunpack.c.h.b16 %v1229
  %v1948 = vunpack.c.l.b16 %v1230
  %v1949 = vunpack.c.h.b16 %v1230
  %v1950 = vunpack.c.l.b16 %v1231
  %v1951 = vunpack.c.h.b16 %v1231
  %v1952 = vunpack.c.l.b16 %v1232
  %v1953 = vunpack.c.h.b16 %v1232
  %v1954 = vunpack.c.l.b16 %v1233
  %v1955 = vunpack.c.h.b16 %v1233
  %v1956 = vunpack.c.l.b16 %v1234
  %v1957 = vunpack.c.h.b16 %v1234
  %v1958 = vunpack.c.l.b16 %v1235
  %v1959 = vunpack.c.h.b16 %v1235
  %v1960 = vunpack.c.l.b16 %v1236
  %v1961 = vunpack.c.h.b16 %v1236
  %v1962 = vunpack.c.l.b16 %v1237
  %v1963 = vunpack.c.h.b16 %v1237
  %v1964 = vunpack.c.l.b16 %v1238
  %v1965 = vunpack.c.h.b16 %v1238
  %v1966 = vunpack.c.l.b16 %v1239
  %v1967 = vunpack.c.h.b16 %v1239
  %v1968 = vunpack.c.l.b16 %v1240
  %v1969 = vunpack.c.h.b16 %v1240
  %v1970 = vunpack.c.l.b16 %v1241
  %v1971 = vunpack.c.h.b16 %v1241
  %v1972 = vunpack.c.l.b16 %v1242
  %v1973 = vunpack.c.h.b16 %v1242
  %v1974 = vunpack.c.l.b16 %v1243
  %v1975 = vunpack.c.h.b16 %v1243
  %v1976 = vunpack.c.l.b16 %v1244
  %v1977 = vunpack.c.h.b16 %v1244
  %v1978 = vunpack.c.l.b16 %v1245
  %v1979 = vunpack.c.h.b16 %v1245
  %v1980 = vunpack.c.l.b16 %v1246
  %v1981 = vunpack.c.h.b16 %v1246
  %v1982 = vunpack.c.l.b16 %v1247
  %v1983 = vunpack.c.h.b16 %v1247
  %v1984 = vunpack.c.l.b16 %v1248
  %v1985 = vunpack.c.h.b16 %v1248
  %v1986 = vunpack.c.l.b16 %v1249
  %v1987 = vunpack.c.h.b16 %v1249
  %v1988 = vpack.c.b16 %v1870, %v1868
  %v1989 = vpack.c.b16 %v1871, %v1869
  %v1990 = vpack.c.b16 %v1874, %v1872
  %v1991 = vpack.c.b16 %v1875, %v1873
  %v1992 = vpack.c.b16 %v1878, %v1876
  %v1993 = vpack.c.b16 %v1879, %v1877
  %v1994 = vpack.c.b16 %v1882, %v1880
  %v1995 = vpack.c.b16 %v1883, %v1881
  %v1996 = vpack.c.b16 %v1886, %v1884
  %v1997 = vpack.c.b16 %v1887, %v1885
  %v1998 = vpack.c.b16 %v1890, %v1888
  %v1999 = vpack.c.b16 %v1891, %v1889
  %v2000 = vpack.c.b16 %v1894, %v1892
  %v2001 = vpack.c.b16 %v1895, %v1893
  %v2002 = vpack.c.b16 %v1898, %v1896
  %v2003 = vpack.c.b16 %v1899, %v1897
  %v2004 = vpack.c.b16 %v1902, %v1900
  %v2005 = vpack.c.b16 %v1903, %v1901
  %v2006 = vpack.c.b16 %v1906, %v1904
  %v2007 = vpack.c.b16 %v1907, %v1905
  %v2008 = vpack.c.b16 %v1910, %v1908
  %v2009 = vpack.c.b16 %v1911, %v1909
  %v2010 = vpack.c.b16 %v1914, %v1912
  %v2011 = vpack.c.b16 %v1915, %v1913
  %v2012 = vpack.c.b16 %v1918, %v1916
  %v2013 = vpack.c.b16 %v1919, %v1917
  %v2014 = vpack.c.b16 %v1922, %v1920
  %v2015 = vpack.c.b16 %v1923, %v1921
  %v2016 = vpack.c.b16 %v1926, %v1924
  %v2017 = vpack.c.b16 %v1927, %v1925
  %v2018 = vpack.c.b16 %v1930, %v1928
  %v2019 = vpack.c.b16 %v1931, %v1929
  %v2020 = vpack.c.b16 %v1934, %v1932
  %v2021 = vpack.c.b16 %v1935, %v1933
  %v2022 = vpack.c.b16 %v1938, %v1936
  %v2023 = vpack.c.b16 %v1939, %v1937
  %v2024 = vpack.c.b16 %v1942, %v1940
  %v2025 = vpack.c.b16 %v1943, %v1941
  %v2026 = vpack.c.b16 %v1946, %v1944
  %v2027 = vpack.c.b16 %v1947, %v1945
  %v2028 = vpack.c.b16 %v1950, %v1948
  %v2029 = vpack.c.b16 %v1951, %v1949
  %v2030 = vpack.c.b16 %v1954, %v1952
  %v2031 = vpack.c.b16 %v1955, %v1953
  %v2032 = vpack.c.b16 %v1958, %v1956
  %v2033 = vpack.c.b16 %v1959, %v1957
  %v2034 = vpack.c.b16 %v1962, %v1960
  %v2035 = vpack.c.b16 %v1963, %v1961
  %v2036 = vpack.c.b16 %v1966, %v1964
  %v2037 = vpack.c.b16 %v1967, %v1965
  %v2038 = vpack.c.b16 %v1970, %v1968
  %v2039 = vpack.c.b16 %v1971, %v1969
  %v2040 = vpack.c.b16 %v1974, %v1972
  %v2041 = vpack.c.b16 %v1975, %v1973
  %v2042 = vpack.c.b16 %v1978, %v1976
  %v2043 = vpack.c.b16 %v1979, %v1977
  %v2044 = vpack.c.b16 %v1982, %v1980
  %v2045 = vpack.c.b16 %v1983, %v1981
  %v2046 = vpack.c.b16 %v1986, %v1984
  %v2047 = vpack.c.b16 %v1987, %v1985
  %v2109 = vsel %vm475, %v1297, 0
  %v2112 = vsel %vm475, %v1333, 0
  %v2115 = vsel %vm475, %v1369, 0
  %v2118 = vsel %vm475, %v1405, 0
  %v2121 = vsel %vm475, %v1441, 0
  %v2124 = vsel %vm475, %v1477, 0
  %v2127 = vsel %vm475, %v1513, 0
  %v2130 = vsel %vm475, %v1549, 0
  %v2133 = vsel %vm475, %v1585, 0
  %v2136 = vsel %vm475, %v1621, 0
  %v2139 = vsel %vm475, %v1657, 0
  %v2142 = vsel %vm475, %v1693, 0
  %v2145 = vsel %vm475, %v1729, 0
  %v2148 = vsel %vm475, %v1765, 0
  %2150 = vmatprep.subr.bf16.mxu0 %v1989
  %2151 = vmatpush1.bf16.msra.mxu0 %v1988
  %2152 = vmatprep.subr.bf16.mxu0 %v1991
  %2153 = vmatpush1.bf16.msra.mxu0 %v1990
  %2154 = vmatprep.subr.bf16.mxu0 %v1993
  %2155 = vmatpush1.bf16.msra.mxu0 %v1992
  %2156 = vmatprep.subr.bf16.mxu0 %v1995
  %2157 = vmatpush1.bf16.msra.mxu0 %v1994
  %2158 = vmatprep.subr.bf16.mxu0 %v1997
  %2159 = vmatpush1.bf16.msra.mxu0 %v1996
  %2160 = vmatprep.subr.bf16.mxu0 %v1999
  %2161 = vmatpush1.bf16.msra.mxu0 %v1998
  %2162 = vmatprep.subr.bf16.mxu0 %v2001
  %2163 = vmatpush1.bf16.msra.mxu0 %v2000
  %2164 = vmatprep.subr.bf16.mxu0 %v2003
  %2165 = vmatpush1.bf16.msra.mxu0 %v2002
  %2166 = vmatprep.subr.bf16.mxu0 %v2005
  %2167 = vmatpush1.bf16.msra.mxu0 %v2004
  %2168 = vmatprep.subr.bf16.mxu0 %v2007
  %2169 = vmatpush1.bf16.msra.mxu0 %v2006
  %2170 = vmatprep.subr.bf16.mxu0 %v2009
  %2171 = vmatpush1.bf16.msra.mxu0 %v2008
  %2172 = vmatprep.subr.bf16.mxu0 %v2011
  %2173 = vmatpush1.bf16.msra.mxu0 %v2010
  %2174 = vmatprep.subr.bf16.mxu0 %v2013
  %2175 = vmatpush1.bf16.msra.mxu0 %v2012
  %2176 = vmatprep.subr.bf16.mxu0 %v2015
  %2177 = vmatpush1.bf16.msra.mxu0 %v2014
  %2178 = vmatprep.subr.bf16.mxu0 %v2017
  %2179 = vmatpush1.bf16.msra.mxu0 %v2016
  %2180 = vmatprep.subr.bf16.mxu0 %v2019
  %2181 = vmatpush1.bf16.msra.mxu0 %v2018
  %2182 = vmatprep.mubr.bf16.mxu0 %v1295
  %2183 = vmatmul.mubr.bf16.gmra.mrb[0].mxu0 %v1294
  %v2184 = vpop.f32.mrb[0].mxu0
  %v2185 = vadd.f32 %v1255, %v2184
  %v2186 = vpop.f32.mrb[0].mxu0
  %v2187 = vadd.f32 %v1259, %v2186
  %v2188 = vpop.f32.mrb[0].mxu0
  %v2189 = vadd.f32 %v1255, %v2188
  %v2190 = vpop.f32.mrb[0].mxu0
  %v2191 = vadd.f32 %v1259, %v2190
  %2192 = vmatprep.mubr.bf16.mxu0 %v1331
  %2193 = vmatmul.mubr.bf16.gmra.mrb[0].mxu0 %v1330
  %v2194 = vpop.f32.mrb[0].mxu0
  %v2195 = vadd.f32 %v1255, %v2194
  %v2196 = vpop.f32.mrb[0].mxu0
  %v2197 = vadd.f32 %v1259, %v2196
  %v2198 = vpop.f32.mrb[0].mxu0
  %v2199 = vadd.f32 %v1255, %v2198
  %v2200 = vpop.f32.mrb[0].mxu0
  %v2201 = vadd.f32 %v1259, %v2200
  %2202 = vmatprep.mubr.bf16.mxu0 %v1367
  %2203 = vmatmul.mubr.bf16.gmra.mrb[0].mxu0 %v1366
  %v2204 = vpop.f32.mrb[0].mxu0
  %v2205 = vadd.f32 %v1255, %v2204
  %v2206 = vpop.f32.mrb[0].mxu0
  %v2207 = vadd.f32 %v1259, %v2206
  %v2208 = vpop.f32.mrb[0].mxu0
  %v2209 = vadd.f32 %v1255, %v2208
  %v2210 = vpop.f32.mrb[0].mxu0
  %v2211 = vadd.f32 %v1259, %v2210
  %2212 = vmatprep.mubr.bf16.mxu0 %v1403
  %2213 = vmatmul.mubr.bf16.gmra.mrb[0].mxu0 %v1402
  %v2214 = vpop.f32.mrb[0].mxu0
  %v2215 = vadd.f32 %v1255, %v2214
  %v2216 = vpop.f32.mrb[0].mxu0
  %v2217 = vadd.f32 %v1259, %v2216
  %v2218 = vpop.f32.mrb[0].mxu0
  %v2219 = vadd.f32 %v1255, %v2218
  %v2220 = vpop.f32.mrb[0].mxu0
  %v2221 = vadd.f32 %v1259, %v2220
  %2222 = vmatprep.mubr.bf16.mxu0 %v1439
  %2223 = vmatmul.mubr.bf16.gmra.mrb[0].mxu0 %v1438
  %v2224 = vpop.f32.mrb[0].mxu0
  %v2225 = vadd.f32 %v1255, %v2224
  %v2226 = vpop.f32.mrb[0].mxu0
  %v2227 = vadd.f32 %v1259, %v2226
  %v2228 = vpop.f32.mrb[0].mxu0
  %v2229 = vadd.f32 %v1255, %v2228
  %v2230 = vpop.f32.mrb[0].mxu0
  %v2231 = vadd.f32 %v1259, %v2230
  %2232 = vmatprep.mubr.bf16.mxu0 %v1475
  %2233 = vmatmul.mubr.bf16.gmra.mrb[0].mxu0 %v1474
  %v2234 = vpop.f32.mrb[0].mxu0
  %v2235 = vadd.f32 %v1255, %v2234
  %v2236 = vpop.f32.mrb[0].mxu0
  %v2237 = vadd.f32 %v1259, %v2236
  %v2238 = vpop.f32.mrb[0].mxu0
  %v2239 = vadd.f32 %v1255, %v2238
  %v2240 = vpop.f32.mrb[0].mxu0
  %v2241 = vadd.f32 %v1259, %v2240
  %2242 = vmatprep.mubr.bf16.mxu0 %v1511
  %2243 = vmatmul.mubr.bf16.gmra.mrb[0].mxu0 %v1510
  %v2244 = vpop.f32.mrb[0].mxu0
  %v2245 = vadd.f32 %v1255, %v2244
  %v2246 = vpop.f32.mrb[0].mxu0
  %v2247 = vadd.f32 %v1259, %v2246
  %v2248 = vpop.f32.mrb[0].mxu0
  %v2249 = vadd.f32 %v1255, %v2248
  %v2250 = vpop.f32.mrb[0].mxu0
  %v2251 = vadd.f32 %v1259, %v2250
  %2252 = vmatprep.mubr.bf16.mxu0 %v1547
  %2253 = vmatmul.mubr.bf16.gmra.mrb[0].mxu0 %v1546
  %v2254 = vpop.f32.mrb[0].mxu0
  %v2255 = vadd.f32 %v1255, %v2254
  %v2256 = vpop.f32.mrb[0].mxu0
  %v2257 = vadd.f32 %v1259, %v2256
  %v2258 = vpop.f32.mrb[0].mxu0
  %v2259 = vadd.f32 %v1255, %v2258
  %v2260 = vpop.f32.mrb[0].mxu0
  %v2261 = vadd.f32 %v1259, %v2260
  %2262 = vmatprep.mubr.bf16.mxu0 %v1583
  %2263 = vmatmul.mubr.bf16.gmra.mrb[0].mxu0 %v1582
  %v2264 = vpop.f32.mrb[0].mxu0
  %v2265 = vadd.f32 %v1255, %v2264
  %v2266 = vpop.f32.mrb[0].mxu0
  %v2267 = vadd.f32 %v1259, %v2266
  %v2268 = vpop.f32.mrb[0].mxu0
  %v2269 = vadd.f32 %v1255, %v2268
  %v2270 = vpop.f32.mrb[0].mxu0
  %v2271 = vadd.f32 %v1259, %v2270
  %2272 = vmatprep.mubr.bf16.mxu0 %v1619
  %2273 = vmatmul.mubr.bf16.gmra.mrb[0].mxu0 %v1618
  %v2274 = vpop.f32.mrb[0].mxu0
  %v2275 = vadd.f32 %v1255, %v2274
  %v2276 = vpop.f32.mrb[0].mxu0
  %v2277 = vadd.f32 %v1259, %v2276
  %v2278 = vpop.f32.mrb[0].mxu0
  %v2279 = vadd.f32 %v1255, %v2278
  %v2280 = vpop.f32.mrb[0].mxu0
  %v2281 = vadd.f32 %v1259, %v2280
  %2282 = vmatprep.mubr.bf16.mxu0 %v1655
  %2283 = vmatmul.mubr.bf16.gmra.mrb[0].mxu0 %v1654
  %v2284 = vpop.f32.mrb[0].mxu0
  %v2285 = vadd.f32 %v1255, %v2284
  %v2286 = vpop.f32.mrb[0].mxu0
  %v2287 = vadd.f32 %v1259, %v2286
  %v2288 = vpop.f32.mrb[0].mxu0
  %v2289 = vadd.f32 %v1255, %v2288
  %v2290 = vpop.f32.mrb[0].mxu0
  %v2291 = vadd.f32 %v1259, %v2290
  %2292 = vmatprep.mubr.bf16.mxu0 %v1691
  %2293 = vmatmul.mubr.bf16.gmra.mrb[0].mxu0 %v1690
  %v2294 = vpop.f32.mrb[0].mxu0
  %v2295 = vadd.f32 %v1255, %v2294
  %v2296 = vpop.f32.mrb[0].mxu0
  %v2297 = vadd.f32 %v1259, %v2296
  %v2298 = vpop.f32.mrb[0].mxu0
  %v2299 = vadd.f32 %v1255, %v2298
  %v2300 = vpop.f32.mrb[0].mxu0
  %v2301 = vadd.f32 %v1259, %v2300
  %2302 = vmatprep.mubr.bf16.mxu0 %v1727
  %2303 = vmatmul.mubr.bf16.gmra.mrb[0].mxu0 %v1726
  %v2304 = vpop.f32.mrb[0].mxu0
  %v2305 = vadd.f32 %v1255, %v2304
  %v2306 = vpop.f32.mrb[0].mxu0
  %v2307 = vadd.f32 %v1259, %v2306
  %v2308 = vpop.f32.mrb[0].mxu0
  %v2309 = vadd.f32 %v1255, %v2308
  %v2310 = vpop.f32.mrb[0].mxu0
  %v2311 = vadd.f32 %v1259, %v2310
  %2312 = vmatprep.mubr.bf16.mxu0 %v1763
  %2313 = vmatmul.mubr.bf16.gmra.mrb[0].mxu0 %v1762
  %v2314 = vpop.f32.mrb[0].mxu0
  %v2315 = vadd.f32 %v1255, %v2314
  %v2316 = vpop.f32.mrb[0].mxu0
  %v2317 = vadd.f32 %v1259, %v2316
  %v2318 = vpop.f32.mrb[0].mxu0
  %v2319 = vadd.f32 %v1255, %v2318
  %v2320 = vpop.f32.mrb[0].mxu0
  %v2321 = vadd.f32 %v1259, %v2320
  %2322 = vdwg.mxu0
  %2323 = vmatprep.subr.bf16.mxu0 %v2021
  %2324 = vmatpush1.bf16.msra.mxu0 %v2020
  %2325 = vmatprep.subr.bf16.mxu0 %v2023
  %2326 = vmatpush1.bf16.msra.mxu0 %v2022
  %2327 = vmatprep.subr.bf16.mxu0 %v2025
  %2328 = vmatpush1.bf16.msra.mxu0 %v2024
  %2329 = vmatprep.subr.bf16.mxu0 %v2027
  %2330 = vmatpush1.bf16.msra.mxu0 %v2026
  %2331 = vmatprep.subr.bf16.mxu0 %v2029
  %2332 = vmatpush1.bf16.msra.mxu0 %v2028
  %2333 = vmatprep.subr.bf16.mxu0 %v2031
  %2334 = vmatpush1.bf16.msra.mxu0 %v2030
  %2335 = vmatprep.subr.bf16.mxu0 %v2033
  %2336 = vmatpush1.bf16.msra.mxu0 %v2032
  %2337 = vmatprep.subr.bf16.mxu0 %v2035
  %2338 = vmatpush1.bf16.msra.mxu0 %v2034
  %2339 = vmatprep.subr.bf16.mxu0 %v2037
  %2340 = vmatpush1.bf16.msra.mxu0 %v2036
  %2341 = vmatprep.subr.bf16.mxu0 %v2039
  %2342 = vmatpush1.bf16.msra.mxu0 %v2038
  %2343 = vmatprep.subr.bf16.mxu0 %v2041
  %2344 = vmatpush1.bf16.msra.mxu0 %v2040
  %2345 = vmatprep.subr.bf16.mxu0 %v2043
  %2346 = vmatpush1.bf16.msra.mxu0 %v2042
  %2347 = vmatprep.subr.bf16.mxu0 %v2045
  %2348 = vmatpush1.bf16.msra.mxu0 %v2044
  %2349 = vmatprep.subr.bf16.mxu0 %v2047
  %2350 = vmatpush1.bf16.msra.mxu0 %v2046
  %2351 = vmatprep.subr.bf16.mxu0 0
  %2352 = vmatpush1.bf16.msra.mxu0 0
  %2353 = vmatprep.subr.bf16.mxu0 0
  %2354 = vmatpush1.bf16.msra.mxu0 0
  %2355 = vmatprep.mubr.bf16.mxu0 %v2109
  %2356 = vmatmul.mubr.bf16.gmra.mrb[0].mxu0 %v1296
  %v2357 = vpop.f32.mrb[0].mxu0
  %v2358 = vadd.f32 %v2185, %v2357
  %v2359 = vpop.f32.mrb[0].mxu0
  %v2360 = vadd.f32 %v2187, %v2359
  %v2361 = vpop.f32.mrb[0].mxu0
  %v2362 = vadd.f32 %v2189, %v2361
  %v2363 = vpop.f32.mrb[0].mxu0
  %v2364 = vadd.f32 %v2191, %v2363
  %2365 = vmatprep.mubr.bf16.mxu0 %v2112
  %2366 = vmatmul.mubr.bf16.gmra.mrb[0].mxu0 %v1332
  %v2367 = vpop.f32.mrb[0].mxu0
  %v2368 = vadd.f32 %v2195, %v2367
  %v2369 = vpop.f32.mrb[0].mxu0
  %v2370 = vadd.f32 %v2197, %v2369
  %v2371 = vpop.f32.mrb[0].mxu0
  %v2372 = vadd.f32 %v2199, %v2371
  %v2373 = vpop.f32.mrb[0].mxu0
  %v2374 = vadd.f32 %v2201, %v2373
  %2375 = vmatprep.mubr.bf16.mxu0 %v2115
  %2376 = vmatmul.mubr.bf16.gmra.mrb[0].mxu0 %v1368
  %v2377 = vpop.f32.mrb[0].mxu0
  %v2378 = vadd.f32 %v2205, %v2377
  %v2379 = vpop.f32.mrb[0].mxu0
  %v2380 = vadd.f32 %v2207, %v2379
  %v2381 = vpop.f32.mrb[0].mxu0
  %v2382 = vadd.f32 %v2209, %v2381
  %v2383 = vpop.f32.mrb[0].mxu0
  %v2384 = vadd.f32 %v2211, %v2383
  %2385 = vmatprep.mubr.bf16.mxu0 %v2118
  %2386 = vmatmul.mubr.bf16.gmra.mrb[0].mxu0 %v1404
  %v2387 = vpop.f32.mrb[0].mxu0
  %v2388 = vadd.f32 %v2215, %v2387
  %v2389 = vpop.f32.mrb[0].mxu0
  %v2390 = vadd.f32 %v2217, %v2389
  %v2391 = vpop.f32.mrb[0].mxu0
  %v2392 = vadd.f32 %v2219, %v2391
  %v2393 = vpop.f32.mrb[0].mxu0
  %v2394 = vadd.f32 %v2221, %v2393
  %2395 = vmatprep.mubr.bf16.mxu0 %v2121
  %2396 = vmatmul.mubr.bf16.gmra.mrb[0].mxu0 %v1440
  %v2397 = vpop.f32.mrb[0].mxu0
  %v2398 = vadd.f32 %v2225, %v2397
  %v2399 = vpop.f32.mrb[0].mxu0
  %v2400 = vadd.f32 %v2227, %v2399
  %v2401 = vpop.f32.mrb[0].mxu0
  %v2402 = vadd.f32 %v2229, %v2401
  %v2403 = vpop.f32.mrb[0].mxu0
  %v2404 = vadd.f32 %v2231, %v2403
  %2405 = vmatprep.mubr.bf16.mxu0 %v2124
  %2406 = vmatmul.mubr.bf16.gmra.mrb[0].mxu0 %v1476
  %v2407 = vpop.f32.mrb[0].mxu0
  %v2408 = vadd.f32 %v2235, %v2407
  %v2409 = vpop.f32.mrb[0].mxu0
  %v2410 = vadd.f32 %v2237, %v2409
  %v2411 = vpop.f32.mrb[0].mxu0
  %v2412 = vadd.f32 %v2239, %v2411
  %v2413 = vpop.f32.mrb[0].mxu0
  %v2414 = vadd.f32 %v2241, %v2413
  %2415 = vmatprep.mubr.bf16.mxu0 %v2127
  %2416 = vmatmul.mubr.bf16.gmra.mrb[0].mxu0 %v1512
  %v2417 = vpop.f32.mrb[0].mxu0
  %v2418 = vadd.f32 %v2245, %v2417
  %v2419 = vpop.f32.mrb[0].mxu0
  %v2420 = vadd.f32 %v2247, %v2419
  %v2421 = vpop.f32.mrb[0].mxu0
  %v2422 = vadd.f32 %v2249, %v2421
  %v2423 = vpop.f32.mrb[0].mxu0
  %v2424 = vadd.f32 %v2251, %v2423
  %2425 = vmatprep.mubr.bf16.mxu0 %v2130
  %2426 = vmatmul.mubr.bf16.gmra.mrb[0].mxu0 %v1548
  %v2427 = vpop.f32.mrb[0].mxu0
  %v2428 = vadd.f32 %v2255, %v2427
  %v2429 = vpop.f32.mrb[0].mxu0
  %v2430 = vadd.f32 %v2257, %v2429
  %v2431 = vpop.f32.mrb[0].mxu0
  %v2432 = vadd.f32 %v2259, %v2431
  %v2433 = vpop.f32.mrb[0].mxu0
  %v2434 = vadd.f32 %v2261, %v2433
  %2435 = vmatprep.mubr.bf16.mxu0 %v2133
  %2436 = vmatmul.mubr.bf16.gmra.mrb[0].mxu0 %v1584
  %v2437 = vpop.f32.mrb[0].mxu0
  %v2438 = vadd.f32 %v2265, %v2437
  %v2439 = vpop.f32.mrb[0].mxu0
  %v2440 = vadd.f32 %v2267, %v2439
  %v2441 = vpop.f32.mrb[0].mxu0
  %v2442 = vadd.f32 %v2269, %v2441
  %v2443 = vpop.f32.mrb[0].mxu0
  %v2444 = vadd.f32 %v2271, %v2443
  %2445 = vmatprep.mubr.bf16.mxu0 %v2136
  %2446 = vmatmul.mubr.bf16.gmra.mrb[0].mxu0 %v1620
  %v2447 = vpop.f32.mrb[0].mxu0
  %v2448 = vadd.f32 %v2275, %v2447
  %v2449 = vpop.f32.mrb[0].mxu0
  %v2450 = vadd.f32 %v2277, %v2449
  %v2451 = vpop.f32.mrb[0].mxu0
  %v2452 = vadd.f32 %v2279, %v2451
  %v2453 = vpop.f32.mrb[0].mxu0
  %v2454 = vadd.f32 %v2281, %v2453
  %2455 = vmatprep.mubr.bf16.mxu0 %v2139
  %2456 = vmatmul.mubr.bf16.gmra.mrb[0].mxu0 %v1656
  %v2457 = vpop.f32.mrb[0].mxu0
  %v2458 = vadd.f32 %v2285, %v2457
  %v2459 = vpop.f32.mrb[0].mxu0
  %v2460 = vadd.f32 %v2287, %v2459
  %v2461 = vpop.f32.mrb[0].mxu0
  %v2462 = vadd.f32 %v2289, %v2461
  %v2463 = vpop.f32.mrb[0].mxu0
  %v2464 = vadd.f32 %v2291, %v2463
  %2465 = vmatprep.mubr.bf16.mxu0 %v2142
  %2466 = vmatmul.mubr.bf16.gmra.mrb[0].mxu0 %v1692
  %v2467 = vpop.f32.mrb[0].mxu0
  %v2468 = vadd.f32 %v2295, %v2467
  %v2469 = vpop.f32.mrb[0].mxu0
  %v2470 = vadd.f32 %v2297, %v2469
  %v2471 = vpop.f32.mrb[0].mxu0
  %v2472 = vadd.f32 %v2299, %v2471
  %v2473 = vpop.f32.mrb[0].mxu0
  %v2474 = vadd.f32 %v2301, %v2473
  %2475 = vmatprep.mubr.bf16.mxu0 %v2145
  %2476 = vmatmul.mubr.bf16.gmra.mrb[0].mxu0 %v1728
  %v2477 = vpop.f32.mrb[0].mxu0
  %v2478 = vadd.f32 %v2305, %v2477
  %v2479 = vpop.f32.mrb[0].mxu0
  %v2480 = vadd.f32 %v2307, %v2479
  %v2481 = vpop.f32.mrb[0].mxu0
  %v2482 = vadd.f32 %v2309, %v2481
  %v2483 = vpop.f32.mrb[0].mxu0
  %v2484 = vadd.f32 %v2311, %v2483
  %2485 = vmatprep.mubr.bf16.mxu0 %v2148
  %2486 = vmatmul.mubr.bf16.gmra.mrb[0].mxu0 %v1764
  %v2487 = vpop.f32.mrb[0].mxu0
  %v2488 = vadd.f32 %v2315, %v2487
  %v2489 = vpop.f32.mrb[0].mxu0
  %v2490 = vadd.f32 %v2317, %v2489
  %v2491 = vpop.f32.mrb[0].mxu0
  %v2492 = vadd.f32 %v2319, %v2491
  %v2493 = vpop.f32.mrb[0].mxu0
  %v2494 = vadd.f32 %v2321, %v2493
  %2495 = vdwg.mxu0
  %v2496 = vmax.f32 %v2358, 0.0
  %v2497 = vmax.f32 %v2360, 0.0
  %v2498 = vmax.f32 %v2362, 0.0
  %v2499 = vmax.f32 %v2364, 0.0
  %v2500 = vmax.f32 %v2368, 0.0
  %v2501 = vmax.f32 %v2370, 0.0
  %v2502 = vmax.f32 %v2372, 0.0
  %v2503 = vmax.f32 %v2374, 0.0
  %v2504 = vmax.f32 %v2378, 0.0
  %v2505 = vmax.f32 %v2380, 0.0
  %v2506 = vmax.f32 %v2382, 0.0
  %v2507 = vmax.f32 %v2384, 0.0
  %v2508 = vmax.f32 %v2388, 0.0
  %v2509 = vmax.f32 %v2390, 0.0
  %v2510 = vmax.f32 %v2392, 0.0
  %v2511 = vmax.f32 %v2394, 0.0
  %v2512 = vmax.f32 %v2398, 0.0
  %v2513 = vmax.f32 %v2400, 0.0
  %v2514 = vmax.f32 %v2402, 0.0
  %v2515 = vmax.f32 %v2404, 0.0
  %v2516 = vmax.f32 %v2408, 0.0
  %v2517 = vmax.f32 %v2410, 0.0
  %v2518 = vmax.f32 %v2412, 0.0
  %v2519 = vmax.f32 %v2414, 0.0
  %v2520 = vmax.f32 %v2418, 0.0
  %v2521 = vmax.f32 %v2420, 0.0
  %v2522 = vmax.f32 %v2422, 0.0
  %v2523 = vmax.f32 %v2424, 0.0
  %v2524 = vmax.f32 %v2428, 0.0
  %v2525 = vmax.f32 %v2430, 0.0
  %v2526 = vmax.f32 %v2432, 0.0
  %v2527 = vmax.f32 %v2434, 0.0
  %v2528 = vmax.f32 %v2438, 0.0
  %v2529 = vmax.f32 %v2440, 0.0
  %v2530 = vmax.f32 %v2442, 0.0
  %v2531 = vmax.f32 %v2444, 0.0
  %v2532 = vmax.f32 %v2448, 0.0
  %v2533 = vmax.f32 %v2450, 0.0
  %v2534 = vmax.f32 %v2452, 0.0
  %v2535 = vmax.f32 %v2454, 0.0
  %v2536 = vmax.f32 %v2458, 0.0
  %v2537 = vmax.f32 %v2460, 0.0
  %v2538 = vmax.f32 %v2462, 0.0
  %v2539 = vmax.f32 %v2464, 0.0
  %v2540 = vmax.f32 %v2468, 0.0
  %v2541 = vmax.f32 %v2470, 0.0
  %v2542 = vmax.f32 %v2472, 0.0
  %v2543 = vmax.f32 %v2474, 0.0
  %v2544 = vmax.f32 %v2478, 0.0
  %v2545 = vmax.f32 %v2480, 0.0
  %v2546 = vmax.f32 %v2482, 0.0
  %v2547 = vmax.f32 %v2484, 0.0
  %v2548 = vmax.f32 %v2488, 0.0
  %v2549 = vmax.f32 %v2490, 0.0
  %v2550 = vmax.f32 %v2492, 0.0
  %v2551 = vmax.f32 %v2494, 0.0
  %v2608 = vcombine.low %v2496, %v2497
  %v2609 = vcombine.high %v2496, %v2497
  %v2610 = vcombine.low %v2498, %v2499
  %v2611 = vcombine.high %v2498, %v2499
  %v2612 = vcombine.low %v2500, %v2501
  %v2613 = vcombine.high %v2500, %v2501
  %v2614 = vcombine.low %v2502, %v2503
  %v2615 = vcombine.high %v2502, %v2503
  %v2616 = vcombine.low %v2504, %v2505
  %v2617 = vcombine.high %v2504, %v2505
  %v2618 = vcombine.low %v2506, %v2507
  %v2619 = vcombine.high %v2506, %v2507
  %v2620 = vcombine.low %v2508, %v2509
  %v2621 = vcombine.high %v2508, %v2509
  %v2622 = vcombine.low %v2510, %v2511
  %v2623 = vcombine.high %v2510, %v2511
  %v2624 = vcombine.low %v2512, %v2513
  %v2625 = vcombine.high %v2512, %v2513
  %v2626 = vcombine.low %v2514, %v2515
  %v2627 = vcombine.high %v2514, %v2515
  %v2628 = vcombine.low %v2516, %v2517
  %v2629 = vcombine.high %v2516, %v2517
  %v2630 = vcombine.low %v2518, %v2519
  %v2631 = vcombine.high %v2518, %v2519
  %v2632 = vcombine.low %v2520, %v2521
  %v2633 = vcombine.high %v2520, %v2521
  %v2634 = vcombine.low %v2522, %v2523
  %v2635 = vcombine.high %v2522, %v2523
  %v2636 = vcombine.low %v2524, %v2525
  %v2637 = vcombine.high %v2524, %v2525
  %v2638 = vcombine.low %v2526, %v2527
  %v2639 = vcombine.high %v2526, %v2527
  %v2640 = vcombine.low %v2528, %v2529
  %v2641 = vcombine.high %v2528, %v2529
  %v2642 = vcombine.low %v2530, %v2531
  %v2643 = vcombine.high %v2530, %v2531
  %v2644 = vcombine.low %v2532, %v2533
  %v2645 = vcombine.high %v2532, %v2533
  %v2646 = vcombine.low %v2534, %v2535
  %v2647 = vcombine.high %v2534, %v2535
  %v2648 = vcombine.low %v2536, %v2537
  %v2649 = vcombine.high %v2536, %v2537
  %v2650 = vcombine.low %v2538, %v2539
  %v2651 = vcombine.high %v2538, %v2539
  %v2652 = vcombine.low %v2540, %v2541
  %v2653 = vcombine.high %v2540, %v2541
  %v2654 = vcombine.low %v2542, %v2543
  %v2655 = vcombine.high %v2542, %v2543
  %v2656 = vcombine.low %v2544, %v2545
  %v2657 = vcombine.high %v2544, %v2545
  %v2658 = vcombine.low %v2546, %v2547
  %v2659 = vcombine.high %v2546, %v2547
  %v2660 = vcombine.low %v2548, %v2549
  %v2661 = vcombine.high %v2548, %v2549
  %v2662 = vcombine.low %v2550, %v2551
  %v2663 = vcombine.high %v2550, %v2551
  %2720 = vrot.lane.b32.xlu0 %v2608, 122
  %v2721 = vpop.permute.xlu0 %2720
  %2722 = vrot.lane.b32.xlu0 %v2609, 122
  %v2723 = vpop.permute.xlu0 %2722
  %2724 = vrot.lane.b32.xlu0 %v2610, 122
  %v2725 = vpop.permute.xlu0 %2724
  %2726 = vrot.lane.b32.xlu0 %v2611, 122
  %v2727 = vpop.permute.xlu0 %2726
  %2728 = vrot.lane.b32.xlu0 %v2612, 122
  %v2729 = vpop.permute.xlu0 %2728
  %2730 = vrot.lane.b32.xlu0 %v2613, 122
  %v2731 = vpop.permute.xlu0 %2730
  %2732 = vrot.lane.b32.xlu0 %v2614, 122
  %v2733 = vpop.permute.xlu0 %2732
  %2734 = vrot.lane.b32.xlu0 %v2615, 122
  %v2735 = vpop.permute.xlu0 %2734
  %2736 = vrot.lane.b32.xlu0 %v2616, 122
  %v2737 = vpop.permute.xlu0 %2736
  %2738 = vrot.lane.b32.xlu0 %v2617, 122
  %v2739 = vpop.permute.xlu0 %2738
  %2740 = vrot.lane.b32.xlu0 %v2618, 122
  %v2741 = vpop.permute.xlu0 %2740
  %2742 = vrot.lane.b32.xlu0 %v2619, 122
  %v2743 = vpop.permute.xlu0 %2742
  %2744 = vrot.lane.b32.xlu0 %v2620, 122
  %v2745 = vpop.permute.xlu0 %2744
  %2746 = vrot.lane.b32.xlu0 %v2621, 122
  %v2747 = vpop.permute.xlu0 %2746
  %2748 = vrot.lane.b32.xlu0 %v2622, 122
  %v2749 = vpop.permute.xlu0 %2748
  %2750 = vrot.lane.b32.xlu0 %v2623, 122
  %v2751 = vpop.permute.xlu0 %2750
  %2752 = vrot.lane.b32.xlu0 %v2624, 122
  %v2753 = vpop.permute.xlu0 %2752
  %2754 = vrot.lane.b32.xlu0 %v2625, 122
  %v2755 = vpop.permute.xlu0 %2754
  %2756 = vrot.lane.b32.xlu0 %v2626, 122
  %v2757 = vpop.permute.xlu0 %2756
  %2758 = vrot.lane.b32.xlu0 %v2627, 122
  %v2759 = vpop.permute.xlu0 %2758
  %2760 = vrot.lane.b32.xlu0 %v2628, 122
  %v2761 = vpop.permute.xlu0 %2760
  %2762 = vrot.lane.b32.xlu0 %v2629, 122
  %v2763 = vpop.permute.xlu0 %2762
  %2764 = vrot.lane.b32.xlu0 %v2630, 122
  %v2765 = vpop.permute.xlu0 %2764
  %2766 = vrot.lane.b32.xlu0 %v2631, 122
  %v2767 = vpop.permute.xlu0 %2766
  %2768 = vrot.lane.b32.xlu0 %v2632, 122
  %v2769 = vpop.permute.xlu0 %2768
  %2770 = vrot.lane.b32.xlu0 %v2633, 122
  %v2771 = vpop.permute.xlu0 %2770
  %2772 = vrot.lane.b32.xlu0 %v2634, 122
  %v2773 = vpop.permute.xlu0 %2772
  %2774 = vrot.lane.b32.xlu0 %v2635, 122
  %v2775 = vpop.permute.xlu0 %2774
  %2776 = vrot.lane.b32.xlu0 %v2636, 122
  %v2777 = vpop.permute.xlu0 %2776
  %2778 = vrot.lane.b32.xlu0 %v2637, 122
  %v2779 = vpop.permute.xlu0 %2778
  %2780 = vrot.lane.b32.xlu0 %v2638, 122
  %v2781 = vpop.permute.xlu0 %2780
  %2782 = vrot.lane.b32.xlu0 %v2639, 122
  %v2783 = vpop.permute.xlu0 %2782
  %2784 = vrot.lane.b32.xlu0 %v2640, 122
  %v2785 = vpop.permute.xlu0 %2784
  %2786 = vrot.lane.b32.xlu0 %v2641, 122
  %v2787 = vpop.permute.xlu0 %2786
  %2788 = vrot.lane.b32.xlu0 %v2642, 122
  %v2789 = vpop.permute.xlu0 %2788
  %2790 = vrot.lane.b32.xlu0 %v2643, 122
  %v2791 = vpop.permute.xlu0 %2790
  %2792 = vrot.lane.b32.xlu0 %v2644, 122
  %v2793 = vpop.permute.xlu0 %2792
  %2794 = vrot.lane.b32.xlu0 %v2645, 122
  %v2795 = vpop.permute.xlu0 %2794
  %2796 = vrot.lane.b32.xlu0 %v2646, 122
  %v2797 = vpop.permute.xlu0 %2796
  %2798 = vrot.lane.b32.xlu0 %v2647, 122
  %v2799 = vpop.permute.xlu0 %2798
  %2800 = vrot.lane.b32.xlu0 %v2648, 122
  %v2801 = vpop.permute.xlu0 %2800
  %2802 = vrot.lane.b32.xlu0 %v2649, 122
  %v2803 = vpop.permute.xlu0 %2802
  %2804 = vrot.lane.b32.xlu0 %v2650, 122
  %v2805 = vpop.permute.xlu0 %2804
  %2806 = vrot.lane.b32.xlu0 %v2651, 122
  %v2807 = vpop.permute.xlu0 %2806
  %2808 = vrot.lane.b32.xlu0 %v2652, 122
  %v2809 = vpop.permute.xlu0 %2808
  %2810 = vrot.lane.b32.xlu0 %v2653, 122
  %v2811 = vpop.permute.xlu0 %2810
  %2812 = vrot.lane.b32.xlu0 %v2654, 122
  %v2813 = vpop.permute.xlu0 %2812
  %2814 = vrot.lane.b32.xlu0 %v2655, 122
  %v2815 = vpop.permute.xlu0 %2814
  %2816 = vrot.lane.b32.xlu0 %v2656, 122
  %v2817 = vpop.permute.xlu0 %2816
  %2818 = vrot.lane.b32.xlu0 %v2657, 122
  %v2819 = vpop.permute.xlu0 %2818
  %2820 = vrot.lane.b32.xlu0 %v2658, 122
  %v2821 = vpop.permute.xlu0 %2820
  %2822 = vrot.lane.b32.xlu0 %v2659, 122
  %v2823 = vpop.permute.xlu0 %2822
  %2824 = vrot.lane.b32.xlu0 %v2660, 122
  %v2825 = vpop.permute.xlu0 %2824
  %2826 = vrot.lane.b32.xlu0 %v2661, 122
  %v2827 = vpop.permute.xlu0 %2826
  %2828 = vrot.lane.b32.xlu0 %v2662, 122
  %v2829 = vpop.permute.xlu0 %2828
  %2830 = vrot.lane.b32.xlu0 %v2663, 122
  %v2831 = vpop.permute.xlu0 %2830
  %v2888 = vmax.f32 %v2608, %v2721
  %v2889 = vmax.f32 %v2609, %v2723
  %v2890 = vmax.f32 %v2610, %v2725
  %v2891 = vmax.f32 %v2611, %v2727
  %v2892 = vmax.f32 %v2612, %v2729
  %v2893 = vmax.f32 %v2613, %v2731
  %v2894 = vmax.f32 %v2614, %v2733
  %v2895 = vmax.f32 %v2615, %v2735
  %v2896 = vmax.f32 %v2616, %v2737
  %v2897 = vmax.f32 %v2617, %v2739
  %v2898 = vmax.f32 %v2618, %v2741
  %v2899 = vmax.f32 %v2619, %v2743
  %v2900 = vmax.f32 %v2620, %v2745
  %v2901 = vmax.f32 %v2621, %v2747
  %v2902 = vmax.f32 %v2622, %v2749
  %v2903 = vmax.f32 %v2623, %v2751
  %v2904 = vmax.f32 %v2624, %v2753
  %v2905 = vmax.f32 %v2625, %v2755
  %v2906 = vmax.f32 %v2626, %v2757
  %v2907 = vmax.f32 %v2627, %v2759
  %v2908 = vmax.f32 %v2628, %v2761
  %v2909 = vmax.f32 %v2629, %v2763
  %v2910 = vmax.f32 %v2630, %v2765
  %v2911 = vmax.f32 %v2631, %v2767
  %v2912 = vmax.f32 %v2632, %v2769
  %v2913 = vmax.f32 %v2633, %v2771
  %v2914 = vmax.f32 %v2634, %v2773
  %v2915 = vmax.f32 %v2635, %v2775
  %v2916 = vmax.f32 %v2636, %v2777
  %v2917 = vmax.f32 %v2637, %v2779
  %v2918 = vmax.f32 %v2638, %v2781
  %v2919 = vmax.f32 %v2639, %v2783
  %v2920 = vmax.f32 %v2640, %v2785
  %v2921 = vmax.f32 %v2641, %v2787
  %v2922 = vmax.f32 %v2642, %v2789
  %v2923 = vmax.f32 %v2643, %v2791
  %v2924 = vmax.f32 %v2644, %v2793
  %v2925 = vmax.f32 %v2645, %v2795
  %v2926 = vmax.f32 %v2646, %v2797
  %v2927 = vmax.f32 %v2647, %v2799
  %v2928 = vmax.f32 %v2648, %v2801
  %v2929 = vmax.f32 %v2649, %v2803
  %v2930 = vmax.f32 %v2650, %v2805
  %v2931 = vmax.f32 %v2651, %v2807
  %v2932 = vmax.f32 %v2652, %v2809
  %v2933 = vmax.f32 %v2653, %v2811
  %v2934 = vmax.f32 %v2654, %v2813
  %v2935 = vmax.f32 %v2655, %v2815
  %v2936 = vmax.f32 %v2656, %v2817
  %v2937 = vmax.f32 %v2657, %v2819
  %v2938 = vmax.f32 %v2658, %v2821
  %v2939 = vmax.f32 %v2659, %v2823
  %v2940 = vmax.f32 %v2660, %v2825
  %v2941 = vmax.f32 %v2661, %v2827
  %v2942 = vmax.f32 %v2662, %v2829
  %v2943 = vmax.f32 %v2663, %v2831
  %v2944 = vrot.slane %v2721, 4
  %v2945 = vrot.slane %v2723, 4
  %v2946 = vrot.slane %v2725, 4
  %v2947 = vrot.slane %v2727, 4
  %v2948 = vrot.slane %v2729, 4
  %v2949 = vrot.slane %v2731, 4
  %v2950 = vrot.slane %v2733, 4
  %v2951 = vrot.slane %v2735, 4
  %v2952 = vrot.slane %v2737, 4
  %v2953 = vrot.slane %v2739, 4
  %v2954 = vrot.slane %v2741, 4
  %v2955 = vrot.slane %v2743, 4
  %v2956 = vrot.slane %v2745, 4
  %v2957 = vrot.slane %v2747, 4
  %v2958 = vrot.slane %v2749, 4
  %v2959 = vrot.slane %v2751, 4
  %v2960 = vrot.slane %v2753, 4
  %v2961 = vrot.slane %v2755, 4
  %v2962 = vrot.slane %v2757, 4
  %v2963 = vrot.slane %v2759, 4
  %v2964 = vrot.slane %v2761, 4
  %v2965 = vrot.slane %v2763, 4
  %v2966 = vrot.slane %v2765, 4
  %v2967 = vrot.slane %v2767, 4
  %v2968 = vrot.slane %v2769, 4
  %v2969 = vrot.slane %v2771, 4
  %v2970 = vrot.slane %v2773, 4
  %v2971 = vrot.slane %v2775, 4
  %v2972 = vrot.slane %v2777, 4
  %v2973 = vrot.slane %v2779, 4
  %v2974 = vrot.slane %v2781, 4
  %v2975 = vrot.slane %v2783, 4
  %v2976 = vrot.slane %v2785, 4
  %v2977 = vrot.slane %v2787, 4
  %v2978 = vrot.slane %v2789, 4
  %v2979 = vrot.slane %v2791, 4
  %v2980 = vrot.slane %v2793, 4
  %v2981 = vrot.slane %v2795, 4
  %v2982 = vrot.slane %v2797, 4
  %v2983 = vrot.slane %v2799, 4
  %v2984 = vrot.slane %v2801, 4
  %v2985 = vrot.slane %v2803, 4
  %v2986 = vrot.slane %v2805, 4
  %v2987 = vrot.slane %v2807, 4
  %v2988 = vrot.slane %v2809, 4
  %v2989 = vrot.slane %v2811, 4
  %v2990 = vrot.slane %v2813, 4
  %v2991 = vrot.slane %v2815, 4
  %v2992 = vrot.slane %v2817, 4
  %v2993 = vrot.slane %v2819, 4
  %v2994 = vrot.slane %v2821, 4
  %v2995 = vrot.slane %v2823, 4
  %v2996 = vrot.slane %v2825, 4
  %v2997 = vrot.slane %v2827, 4
  %v2998 = vrot.slane %v2829, 4
  %v2999 = vrot.slane %v2831, 4
  %vm3000 = vcmask 998400
  %v3001 = vsel %vm3000, %v2721, %v2944
  %v3002 = vsel %vm3000, %v2723, %v2945
  %v3003 = vsel %vm3000, %v2725, %v2946
  %v3004 = vsel %vm3000, %v2727, %v2947
  %v3005 = vsel %vm3000, %v2729, %v2948
  %v3006 = vsel %vm3000, %v2731, %v2949
  %v3007 = vsel %vm3000, %v2733, %v2950
  %v3008 = vsel %vm3000, %v2735, %v2951
  %v3009 = vsel %vm3000, %v2737, %v2952
  %v3010 = vsel %vm3000, %v2739, %v2953
  %v3011 = vsel %vm3000, %v2741, %v2954
  %v3012 = vsel %vm3000, %v2743, %v2955
  %v3013 = vsel %vm3000, %v2745, %v2956
  %v3014 = vsel %vm3000, %v2747, %v2957
  %v3015 = vsel %vm3000, %v2749, %v2958
  %v3016 = vsel %vm3000, %v2751, %v2959
  %v3017 = vsel %vm3000, %v2753, %v2960
  %v3018 = vsel %vm3000, %v2755, %v2961
  %v3019 = vsel %vm3000, %v2757, %v2962
  %v3020 = vsel %vm3000, %v2759, %v2963
  %v3021 = vsel %vm3000, %v2761, %v2964
  %v3022 = vsel %vm3000, %v2763, %v2965
  %v3023 = vsel %vm3000, %v2765, %v2966
  %v3024 = vsel %vm3000, %v2767, %v2967
  %v3025 = vsel %vm3000, %v2769, %v2968
  %v3026 = vsel %vm3000, %v2771, %v2969
  %v3027 = vsel %vm3000, %v2773, %v2970
  %v3028 = vsel %vm3000, %v2775, %v2971
  %v3029 = vsel %vm3000, %v2777, %v2972
  %v3030 = vsel %vm3000, %v2779, %v2973
  %v3031 = vsel %vm3000, %v2781, %v2974
  %v3032 = vsel %vm3000, %v2783, %v2975
  %v3033 = vsel %vm3000, %v2785, %v2976
  %v3034 = vsel %vm3000, %v2787, %v2977
  %v3035 = vsel %vm3000, %v2789, %v2978
  %v3036 = vsel %vm3000, %v2791, %v2979
  %v3037 = vsel %vm3000, %v2793, %v2980
  %v3038 = vsel %vm3000, %v2795, %v2981
  %v3039 = vsel %vm3000, %v2797, %v2982
  %v3040 = vsel %vm3000, %v2799, %v2983
  %v3041 = vsel %vm3000, %v2801, %v2984
  %v3042 = vsel %vm3000, %v2803, %v2985
  %v3043 = vsel %vm3000, %v2805, %v2986
  %v3044 = vsel %vm3000, %v2807, %v2987
  %v3045 = vsel %vm3000, %v2809, %v2988
  %v3046 = vsel %vm3000, %v2811, %v2989
  %v3047 = vsel %vm3000, %v2813, %v2990
  %v3048 = vsel %vm3000, %v2815, %v2991
  %v3049 = vsel %vm3000, %v2817, %v2992
  %v3050 = vsel %vm3000, %v2819, %v2993
  %v3051 = vsel %vm3000, %v2821, %v2994
  %v3052 = vsel %vm3000, %v2823, %v2995
  %v3053 = vsel %vm3000, %v2825, %v2996
  %v3054 = vsel %vm3000, %v2827, %v2997
  %v3055 = vsel %vm3000, %v2829, %v2998
  %v3056 = vsel %vm3000, %v2831, %v2999
  %v3113 = vmax.f32 %v2608, %v3001
  %v3114 = vmax.f32 %v2609, %v3002
  %v3115 = vmax.f32 %v2610, %v3003
  %v3116 = vmax.f32 %v2611, %v3004
  %v3117 = vmax.f32 %v2612, %v3005
  %v3118 = vmax.f32 %v2613, %v3006
  %v3119 = vmax.f32 %v2614, %v3007
  %v3120 = vmax.f32 %v2615, %v3008
  %v3121 = vmax.f32 %v2616, %v3009
  %v3122 = vmax.f32 %v2617, %v3010
  %v3123 = vmax.f32 %v2618, %v3011
  %v3124 = vmax.f32 %v2619, %v3012
  %v3125 = vmax.f32 %v2620, %v3013
  %v3126 = vmax.f32 %v2621, %v3014
  %v3127 = vmax.f32 %v2622, %v3015
  %v3128 = vmax.f32 %v2623, %v3016
  %v3129 = vmax.f32 %v2624, %v3017
  %v3130 = vmax.f32 %v2625, %v3018
  %v3131 = vmax.f32 %v2626, %v3019
  %v3132 = vmax.f32 %v2627, %v3020
  %v3133 = vmax.f32 %v2628, %v3021
  %v3134 = vmax.f32 %v2629, %v3022
  %v3135 = vmax.f32 %v2630, %v3023
  %v3136 = vmax.f32 %v2631, %v3024
  %v3137 = vmax.f32 %v2632, %v3025
  %v3138 = vmax.f32 %v2633, %v3026
  %v3139 = vmax.f32 %v2634, %v3027
  %v3140 = vmax.f32 %v2635, %v3028
  %v3141 = vmax.f32 %v2636, %v3029
  %v3142 = vmax.f32 %v2637, %v3030
  %v3143 = vmax.f32 %v2638, %v3031
  %v3144 = vmax.f32 %v2639, %v3032
  %v3145 = vmax.f32 %v2640, %v3033
  %v3146 = vmax.f32 %v2641, %v3034
  %v3147 = vmax.f32 %v2642, %v3035
  %v3148 = vmax.f32 %v2643, %v3036
  %v3149 = vmax.f32 %v2644, %v3037
  %v3150 = vmax.f32 %v2645, %v3038
  %v3151 = vmax.f32 %v2646, %v3039
  %v3152 = vmax.f32 %v2647, %v3040
  %v3153 = vmax.f32 %v2648, %v3041
  %v3154 = vmax.f32 %v2649, %v3042
  %v3155 = vmax.f32 %v2650, %v3043
  %v3156 = vmax.f32 %v2651, %v3044
  %v3157 = vmax.f32 %v2652, %v3045
  %v3158 = vmax.f32 %v2653, %v3046
  %v3159 = vmax.f32 %v2654, %v3047
  %v3160 = vmax.f32 %v2655, %v3048
  %v3161 = vmax.f32 %v2656, %v3049
  %v3162 = vmax.f32 %v2657, %v3050
  %v3163 = vmax.f32 %v2658, %v3051
  %v3164 = vmax.f32 %v2659, %v3052
  %v3165 = vmax.f32 %v2660, %v3053
  %v3166 = vmax.f32 %v2661, %v3054
  %v3167 = vmax.f32 %v2662, %v3055
  %v3168 = vmax.f32 %v2663, %v3056
  %3169 = vrot.lane.b32.xlu0 %v2608, 124
  %v3170 = vpop.permute.xlu0 %3169
  %3171 = vrot.lane.b32.xlu0 %v2609, 124
  %v3172 = vpop.permute.xlu0 %3171
  %3173 = vrot.lane.b32.xlu0 %v2610, 124
  %v3174 = vpop.permute.xlu0 %3173
  %3175 = vrot.lane.b32.xlu0 %v2611, 124
  %v3176 = vpop.permute.xlu0 %3175
  %3177 = vrot.lane.b32.xlu0 %v2612, 124
  %v3178 = vpop.permute.xlu0 %3177
  %3179 = vrot.lane.b32.xlu0 %v2613, 124
  %v3180 = vpop.permute.xlu0 %3179
  %3181 = vrot.lane.b32.xlu0 %v2614, 124
  %v3182 = vpop.permute.xlu0 %3181
  %3183 = vrot.lane.b32.xlu0 %v2615, 124
  %v3184 = vpop.permute.xlu0 %3183
  %3185 = vrot.lane.b32.xlu0 %v2616, 124
  %v3186 = vpop.permute.xlu0 %3185
  %3187 = vrot.lane.b32.xlu0 %v2617, 124
  %v3188 = vpop.permute.xlu0 %3187
  %3189 = vrot.lane.b32.xlu0 %v2618, 124
  %v3190 = vpop.permute.xlu0 %3189
  %3191 = vrot.lane.b32.xlu0 %v2619, 124
  %v3192 = vpop.permute.xlu0 %3191
  %3193 = vrot.lane.b32.xlu0 %v2620, 124
  %v3194 = vpop.permute.xlu0 %3193
  %3195 = vrot.lane.b32.xlu0 %v2621, 124
  %v3196 = vpop.permute.xlu0 %3195
  %3197 = vrot.lane.b32.xlu0 %v2622, 124
  %v3198 = vpop.permute.xlu0 %3197
  %3199 = vrot.lane.b32.xlu0 %v2623, 124
  %v3200 = vpop.permute.xlu0 %3199
  %3201 = vrot.lane.b32.xlu0 %v2624, 124
  %v3202 = vpop.permute.xlu0 %3201
  %3203 = vrot.lane.b32.xlu0 %v2625, 124
  %v3204 = vpop.permute.xlu0 %3203
  %3205 = vrot.lane.b32.xlu0 %v2626, 124
  %v3206 = vpop.permute.xlu0 %3205
  %3207 = vrot.lane.b32.xlu0 %v2627, 124
  %v3208 = vpop.permute.xlu0 %3207
  %3209 = vrot.lane.b32.xlu0 %v2628, 124
  %v3210 = vpop.permute.xlu0 %3209
  %3211 = vrot.lane.b32.xlu0 %v2629, 124
  %v3212 = vpop.permute.xlu0 %3211
  %3213 = vrot.lane.b32.xlu0 %v2630, 124
  %v3214 = vpop.permute.xlu0 %3213
  %3215 = vrot.lane.b32.xlu0 %v2631, 124
  %v3216 = vpop.permute.xlu0 %3215
  %3217 = vrot.lane.b32.xlu0 %v2632, 124
  %v3218 = vpop.permute.xlu0 %3217
  %3219 = vrot.lane.b32.xlu0 %v2633, 124
  %v3220 = vpop.permute.xlu0 %3219
  %3221 = vrot.lane.b32.xlu0 %v2634, 124
  %v3222 = vpop.permute.xlu0 %3221
  %3223 = vrot.lane.b32.xlu0 %v2635, 124
  %v3224 = vpop.permute.xlu0 %3223
  %3225 = vrot.lane.b32.xlu0 %v2636, 124
  %v3226 = vpop.permute.xlu0 %3225
  %3227 = vrot.lane.b32.xlu0 %v2637, 124
  %v3228 = vpop.permute.xlu0 %3227
  %3229 = vrot.lane.b32.xlu0 %v2638, 124
  %v3230 = vpop.permute.xlu0 %3229
  %3231 = vrot.lane.b32.xlu0 %v2639, 124
  %v3232 = vpop.permute.xlu0 %3231
  %3233 = vrot.lane.b32.xlu0 %v2640, 124
  %v3234 = vpop.permute.xlu0 %3233
  %3235 = vrot.lane.b32.xlu0 %v2641, 124
  %v3236 = vpop.permute.xlu0 %3235
  %3237 = vrot.lane.b32.xlu0 %v2642, 124
  %v3238 = vpop.permute.xlu0 %3237
  %3239 = vrot.lane.b32.xlu0 %v2643, 124
  %v3240 = vpop.permute.xlu0 %3239
  %3241 = vrot.lane.b32.xlu0 %v2644, 124
  %v3242 = vpop.permute.xlu0 %3241
  %3243 = vrot.lane.b32.xlu0 %v2645, 124
  %v3244 = vpop.permute.xlu0 %3243
  %3245 = vrot.lane.b32.xlu0 %v2646, 124
  %v3246 = vpop.permute.xlu0 %3245
  %3247 = vrot.lane.b32.xlu0 %v2647, 124
  %v3248 = vpop.permute.xlu0 %3247
  %3249 = vrot.lane.b32.xlu0 %v2648, 124
  %v3250 = vpop.permute.xlu0 %3249
  %3251 = vrot.lane.b32.xlu0 %v2649, 124
  %v3252 = vpop.permute.xlu0 %3251
  %3253 = vrot.lane.b32.xlu0 %v2650, 124
  %v3254 = vpop.permute.xlu0 %3253
  %3255 = vrot.lane.b32.xlu0 %v2651, 124
  %v3256 = vpop.permute.xlu0 %3255
  %3257 = vrot.lane.b32.xlu0 %v2652, 124
  %v3258 = vpop.permute.xlu0 %3257
  %3259 = vrot.lane.b32.xlu0 %v2653, 124
  %v3260 = vpop.permute.xlu0 %3259
  %3261 = vrot.lane.b32.xlu0 %v2654, 124
  %v3262 = vpop.permute.xlu0 %3261
  %3263 = vrot.lane.b32.xlu0 %v2655, 124
  %v3264 = vpop.permute.xlu0 %3263
  %3265 = vrot.lane.b32.xlu0 %v2656, 124
  %v3266 = vpop.permute.xlu0 %3265
  %3267 = vrot.lane.b32.xlu0 %v2657, 124
  %v3268 = vpop.permute.xlu0 %3267
  %3269 = vrot.lane.b32.xlu0 %v2658, 124
  %v3270 = vpop.permute.xlu0 %3269
  %3271 = vrot.lane.b32.xlu0 %v2659, 124
  %v3272 = vpop.permute.xlu0 %3271
  %3273 = vrot.lane.b32.xlu0 %v2660, 124
  %v3274 = vpop.permute.xlu0 %3273
  %3275 = vrot.lane.b32.xlu0 %v2661, 124
  %v3276 = vpop.permute.xlu0 %3275
  %3277 = vrot.lane.b32.xlu0 %v2662, 124
  %v3278 = vpop.permute.xlu0 %3277
  %3279 = vrot.lane.b32.xlu0 %v2663, 124
  %v3280 = vpop.permute.xlu0 %3279
  %v3281 = vrot.slane %v3170, 4
  %v3282 = vrot.slane %v3172, 4
  %v3283 = vrot.slane %v3174, 4
  %v3284 = vrot.slane %v3176, 4
  %v3285 = vrot.slane %v3178, 4
  %v3286 = vrot.slane %v3180, 4
  %v3287 = vrot.slane %v3182, 4
  %v3288 = vrot.slane %v3184, 4
  %v3289 = vrot.slane %v3186, 4
  %v3290 = vrot.slane %v3188, 4
  %v3291 = vrot.slane %v3190, 4
  %v3292 = vrot.slane %v3192, 4
  %v3293 = vrot.slane %v3194, 4
  %v3294 = vrot.slane %v3196, 4
  %v3295 = vrot.slane %v3198, 4
  %v3296 = vrot.slane %v3200, 4
  %v3297 = vrot.slane %v3202, 4
  %v3298 = vrot.slane %v3204, 4
  %v3299 = vrot.slane %v3206, 4
  %v3300 = vrot.slane %v3208, 4
  %v3301 = vrot.slane %v3210, 4
  %v3302 = vrot.slane %v3212, 4
  %v3303 = vrot.slane %v3214, 4
  %v3304 = vrot.slane %v3216, 4
  %v3305 = vrot.slane %v3218, 4
  %v3306 = vrot.slane %v3220, 4
  %v3307 = vrot.slane %v3222, 4
  %v3308 = vrot.slane %v3224, 4
  %v3309 = vrot.slane %v3226, 4
  %v3310 = vrot.slane %v3228, 4
  %v3311 = vrot.slane %v3230, 4
  %v3312 = vrot.slane %v3232, 4
  %v3313 = vrot.slane %v3234, 4
  %v3314 = vrot.slane %v3236, 4
  %v3315 = vrot.slane %v3238, 4
  %v3316 = vrot.slane %v3240, 4
  %v3317 = vrot.slane %v3242, 4
  %v3318 = vrot.slane %v3244, 4
  %v3319 = vrot.slane %v3246, 4
  %v3320 = vrot.slane %v3248, 4
  %v3321 = vrot.slane %v3250, 4
  %v3322 = vrot.slane %v3252, 4
  %v3323 = vrot.slane %v3254, 4
  %v3324 = vrot.slane %v3256, 4
  %v3325 = vrot.slane %v3258, 4
  %v3326 = vrot.slane %v3260, 4
  %v3327 = vrot.slane %v3262, 4
  %v3328 = vrot.slane %v3264, 4
  %v3329 = vrot.slane %v3266, 4
  %v3330 = vrot.slane %v3268, 4
  %v3331 = vrot.slane %v3270, 4
  %v3332 = vrot.slane %v3272, 4
  %v3333 = vrot.slane %v3274, 4
  %v3334 = vrot.slane %v3276, 4
  %v3335 = vrot.slane %v3278, 4
  %v3336 = vrot.slane %v3280, 4
  %3393 = vrot.lane.b32.xlu0 %v2608, 118
  %v3394 = vpop.permute.xlu0 %3393
  %3395 = vrot.lane.b32.xlu0 %v2609, 118
  %v3396 = vpop.permute.xlu0 %3395
  %3397 = vrot.lane.b32.xlu0 %v2610, 118
  %v3398 = vpop.permute.xlu0 %3397
  %3399 = vrot.lane.b32.xlu0 %v2611, 118
  %v3400 = vpop.permute.xlu0 %3399
  %3401 = vrot.lane.b32.xlu0 %v2612, 118
  %v3402 = vpop.permute.xlu0 %3401
  %3403 = vrot.lane.b32.xlu0 %v2613, 118
  %v3404 = vpop.permute.xlu0 %3403
  %3405 = vrot.lane.b32.xlu0 %v2614, 118
  %v3406 = vpop.permute.xlu0 %3405
  %3407 = vrot.lane.b32.xlu0 %v2615, 118
  %v3408 = vpop.permute.xlu0 %3407
  %3409 = vrot.lane.b32.xlu0 %v2616, 118
  %v3410 = vpop.permute.xlu0 %3409
  %3411 = vrot.lane.b32.xlu0 %v2617, 118
  %v3412 = vpop.permute.xlu0 %3411
  %3413 = vrot.lane.b32.xlu0 %v2618, 118
  %v3414 = vpop.permute.xlu0 %3413
  %3415 = vrot.lane.b32.xlu0 %v2619, 118
  %v3416 = vpop.permute.xlu0 %3415
  %3417 = vrot.lane.b32.xlu0 %v2620, 118
  %v3418 = vpop.permute.xlu0 %3417
  %3419 = vrot.lane.b32.xlu0 %v2621, 118
  %v3420 = vpop.permute.xlu0 %3419
  %3421 = vrot.lane.b32.xlu0 %v2622, 118
  %v3422 = vpop.permute.xlu0 %3421
  %3423 = vrot.lane.b32.xlu0 %v2623, 118
  %v3424 = vpop.permute.xlu0 %3423
  %3425 = vrot.lane.b32.xlu0 %v2624, 118
  %v3426 = vpop.permute.xlu0 %3425
  %3427 = vrot.lane.b32.xlu0 %v2625, 118
  %v3428 = vpop.permute.xlu0 %3427
  %3429 = vrot.lane.b32.xlu0 %v2626, 118
  %v3430 = vpop.permute.xlu0 %3429
  %3431 = vrot.lane.b32.xlu0 %v2627, 118
  %v3432 = vpop.permute.xlu0 %3431
  %3433 = vrot.lane.b32.xlu0 %v2628, 118
  %v3434 = vpop.permute.xlu0 %3433
  %3435 = vrot.lane.b32.xlu0 %v2629, 118
  %v3436 = vpop.permute.xlu0 %3435
  %3437 = vrot.lane.b32.xlu0 %v2630, 118
  %v3438 = vpop.permute.xlu0 %3437
  %3439 = vrot.lane.b32.xlu0 %v2631, 118
  %v3440 = vpop.permute.xlu0 %3439
  %3441 = vrot.lane.b32.xlu0 %v2632, 118
  %v3442 = vpop.permute.xlu0 %3441
  %3443 = vrot.lane.b32.xlu0 %v2633, 118
  %v3444 = vpop.permute.xlu0 %3443
  %3445 = vrot.lane.b32.xlu0 %v2634, 118
  %v3446 = vpop.permute.xlu0 %3445
  %3447 = vrot.lane.b32.xlu0 %v2635, 118
  %v3448 = vpop.permute.xlu0 %3447
  %3449 = vrot.lane.b32.xlu0 %v2636, 118
  %v3450 = vpop.permute.xlu0 %3449
  %3451 = vrot.lane.b32.xlu0 %v2637, 118
  %v3452 = vpop.permute.xlu0 %3451
  %3453 = vrot.lane.b32.xlu0 %v2638, 118
  %v3454 = vpop.permute.xlu0 %3453
  %3455 = vrot.lane.b32.xlu0 %v2639, 118
  %v3456 = vpop.permute.xlu0 %3455
  %3457 = vrot.lane.b32.xlu0 %v2640, 118
  %v3458 = vpop.permute.xlu0 %3457
  %3459 = vrot.lane.b32.xlu0 %v2641, 118
  %v3460 = vpop.permute.xlu0 %3459
  %3461 = vrot.lane.b32.xlu0 %v2642, 118
  %v3462 = vpop.permute.xlu0 %3461
  %3463 = vrot.lane.b32.xlu0 %v2643, 118
  %v3464 = vpop.permute.xlu0 %3463
  %3465 = vrot.lane.b32.xlu0 %v2644, 118
  %v3466 = vpop.permute.xlu0 %3465
  %3467 = vrot.lane.b32.xlu0 %v2645, 118
  %v3468 = vpop.permute.xlu0 %3467
  %3469 = vrot.lane.b32.xlu0 %v2646, 118
  %v3470 = vpop.permute.xlu0 %3469
  %3471 = vrot.lane.b32.xlu0 %v2647, 118
  %v3472 = vpop.permute.xlu0 %3471
  %3473 = vrot.lane.b32.xlu0 %v2648, 118
  %v3474 = vpop.permute.xlu0 %3473
  %3475 = vrot.lane.b32.xlu0 %v2649, 118
  %v3476 = vpop.permute.xlu0 %3475
  %3477 = vrot.lane.b32.xlu0 %v2650, 118
  %v3478 = vpop.permute.xlu0 %3477
  %3479 = vrot.lane.b32.xlu0 %v2651, 118
  %v3480 = vpop.permute.xlu0 %3479
  %3481 = vrot.lane.b32.xlu0 %v2652, 118
  %v3482 = vpop.permute.xlu0 %3481
  %3483 = vrot.lane.b32.xlu0 %v2653, 118
  %v3484 = vpop.permute.xlu0 %3483
  %3485 = vrot.lane.b32.xlu0 %v2654, 118
  %v3486 = vpop.permute.xlu0 %3485
  %3487 = vrot.lane.b32.xlu0 %v2655, 118
  %v3488 = vpop.permute.xlu0 %3487
  %3489 = vrot.lane.b32.xlu0 %v2656, 118
  %v3490 = vpop.permute.xlu0 %3489
  %3491 = vrot.lane.b32.xlu0 %v2657, 118
  %v3492 = vpop.permute.xlu0 %3491
  %3493 = vrot.lane.b32.xlu0 %v2658, 118
  %v3494 = vpop.permute.xlu0 %3493
  %3495 = vrot.lane.b32.xlu0 %v2659, 118
  %v3496 = vpop.permute.xlu0 %3495
  %3497 = vrot.lane.b32.xlu0 %v2660, 118
  %v3498 = vpop.permute.xlu0 %3497
  %3499 = vrot.lane.b32.xlu0 %v2661, 118
  %v3500 = vpop.permute.xlu0 %3499
  %3501 = vrot.lane.b32.xlu0 %v2662, 118
  %v3502 = vpop.permute.xlu0 %3501
  %3503 = vrot.lane.b32.xlu0 %v2663, 118
  %v3504 = vpop.permute.xlu0 %3503
  %v3505 = vrot.slane %v3394, 4
  %v3506 = vrot.slane %v3396, 4
  %v3507 = vrot.slane %v3398, 4
  %v3508 = vrot.slane %v3400, 4
  %v3509 = vrot.slane %v3402, 4
  %v3510 = vrot.slane %v3404, 4
  %v3511 = vrot.slane %v3406, 4
  %v3512 = vrot.slane %v3408, 4
  %v3513 = vrot.slane %v3410, 4
  %v3514 = vrot.slane %v3412, 4
  %v3515 = vrot.slane %v3414, 4
  %v3516 = vrot.slane %v3416, 4
  %v3517 = vrot.slane %v3418, 4
  %v3518 = vrot.slane %v3420, 4
  %v3519 = vrot.slane %v3422, 4
  %v3520 = vrot.slane %v3424, 4
  %v3521 = vrot.slane %v3426, 4
  %v3522 = vrot.slane %v3428, 4
  %v3523 = vrot.slane %v3430, 4
  %v3524 = vrot.slane %v3432, 4
  %v3525 = vrot.slane %v3434, 4
  %v3526 = vrot.slane %v3436, 4
  %v3527 = vrot.slane %v3438, 4
  %v3528 = vrot.slane %v3440, 4
  %v3529 = vrot.slane %v3442, 4
  %v3530 = vrot.slane %v3444, 4
  %v3531 = vrot.slane %v3446, 4
  %v3532 = vrot.slane %v3448, 4
  %v3533 = vrot.slane %v3450, 4
  %v3534 = vrot.slane %v3452, 4
  %v3535 = vrot.slane %v3454, 4
  %v3536 = vrot.slane %v3456, 4
  %v3537 = vrot.slane %v3458, 4
  %v3538 = vrot.slane %v3460, 4
  %v3539 = vrot.slane %v3462, 4
  %v3540 = vrot.slane %v3464, 4
  %v3541 = vrot.slane %v3466, 4
  %v3542 = vrot.slane %v3468, 4
  %v3543 = vrot.slane %v3470, 4
  %v3544 = vrot.slane %v3472, 4
  %v3545 = vrot.slane %v3474, 4
  %v3546 = vrot.slane %v3476, 4
  %v3547 = vrot.slane %v3478, 4
  %v3548 = vrot.slane %v3480, 4
  %v3549 = vrot.slane %v3482, 4
  %v3550 = vrot.slane %v3484, 4
  %v3551 = vrot.slane %v3486, 4
  %v3552 = vrot.slane %v3488, 4
  %v3553 = vrot.slane %v3490, 4
  %v3554 = vrot.slane %v3492, 4
  %v3555 = vrot.slane %v3494, 4
  %v3556 = vrot.slane %v3496, 4
  %v3557 = vrot.slane %v3498, 4
  %v3558 = vrot.slane %v3500, 4
  %v3559 = vrot.slane %v3502, 4
  %v3560 = vrot.slane %v3504, 4
  %v3617 = vmax.f32 %v3281, %v3505
  %v3618 = vmax.f32 %v3282, %v3506
  %v3619 = vmax.f32 %v3283, %v3507
  %v3620 = vmax.f32 %v3284, %v3508
  %v3621 = vmax.f32 %v3285, %v3509
  %v3622 = vmax.f32 %v3286, %v3510
  %v3623 = vmax.f32 %v3287, %v3511
  %v3624 = vmax.f32 %v3288, %v3512
  %v3625 = vmax.f32 %v3289, %v3513
  %v3626 = vmax.f32 %v3290, %v3514
  %v3627 = vmax.f32 %v3291, %v3515
  %v3628 = vmax.f32 %v3292, %v3516
  %v3629 = vmax.f32 %v3293, %v3517
  %v3630 = vmax.f32 %v3294, %v3518
  %v3631 = vmax.f32 %v3295, %v3519
  %v3632 = vmax.f32 %v3296, %v3520
  %v3633 = vmax.f32 %v3297, %v3521
  %v3634 = vmax.f32 %v3298, %v3522
  %v3635 = vmax.f32 %v3299, %v3523
  %v3636 = vmax.f32 %v3300, %v3524
  %v3637 = vmax.f32 %v3301, %v3525
  %v3638 = vmax.f32 %v3302, %v3526
  %v3639 = vmax.f32 %v3303, %v3527
  %v3640 = vmax.f32 %v3304, %v3528
  %v3641 = vmax.f32 %v3305, %v3529
  %v3642 = vmax.f32 %v3306, %v3530
  %v3643 = vmax.f32 %v3307, %v3531
  %v3644 = vmax.f32 %v3308, %v3532
  %v3645 = vmax.f32 %v3309, %v3533
  %v3646 = vmax.f32 %v3310, %v3534
  %v3647 = vmax.f32 %v3311, %v3535
  %v3648 = vmax.f32 %v3312, %v3536
  %v3649 = vmax.f32 %v3313, %v3537
  %v3650 = vmax.f32 %v3314, %v3538
  %v3651 = vmax.f32 %v3315, %v3539
  %v3652 = vmax.f32 %v3316, %v3540
  %v3653 = vmax.f32 %v3317, %v3541
  %v3654 = vmax.f32 %v3318, %v3542
  %v3655 = vmax.f32 %v3319, %v3543
  %v3656 = vmax.f32 %v3320, %v3544
  %v3657 = vmax.f32 %v3321, %v3545
  %v3658 = vmax.f32 %v3322, %v3546
  %v3659 = vmax.f32 %v3323, %v3547
  %v3660 = vmax.f32 %v3324, %v3548
  %v3661 = vmax.f32 %v3325, %v3549
  %v3662 = vmax.f32 %v3326, %v3550
  %v3663 = vmax.f32 %v3327, %v3551
  %v3664 = vmax.f32 %v3328, %v3552
  %v3665 = vmax.f32 %v3329, %v3553
  %v3666 = vmax.f32 %v3330, %v3554
  %v3667 = vmax.f32 %v3331, %v3555
  %v3668 = vmax.f32 %v3332, %v3556
  %v3669 = vmax.f32 %v3333, %v3557
  %v3670 = vmax.f32 %v3334, %v3558
  %v3671 = vmax.f32 %v3335, %v3559
  %v3672 = vmax.f32 %v3336, %v3560
  %3673 = vrot.lane.b32.xlu0 %v2608, 112
  %v3674 = vpop.permute.xlu0 %3673
  %3675 = vrot.lane.b32.xlu0 %v2609, 112
  %v3676 = vpop.permute.xlu0 %3675
  %3677 = vrot.lane.b32.xlu0 %v2610, 112
  %v3678 = vpop.permute.xlu0 %3677
  %3679 = vrot.lane.b32.xlu0 %v2611, 112
  %v3680 = vpop.permute.xlu0 %3679
  %3681 = vrot.lane.b32.xlu0 %v2612, 112
  %v3682 = vpop.permute.xlu0 %3681
  %3683 = vrot.lane.b32.xlu0 %v2613, 112
  %v3684 = vpop.permute.xlu0 %3683
  %3685 = vrot.lane.b32.xlu0 %v2614, 112
  %v3686 = vpop.permute.xlu0 %3685
  %3687 = vrot.lane.b32.xlu0 %v2615, 112
  %v3688 = vpop.permute.xlu0 %3687
  %3689 = vrot.lane.b32.xlu0 %v2616, 112
  %v3690 = vpop.permute.xlu0 %3689
  %3691 = vrot.lane.b32.xlu0 %v2617, 112
  %v3692 = vpop.permute.xlu0 %3691
  %3693 = vrot.lane.b32.xlu0 %v2618, 112
  %v3694 = vpop.permute.xlu0 %3693
  %3695 = vrot.lane.b32.xlu0 %v2619, 112
  %v3696 = vpop.permute.xlu0 %3695
  %3697 = vrot.lane.b32.xlu0 %v2620, 112
  %v3698 = vpop.permute.xlu0 %3697
  %3699 = vrot.lane.b32.xlu0 %v2621, 112
  %v3700 = vpop.permute.xlu0 %3699
  %3701 = vrot.lane.b32.xlu0 %v2622, 112
  %v3702 = vpop.permute.xlu0 %3701
  %3703 = vrot.lane.b32.xlu0 %v2623, 112
  %v3704 = vpop.permute.xlu0 %3703
  %3705 = vrot.lane.b32.xlu0 %v2624, 112
  %v3706 = vpop.permute.xlu0 %3705
  %3707 = vrot.lane.b32.xlu0 %v2625, 112
  %v3708 = vpop.permute.xlu0 %3707
  %3709 = vrot.lane.b32.xlu0 %v2626, 112
  %v3710 = vpop.permute.xlu0 %3709
  %3711 = vrot.lane.b32.xlu0 %v2627, 112
  %v3712 = vpop.permute.xlu0 %3711
  %3713 = vrot.lane.b32.xlu0 %v2628, 112
  %v3714 = vpop.permute.xlu0 %3713
  %3715 = vrot.lane.b32.xlu0 %v2629, 112
  %v3716 = vpop.permute.xlu0 %3715
  %3717 = vrot.lane.b32.xlu0 %v2630, 112
  %v3718 = vpop.permute.xlu0 %3717
  %3719 = vrot.lane.b32.xlu0 %v2631, 112
  %v3720 = vpop.permute.xlu0 %3719
  %3721 = vrot.lane.b32.xlu0 %v2632, 112
  %v3722 = vpop.permute.xlu0 %3721
  %3723 = vrot.lane.b32.xlu0 %v2633, 112
  %v3724 = vpop.permute.xlu0 %3723
  %3725 = vrot.lane.b32.xlu0 %v2634, 112
  %v3726 = vpop.permute.xlu0 %3725
  %3727 = vrot.lane.b32.xlu0 %v2635, 112
  %v3728 = vpop.permute.xlu0 %3727
  %3729 = vrot.lane.b32.xlu0 %v2636, 112
  %v3730 = vpop.permute.xlu0 %3729
  %3731 = vrot.lane.b32.xlu0 %v2637, 112
  %v3732 = vpop.permute.xlu0 %3731
  %3733 = vrot.lane.b32.xlu0 %v2638, 112
  %v3734 = vpop.permute.xlu0 %3733
  %3735 = vrot.lane.b32.xlu0 %v2639, 112
  %v3736 = vpop.permute.xlu0 %3735
  %3737 = vrot.lane.b32.xlu0 %v2640, 112
  %v3738 = vpop.permute.xlu0 %3737
  %3739 = vrot.lane.b32.xlu0 %v2641, 112
  %v3740 = vpop.permute.xlu0 %3739
  %3741 = vrot.lane.b32.xlu0 %v2642, 112
  %v3742 = vpop.permute.xlu0 %3741
  %3743 = vrot.lane.b32.xlu0 %v2643, 112
  %v3744 = vpop.permute.xlu0 %3743
  %3745 = vrot.lane.b32.xlu0 %v2644, 112
  %v3746 = vpop.permute.xlu0 %3745
  %3747 = vrot.lane.b32.xlu0 %v2645, 112
  %v3748 = vpop.permute.xlu0 %3747
  %3749 = vrot.lane.b32.xlu0 %v2646, 112
  %v3750 = vpop.permute.xlu0 %3749
  %3751 = vrot.lane.b32.xlu0 %v2647, 112
  %v3752 = vpop.permute.xlu0 %3751
  %3753 = vrot.lane.b32.xlu0 %v2648, 112
  %v3754 = vpop.permute.xlu0 %3753
  %3755 = vrot.lane.b32.xlu0 %v2649, 112
  %v3756 = vpop.permute.xlu0 %3755
  %3757 = vrot.lane.b32.xlu0 %v2650, 112
  %v3758 = vpop.permute.xlu0 %3757
  %3759 = vrot.lane.b32.xlu0 %v2651, 112
  %v3760 = vpop.permute.xlu0 %3759
  %3761 = vrot.lane.b32.xlu0 %v2652, 112
  %v3762 = vpop.permute.xlu0 %3761
  %3763 = vrot.lane.b32.xlu0 %v2653, 112
  %v3764 = vpop.permute.xlu0 %3763
  %3765 = vrot.lane.b32.xlu0 %v2654, 112
  %v3766 = vpop.permute.xlu0 %3765
  %3767 = vrot.lane.b32.xlu0 %v2655, 112
  %v3768 = vpop.permute.xlu0 %3767
  %3769 = vrot.lane.b32.xlu0 %v2656, 112
  %v3770 = vpop.permute.xlu0 %3769
  %3771 = vrot.lane.b32.xlu0 %v2657, 112
  %v3772 = vpop.permute.xlu0 %3771
  %3773 = vrot.lane.b32.xlu0 %v2658, 112
  %v3774 = vpop.permute.xlu0 %3773
  %3775 = vrot.lane.b32.xlu0 %v2659, 112
  %v3776 = vpop.permute.xlu0 %3775
  %3777 = vrot.lane.b32.xlu0 %v2660, 112
  %v3778 = vpop.permute.xlu0 %3777
  %3779 = vrot.lane.b32.xlu0 %v2661, 112
  %v3780 = vpop.permute.xlu0 %3779
  %3781 = vrot.lane.b32.xlu0 %v2662, 112
  %v3782 = vpop.permute.xlu0 %3781
  %3783 = vrot.lane.b32.xlu0 %v2663, 112
  %v3784 = vpop.permute.xlu0 %3783
  %v3785 = vrot.slane %v3674, 4
  %v3786 = vrot.slane %v3676, 4
  %v3787 = vrot.slane %v3678, 4
  %v3788 = vrot.slane %v3680, 4
  %v3789 = vrot.slane %v3682, 4
  %v3790 = vrot.slane %v3684, 4
  %v3791 = vrot.slane %v3686, 4
  %v3792 = vrot.slane %v3688, 4
  %v3793 = vrot.slane %v3690, 4
  %v3794 = vrot.slane %v3692, 4
  %v3795 = vrot.slane %v3694, 4
  %v3796 = vrot.slane %v3696, 4
  %v3797 = vrot.slane %v3698, 4
  %v3798 = vrot.slane %v3700, 4
  %v3799 = vrot.slane %v3702, 4
  %v3800 = vrot.slane %v3704, 4
  %v3801 = vrot.slane %v3706, 4
  %v3802 = vrot.slane %v3708, 4
  %v3803 = vrot.slane %v3710, 4
  %v3804 = vrot.slane %v3712, 4
  %v3805 = vrot.slane %v3714, 4
  %v3806 = vrot.slane %v3716, 4
  %v3807 = vrot.slane %v3718, 4
  %v3808 = vrot.slane %v3720, 4
  %v3809 = vrot.slane %v3722, 4
  %v3810 = vrot.slane %v3724, 4
  %v3811 = vrot.slane %v3726, 4
  %v3812 = vrot.slane %v3728, 4
  %v3813 = vrot.slane %v3730, 4
  %v3814 = vrot.slane %v3732, 4
  %v3815 = vrot.slane %v3734, 4
  %v3816 = vrot.slane %v3736, 4
  %v3817 = vrot.slane %v3738, 4
  %v3818 = vrot.slane %v3740, 4
  %v3819 = vrot.slane %v3742, 4
  %v3820 = vrot.slane %v3744, 4
  %v3821 = vrot.slane %v3746, 4
  %v3822 = vrot.slane %v3748, 4
  %v3823 = vrot.slane %v3750, 4
  %v3824 = vrot.slane %v3752, 4
  %v3825 = vrot.slane %v3754, 4
  %v3826 = vrot.slane %v3756, 4
  %v3827 = vrot.slane %v3758, 4
  %v3828 = vrot.slane %v3760, 4
  %v3829 = vrot.slane %v3762, 4
  %v3830 = vrot.slane %v3764, 4
  %v3831 = vrot.slane %v3766, 4
  %v3832 = vrot.slane %v3768, 4
  %v3833 = vrot.slane %v3770, 4
  %v3834 = vrot.slane %v3772, 4
  %v3835 = vrot.slane %v3774, 4
  %v3836 = vrot.slane %v3776, 4
  %v3837 = vrot.slane %v3778, 4
  %v3838 = vrot.slane %v3780, 4
  %v3839 = vrot.slane %v3782, 4
  %v3840 = vrot.slane %v3784, 4
  %3897 = vrot.lane.b32.xlu0 %v2608, 106
  %v3898 = vpop.permute.xlu0 %3897
  %3899 = vrot.lane.b32.xlu0 %v2609, 106
  %v3900 = vpop.permute.xlu0 %3899
  %3901 = vrot.lane.b32.xlu0 %v2610, 106
  %v3902 = vpop.permute.xlu0 %3901
  %3903 = vrot.lane.b32.xlu0 %v2611, 106
  %v3904 = vpop.permute.xlu0 %3903
  %3905 = vrot.lane.b32.xlu0 %v2612, 106
  %v3906 = vpop.permute.xlu0 %3905
  %3907 = vrot.lane.b32.xlu0 %v2613, 106
  %v3908 = vpop.permute.xlu0 %3907
  %3909 = vrot.lane.b32.xlu0 %v2614, 106
  %v3910 = vpop.permute.xlu0 %3909
  %3911 = vrot.lane.b32.xlu0 %v2615, 106
  %v3912 = vpop.permute.xlu0 %3911
  %3913 = vrot.lane.b32.xlu0 %v2616, 106
  %v3914 = vpop.permute.xlu0 %3913
  %3915 = vrot.lane.b32.xlu0 %v2617, 106
  %v3916 = vpop.permute.xlu0 %3915
  %3917 = vrot.lane.b32.xlu0 %v2618, 106
  %v3918 = vpop.permute.xlu0 %3917
  %3919 = vrot.lane.b32.xlu0 %v2619, 106
  %v3920 = vpop.permute.xlu0 %3919
  %3921 = vrot.lane.b32.xlu0 %v2620, 106
  %v3922 = vpop.permute.xlu0 %3921
  %3923 = vrot.lane.b32.xlu0 %v2621, 106
  %v3924 = vpop.permute.xlu0 %3923
  %3925 = vrot.lane.b32.xlu0 %v2622, 106
  %v3926 = vpop.permute.xlu0 %3925
  %3927 = vrot.lane.b32.xlu0 %v2623, 106
  %v3928 = vpop.permute.xlu0 %3927
  %3929 = vrot.lane.b32.xlu0 %v2624, 106
  %v3930 = vpop.permute.xlu0 %3929
  %3931 = vrot.lane.b32.xlu0 %v2625, 106
  %v3932 = vpop.permute.xlu0 %3931
  %3933 = vrot.lane.b32.xlu0 %v2626, 106
  %v3934 = vpop.permute.xlu0 %3933
  %3935 = vrot.lane.b32.xlu0 %v2627, 106
  %v3936 = vpop.permute.xlu0 %3935
  %3937 = vrot.lane.b32.xlu0 %v2628, 106
  %v3938 = vpop.permute.xlu0 %3937
  %3939 = vrot.lane.b32.xlu0 %v2629, 106
  %v3940 = vpop.permute.xlu0 %3939
  %3941 = vrot.lane.b32.xlu0 %v2630, 106
  %v3942 = vpop.permute.xlu0 %3941
  %3943 = vrot.lane.b32.xlu0 %v2631, 106
  %v3944 = vpop.permute.xlu0 %3943
  %3945 = vrot.lane.b32.xlu0 %v2632, 106
  %v3946 = vpop.permute.xlu0 %3945
  %3947 = vrot.lane.b32.xlu0 %v2633, 106
  %v3948 = vpop.permute.xlu0 %3947
  %3949 = vrot.lane.b32.xlu0 %v2634, 106
  %v3950 = vpop.permute.xlu0 %3949
  %3951 = vrot.lane.b32.xlu0 %v2635, 106
  %v3952 = vpop.permute.xlu0 %3951
  %3953 = vrot.lane.b32.xlu0 %v2636, 106
  %v3954 = vpop.permute.xlu0 %3953
  %3955 = vrot.lane.b32.xlu0 %v2637, 106
  %v3956 = vpop.permute.xlu0 %3955
  %3957 = vrot.lane.b32.xlu0 %v2638, 106
  %v3958 = vpop.permute.xlu0 %3957
  %3959 = vrot.lane.b32.xlu0 %v2639, 106
  %v3960 = vpop.permute.xlu0 %3959
  %3961 = vrot.lane.b32.xlu0 %v2640, 106
  %v3962 = vpop.permute.xlu0 %3961
  %3963 = vrot.lane.b32.xlu0 %v2641, 106
  %v3964 = vpop.permute.xlu0 %3963
  %3965 = vrot.lane.b32.xlu0 %v2642, 106
  %v3966 = vpop.permute.xlu0 %3965
  %3967 = vrot.lane.b32.xlu0 %v2643, 106
  %v3968 = vpop.permute.xlu0 %3967
  %3969 = vrot.lane.b32.xlu0 %v2644, 106
  %v3970 = vpop.permute.xlu0 %3969
  %3971 = vrot.lane.b32.xlu0 %v2645, 106
  %v3972 = vpop.permute.xlu0 %3971
  %3973 = vrot.lane.b32.xlu0 %v2646, 106
  %v3974 = vpop.permute.xlu0 %3973
  %3975 = vrot.lane.b32.xlu0 %v2647, 106
  %v3976 = vpop.permute.xlu0 %3975
  %3977 = vrot.lane.b32.xlu0 %v2648, 106
  %v3978 = vpop.permute.xlu0 %3977
  %3979 = vrot.lane.b32.xlu0 %v2649, 106
  %v3980 = vpop.permute.xlu0 %3979
  %3981 = vrot.lane.b32.xlu0 %v2650, 106
  %v3982 = vpop.permute.xlu0 %3981
  %3983 = vrot.lane.b32.xlu0 %v2651, 106
  %v3984 = vpop.permute.xlu0 %3983
  %3985 = vrot.lane.b32.xlu0 %v2652, 106
  %v3986 = vpop.permute.xlu0 %3985
  %3987 = vrot.lane.b32.xlu0 %v2653, 106
  %v3988 = vpop.permute.xlu0 %3987
  %3989 = vrot.lane.b32.xlu0 %v2654, 106
  %v3990 = vpop.permute.xlu0 %3989
  %3991 = vrot.lane.b32.xlu0 %v2655, 106
  %v3992 = vpop.permute.xlu0 %3991
  %3993 = vrot.lane.b32.xlu0 %v2656, 106
  %v3994 = vpop.permute.xlu0 %3993
  %3995 = vrot.lane.b32.xlu0 %v2657, 106
  %v3996 = vpop.permute.xlu0 %3995
  %3997 = vrot.lane.b32.xlu0 %v2658, 106
  %v3998 = vpop.permute.xlu0 %3997
  %3999 = vrot.lane.b32.xlu0 %v2659, 106
  %v4000 = vpop.permute.xlu0 %3999
  %4001 = vrot.lane.b32.xlu0 %v2660, 106
  %v4002 = vpop.permute.xlu0 %4001
  %4003 = vrot.lane.b32.xlu0 %v2661, 106
  %v4004 = vpop.permute.xlu0 %4003
  %4005 = vrot.lane.b32.xlu0 %v2662, 106
  %v4006 = vpop.permute.xlu0 %4005
  %4007 = vrot.lane.b32.xlu0 %v2663, 106
  %v4008 = vpop.permute.xlu0 %4007
  %v4009 = vrot.slane %v3898, 4
  %v4010 = vrot.slane %v3900, 4
  %v4011 = vrot.slane %v3902, 4
  %v4012 = vrot.slane %v3904, 4
  %v4013 = vrot.slane %v3906, 4
  %v4014 = vrot.slane %v3908, 4
  %v4015 = vrot.slane %v3910, 4
  %v4016 = vrot.slane %v3912, 4
  %v4017 = vrot.slane %v3914, 4
  %v4018 = vrot.slane %v3916, 4
  %v4019 = vrot.slane %v3918, 4
  %v4020 = vrot.slane %v3920, 4
  %v4021 = vrot.slane %v3922, 4
  %v4022 = vrot.slane %v3924, 4
  %v4023 = vrot.slane %v3926, 4
  %v4024 = vrot.slane %v3928, 4
  %v4025 = vrot.slane %v3930, 4
  %v4026 = vrot.slane %v3932, 4
  %v4027 = vrot.slane %v3934, 4
  %v4028 = vrot.slane %v3936, 4
  %v4029 = vrot.slane %v3938, 4
  %v4030 = vrot.slane %v3940, 4
  %v4031 = vrot.slane %v3942, 4
  %v4032 = vrot.slane %v3944, 4
  %v4033 = vrot.slane %v3946, 4
  %v4034 = vrot.slane %v3948, 4
  %v4035 = vrot.slane %v3950, 4
  %v4036 = vrot.slane %v3952, 4
  %v4037 = vrot.slane %v3954, 4
  %v4038 = vrot.slane %v3956, 4
  %v4039 = vrot.slane %v3958, 4
  %v4040 = vrot.slane %v3960, 4
  %v4041 = vrot.slane %v3962, 4
  %v4042 = vrot.slane %v3964, 4
  %v4043 = vrot.slane %v3966, 4
  %v4044 = vrot.slane %v3968, 4
  %v4045 = vrot.slane %v3970, 4
  %v4046 = vrot.slane %v3972, 4
  %v4047 = vrot.slane %v3974, 4
  %v4048 = vrot.slane %v3976, 4
  %v4049 = vrot.slane %v3978, 4
  %v4050 = vrot.slane %v3980, 4
  %v4051 = vrot.slane %v3982, 4
  %v4052 = vrot.slane %v3984, 4
  %v4053 = vrot.slane %v3986, 4
  %v4054 = vrot.slane %v3988, 4
  %v4055 = vrot.slane %v3990, 4
  %v4056 = vrot.slane %v3992, 4
  %v4057 = vrot.slane %v3994, 4
  %v4058 = vrot.slane %v3996, 4
  %v4059 = vrot.slane %v3998, 4
  %v4060 = vrot.slane %v4000, 4
  %v4061 = vrot.slane %v4002, 4
  %v4062 = vrot.slane %v4004, 4
  %v4063 = vrot.slane %v4006, 4
  %v4064 = vrot.slane %v4008, 4
  %v4121 = vmax.f32 %v3785, %v4009
  %v4122 = vmax.f32 %v3786, %v4010
  %v4123 = vmax.f32 %v3787, %v4011
  %v4124 = vmax.f32 %v3788, %v4012
  %v4125 = vmax.f32 %v3789, %v4013
  %v4126 = vmax.f32 %v3790, %v4014
  %v4127 = vmax.f32 %v3791, %v4015
  %v4128 = vmax.f32 %v3792, %v4016
  %v4129 = vmax.f32 %v3793, %v4017
  %v4130 = vmax.f32 %v3794, %v4018
  %v4131 = vmax.f32 %v3795, %v4019
  %v4132 = vmax.f32 %v3796, %v4020
  %v4133 = vmax.f32 %v3797, %v4021
  %v4134 = vmax.f32 %v3798, %v4022
  %v4135 = vmax.f32 %v3799, %v4023
  %v4136 = vmax.f32 %v3800, %v4024
  %v4137 = vmax.f32 %v3801, %v4025
  %v4138 = vmax.f32 %v3802, %v4026
  %v4139 = vmax.f32 %v3803, %v4027
  %v4140 = vmax.f32 %v3804, %v4028
  %v4141 = vmax.f32 %v3805, %v4029
  %v4142 = vmax.f32 %v3806, %v4030
  %v4143 = vmax.f32 %v3807, %v4031
  %v4144 = vmax.f32 %v3808, %v4032
  %v4145 = vmax.f32 %v3809, %v4033
  %v4146 = vmax.f32 %v3810, %v4034
  %v4147 = vmax.f32 %v3811, %v4035
  %v4148 = vmax.f32 %v3812, %v4036
  %v4149 = vmax.f32 %v3813, %v4037
  %v4150 = vmax.f32 %v3814, %v4038
  %v4151 = vmax.f32 %v3815, %v4039
  %v4152 = vmax.f32 %v3816, %v4040
  %v4153 = vmax.f32 %v3817, %v4041
  %v4154 = vmax.f32 %v3818, %v4042
  %v4155 = vmax.f32 %v3819, %v4043
  %v4156 = vmax.f32 %v3820, %v4044
  %v4157 = vmax.f32 %v3821, %v4045
  %v4158 = vmax.f32 %v3822, %v4046
  %v4159 = vmax.f32 %v3823, %v4047
  %v4160 = vmax.f32 %v3824, %v4048
  %v4161 = vmax.f32 %v3825, %v4049
  %v4162 = vmax.f32 %v3826, %v4050
  %v4163 = vmax.f32 %v3827, %v4051
  %v4164 = vmax.f32 %v3828, %v4052
  %v4165 = vmax.f32 %v3829, %v4053
  %v4166 = vmax.f32 %v3830, %v4054
  %v4167 = vmax.f32 %v3831, %v4055
  %v4168 = vmax.f32 %v3832, %v4056
  %v4169 = vmax.f32 %v3833, %v4057
  %v4170 = vmax.f32 %v3834, %v4058
  %v4171 = vmax.f32 %v3835, %v4059
  %v4172 = vmax.f32 %v3836, %v4060
  %v4173 = vmax.f32 %v3837, %v4061
  %v4174 = vmax.f32 %v3838, %v4062
  %v4175 = vmax.f32 %v3839, %v4063
  %v4176 = vmax.f32 %v3840, %v4064
  %4177 = vrot.lane.b32.xlu0 %v2608, 100
  %v4178 = vpop.permute.xlu0 %4177
  %4179 = vrot.lane.b32.xlu0 %v2609, 100
  %v4180 = vpop.permute.xlu0 %4179
  %4181 = vrot.lane.b32.xlu0 %v2610, 100
  %v4182 = vpop.permute.xlu0 %4181
  %4183 = vrot.lane.b32.xlu0 %v2611, 100
  %v4184 = vpop.permute.xlu0 %4183
  %4185 = vrot.lane.b32.xlu0 %v2612, 100
  %v4186 = vpop.permute.xlu0 %4185
  %4187 = vrot.lane.b32.xlu0 %v2613, 100
  %v4188 = vpop.permute.xlu0 %4187
  %4189 = vrot.lane.b32.xlu0 %v2614, 100
  %v4190 = vpop.permute.xlu0 %4189
  %4191 = vrot.lane.b32.xlu0 %v2615, 100
  %v4192 = vpop.permute.xlu0 %4191
  %4193 = vrot.lane.b32.xlu0 %v2616, 100
  %v4194 = vpop.permute.xlu0 %4193
  %4195 = vrot.lane.b32.xlu0 %v2617, 100
  %v4196 = vpop.permute.xlu0 %4195
  %4197 = vrot.lane.b32.xlu0 %v2618, 100
  %v4198 = vpop.permute.xlu0 %4197
  %4199 = vrot.lane.b32.xlu0 %v2619, 100
  %v4200 = vpop.permute.xlu0 %4199
  %4201 = vrot.lane.b32.xlu0 %v2620, 100
  %v4202 = vpop.permute.xlu0 %4201
  %4203 = vrot.lane.b32.xlu0 %v2621, 100
  %v4204 = vpop.permute.xlu0 %4203
  %4205 = vrot.lane.b32.xlu0 %v2622, 100
  %v4206 = vpop.permute.xlu0 %4205
  %4207 = vrot.lane.b32.xlu0 %v2623, 100
  %v4208 = vpop.permute.xlu0 %4207
  %4209 = vrot.lane.b32.xlu0 %v2624, 100
  %v4210 = vpop.permute.xlu0 %4209
  %4211 = vrot.lane.b32.xlu0 %v2625, 100
  %v4212 = vpop.permute.xlu0 %4211
  %4213 = vrot.lane.b32.xlu0 %v2626, 100
  %v4214 = vpop.permute.xlu0 %4213
  %4215 = vrot.lane.b32.xlu0 %v2627, 100
  %v4216 = vpop.permute.xlu0 %4215
  %4217 = vrot.lane.b32.xlu0 %v2628, 100
  %v4218 = vpop.permute.xlu0 %4217
  %4219 = vrot.lane.b32.xlu0 %v2629, 100
  %v4220 = vpop.permute.xlu0 %4219
  %4221 = vrot.lane.b32.xlu0 %v2630, 100
  %v4222 = vpop.permute.xlu0 %4221
  %4223 = vrot.lane.b32.xlu0 %v2631, 100
  %v4224 = vpop.permute.xlu0 %4223
  %4225 = vrot.lane.b32.xlu0 %v2632, 100
  %v4226 = vpop.permute.xlu0 %4225
  %4227 = vrot.lane.b32.xlu0 %v2633, 100
  %v4228 = vpop.permute.xlu0 %4227
  %4229 = vrot.lane.b32.xlu0 %v2634, 100
  %v4230 = vpop.permute.xlu0 %4229
  %4231 = vrot.lane.b32.xlu0 %v2635, 100
  %v4232 = vpop.permute.xlu0 %4231
  %4233 = vrot.lane.b32.xlu0 %v2636, 100
  %v4234 = vpop.permute.xlu0 %4233
  %4235 = vrot.lane.b32.xlu0 %v2637, 100
  %v4236 = vpop.permute.xlu0 %4235
  %4237 = vrot.lane.b32.xlu0 %v2638, 100
  %v4238 = vpop.permute.xlu0 %4237
  %4239 = vrot.lane.b32.xlu0 %v2639, 100
  %v4240 = vpop.permute.xlu0 %4239
  %4241 = vrot.lane.b32.xlu0 %v2640, 100
  %v4242 = vpop.permute.xlu0 %4241
  %4243 = vrot.lane.b32.xlu0 %v2641, 100
  %v4244 = vpop.permute.xlu0 %4243
  %4245 = vrot.lane.b32.xlu0 %v2642, 100
  %v4246 = vpop.permute.xlu0 %4245
  %4247 = vrot.lane.b32.xlu0 %v2643, 100
  %v4248 = vpop.permute.xlu0 %4247
  %4249 = vrot.lane.b32.xlu0 %v2644, 100
  %v4250 = vpop.permute.xlu0 %4249
  %4251 = vrot.lane.b32.xlu0 %v2645, 100
  %v4252 = vpop.permute.xlu0 %4251
  %4253 = vrot.lane.b32.xlu0 %v2646, 100
  %v4254 = vpop.permute.xlu0 %4253
  %4255 = vrot.lane.b32.xlu0 %v2647, 100
  %v4256 = vpop.permute.xlu0 %4255
  %4257 = vrot.lane.b32.xlu0 %v2648, 100
  %v4258 = vpop.permute.xlu0 %4257
  %4259 = vrot.lane.b32.xlu0 %v2649, 100
  %v4260 = vpop.permute.xlu0 %4259
  %4261 = vrot.lane.b32.xlu0 %v2650, 100
  %v4262 = vpop.permute.xlu0 %4261
  %4263 = vrot.lane.b32.xlu0 %v2651, 100
  %v4264 = vpop.permute.xlu0 %4263
  %4265 = vrot.lane.b32.xlu0 %v2652, 100
  %v4266 = vpop.permute.xlu0 %4265
  %4267 = vrot.lane.b32.xlu0 %v2653, 100
  %v4268 = vpop.permute.xlu0 %4267
  %4269 = vrot.lane.b32.xlu0 %v2654, 100
  %v4270 = vpop.permute.xlu0 %4269
  %4271 = vrot.lane.b32.xlu0 %v2655, 100
  %v4272 = vpop.permute.xlu0 %4271
  %4273 = vrot.lane.b32.xlu0 %v2656, 100
  %v4274 = vpop.permute.xlu0 %4273
  %4275 = vrot.lane.b32.xlu0 %v2657, 100
  %v4276 = vpop.permute.xlu0 %4275
  %4277 = vrot.lane.b32.xlu0 %v2658, 100
  %v4278 = vpop.permute.xlu0 %4277
  %4279 = vrot.lane.b32.xlu0 %v2659, 100
  %v4280 = vpop.permute.xlu0 %4279
  %4281 = vrot.lane.b32.xlu0 %v2660, 100
  %v4282 = vpop.permute.xlu0 %4281
  %4283 = vrot.lane.b32.xlu0 %v2661, 100
  %v4284 = vpop.permute.xlu0 %4283
  %4285 = vrot.lane.b32.xlu0 %v2662, 100
  %v4286 = vpop.permute.xlu0 %4285
  %4287 = vrot.lane.b32.xlu0 %v2663, 100
  %v4288 = vpop.permute.xlu0 %4287
  %v4289 = vrot.slane %v4178, 4
  %v4290 = vrot.slane %v4180, 4
  %v4291 = vrot.slane %v4182, 4
  %v4292 = vrot.slane %v4184, 4
  %v4293 = vrot.slane %v4186, 4
  %v4294 = vrot.slane %v4188, 4
  %v4295 = vrot.slane %v4190, 4
  %v4296 = vrot.slane %v4192, 4
  %v4297 = vrot.slane %v4194, 4
  %v4298 = vrot.slane %v4196, 4
  %v4299 = vrot.slane %v4198, 4
  %v4300 = vrot.slane %v4200, 4
  %v4301 = vrot.slane %v4202, 4
  %v4302 = vrot.slane %v4204, 4
  %v4303 = vrot.slane %v4206, 4
  %v4304 = vrot.slane %v4208, 4
  %v4305 = vrot.slane %v4210, 4
  %v4306 = vrot.slane %v4212, 4
  %v4307 = vrot.slane %v4214, 4
  %v4308 = vrot.slane %v4216, 4
  %v4309 = vrot.slane %v4218, 4
  %v4310 = vrot.slane %v4220, 4
  %v4311 = vrot.slane %v4222, 4
  %v4312 = vrot.slane %v4224, 4
  %v4313 = vrot.slane %v4226, 4
  %v4314 = vrot.slane %v4228, 4
  %v4315 = vrot.slane %v4230, 4
  %v4316 = vrot.slane %v4232, 4
  %v4317 = vrot.slane %v4234, 4
  %v4318 = vrot.slane %v4236, 4
  %v4319 = vrot.slane %v4238, 4
  %v4320 = vrot.slane %v4240, 4
  %v4321 = vrot.slane %v4242, 4
  %v4322 = vrot.slane %v4244, 4
  %v4323 = vrot.slane %v4246, 4
  %v4324 = vrot.slane %v4248, 4
  %v4325 = vrot.slane %v4250, 4
  %v4326 = vrot.slane %v4252, 4
  %v4327 = vrot.slane %v4254, 4
  %v4328 = vrot.slane %v4256, 4
  %v4329 = vrot.slane %v4258, 4
  %v4330 = vrot.slane %v4260, 4
  %v4331 = vrot.slane %v4262, 4
  %v4332 = vrot.slane %v4264, 4
  %v4333 = vrot.slane %v4266, 4
  %v4334 = vrot.slane %v4268, 4
  %v4335 = vrot.slane %v4270, 4
  %v4336 = vrot.slane %v4272, 4
  %v4337 = vrot.slane %v4274, 4
  %v4338 = vrot.slane %v4276, 4
  %v4339 = vrot.slane %v4278, 4
  %v4340 = vrot.slane %v4280, 4
  %v4341 = vrot.slane %v4282, 4
  %v4342 = vrot.slane %v4284, 4
  %v4343 = vrot.slane %v4286, 4
  %v4344 = vrot.slane %v4288, 4
  %4401 = vrot.lane.b32.xlu0 %v2608, 94
  %v4402 = vpop.permute.xlu0 %4401
  %4403 = vrot.lane.b32.xlu0 %v2609, 94
  %v4404 = vpop.permute.xlu0 %4403
  %4405 = vrot.lane.b32.xlu0 %v2610, 94
  %v4406 = vpop.permute.xlu0 %4405
  %4407 = vrot.lane.b32.xlu0 %v2611, 94
  %v4408 = vpop.permute.xlu0 %4407
  %4409 = vrot.lane.b32.xlu0 %v2612, 94
  %v4410 = vpop.permute.xlu0 %4409
  %4411 = vrot.lane.b32.xlu0 %v2613, 94
  %v4412 = vpop.permute.xlu0 %4411
  %4413 = vrot.lane.b32.xlu0 %v2614, 94
  %v4414 = vpop.permute.xlu0 %4413
  %4415 = vrot.lane.b32.xlu0 %v2615, 94
  %v4416 = vpop.permute.xlu0 %4415
  %4417 = vrot.lane.b32.xlu0 %v2616, 94
  %v4418 = vpop.permute.xlu0 %4417
  %4419 = vrot.lane.b32.xlu0 %v2617, 94
  %v4420 = vpop.permute.xlu0 %4419
  %4421 = vrot.lane.b32.xlu0 %v2618, 94
  %v4422 = vpop.permute.xlu0 %4421
  %4423 = vrot.lane.b32.xlu0 %v2619, 94
  %v4424 = vpop.permute.xlu0 %4423
  %4425 = vrot.lane.b32.xlu0 %v2620, 94
  %v4426 = vpop.permute.xlu0 %4425
  %4427 = vrot.lane.b32.xlu0 %v2621, 94
  %v4428 = vpop.permute.xlu0 %4427
  %4429 = vrot.lane.b32.xlu0 %v2622, 94
  %v4430 = vpop.permute.xlu0 %4429
  %4431 = vrot.lane.b32.xlu0 %v2623, 94
  %v4432 = vpop.permute.xlu0 %4431
  %4433 = vrot.lane.b32.xlu0 %v2624, 94
  %v4434 = vpop.permute.xlu0 %4433
  %4435 = vrot.lane.b32.xlu0 %v2625, 94
  %v4436 = vpop.permute.xlu0 %4435
  %4437 = vrot.lane.b32.xlu0 %v2626, 94
  %v4438 = vpop.permute.xlu0 %4437
  %4439 = vrot.lane.b32.xlu0 %v2627, 94
  %v4440 = vpop.permute.xlu0 %4439
  %4441 = vrot.lane.b32.xlu0 %v2628, 94
  %v4442 = vpop.permute.xlu0 %4441
  %4443 = vrot.lane.b32.xlu0 %v2629, 94
  %v4444 = vpop.permute.xlu0 %4443
  %4445 = vrot.lane.b32.xlu0 %v2630, 94
  %v4446 = vpop.permute.xlu0 %4445
  %4447 = vrot.lane.b32.xlu0 %v2631, 94
  %v4448 = vpop.permute.xlu0 %4447
  %4449 = vrot.lane.b32.xlu0 %v2632, 94
  %v4450 = vpop.permute.xlu0 %4449
  %4451 = vrot.lane.b32.xlu0 %v2633, 94
  %v4452 = vpop.permute.xlu0 %4451
  %4453 = vrot.lane.b32.xlu0 %v2634, 94
  %v4454 = vpop.permute.xlu0 %4453
  %4455 = vrot.lane.b32.xlu0 %v2635, 94
  %v4456 = vpop.permute.xlu0 %4455
  %4457 = vrot.lane.b32.xlu0 %v2636, 94
  %v4458 = vpop.permute.xlu0 %4457
  %4459 = vrot.lane.b32.xlu0 %v2637, 94
  %v4460 = vpop.permute.xlu0 %4459
  %4461 = vrot.lane.b32.xlu0 %v2638, 94
  %v4462 = vpop.permute.xlu0 %4461
  %4463 = vrot.lane.b32.xlu0 %v2639, 94
  %v4464 = vpop.permute.xlu0 %4463
  %4465 = vrot.lane.b32.xlu0 %v2640, 94
  %v4466 = vpop.permute.xlu0 %4465
  %4467 = vrot.lane.b32.xlu0 %v2641, 94
  %v4468 = vpop.permute.xlu0 %4467
  %4469 = vrot.lane.b32.xlu0 %v2642, 94
  %v4470 = vpop.permute.xlu0 %4469
  %4471 = vrot.lane.b32.xlu0 %v2643, 94
  %v4472 = vpop.permute.xlu0 %4471
  %4473 = vrot.lane.b32.xlu0 %v2644, 94
  %v4474 = vpop.permute.xlu0 %4473
  %4475 = vrot.lane.b32.xlu0 %v2645, 94
  %v4476 = vpop.permute.xlu0 %4475
  %4477 = vrot.lane.b32.xlu0 %v2646, 94
  %v4478 = vpop.permute.xlu0 %4477
  %4479 = vrot.lane.b32.xlu0 %v2647, 94
  %v4480 = vpop.permute.xlu0 %4479
  %4481 = vrot.lane.b32.xlu0 %v2648, 94
  %v4482 = vpop.permute.xlu0 %4481
  %4483 = vrot.lane.b32.xlu0 %v2649, 94
  %v4484 = vpop.permute.xlu0 %4483
  %4485 = vrot.lane.b32.xlu0 %v2650, 94
  %v4486 = vpop.permute.xlu0 %4485
  %4487 = vrot.lane.b32.xlu0 %v2651, 94
  %v4488 = vpop.permute.xlu0 %4487
  %4489 = vrot.lane.b32.xlu0 %v2652, 94
  %v4490 = vpop.permute.xlu0 %4489
  %4491 = vrot.lane.b32.xlu0 %v2653, 94
  %v4492 = vpop.permute.xlu0 %4491
  %4493 = vrot.lane.b32.xlu0 %v2654, 94
  %v4494 = vpop.permute.xlu0 %4493
  %4495 = vrot.lane.b32.xlu0 %v2655, 94
  %v4496 = vpop.permute.xlu0 %4495
  %4497 = vrot.lane.b32.xlu0 %v2656, 94
  %v4498 = vpop.permute.xlu0 %4497
  %4499 = vrot.lane.b32.xlu0 %v2657, 94
  %v4500 = vpop.permute.xlu0 %4499
  %4501 = vrot.lane.b32.xlu0 %v2658, 94
  %v4502 = vpop.permute.xlu0 %4501
  %4503 = vrot.lane.b32.xlu0 %v2659, 94
  %v4504 = vpop.permute.xlu0 %4503
  %4505 = vrot.lane.b32.xlu0 %v2660, 94
  %v4506 = vpop.permute.xlu0 %4505
  %4507 = vrot.lane.b32.xlu0 %v2661, 94
  %v4508 = vpop.permute.xlu0 %4507
  %4509 = vrot.lane.b32.xlu0 %v2662, 94
  %v4510 = vpop.permute.xlu0 %4509
  %4511 = vrot.lane.b32.xlu0 %v2663, 94
  %v4512 = vpop.permute.xlu0 %4511
  %v4513 = vrot.slane %v4402, 4
  %v4514 = vrot.slane %v4404, 4
  %v4515 = vrot.slane %v4406, 4
  %v4516 = vrot.slane %v4408, 4
  %v4517 = vrot.slane %v4410, 4
  %v4518 = vrot.slane %v4412, 4
  %v4519 = vrot.slane %v4414, 4
  %v4520 = vrot.slane %v4416, 4
  %v4521 = vrot.slane %v4418, 4
  %v4522 = vrot.slane %v4420, 4
  %v4523 = vrot.slane %v4422, 4
  %v4524 = vrot.slane %v4424, 4
  %v4525 = vrot.slane %v4426, 4
  %v4526 = vrot.slane %v4428, 4
  %v4527 = vrot.slane %v4430, 4
  %v4528 = vrot.slane %v4432, 4
  %v4529 = vrot.slane %v4434, 4
  %v4530 = vrot.slane %v4436, 4
  %v4531 = vrot.slane %v4438, 4
  %v4532 = vrot.slane %v4440, 4
  %v4533 = vrot.slane %v4442, 4
  %v4534 = vrot.slane %v4444, 4
  %v4535 = vrot.slane %v4446, 4
  %v4536 = vrot.slane %v4448, 4
  %v4537 = vrot.slane %v4450, 4
  %v4538 = vrot.slane %v4452, 4
  %v4539 = vrot.slane %v4454, 4
  %v4540 = vrot.slane %v4456, 4
  %v4541 = vrot.slane %v4458, 4
  %v4542 = vrot.slane %v4460, 4
  %v4543 = vrot.slane %v4462, 4
  %v4544 = vrot.slane %v4464, 4
  %v4545 = vrot.slane %v4466, 4
  %v4546 = vrot.slane %v4468, 4
  %v4547 = vrot.slane %v4470, 4
  %v4548 = vrot.slane %v4472, 4
  %v4549 = vrot.slane %v4474, 4
  %v4550 = vrot.slane %v4476, 4
  %v4551 = vrot.slane %v4478, 4
  %v4552 = vrot.slane %v4480, 4
  %v4553 = vrot.slane %v4482, 4
  %v4554 = vrot.slane %v4484, 4
  %v4555 = vrot.slane %v4486, 4
  %v4556 = vrot.slane %v4488, 4
  %v4557 = vrot.slane %v4490, 4
  %v4558 = vrot.slane %v4492, 4
  %v4559 = vrot.slane %v4494, 4
  %v4560 = vrot.slane %v4496, 4
  %v4561 = vrot.slane %v4498, 4
  %v4562 = vrot.slane %v4500, 4
  %v4563 = vrot.slane %v4502, 4
  %v4564 = vrot.slane %v4504, 4
  %v4565 = vrot.slane %v4506, 4
  %v4566 = vrot.slane %v4508, 4
  %v4567 = vrot.slane %v4510, 4
  %v4568 = vrot.slane %v4512, 4
  %v4625 = vmax.f32 %v4289, %v4513
  %v4626 = vmax.f32 %v4290, %v4514
  %v4627 = vmax.f32 %v4291, %v4515
  %v4628 = vmax.f32 %v4292, %v4516
  %v4629 = vmax.f32 %v4293, %v4517
  %v4630 = vmax.f32 %v4294, %v4518
  %v4631 = vmax.f32 %v4295, %v4519
  %v4632 = vmax.f32 %v4296, %v4520
  %v4633 = vmax.f32 %v4297, %v4521
  %v4634 = vmax.f32 %v4298, %v4522
  %v4635 = vmax.f32 %v4299, %v4523
  %v4636 = vmax.f32 %v4300, %v4524
  %v4637 = vmax.f32 %v4301, %v4525
  %v4638 = vmax.f32 %v4302, %v4526
  %v4639 = vmax.f32 %v4303, %v4527
  %v4640 = vmax.f32 %v4304, %v4528
  %v4641 = vmax.f32 %v4305, %v4529
  %v4642 = vmax.f32 %v4306, %v4530
  %v4643 = vmax.f32 %v4307, %v4531
  %v4644 = vmax.f32 %v4308, %v4532
  %v4645 = vmax.f32 %v4309, %v4533
  %v4646 = vmax.f32 %v4310, %v4534
  %v4647 = vmax.f32 %v4311, %v4535
  %v4648 = vmax.f32 %v4312, %v4536
  %v4649 = vmax.f32 %v4313, %v4537
  %v4650 = vmax.f32 %v4314, %v4538
  %v4651 = vmax.f32 %v4315, %v4539
  %v4652 = vmax.f32 %v4316, %v4540
  %v4653 = vmax.f32 %v4317, %v4541
  %v4654 = vmax.f32 %v4318, %v4542
  %v4655 = vmax.f32 %v4319, %v4543
  %v4656 = vmax.f32 %v4320, %v4544
  %v4657 = vmax.f32 %v4321, %v4545
  %v4658 = vmax.f32 %v4322, %v4546
  %v4659 = vmax.f32 %v4323, %v4547
  %v4660 = vmax.f32 %v4324, %v4548
  %v4661 = vmax.f32 %v4325, %v4549
  %v4662 = vmax.f32 %v4326, %v4550
  %v4663 = vmax.f32 %v4327, %v4551
  %v4664 = vmax.f32 %v4328, %v4552
  %v4665 = vmax.f32 %v4329, %v4553
  %v4666 = vmax.f32 %v4330, %v4554
  %v4667 = vmax.f32 %v4331, %v4555
  %v4668 = vmax.f32 %v4332, %v4556
  %v4669 = vmax.f32 %v4333, %v4557
  %v4670 = vmax.f32 %v4334, %v4558
  %v4671 = vmax.f32 %v4335, %v4559
  %v4672 = vmax.f32 %v4336, %v4560
  %v4673 = vmax.f32 %v4337, %v4561
  %v4674 = vmax.f32 %v4338, %v4562
  %v4675 = vmax.f32 %v4339, %v4563
  %v4676 = vmax.f32 %v4340, %v4564
  %v4677 = vmax.f32 %v4341, %v4565
  %v4678 = vmax.f32 %v4342, %v4566
  %v4679 = vmax.f32 %v4343, %v4567
  %v4680 = vmax.f32 %v4344, %v4568
  %v4737 = vcombine.low %v2888, %v2889
  %v4738 = vcombine.low %v2890, %v2891
  %v4739 = vcombine.low %v2892, %v2893
  %v4740 = vcombine.low %v2895, %v2896
  %v4741 = vcombine.low %v2897, %v2898
  %v4742 = vcombine.low %v2899, %v2900
  %v4743 = vcombine.low %v2902, %v2903
  %v4744 = vcombine.low %v2904, %v2905
  %v4745 = vcombine.low %v2906, %v2907
  %v4746 = vcombine.low %v2909, %v2910
  %v4747 = vcombine.low %v2911, %v2912
  %v4748 = vcombine.low %v2913, %v2914
  %v4749 = vcombine.low %v2916, %v2917
  %v4750 = vcombine.low %v2918, %v2919
  %v4751 = vcombine.low %v2920, %v2921
  %v4752 = vcombine.low %v2923, %v2924
  %v4753 = vcombine.low %v2925, %v2926
  %v4754 = vcombine.low %v2927, %v2928
  %v4755 = vcombine.low %v2930, %v2931
  %v4756 = vcombine.low %v2932, %v2933
  %v4757 = vcombine.low %v2934, %v2935
  %v4758 = vcombine.low %v2937, %v2938
  %v4759 = vcombine.low %v2939, %v2940
  %v4760 = vcombine.low %v2941, %v2942
  %4785 = vrot.lane.b32.xlu0 %v4737, 122
  %v4786 = vpop.permute.xlu0 %4785
  %4787 = vrot.lane.b32.xlu0 %v4738, 122
  %v4788 = vpop.permute.xlu0 %4787
  %4789 = vrot.lane.b32.xlu0 %v4739, 122
  %v4790 = vpop.permute.xlu0 %4789
  %4791 = vrot.lane.b32.xlu0 %v2894, 122
  %v4792 = vpop.permute.xlu0 %4791
  %4793 = vrot.lane.b32.xlu0 %v4740, 122
  %v4794 = vpop.permute.xlu0 %4793
  %4795 = vrot.lane.b32.xlu0 %v4741, 122
  %v4796 = vpop.permute.xlu0 %4795
  %4797 = vrot.lane.b32.xlu0 %v4742, 122
  %v4798 = vpop.permute.xlu0 %4797
  %4799 = vrot.lane.b32.xlu0 %v2901, 122
  %v4800 = vpop.permute.xlu0 %4799
  %4801 = vrot.lane.b32.xlu0 %v4743, 122
  %v4802 = vpop.permute.xlu0 %4801
  %4803 = vrot.lane.b32.xlu0 %v4744, 122
  %v4804 = vpop.permute.xlu0 %4803
  %4805 = vrot.lane.b32.xlu0 %v4745, 122
  %v4806 = vpop.permute.xlu0 %4805
  %4807 = vrot.lane.b32.xlu0 %v2908, 122
  %v4808 = vpop.permute.xlu0 %4807
  %4809 = vrot.lane.b32.xlu0 %v4746, 122
  %v4810 = vpop.permute.xlu0 %4809
  %4811 = vrot.lane.b32.xlu0 %v4747, 122
  %v4812 = vpop.permute.xlu0 %4811
  %4813 = vrot.lane.b32.xlu0 %v4748, 122
  %v4814 = vpop.permute.xlu0 %4813
  %4815 = vrot.lane.b32.xlu0 %v2915, 122
  %v4816 = vpop.permute.xlu0 %4815
  %4817 = vrot.lane.b32.xlu0 %v4749, 122
  %v4818 = vpop.permute.xlu0 %4817
  %4819 = vrot.lane.b32.xlu0 %v4750, 122
  %v4820 = vpop.permute.xlu0 %4819
  %4821 = vrot.lane.b32.xlu0 %v4751, 122
  %v4822 = vpop.permute.xlu0 %4821
  %4823 = vrot.lane.b32.xlu0 %v2922, 122
  %v4824 = vpop.permute.xlu0 %4823
  %4825 = vrot.lane.b32.xlu0 %v4752, 122
  %v4826 = vpop.permute.xlu0 %4825
  %4827 = vrot.lane.b32.xlu0 %v4753, 122
  %v4828 = vpop.permute.xlu0 %4827
  %4829 = vrot.lane.b32.xlu0 %v4754, 122
  %v4830 = vpop.permute.xlu0 %4829
  %4831 = vrot.lane.b32.xlu0 %v2929, 122
  %v4832 = vpop.permute.xlu0 %4831
  %4833 = vrot.lane.b32.xlu0 %v4755, 122
  %v4834 = vpop.permute.xlu0 %4833
  %4835 = vrot.lane.b32.xlu0 %v4756, 122
  %v4836 = vpop.permute.xlu0 %4835
  %4837 = vrot.lane.b32.xlu0 %v4757, 122
  %v4838 = vpop.permute.xlu0 %4837
  %4839 = vrot.lane.b32.xlu0 %v2936, 122
  %v4840 = vpop.permute.xlu0 %4839
  %4841 = vrot.lane.b32.xlu0 %v4758, 122
  %v4842 = vpop.permute.xlu0 %4841
  %4843 = vrot.lane.b32.xlu0 %v4759, 122
  %v4844 = vpop.permute.xlu0 %4843
  %4845 = vrot.lane.b32.xlu0 %v4760, 122
  %v4846 = vpop.permute.xlu0 %4845
  %4847 = vrot.lane.b32.xlu0 %v2943, 122
  %v4848 = vpop.permute.xlu0 %4847
  %4881 = vrot.lane.b32.xlu0 %v4737, 116
  %v4882 = vpop.permute.xlu0 %4881
  %4883 = vrot.lane.b32.xlu0 %v4738, 116
  %v4884 = vpop.permute.xlu0 %4883
  %4885 = vrot.lane.b32.xlu0 %v4739, 116
  %v4886 = vpop.permute.xlu0 %4885
  %4887 = vrot.lane.b32.xlu0 %v2894, 116
  %v4888 = vpop.permute.xlu0 %4887
  %4889 = vrot.lane.b32.xlu0 %v4740, 116
  %v4890 = vpop.permute.xlu0 %4889
  %4891 = vrot.lane.b32.xlu0 %v4741, 116
  %v4892 = vpop.permute.xlu0 %4891
  %4893 = vrot.lane.b32.xlu0 %v4742, 116
  %v4894 = vpop.permute.xlu0 %4893
  %4895 = vrot.lane.b32.xlu0 %v2901, 116
  %v4896 = vpop.permute.xlu0 %4895
  %4897 = vrot.lane.b32.xlu0 %v4743, 116
  %v4898 = vpop.permute.xlu0 %4897
  %4899 = vrot.lane.b32.xlu0 %v4744, 116
  %v4900 = vpop.permute.xlu0 %4899
  %4901 = vrot.lane.b32.xlu0 %v4745, 116
  %v4902 = vpop.permute.xlu0 %4901
  %4903 = vrot.lane.b32.xlu0 %v2908, 116
  %v4904 = vpop.permute.xlu0 %4903
  %4905 = vrot.lane.b32.xlu0 %v4746, 116
  %v4906 = vpop.permute.xlu0 %4905
  %4907 = vrot.lane.b32.xlu0 %v4747, 116
  %v4908 = vpop.permute.xlu0 %4907
  %4909 = vrot.lane.b32.xlu0 %v4748, 116
  %v4910 = vpop.permute.xlu0 %4909
  %4911 = vrot.lane.b32.xlu0 %v2915, 116
  %v4912 = vpop.permute.xlu0 %4911
  %4913 = vrot.lane.b32.xlu0 %v4749, 116
  %v4914 = vpop.permute.xlu0 %4913
  %4915 = vrot.lane.b32.xlu0 %v4750, 116
  %v4916 = vpop.permute.xlu0 %4915
  %4917 = vrot.lane.b32.xlu0 %v4751, 116
  %v4918 = vpop.permute.xlu0 %4917
  %4919 = vrot.lane.b32.xlu0 %v2922, 116
  %v4920 = vpop.permute.xlu0 %4919
  %4921 = vrot.lane.b32.xlu0 %v4752, 116
  %v4922 = vpop.permute.xlu0 %4921
  %4923 = vrot.lane.b32.xlu0 %v4753, 116
  %v4924 = vpop.permute.xlu0 %4923
  %4925 = vrot.lane.b32.xlu0 %v4754, 116
  %v4926 = vpop.permute.xlu0 %4925
  %4927 = vrot.lane.b32.xlu0 %v2929, 116
  %v4928 = vpop.permute.xlu0 %4927
  %4929 = vrot.lane.b32.xlu0 %v4755, 116
  %v4930 = vpop.permute.xlu0 %4929
  %4931 = vrot.lane.b32.xlu0 %v4756, 116
  %v4932 = vpop.permute.xlu0 %4931
  %4933 = vrot.lane.b32.xlu0 %v4757, 116
  %v4934 = vpop.permute.xlu0 %4933
  %4935 = vrot.lane.b32.xlu0 %v2936, 116
  %v4936 = vpop.permute.xlu0 %4935
  %4937 = vrot.lane.b32.xlu0 %v4758, 116
  %v4938 = vpop.permute.xlu0 %4937
  %4939 = vrot.lane.b32.xlu0 %v4759, 116
  %v4940 = vpop.permute.xlu0 %4939
  %4941 = vrot.lane.b32.xlu0 %v4760, 116
  %v4942 = vpop.permute.xlu0 %4941
  %4943 = vrot.lane.b32.xlu0 %v2943, 116
  %v4944 = vpop.permute.xlu0 %4943
  %4977 = vrot.lane.b32.xlu0 %v4737, 110
  %v4978 = vpop.permute.xlu0 %4977
  %4979 = vrot.lane.b32.xlu0 %v4738, 110
  %v4980 = vpop.permute.xlu0 %4979
  %4981 = vrot.lane.b32.xlu0 %v4739, 110
  %v4982 = vpop.permute.xlu0 %4981
  %4983 = vrot.lane.b32.xlu0 %v2894, 110
  %v4984 = vpop.permute.xlu0 %4983
  %4985 = vrot.lane.b32.xlu0 %v4740, 110
  %v4986 = vpop.permute.xlu0 %4985
  %4987 = vrot.lane.b32.xlu0 %v4741, 110
  %v4988 = vpop.permute.xlu0 %4987
  %4989 = vrot.lane.b32.xlu0 %v4742, 110
  %v4990 = vpop.permute.xlu0 %4989
  %4991 = vrot.lane.b32.xlu0 %v2901, 110
  %v4992 = vpop.permute.xlu0 %4991
  %4993 = vrot.lane.b32.xlu0 %v4743, 110
  %v4994 = vpop.permute.xlu0 %4993
  %4995 = vrot.lane.b32.xlu0 %v4744, 110
  %v4996 = vpop.permute.xlu0 %4995
  %4997 = vrot.lane.b32.xlu0 %v4745, 110
  %v4998 = vpop.permute.xlu0 %4997
  %4999 = vrot.lane.b32.xlu0 %v2908, 110
  %v5000 = vpop.permute.xlu0 %4999
  %5001 = vrot.lane.b32.xlu0 %v4746, 110
  %v5002 = vpop.permute.xlu0 %5001
  %5003 = vrot.lane.b32.xlu0 %v4747, 110
  %v5004 = vpop.permute.xlu0 %5003
  %5005 = vrot.lane.b32.xlu0 %v4748, 110
  %v5006 = vpop.permute.xlu0 %5005
  %5007 = vrot.lane.b32.xlu0 %v2915, 110
  %v5008 = vpop.permute.xlu0 %5007
  %5009 = vrot.lane.b32.xlu0 %v4749, 110
  %v5010 = vpop.permute.xlu0 %5009
  %5011 = vrot.lane.b32.xlu0 %v4750, 110
  %v5012 = vpop.permute.xlu0 %5011
  %5013 = vrot.lane.b32.xlu0 %v4751, 110
  %v5014 = vpop.permute.xlu0 %5013
  %5015 = vrot.lane.b32.xlu0 %v2922, 110
  %v5016 = vpop.permute.xlu0 %5015
  %5017 = vrot.lane.b32.xlu0 %v4752, 110
  %v5018 = vpop.permute.xlu0 %5017
  %5019 = vrot.lane.b32.xlu0 %v4753, 110
  %v5020 = vpop.permute.xlu0 %5019
  %5021 = vrot.lane.b32.xlu0 %v4754, 110
  %v5022 = vpop.permute.xlu0 %5021
  %5023 = vrot.lane.b32.xlu0 %v2929, 110
  %v5024 = vpop.permute.xlu0 %5023
  %5025 = vrot.lane.b32.xlu0 %v4755, 110
  %v5026 = vpop.permute.xlu0 %5025
  %5027 = vrot.lane.b32.xlu0 %v4756, 110
  %v5028 = vpop.permute.xlu0 %5027
  %5029 = vrot.lane.b32.xlu0 %v4757, 110
  %v5030 = vpop.permute.xlu0 %5029
  %5031 = vrot.lane.b32.xlu0 %v2936, 110
  %v5032 = vpop.permute.xlu0 %5031
  %5033 = vrot.lane.b32.xlu0 %v4758, 110
  %v5034 = vpop.permute.xlu0 %5033
  %5035 = vrot.lane.b32.xlu0 %v4759, 110
  %v5036 = vpop.permute.xlu0 %5035
  %5037 = vrot.lane.b32.xlu0 %v4760, 110
  %v5038 = vpop.permute.xlu0 %5037
  %5039 = vrot.lane.b32.xlu0 %v2943, 110
  %v5040 = vpop.permute.xlu0 %5039
  %5073 = vrot.lane.b32.xlu0 %v4737, 104
  %v5074 = vpop.permute.xlu0 %5073
  %5075 = vrot.lane.b32.xlu0 %v4738, 104
  %v5076 = vpop.permute.xlu0 %5075
  %5077 = vrot.lane.b32.xlu0 %v4739, 104
  %v5078 = vpop.permute.xlu0 %5077
  %5079 = vrot.lane.b32.xlu0 %v2894, 104
  %v5080 = vpop.permute.xlu0 %5079
  %5081 = vrot.lane.b32.xlu0 %v4740, 104
  %v5082 = vpop.permute.xlu0 %5081
  %5083 = vrot.lane.b32.xlu0 %v4741, 104
  %v5084 = vpop.permute.xlu0 %5083
  %5085 = vrot.lane.b32.xlu0 %v4742, 104
  %v5086 = vpop.permute.xlu0 %5085
  %5087 = vrot.lane.b32.xlu0 %v2901, 104
  %v5088 = vpop.permute.xlu0 %5087
  %5089 = vrot.lane.b32.xlu0 %v4743, 104
  %v5090 = vpop.permute.xlu0 %5089
  %5091 = vrot.lane.b32.xlu0 %v4744, 104
  %v5092 = vpop.permute.xlu0 %5091
  %5093 = vrot.lane.b32.xlu0 %v4745, 104
  %v5094 = vpop.permute.xlu0 %5093
  %5095 = vrot.lane.b32.xlu0 %v2908, 104
  %v5096 = vpop.permute.xlu0 %5095
  %5097 = vrot.lane.b32.xlu0 %v4746, 104
  %v5098 = vpop.permute.xlu0 %5097
  %5099 = vrot.lane.b32.xlu0 %v4747, 104
  %v5100 = vpop.permute.xlu0 %5099
  %5101 = vrot.lane.b32.xlu0 %v4748, 104
  %v5102 = vpop.permute.xlu0 %5101
  %5103 = vrot.lane.b32.xlu0 %v2915, 104
  %v5104 = vpop.permute.xlu0 %5103
  %5105 = vrot.lane.b32.xlu0 %v4749, 104
  %v5106 = vpop.permute.xlu0 %5105
  %5107 = vrot.lane.b32.xlu0 %v4750, 104
  %v5108 = vpop.permute.xlu0 %5107
  %5109 = vrot.lane.b32.xlu0 %v4751, 104
  %v5110 = vpop.permute.xlu0 %5109
  %5111 = vrot.lane.b32.xlu0 %v2922, 104
  %v5112 = vpop.permute.xlu0 %5111
  %5113 = vrot.lane.b32.xlu0 %v4752, 104
  %v5114 = vpop.permute.xlu0 %5113
  %5115 = vrot.lane.b32.xlu0 %v4753, 104
  %v5116 = vpop.permute.xlu0 %5115
  %5117 = vrot.lane.b32.xlu0 %v4754, 104
  %v5118 = vpop.permute.xlu0 %5117
  %5119 = vrot.lane.b32.xlu0 %v2929, 104
  %v5120 = vpop.permute.xlu0 %5119
  %5121 = vrot.lane.b32.xlu0 %v4755, 104
  %v5122 = vpop.permute.xlu0 %5121
  %5123 = vrot.lane.b32.xlu0 %v4756, 104
  %v5124 = vpop.permute.xlu0 %5123
  %5125 = vrot.lane.b32.xlu0 %v4757, 104
  %v5126 = vpop.permute.xlu0 %5125
  %5127 = vrot.lane.b32.xlu0 %v2936, 104
  %v5128 = vpop.permute.xlu0 %5127
  %5129 = vrot.lane.b32.xlu0 %v4758, 104
  %v5130 = vpop.permute.xlu0 %5129
  %5131 = vrot.lane.b32.xlu0 %v4759, 104
  %v5132 = vpop.permute.xlu0 %5131
  %5133 = vrot.lane.b32.xlu0 %v4760, 104
  %v5134 = vpop.permute.xlu0 %5133
  %5135 = vrot.lane.b32.xlu0 %v2943, 104
  %v5136 = vpop.permute.xlu0 %5135
  %5169 = vrot.lane.b32.xlu0 %v4737, 98
  %v5170 = vpop.permute.xlu0 %5169
  %5171 = vrot.lane.b32.xlu0 %v4738, 98
  %v5172 = vpop.permute.xlu0 %5171
  %5173 = vrot.lane.b32.xlu0 %v4739, 98
  %v5174 = vpop.permute.xlu0 %5173
  %5175 = vrot.lane.b32.xlu0 %v2894, 98
  %v5176 = vpop.permute.xlu0 %5175
  %5177 = vrot.lane.b32.xlu0 %v4740, 98
  %v5178 = vpop.permute.xlu0 %5177
  %5179 = vrot.lane.b32.xlu0 %v4741, 98
  %v5180 = vpop.permute.xlu0 %5179
  %5181 = vrot.lane.b32.xlu0 %v4742, 98
  %v5182 = vpop.permute.xlu0 %5181
  %5183 = vrot.lane.b32.xlu0 %v2901, 98
  %v5184 = vpop.permute.xlu0 %5183
  %5185 = vrot.lane.b32.xlu0 %v4743, 98
  %v5186 = vpop.permute.xlu0 %5185
  %5187 = vrot.lane.b32.xlu0 %v4744, 98
  %v5188 = vpop.permute.xlu0 %5187
  %5189 = vrot.lane.b32.xlu0 %v4745, 98
  %v5190 = vpop.permute.xlu0 %5189
  %5191 = vrot.lane.b32.xlu0 %v2908, 98
  %v5192 = vpop.permute.xlu0 %5191
  %5193 = vrot.lane.b32.xlu0 %v4746, 98
  %v5194 = vpop.permute.xlu0 %5193
  %5195 = vrot.lane.b32.xlu0 %v4747, 98
  %v5196 = vpop.permute.xlu0 %5195
  %5197 = vrot.lane.b32.xlu0 %v4748, 98
  %v5198 = vpop.permute.xlu0 %5197
  %5199 = vrot.lane.b32.xlu0 %v2915, 98
  %v5200 = vpop.permute.xlu0 %5199
  %5201 = vrot.lane.b32.xlu0 %v4749, 98
  %v5202 = vpop.permute.xlu0 %5201
  %5203 = vrot.lane.b32.xlu0 %v4750, 98
  %v5204 = vpop.permute.xlu0 %5203
  %5205 = vrot.lane.b32.xlu0 %v4751, 98
  %v5206 = vpop.permute.xlu0 %5205
  %5207 = vrot.lane.b32.xlu0 %v2922, 98
  %v5208 = vpop.permute.xlu0 %5207
  %5209 = vrot.lane.b32.xlu0 %v4752, 98
  %v5210 = vpop.permute.xlu0 %5209
  %5211 = vrot.lane.b32.xlu0 %v4753, 98
  %v5212 = vpop.permute.xlu0 %5211
  %5213 = vrot.lane.b32.xlu0 %v4754, 98
  %v5214 = vpop.permute.xlu0 %5213
  %5215 = vrot.lane.b32.xlu0 %v2929, 98
  %v5216 = vpop.permute.xlu0 %5215
  %5217 = vrot.lane.b32.xlu0 %v4755, 98
  %v5218 = vpop.permute.xlu0 %5217
  %5219 = vrot.lane.b32.xlu0 %v4756, 98
  %v5220 = vpop.permute.xlu0 %5219
  %5221 = vrot.lane.b32.xlu0 %v4757, 98
  %v5222 = vpop.permute.xlu0 %5221
  %5223 = vrot.lane.b32.xlu0 %v2936, 98
  %v5224 = vpop.permute.xlu0 %5223
  %5225 = vrot.lane.b32.xlu0 %v4758, 98
  %v5226 = vpop.permute.xlu0 %5225
  %5227 = vrot.lane.b32.xlu0 %v4759, 98
  %v5228 = vpop.permute.xlu0 %5227
  %5229 = vrot.lane.b32.xlu0 %v4760, 98
  %v5230 = vpop.permute.xlu0 %5229
  %5231 = vrot.lane.b32.xlu0 %v2943, 98
  %v5232 = vpop.permute.xlu0 %5231
  %5265 = vrot.lane.b32.xlu0 %v4737, 92
  %v5266 = vpop.permute.xlu0 %5265
  %5267 = vrot.lane.b32.xlu0 %v4738, 92
  %v5268 = vpop.permute.xlu0 %5267
  %5269 = vrot.lane.b32.xlu0 %v4739, 92
  %v5270 = vpop.permute.xlu0 %5269
  %5271 = vrot.lane.b32.xlu0 %v2894, 92
  %v5272 = vpop.permute.xlu0 %5271
  %5273 = vrot.lane.b32.xlu0 %v4740, 92
  %v5274 = vpop.permute.xlu0 %5273
  %5275 = vrot.lane.b32.xlu0 %v4741, 92
  %v5276 = vpop.permute.xlu0 %5275
  %5277 = vrot.lane.b32.xlu0 %v4742, 92
  %v5278 = vpop.permute.xlu0 %5277
  %5279 = vrot.lane.b32.xlu0 %v2901, 92
  %v5280 = vpop.permute.xlu0 %5279
  %5281 = vrot.lane.b32.xlu0 %v4743, 92
  %v5282 = vpop.permute.xlu0 %5281
  %5283 = vrot.lane.b32.xlu0 %v4744, 92
  %v5284 = vpop.permute.xlu0 %5283
  %5285 = vrot.lane.b32.xlu0 %v4745, 92
  %v5286 = vpop.permute.xlu0 %5285
  %5287 = vrot.lane.b32.xlu0 %v2908, 92
  %v5288 = vpop.permute.xlu0 %5287
  %5289 = vrot.lane.b32.xlu0 %v4746, 92
  %v5290 = vpop.permute.xlu0 %5289
  %5291 = vrot.lane.b32.xlu0 %v4747, 92
  %v5292 = vpop.permute.xlu0 %5291
  %5293 = vrot.lane.b32.xlu0 %v4748, 92
  %v5294 = vpop.permute.xlu0 %5293
  %5295 = vrot.lane.b32.xlu0 %v2915, 92
  %v5296 = vpop.permute.xlu0 %5295
  %5297 = vrot.lane.b32.xlu0 %v4749, 92
  %v5298 = vpop.permute.xlu0 %5297
  %5299 = vrot.lane.b32.xlu0 %v4750, 92
  %v5300 = vpop.permute.xlu0 %5299
  %5301 = vrot.lane.b32.xlu0 %v4751, 92
  %v5302 = vpop.permute.xlu0 %5301
  %5303 = vrot.lane.b32.xlu0 %v2922, 92
  %v5304 = vpop.permute.xlu0 %5303
  %5305 = vrot.lane.b32.xlu0 %v4752, 92
  %v5306 = vpop.permute.xlu0 %5305
  %5307 = vrot.lane.b32.xlu0 %v4753, 92
  %v5308 = vpop.permute.xlu0 %5307
  %5309 = vrot.lane.b32.xlu0 %v4754, 92
  %v5310 = vpop.permute.xlu0 %5309
  %5311 = vrot.lane.b32.xlu0 %v2929, 92
  %v5312 = vpop.permute.xlu0 %5311
  %5313 = vrot.lane.b32.xlu0 %v4755, 92
  %v5314 = vpop.permute.xlu0 %5313
  %5315 = vrot.lane.b32.xlu0 %v4756, 92
  %v5316 = vpop.permute.xlu0 %5315
  %5317 = vrot.lane.b32.xlu0 %v4757, 92
  %v5318 = vpop.permute.xlu0 %5317
  %5319 = vrot.lane.b32.xlu0 %v2936, 92
  %v5320 = vpop.permute.xlu0 %5319
  %5321 = vrot.lane.b32.xlu0 %v4758, 92
  %v5322 = vpop.permute.xlu0 %5321
  %5323 = vrot.lane.b32.xlu0 %v4759, 92
  %v5324 = vpop.permute.xlu0 %5323
  %5325 = vrot.lane.b32.xlu0 %v4760, 92
  %v5326 = vpop.permute.xlu0 %5325
  %5327 = vrot.lane.b32.xlu0 %v2943, 92
  %v5328 = vpop.permute.xlu0 %5327
  %5361 = vrot.lane.b32.xlu0 %v4737, 86
  %v5362 = vpop.permute.xlu0 %5361
  %5363 = vrot.lane.b32.xlu0 %v4738, 86
  %v5364 = vpop.permute.xlu0 %5363
  %5365 = vrot.lane.b32.xlu0 %v4739, 86
  %v5366 = vpop.permute.xlu0 %5365
  %5367 = vrot.lane.b32.xlu0 %v2894, 86
  %v5368 = vpop.permute.xlu0 %5367
  %5369 = vrot.lane.b32.xlu0 %v4740, 86
  %v5370 = vpop.permute.xlu0 %5369
  %5371 = vrot.lane.b32.xlu0 %v4741, 86
  %v5372 = vpop.permute.xlu0 %5371
  %5373 = vrot.lane.b32.xlu0 %v4742, 86
  %v5374 = vpop.permute.xlu0 %5373
  %5375 = vrot.lane.b32.xlu0 %v2901, 86
  %v5376 = vpop.permute.xlu0 %5375
  %5377 = vrot.lane.b32.xlu0 %v4743, 86
  %v5378 = vpop.permute.xlu0 %5377
  %5379 = vrot.lane.b32.xlu0 %v4744, 86
  %v5380 = vpop.permute.xlu0 %5379
  %5381 = vrot.lane.b32.xlu0 %v4745, 86
  %v5382 = vpop.permute.xlu0 %5381
  %5383 = vrot.lane.b32.xlu0 %v2908, 86
  %v5384 = vpop.permute.xlu0 %5383
  %5385 = vrot.lane.b32.xlu0 %v4746, 86
  %v5386 = vpop.permute.xlu0 %5385
  %5387 = vrot.lane.b32.xlu0 %v4747, 86
  %v5388 = vpop.permute.xlu0 %5387
  %5389 = vrot.lane.b32.xlu0 %v4748, 86
  %v5390 = vpop.permute.xlu0 %5389
  %5391 = vrot.lane.b32.xlu0 %v2915, 86
  %v5392 = vpop.permute.xlu0 %5391
  %5393 = vrot.lane.b32.xlu0 %v4749, 86
  %v5394 = vpop.permute.xlu0 %5393
  %5395 = vrot.lane.b32.xlu0 %v4750, 86
  %v5396 = vpop.permute.xlu0 %5395
  %5397 = vrot.lane.b32.xlu0 %v4751, 86
  %v5398 = vpop.permute.xlu0 %5397
  %5399 = vrot.lane.b32.xlu0 %v2922, 86
  %v5400 = vpop.permute.xlu0 %5399
  %5401 = vrot.lane.b32.xlu0 %v4752, 86
  %v5402 = vpop.permute.xlu0 %5401
  %5403 = vrot.lane.b32.xlu0 %v4753, 86
  %v5404 = vpop.permute.xlu0 %5403
  %5405 = vrot.lane.b32.xlu0 %v4754, 86
  %v5406 = vpop.permute.xlu0 %5405
  %5407 = vrot.lane.b32.xlu0 %v2929, 86
  %v5408 = vpop.permute.xlu0 %5407
  %5409 = vrot.lane.b32.xlu0 %v4755, 86
  %v5410 = vpop.permute.xlu0 %5409
  %5411 = vrot.lane.b32.xlu0 %v4756, 86
  %v5412 = vpop.permute.xlu0 %5411
  %5413 = vrot.lane.b32.xlu0 %v4757, 86
  %v5414 = vpop.permute.xlu0 %5413
  %5415 = vrot.lane.b32.xlu0 %v2936, 86
  %v5416 = vpop.permute.xlu0 %5415
  %5417 = vrot.lane.b32.xlu0 %v4758, 86
  %v5418 = vpop.permute.xlu0 %5417
  %5419 = vrot.lane.b32.xlu0 %v4759, 86
  %v5420 = vpop.permute.xlu0 %5419
  %5421 = vrot.lane.b32.xlu0 %v4760, 86
  %v5422 = vpop.permute.xlu0 %5421
  %5423 = vrot.lane.b32.xlu0 %v2943, 86
  %v5424 = vpop.permute.xlu0 %5423
  %5457 = vrot.lane.b32.xlu0 %v4737, 80
  %v5458 = vpop.permute.xlu0 %5457
  %5459 = vrot.lane.b32.xlu0 %v4738, 80
  %v5460 = vpop.permute.xlu0 %5459
  %5461 = vrot.lane.b32.xlu0 %v4739, 80
  %v5462 = vpop.permute.xlu0 %5461
  %5463 = vrot.lane.b32.xlu0 %v2894, 80
  %v5464 = vpop.permute.xlu0 %5463
  %5465 = vrot.lane.b32.xlu0 %v4740, 80
  %v5466 = vpop.permute.xlu0 %5465
  %5467 = vrot.lane.b32.xlu0 %v4741, 80
  %v5468 = vpop.permute.xlu0 %5467
  %5469 = vrot.lane.b32.xlu0 %v4742, 80
  %v5470 = vpop.permute.xlu0 %5469
  %5471 = vrot.lane.b32.xlu0 %v2901, 80
  %v5472 = vpop.permute.xlu0 %5471
  %5473 = vrot.lane.b32.xlu0 %v4743, 80
  %v5474 = vpop.permute.xlu0 %5473
  %5475 = vrot.lane.b32.xlu0 %v4744, 80
  %v5476 = vpop.permute.xlu0 %5475
  %5477 = vrot.lane.b32.xlu0 %v4745, 80
  %v5478 = vpop.permute.xlu0 %5477
  %5479 = vrot.lane.b32.xlu0 %v2908, 80
  %v5480 = vpop.permute.xlu0 %5479
  %5481 = vrot.lane.b32.xlu0 %v4746, 80
  %v5482 = vpop.permute.xlu0 %5481
  %5483 = vrot.lane.b32.xlu0 %v4747, 80
  %v5484 = vpop.permute.xlu0 %5483
  %5485 = vrot.lane.b32.xlu0 %v4748, 80
  %v5486 = vpop.permute.xlu0 %5485
  %5487 = vrot.lane.b32.xlu0 %v2915, 80
  %v5488 = vpop.permute.xlu0 %5487
  %5489 = vrot.lane.b32.xlu0 %v4749, 80
  %v5490 = vpop.permute.xlu0 %5489
  %5491 = vrot.lane.b32.xlu0 %v4750, 80
  %v5492 = vpop.permute.xlu0 %5491
  %5493 = vrot.lane.b32.xlu0 %v4751, 80
  %v5494 = vpop.permute.xlu0 %5493
  %5495 = vrot.lane.b32.xlu0 %v2922, 80
  %v5496 = vpop.permute.xlu0 %5495
  %5497 = vrot.lane.b32.xlu0 %v4752, 80
  %v5498 = vpop.permute.xlu0 %5497
  %5499 = vrot.lane.b32.xlu0 %v4753, 80
  %v5500 = vpop.permute.xlu0 %5499
  %5501 = vrot.lane.b32.xlu0 %v4754, 80
  %v5502 = vpop.permute.xlu0 %5501
  %5503 = vrot.lane.b32.xlu0 %v2929, 80
  %v5504 = vpop.permute.xlu0 %5503
  %5505 = vrot.lane.b32.xlu0 %v4755, 80
  %v5506 = vpop.permute.xlu0 %5505
  %5507 = vrot.lane.b32.xlu0 %v4756, 80
  %v5508 = vpop.permute.xlu0 %5507
  %5509 = vrot.lane.b32.xlu0 %v4757, 80
  %v5510 = vpop.permute.xlu0 %5509
  %5511 = vrot.lane.b32.xlu0 %v2936, 80
  %v5512 = vpop.permute.xlu0 %5511
  %5513 = vrot.lane.b32.xlu0 %v4758, 80
  %v5514 = vpop.permute.xlu0 %5513
  %5515 = vrot.lane.b32.xlu0 %v4759, 80
  %v5516 = vpop.permute.xlu0 %5515
  %5517 = vrot.lane.b32.xlu0 %v4760, 80
  %v5518 = vpop.permute.xlu0 %5517
  %5519 = vrot.lane.b32.xlu0 %v2943, 80
  %v5520 = vpop.permute.xlu0 %5519
  %5553 = vrot.lane.b32.xlu0 %v4737, 74
  %v5554 = vpop.permute.xlu0 %5553
  %5555 = vrot.lane.b32.xlu0 %v4738, 74
  %v5556 = vpop.permute.xlu0 %5555
  %5557 = vrot.lane.b32.xlu0 %v4739, 74
  %v5558 = vpop.permute.xlu0 %5557
  %5559 = vrot.lane.b32.xlu0 %v2894, 74
  %v5560 = vpop.permute.xlu0 %5559
  %5561 = vrot.lane.b32.xlu0 %v4740, 74
  %v5562 = vpop.permute.xlu0 %5561
  %5563 = vrot.lane.b32.xlu0 %v4741, 74
  %v5564 = vpop.permute.xlu0 %5563
  %5565 = vrot.lane.b32.xlu0 %v4742, 74
  %v5566 = vpop.permute.xlu0 %5565
  %5567 = vrot.lane.b32.xlu0 %v2901, 74
  %v5568 = vpop.permute.xlu0 %5567
  %5569 = vrot.lane.b32.xlu0 %v4743, 74
  %v5570 = vpop.permute.xlu0 %5569
  %5571 = vrot.lane.b32.xlu0 %v4744, 74
  %v5572 = vpop.permute.xlu0 %5571
  %5573 = vrot.lane.b32.xlu0 %v4745, 74
  %v5574 = vpop.permute.xlu0 %5573
  %5575 = vrot.lane.b32.xlu0 %v2908, 74
  %v5576 = vpop.permute.xlu0 %5575
  %5577 = vrot.lane.b32.xlu0 %v4746, 74
  %v5578 = vpop.permute.xlu0 %5577
  %5579 = vrot.lane.b32.xlu0 %v4747, 74
  %v5580 = vpop.permute.xlu0 %5579
  %5581 = vrot.lane.b32.xlu0 %v4748, 74
  %v5582 = vpop.permute.xlu0 %5581
  %5583 = vrot.lane.b32.xlu0 %v2915, 74
  %v5584 = vpop.permute.xlu0 %5583
  %5585 = vrot.lane.b32.xlu0 %v4749, 74
  %v5586 = vpop.permute.xlu0 %5585
  %5587 = vrot.lane.b32.xlu0 %v4750, 74
  %v5588 = vpop.permute.xlu0 %5587
  %5589 = vrot.lane.b32.xlu0 %v4751, 74
  %v5590 = vpop.permute.xlu0 %5589
  %5591 = vrot.lane.b32.xlu0 %v2922, 74
  %v5592 = vpop.permute.xlu0 %5591
  %5593 = vrot.lane.b32.xlu0 %v4752, 74
  %v5594 = vpop.permute.xlu0 %5593
  %5595 = vrot.lane.b32.xlu0 %v4753, 74
  %v5596 = vpop.permute.xlu0 %5595
  %5597 = vrot.lane.b32.xlu0 %v4754, 74
  %v5598 = vpop.permute.xlu0 %5597
  %5599 = vrot.lane.b32.xlu0 %v2929, 74
  %v5600 = vpop.permute.xlu0 %5599
  %5601 = vrot.lane.b32.xlu0 %v4755, 74
  %v5602 = vpop.permute.xlu0 %5601
  %5603 = vrot.lane.b32.xlu0 %v4756, 74
  %v5604 = vpop.permute.xlu0 %5603
  %5605 = vrot.lane.b32.xlu0 %v4757, 74
  %v5606 = vpop.permute.xlu0 %5605
  %5607 = vrot.lane.b32.xlu0 %v2936, 74
  %v5608 = vpop.permute.xlu0 %5607
  %5609 = vrot.lane.b32.xlu0 %v4758, 74
  %v5610 = vpop.permute.xlu0 %5609
  %5611 = vrot.lane.b32.xlu0 %v4759, 74
  %v5612 = vpop.permute.xlu0 %5611
  %5613 = vrot.lane.b32.xlu0 %v4760, 74
  %v5614 = vpop.permute.xlu0 %5613
  %5615 = vrot.lane.b32.xlu0 %v2943, 74
  %v5616 = vpop.permute.xlu0 %5615
  %v5705 = vcombine.low %v3113, %v3114
  %v5706 = vcombine.low %v3115, %v3116
  %v5707 = vcombine.low %v3117, %v3118
  %v5708 = vcombine.low %v3120, %v3121
  %v5709 = vcombine.low %v3122, %v3123
  %v5710 = vcombine.low %v3124, %v3125
  %v5711 = vcombine.low %v3127, %v3128
  %v5712 = vcombine.low %v3129, %v3130
  %v5713 = vcombine.low %v3131, %v3132
  %v5714 = vcombine.low %v3134, %v3135
  %v5715 = vcombine.low %v3136, %v3137
  %v5716 = vcombine.low %v3138, %v3139
  %v5717 = vcombine.low %v3141, %v3142
  %v5718 = vcombine.low %v3143, %v3144
  %v5719 = vcombine.low %v3145, %v3146
  %v5720 = vcombine.low %v3148, %v3149
  %v5721 = vcombine.low %v3150, %v3151
  %v5722 = vcombine.low %v3152, %v3153
  %v5723 = vcombine.low %v3155, %v3156
  %v5724 = vcombine.low %v3157, %v3158
  %v5725 = vcombine.low %v3159, %v3160
  %v5726 = vcombine.low %v3162, %v3163
  %v5727 = vcombine.low %v3164, %v3165
  %v5728 = vcombine.low %v3166, %v3167
  %5729 = vrot.lane.b32.xlu0 %v5705, 68
  %v5730 = vpop.permute.xlu0 %5729
  %5731 = vrot.lane.b32.xlu0 %v5706, 68
  %v5732 = vpop.permute.xlu0 %5731
  %5733 = vrot.lane.b32.xlu0 %v5707, 68
  %v5734 = vpop.permute.xlu0 %5733
  %5735 = vrot.lane.b32.xlu0 %v3119, 68
  %v5736 = vpop.permute.xlu0 %5735
  %5737 = vrot.lane.b32.xlu0 %v5708, 68
  %v5738 = vpop.permute.xlu0 %5737
  %5739 = vrot.lane.b32.xlu0 %v5709, 68
  %v5740 = vpop.permute.xlu0 %5739
  %5741 = vrot.lane.b32.xlu0 %v5710, 68
  %v5742 = vpop.permute.xlu0 %5741
  %5743 = vrot.lane.b32.xlu0 %v3126, 68
  %v5744 = vpop.permute.xlu0 %5743
  %5745 = vrot.lane.b32.xlu0 %v5711, 68
  %v5746 = vpop.permute.xlu0 %5745
  %5747 = vrot.lane.b32.xlu0 %v5712, 68
  %v5748 = vpop.permute.xlu0 %5747
  %5749 = vrot.lane.b32.xlu0 %v5713, 68
  %v5750 = vpop.permute.xlu0 %5749
  %5751 = vrot.lane.b32.xlu0 %v3133, 68
  %v5752 = vpop.permute.xlu0 %5751
  %5753 = vrot.lane.b32.xlu0 %v5714, 68
  %v5754 = vpop.permute.xlu0 %5753
  %5755 = vrot.lane.b32.xlu0 %v5715, 68
  %v5756 = vpop.permute.xlu0 %5755
  %5757 = vrot.lane.b32.xlu0 %v5716, 68
  %v5758 = vpop.permute.xlu0 %5757
  %5759 = vrot.lane.b32.xlu0 %v3140, 68
  %v5760 = vpop.permute.xlu0 %5759
  %5761 = vrot.lane.b32.xlu0 %v5717, 68
  %v5762 = vpop.permute.xlu0 %5761
  %5763 = vrot.lane.b32.xlu0 %v5718, 68
  %v5764 = vpop.permute.xlu0 %5763
  %5765 = vrot.lane.b32.xlu0 %v5719, 68
  %v5766 = vpop.permute.xlu0 %5765
  %5767 = vrot.lane.b32.xlu0 %v3147, 68
  %v5768 = vpop.permute.xlu0 %5767
  %5769 = vrot.lane.b32.xlu0 %v5720, 68
  %v5770 = vpop.permute.xlu0 %5769
  %5771 = vrot.lane.b32.xlu0 %v5721, 68
  %v5772 = vpop.permute.xlu0 %5771
  %5773 = vrot.lane.b32.xlu0 %v5722, 68
  %v5774 = vpop.permute.xlu0 %5773
  %5775 = vrot.lane.b32.xlu0 %v3154, 68
  %v5776 = vpop.permute.xlu0 %5775
  %5777 = vrot.lane.b32.xlu0 %v5723, 68
  %v5778 = vpop.permute.xlu0 %5777
  %5779 = vrot.lane.b32.xlu0 %v5724, 68
  %v5780 = vpop.permute.xlu0 %5779
  %5781 = vrot.lane.b32.xlu0 %v5725, 68
  %v5782 = vpop.permute.xlu0 %5781
  %5783 = vrot.lane.b32.xlu0 %v3161, 68
  %v5784 = vpop.permute.xlu0 %5783
  %5785 = vrot.lane.b32.xlu0 %v5726, 68
  %v5786 = vpop.permute.xlu0 %5785
  %5787 = vrot.lane.b32.xlu0 %v5727, 68
  %v5788 = vpop.permute.xlu0 %5787
  %5789 = vrot.lane.b32.xlu0 %v5728, 68
  %v5790 = vpop.permute.xlu0 %5789
  %5791 = vrot.lane.b32.xlu0 %v3168, 68
  %v5792 = vpop.permute.xlu0 %5791
  %v5881 = vcombine.low %v3617, %v3618
  %v5882 = vcombine.low %v3619, %v3620
  %v5883 = vcombine.low %v3621, %v3622
  %v5884 = vcombine.low %v3624, %v3625
  %v5885 = vcombine.low %v3626, %v3627
  %v5886 = vcombine.low %v3628, %v3629
  %v5887 = vcombine.low %v3631, %v3632
  %v5888 = vcombine.low %v3633, %v3634
  %v5889 = vcombine.low %v3635, %v3636
  %v5890 = vcombine.low %v3638, %v3639
  %v5891 = vcombine.low %v3640, %v3641
  %v5892 = vcombine.low %v3642, %v3643
  %v5893 = vcombine.low %v3645, %v3646
  %v5894 = vcombine.low %v3647, %v3648
  %v5895 = vcombine.low %v3649, %v3650
  %v5896 = vcombine.low %v3652, %v3653
  %v5897 = vcombine.low %v3654, %v3655
  %v5898 = vcombine.low %v3656, %v3657
  %v5899 = vcombine.low %v3659, %v3660
  %v5900 = vcombine.low %v3661, %v3662
  %v5901 = vcombine.low %v3663, %v3664
  %v5902 = vcombine.low %v3666, %v3667
  %v5903 = vcombine.low %v3668, %v3669
  %v5904 = vcombine.low %v3670, %v3671
  %5905 = vrot.lane.b32.xlu0 %v5881, 66
  %v5906 = vpop.permute.xlu0 %5905
  %5907 = vrot.lane.b32.xlu0 %v5882, 66
  %v5908 = vpop.permute.xlu0 %5907
  %5909 = vrot.lane.b32.xlu0 %v5883, 66
  %v5910 = vpop.permute.xlu0 %5909
  %5911 = vrot.lane.b32.xlu0 %v3623, 66
  %v5912 = vpop.permute.xlu0 %5911
  %5913 = vrot.lane.b32.xlu0 %v5884, 66
  %v5914 = vpop.permute.xlu0 %5913
  %5915 = vrot.lane.b32.xlu0 %v5885, 66
  %v5916 = vpop.permute.xlu0 %5915
  %5917 = vrot.lane.b32.xlu0 %v5886, 66
  %v5918 = vpop.permute.xlu0 %5917
  %5919 = vrot.lane.b32.xlu0 %v3630, 66
  %v5920 = vpop.permute.xlu0 %5919
  %5921 = vrot.lane.b32.xlu0 %v5887, 66
  %v5922 = vpop.permute.xlu0 %5921
  %5923 = vrot.lane.b32.xlu0 %v5888, 66
  %v5924 = vpop.permute.xlu0 %5923
  %5925 = vrot.lane.b32.xlu0 %v5889, 66
  %v5926 = vpop.permute.xlu0 %5925
  %5927 = vrot.lane.b32.xlu0 %v3637, 66
  %v5928 = vpop.permute.xlu0 %5927
  %5929 = vrot.lane.b32.xlu0 %v5890, 66
  %v5930 = vpop.permute.xlu0 %5929
  %5931 = vrot.lane.b32.xlu0 %v5891, 66
  %v5932 = vpop.permute.xlu0 %5931
  %5933 = vrot.lane.b32.xlu0 %v5892, 66
  %v5934 = vpop.permute.xlu0 %5933
  %5935 = vrot.lane.b32.xlu0 %v3644, 66
  %v5936 = vpop.permute.xlu0 %5935
  %5937 = vrot.lane.b32.xlu0 %v5893, 66
  %v5938 = vpop.permute.xlu0 %5937
  %5939 = vrot.lane.b32.xlu0 %v5894, 66
  %v5940 = vpop.permute.xlu0 %5939
  %5941 = vrot.lane.b32.xlu0 %v5895, 66
  %v5942 = vpop.permute.xlu0 %5941
  %5943 = vrot.lane.b32.xlu0 %v3651, 66
  %v5944 = vpop.permute.xlu0 %5943
  %5945 = vrot.lane.b32.xlu0 %v5896, 66
  %v5946 = vpop.permute.xlu0 %5945
  %5947 = vrot.lane.b32.xlu0 %v5897, 66
  %v5948 = vpop.permute.xlu0 %5947
  %5949 = vrot.lane.b32.xlu0 %v5898, 66
  %v5950 = vpop.permute.xlu0 %5949
  %5951 = vrot.lane.b32.xlu0 %v3658, 66
  %v5952 = vpop.permute.xlu0 %5951
  %5953 = vrot.lane.b32.xlu0 %v5899, 66
  %v5954 = vpop.permute.xlu0 %5953
  %5955 = vrot.lane.b32.xlu0 %v5900, 66
  %v5956 = vpop.permute.xlu0 %5955
  %5957 = vrot.lane.b32.xlu0 %v5901, 66
  %v5958 = vpop.permute.xlu0 %5957
  %5959 = vrot.lane.b32.xlu0 %v3665, 66
  %v5960 = vpop.permute.xlu0 %5959
  %5961 = vrot.lane.b32.xlu0 %v5902, 66
  %v5962 = vpop.permute.xlu0 %5961
  %5963 = vrot.lane.b32.xlu0 %v5903, 66
  %v5964 = vpop.permute.xlu0 %5963
  %5965 = vrot.lane.b32.xlu0 %v5904, 66
  %v5966 = vpop.permute.xlu0 %5965
  %5967 = vrot.lane.b32.xlu0 %v3672, 66
  %v5968 = vpop.permute.xlu0 %5967
  %v6057 = vcombine.low %v4121, %v4122
  %v6058 = vcombine.low %v4123, %v4124
  %v6059 = vcombine.low %v4125, %v4126
  %v6060 = vcombine.low %v4128, %v4129
  %v6061 = vcombine.low %v4130, %v4131
  %v6062 = vcombine.low %v4132, %v4133
  %v6063 = vcombine.low %v4135, %v4136
  %v6064 = vcombine.low %v4137, %v4138
  %v6065 = vcombine.low %v4139, %v4140
  %v6066 = vcombine.low %v4142, %v4143
  %v6067 = vcombine.low %v4144, %v4145
  %v6068 = vcombine.low %v4146, %v4147
  %v6069 = vcombine.low %v4149, %v4150
  %v6070 = vcombine.low %v4151, %v4152
  %v6071 = vcombine.low %v4153, %v4154
  %v6072 = vcombine.low %v4156, %v4157
  %v6073 = vcombine.low %v4158, %v4159
  %v6074 = vcombine.low %v4160, %v4161
  %v6075 = vcombine.low %v4163, %v4164
  %v6076 = vcombine.low %v4165, %v4166
  %v6077 = vcombine.low %v4167, %v4168
  %v6078 = vcombine.low %v4170, %v4171
  %v6079 = vcombine.low %v4172, %v4173
  %v6080 = vcombine.low %v4174, %v4175
  %6081 = vrot.lane.b32.xlu0 %v6057, 72
  %v6082 = vpop.permute.xlu0 %6081
  %6083 = vrot.lane.b32.xlu0 %v6058, 72
  %v6084 = vpop.permute.xlu0 %6083
  %6085 = vrot.lane.b32.xlu0 %v6059, 72
  %v6086 = vpop.permute.xlu0 %6085
  %6087 = vrot.lane.b32.xlu0 %v4127, 72
  %v6088 = vpop.permute.xlu0 %6087
  %6089 = vrot.lane.b32.xlu0 %v6060, 72
  %v6090 = vpop.permute.xlu0 %6089
  %6091 = vrot.lane.b32.xlu0 %v6061, 72
  %v6092 = vpop.permute.xlu0 %6091
  %6093 = vrot.lane.b32.xlu0 %v6062, 72
  %v6094 = vpop.permute.xlu0 %6093
  %6095 = vrot.lane.b32.xlu0 %v4134, 72
  %v6096 = vpop.permute.xlu0 %6095
  %6097 = vrot.lane.b32.xlu0 %v6063, 72
  %v6098 = vpop.permute.xlu0 %6097
  %6099 = vrot.lane.b32.xlu0 %v6064, 72
  %v6100 = vpop.permute.xlu0 %6099
  %6101 = vrot.lane.b32.xlu0 %v6065, 72
  %v6102 = vpop.permute.xlu0 %6101
  %6103 = vrot.lane.b32.xlu0 %v4141, 72
  %v6104 = vpop.permute.xlu0 %6103
  %6105 = vrot.lane.b32.xlu0 %v6066, 72
  %v6106 = vpop.permute.xlu0 %6105
  %6107 = vrot.lane.b32.xlu0 %v6067, 72
  %v6108 = vpop.permute.xlu0 %6107
  %6109 = vrot.lane.b32.xlu0 %v6068, 72
  %v6110 = vpop.permute.xlu0 %6109
  %6111 = vrot.lane.b32.xlu0 %v4148, 72
  %v6112 = vpop.permute.xlu0 %6111
  %6113 = vrot.lane.b32.xlu0 %v6069, 72
  %v6114 = vpop.permute.xlu0 %6113
  %6115 = vrot.lane.b32.xlu0 %v6070, 72
  %v6116 = vpop.permute.xlu0 %6115
  %6117 = vrot.lane.b32.xlu0 %v6071, 72
  %v6118 = vpop.permute.xlu0 %6117
  %6119 = vrot.lane.b32.xlu0 %v4155, 72
  %v6120 = vpop.permute.xlu0 %6119
  %6121 = vrot.lane.b32.xlu0 %v6072, 72
  %v6122 = vpop.permute.xlu0 %6121
  %6123 = vrot.lane.b32.xlu0 %v6073, 72
  %v6124 = vpop.permute.xlu0 %6123
  %6125 = vrot.lane.b32.xlu0 %v6074, 72
  %v6126 = vpop.permute.xlu0 %6125
  %6127 = vrot.lane.b32.xlu0 %v4162, 72
  %v6128 = vpop.permute.xlu0 %6127
  %6129 = vrot.lane.b32.xlu0 %v6075, 72
  %v6130 = vpop.permute.xlu0 %6129
  %6131 = vrot.lane.b32.xlu0 %v6076, 72
  %v6132 = vpop.permute.xlu0 %6131
  %6133 = vrot.lane.b32.xlu0 %v6077, 72
  %v6134 = vpop.permute.xlu0 %6133
  %6135 = vrot.lane.b32.xlu0 %v4169, 72
  %v6136 = vpop.permute.xlu0 %6135
  %6137 = vrot.lane.b32.xlu0 %v6078, 72
  %v6138 = vpop.permute.xlu0 %6137
  %6139 = vrot.lane.b32.xlu0 %v6079, 72
  %v6140 = vpop.permute.xlu0 %6139
  %6141 = vrot.lane.b32.xlu0 %v6080, 72
  %v6142 = vpop.permute.xlu0 %6141
  %6143 = vrot.lane.b32.xlu0 %v4176, 72
  %v6144 = vpop.permute.xlu0 %6143
  %v6233 = vcombine.low %v4625, %v4626
  %v6234 = vcombine.low %v4627, %v4628
  %v6235 = vcombine.low %v4629, %v4630
  %v6236 = vcombine.low %v4632, %v4633
  %v6237 = vcombine.low %v4634, %v4635
  %v6238 = vcombine.low %v4636, %v4637
  %v6239 = vcombine.low %v4639, %v4640
  %v6240 = vcombine.low %v4641, %v4642
  %v6241 = vcombine.low %v4643, %v4644
  %v6242 = vcombine.low %v4646, %v4647
  %v6243 = vcombine.low %v4648, %v4649
  %v6244 = vcombine.low %v4650, %v4651
  %v6245 = vcombine.low %v4653, %v4654
  %v6246 = vcombine.low %v4655, %v4656
  %v6247 = vcombine.low %v4657, %v4658
  %v6248 = vcombine.low %v4660, %v4661
  %v6249 = vcombine.low %v4662, %v4663
  %v6250 = vcombine.low %v4664, %v4665
  %v6251 = vcombine.low %v4667, %v4668
  %v6252 = vcombine.low %v4669, %v4670
  %v6253 = vcombine.low %v4671, %v4672
  %v6254 = vcombine.low %v4674, %v4675
  %v6255 = vcombine.low %v4676, %v4677
  %v6256 = vcombine.low %v4678, %v4679
  %6257 = vrot.lane.b32.xlu0 %v6233, 78
  %v6258 = vpop.permute.xlu0 %6257
  %6259 = vrot.lane.b32.xlu0 %v6234, 78
  %v6260 = vpop.permute.xlu0 %6259
  %6261 = vrot.lane.b32.xlu0 %v6235, 78
  %v6262 = vpop.permute.xlu0 %6261
  %6263 = vrot.lane.b32.xlu0 %v4631, 78
  %v6264 = vpop.permute.xlu0 %6263
  %6265 = vrot.lane.b32.xlu0 %v6236, 78
  %v6266 = vpop.permute.xlu0 %6265
  %6267 = vrot.lane.b32.xlu0 %v6237, 78
  %v6268 = vpop.permute.xlu0 %6267
  %6269 = vrot.lane.b32.xlu0 %v6238, 78
  %v6270 = vpop.permute.xlu0 %6269
  %6271 = vrot.lane.b32.xlu0 %v4638, 78
  %v6272 = vpop.permute.xlu0 %6271
  %6273 = vrot.lane.b32.xlu0 %v6239, 78
  %v6274 = vpop.permute.xlu0 %6273
  %6275 = vrot.lane.b32.xlu0 %v6240, 78
  %v6276 = vpop.permute.xlu0 %6275
  %6277 = vrot.lane.b32.xlu0 %v6241, 78
  %v6278 = vpop.permute.xlu0 %6277
  %6279 = vrot.lane.b32.xlu0 %v4645, 78
  %v6280 = vpop.permute.xlu0 %6279
  %6281 = vrot.lane.b32.xlu0 %v6242, 78
  %v6282 = vpop.permute.xlu0 %6281
  %6283 = vrot.lane.b32.xlu0 %v6243, 78
  %v6284 = vpop.permute.xlu0 %6283
  %6285 = vrot.lane.b32.xlu0 %v6244, 78
  %v6286 = vpop.permute.xlu0 %6285
  %6287 = vrot.lane.b32.xlu0 %v4652, 78
  %v6288 = vpop.permute.xlu0 %6287
  %6289 = vrot.lane.b32.xlu0 %v6245, 78
  %v6290 = vpop.permute.xlu0 %6289
  %6291 = vrot.lane.b32.xlu0 %v6246, 78
  %v6292 = vpop.permute.xlu0 %6291
  %6293 = vrot.lane.b32.xlu0 %v6247, 78
  %v6294 = vpop.permute.xlu0 %6293
  %6295 = vrot.lane.b32.xlu0 %v4659, 78
  %v6296 = vpop.permute.xlu0 %6295
  %6297 = vrot.lane.b32.xlu0 %v6248, 78
  %v6298 = vpop.permute.xlu0 %6297
  %6299 = vrot.lane.b32.xlu0 %v6249, 78
  %v6300 = vpop.permute.xlu0 %6299
  %6301 = vrot.lane.b32.xlu0 %v6250, 78
  %v6302 = vpop.permute.xlu0 %6301
  %6303 = vrot.lane.b32.xlu0 %v4666, 78
  %v6304 = vpop.permute.xlu0 %6303
  %6305 = vrot.lane.b32.xlu0 %v6251, 78
  %v6306 = vpop.permute.xlu0 %6305
  %6307 = vrot.lane.b32.xlu0 %v6252, 78
  %v6308 = vpop.permute.xlu0 %6307
  %6309 = vrot.lane.b32.xlu0 %v6253, 78
  %v6310 = vpop.permute.xlu0 %6309
  %6311 = vrot.lane.b32.xlu0 %v4673, 78
  %v6312 = vpop.permute.xlu0 %6311
  %6313 = vrot.lane.b32.xlu0 %v6254, 78
  %v6314 = vpop.permute.xlu0 %6313
  %6315 = vrot.lane.b32.xlu0 %v6255, 78
  %v6316 = vpop.permute.xlu0 %6315
  %6317 = vrot.lane.b32.xlu0 %v6256, 78
  %v6318 = vpop.permute.xlu0 %6317
  %6319 = vrot.lane.b32.xlu0 %v4680, 78
  %v6320 = vpop.permute.xlu0 %6319
  %vm6353 = vcmask 48128
  %v6354 = vsel %vm6353, %v4737, %v4786
  %v6355 = vsel %vm6353, %v4738, %v4788
  %v6356 = vsel %vm6353, %v4739, %v4790
  %v6357 = vsel %vm6353, %v2894, %v4792
  %v6358 = vsel %vm6353, %v4740, %v4794
  %v6359 = vsel %vm6353, %v4741, %v4796
  %v6360 = vsel %vm6353, %v4742, %v4798
  %v6361 = vsel %vm6353, %v2901, %v4800
  %v6362 = vsel %vm6353, %v4743, %v4802
  %v6363 = vsel %vm6353, %v4744, %v4804
  %v6364 = vsel %vm6353, %v4745, %v4806
  %v6365 = vsel %vm6353, %v2908, %v4808
  %v6366 = vsel %vm6353, %v4746, %v4810
  %v6367 = vsel %vm6353, %v4747, %v4812
  %v6368 = vsel %vm6353, %v4748, %v4814
  %v6369 = vsel %vm6353, %v2915, %v4816
  %v6370 = vsel %vm6353, %v4749, %v4818
  %v6371 = vsel %vm6353, %v4750, %v4820
  %v6372 = vsel %vm6353, %v4751, %v4822
  %v6373 = vsel %vm6353, %v2922, %v4824
  %v6374 = vsel %vm6353, %v4752, %v4826
  %v6375 = vsel %vm6353, %v4753, %v4828
  %v6376 = vsel %vm6353, %v4754, %v4830
  %v6377 = vsel %vm6353, %v2929, %v4832
  %v6378 = vsel %vm6353, %v4755, %v4834
  %v6379 = vsel %vm6353, %v4756, %v4836
  %v6380 = vsel %vm6353, %v4757, %v4838
  %v6381 = vsel %vm6353, %v2936, %v4840
  %v6382 = vsel %vm6353, %v4758, %v4842
  %v6383 = vsel %vm6353, %v4759, %v4844
  %v6384 = vsel %vm6353, %v4760, %v4846
  %v6385 = vsel %vm6353, %v2943, %v4848
  %vm6386 = vcmask 97280
  %v6387 = vsel %vm6386, %v6354, %v4882
  %v6388 = vsel %vm6386, %v6355, %v4884
  %v6389 = vsel %vm6386, %v6356, %v4886
  %v6390 = vsel %vm6386, %v6357, %v4888
  %v6391 = vsel %vm6386, %v6358, %v4890
  %v6392 = vsel %vm6386, %v6359, %v4892
  %v6393 = vsel %vm6386, %v6360, %v4894
  %v6394 = vsel %vm6386, %v6361, %v4896
  %v6395 = vsel %vm6386, %v6362, %v4898
  %v6396 = vsel %vm6386, %v6363, %v4900
  %v6397 = vsel %vm6386, %v6364, %v4902
  %v6398 = vsel %vm6386, %v6365, %v4904
  %v6399 = vsel %vm6386, %v6366, %v4906
  %v6400 = vsel %vm6386, %v6367, %v4908
  %v6401 = vsel %vm6386, %v6368, %v4910
  %v6402 = vsel %vm6386, %v6369, %v4912
  %v6403 = vsel %vm6386, %v6370, %v4914
  %v6404 = vsel %vm6386, %v6371, %v4916
  %v6405 = vsel %vm6386, %v6372, %v4918
  %v6406 = vsel %vm6386, %v6373, %v4920
  %v6407 = vsel %vm6386, %v6374, %v4922
  %v6408 = vsel %vm6386, %v6375, %v4924
  %v6409 = vsel %vm6386, %v6376, %v4926
  %v6410 = vsel %vm6386, %v6377, %v4928
  %v6411 = vsel %vm6386, %v6378, %v4930
  %v6412 = vsel %vm6386, %v6379, %v4932
  %v6413 = vsel %vm6386, %v6380, %v4934
  %v6414 = vsel %vm6386, %v6381, %v4936
  %v6415 = vsel %vm6386, %v6382, %v4938
  %v6416 = vsel %vm6386, %v6383, %v4940
  %v6417 = vsel %vm6386, %v6384, %v4942
  %v6418 = vsel %vm6386, %v6385, %v4944
  %vm6419 = vcmask 146432
  %v6420 = vsel %vm6419, %v6387, %v4978
  %v6421 = vsel %vm6419, %v6388, %v4980
  %v6422 = vsel %vm6419, %v6389, %v4982
  %v6423 = vsel %vm6419, %v6390, %v4984
  %v6424 = vsel %vm6419, %v6391, %v4986
  %v6425 = vsel %vm6419, %v6392, %v4988
  %v6426 = vsel %vm6419, %v6393, %v4990
  %v6427 = vsel %vm6419, %v6394, %v4992
  %v6428 = vsel %vm6419, %v6395, %v4994
  %v6429 = vsel %vm6419, %v6396, %v4996
  %v6430 = vsel %vm6419, %v6397, %v4998
  %v6431 = vsel %vm6419, %v6398, %v5000
  %v6432 = vsel %vm6419, %v6399, %v5002
  %v6433 = vsel %vm6419, %v6400, %v5004
  %v6434 = vsel %vm6419, %v6401, %v5006
  %v6435 = vsel %vm6419, %v6402, %v5008
  %v6436 = vsel %vm6419, %v6403, %v5010
  %v6437 = vsel %vm6419, %v6404, %v5012
  %v6438 = vsel %vm6419, %v6405, %v5014
  %v6439 = vsel %vm6419, %v6406, %v5016
  %v6440 = vsel %vm6419, %v6407, %v5018
  %v6441 = vsel %vm6419, %v6408, %v5020
  %v6442 = vsel %vm6419, %v6409, %v5022
  %v6443 = vsel %vm6419, %v6410, %v5024
  %v6444 = vsel %vm6419, %v6411, %v5026
  %v6445 = vsel %vm6419, %v6412, %v5028
  %v6446 = vsel %vm6419, %v6413, %v5030
  %v6447 = vsel %vm6419, %v6414, %v5032
  %v6448 = vsel %vm6419, %v6415, %v5034
  %v6449 = vsel %vm6419, %v6416, %v5036
  %v6450 = vsel %vm6419, %v6417, %v5038
  %v6451 = vsel %vm6419, %v6418, %v5040
  %vm6452 = vcmask 195584
  %v6453 = vsel %vm6452, %v6420, %v5074
  %v6454 = vsel %vm6452, %v6421, %v5076
  %v6455 = vsel %vm6452, %v6422, %v5078
  %v6456 = vsel %vm6452, %v6423, %v5080
  %v6457 = vsel %vm6452, %v6424, %v5082
  %v6458 = vsel %vm6452, %v6425, %v5084
  %v6459 = vsel %vm6452, %v6426, %v5086
  %v6460 = vsel %vm6452, %v6427, %v5088
  %v6461 = vsel %vm6452, %v6428, %v5090
  %v6462 = vsel %vm6452, %v6429, %v5092
  %v6463 = vsel %vm6452, %v6430, %v5094
  %v6464 = vsel %vm6452, %v6431, %v5096
  %v6465 = vsel %vm6452, %v6432, %v5098
  %v6466 = vsel %vm6452, %v6433, %v5100
  %v6467 = vsel %vm6452, %v6434, %v5102
  %v6468 = vsel %vm6452, %v6435, %v5104
  %v6469 = vsel %vm6452, %v6436, %v5106
  %v6470 = vsel %vm6452, %v6437, %v5108
  %v6471 = vsel %vm6452, %v6438, %v5110
  %v6472 = vsel %vm6452, %v6439, %v5112
  %v6473 = vsel %vm6452, %v6440, %v5114
  %v6474 = vsel %vm6452, %v6441, %v5116
  %v6475 = vsel %vm6452, %v6442, %v5118
  %v6476 = vsel %vm6452, %v6443, %v5120
  %v6477 = vsel %vm6452, %v6444, %v5122
  %v6478 = vsel %vm6452, %v6445, %v5124
  %v6479 = vsel %vm6452, %v6446, %v5126
  %v6480 = vsel %vm6452, %v6447, %v5128
  %v6481 = vsel %vm6452, %v6448, %v5130
  %v6482 = vsel %vm6452, %v6449, %v5132
  %v6483 = vsel %vm6452, %v6450, %v5134
  %v6484 = vsel %vm6452, %v6451, %v5136
  %vm6485 = vcmask 244736
  %v6486 = vsel %vm6485, %v6453, %v5170
  %v6487 = vsel %vm6485, %v6454, %v5172
  %v6488 = vsel %vm6485, %v6455, %v5174
  %v6489 = vsel %vm6485, %v6456, %v5176
  %v6490 = vsel %vm6485, %v6457, %v5178
  %v6491 = vsel %vm6485, %v6458, %v5180
  %v6492 = vsel %vm6485, %v6459, %v5182
  %v6493 = vsel %vm6485, %v6460, %v5184
  %v6494 = vsel %vm6485, %v6461, %v5186
  %v6495 = vsel %vm6485, %v6462, %v5188
  %v6496 = vsel %vm6485, %v6463, %v5190
  %v6497 = vsel %vm6485, %v6464, %v5192
  %v6498 = vsel %vm6485, %v6465, %v5194
  %v6499 = vsel %vm6485, %v6466, %v5196
  %v6500 = vsel %vm6485, %v6467, %v5198
  %v6501 = vsel %vm6485, %v6468, %v5200
  %v6502 = vsel %vm6485, %v6469, %v5202
  %v6503 = vsel %vm6485, %v6470, %v5204
  %v6504 = vsel %vm6485, %v6471, %v5206
  %v6505 = vsel %vm6485, %v6472, %v5208
  %v6506 = vsel %vm6485, %v6473, %v5210
  %v6507 = vsel %vm6485, %v6474, %v5212
  %v6508 = vsel %vm6485, %v6475, %v5214
  %v6509 = vsel %vm6485, %v6476, %v5216
  %v6510 = vsel %vm6485, %v6477, %v5218
  %v6511 = vsel %vm6485, %v6478, %v5220
  %v6512 = vsel %vm6485, %v6479, %v5222
  %v6513 = vsel %vm6485, %v6480, %v5224
  %v6514 = vsel %vm6485, %v6481, %v5226
  %v6515 = vsel %vm6485, %v6482, %v5228
  %v6516 = vsel %vm6485, %v6483, %v5230
  %v6517 = vsel %vm6485, %v6484, %v5232
  %vm6518 = vcmask 293888
  %v6519 = vsel %vm6518, %v6486, %v5266
  %v6520 = vsel %vm6518, %v6487, %v5268
  %v6521 = vsel %vm6518, %v6488, %v5270
  %v6522 = vsel %vm6518, %v6489, %v5272
  %v6523 = vsel %vm6518, %v6490, %v5274
  %v6524 = vsel %vm6518, %v6491, %v5276
  %v6525 = vsel %vm6518, %v6492, %v5278
  %v6526 = vsel %vm6518, %v6493, %v5280
  %v6527 = vsel %vm6518, %v6494, %v5282
  %v6528 = vsel %vm6518, %v6495, %v5284
  %v6529 = vsel %vm6518, %v6496, %v5286
  %v6530 = vsel %vm6518, %v6497, %v5288
  %v6531 = vsel %vm6518, %v6498, %v5290
  %v6532 = vsel %vm6518, %v6499, %v5292
  %v6533 = vsel %vm6518, %v6500, %v5294
  %v6534 = vsel %vm6518, %v6501, %v5296
  %v6535 = vsel %vm6518, %v6502, %v5298
  %v6536 = vsel %vm6518, %v6503, %v5300
  %v6537 = vsel %vm6518, %v6504, %v5302
  %v6538 = vsel %vm6518, %v6505, %v5304
  %v6539 = vsel %vm6518, %v6506, %v5306
  %v6540 = vsel %vm6518, %v6507, %v5308
  %v6541 = vsel %vm6518, %v6508, %v5310
  %v6542 = vsel %vm6518, %v6509, %v5312
  %v6543 = vsel %vm6518, %v6510, %v5314
  %v6544 = vsel %vm6518, %v6511, %v5316
  %v6545 = vsel %vm6518, %v6512, %v5318
  %v6546 = vsel %vm6518, %v6513, %v5320
  %v6547 = vsel %vm6518, %v6514, %v5322
  %v6548 = vsel %vm6518, %v6515, %v5324
  %v6549 = vsel %vm6518, %v6516, %v5326
  %v6550 = vsel %vm6518, %v6517, %v5328
  %vm6551 = vcmask 343040
  %v6552 = vsel %vm6551, %v6519, %v5362
  %v6553 = vsel %vm6551, %v6520, %v5364
  %v6554 = vsel %vm6551, %v6521, %v5366
  %v6555 = vsel %vm6551, %v6522, %v5368
  %v6556 = vsel %vm6551, %v6523, %v5370
  %v6557 = vsel %vm6551, %v6524, %v5372
  %v6558 = vsel %vm6551, %v6525, %v5374
  %v6559 = vsel %vm6551, %v6526, %v5376
  %v6560 = vsel %vm6551, %v6527, %v5378
  %v6561 = vsel %vm6551, %v6528, %v5380
  %v6562 = vsel %vm6551, %v6529, %v5382
  %v6563 = vsel %vm6551, %v6530, %v5384
  %v6564 = vsel %vm6551, %v6531, %v5386
  %v6565 = vsel %vm6551, %v6532, %v5388
  %v6566 = vsel %vm6551, %v6533, %v5390
  %v6567 = vsel %vm6551, %v6534, %v5392
  %v6568 = vsel %vm6551, %v6535, %v5394
  %v6569 = vsel %vm6551, %v6536, %v5396
  %v6570 = vsel %vm6551, %v6537, %v5398
  %v6571 = vsel %vm6551, %v6538, %v5400
  %v6572 = vsel %vm6551, %v6539, %v5402
  %v6573 = vsel %vm6551, %v6540, %v5404
  %v6574 = vsel %vm6551, %v6541, %v5406
  %v6575 = vsel %vm6551, %v6542, %v5408
  %v6576 = vsel %vm6551, %v6543, %v5410
  %v6577 = vsel %vm6551, %v6544, %v5412
  %v6578 = vsel %vm6551, %v6545, %v5414
  %v6579 = vsel %vm6551, %v6546, %v5416
  %v6580 = vsel %vm6551, %v6547, %v5418
  %v6581 = vsel %vm6551, %v6548, %v5420
  %v6582 = vsel %vm6551, %v6549, %v5422
  %v6583 = vsel %vm6551, %v6550, %v5424
  %vm6584 = vcmask 392192
  %v6585 = vsel %vm6584, %v6552, %v5458
  %v6586 = vsel %vm6584, %v6553, %v5460
  %v6587 = vsel %vm6584, %v6554, %v5462
  %v6588 = vsel %vm6584, %v6555, %v5464
  %v6589 = vsel %vm6584, %v6556, %v5466
  %v6590 = vsel %vm6584, %v6557, %v5468
  %v6591 = vsel %vm6584, %v6558, %v5470
  %v6592 = vsel %vm6584, %v6559, %v5472
  %v6593 = vsel %vm6584, %v6560, %v5474
  %v6594 = vsel %vm6584, %v6561, %v5476
  %v6595 = vsel %vm6584, %v6562, %v5478
  %v6596 = vsel %vm6584, %v6563, %v5480
  %v6597 = vsel %vm6584, %v6564, %v5482
  %v6598 = vsel %vm6584, %v6565, %v5484
  %v6599 = vsel %vm6584, %v6566, %v5486
  %v6600 = vsel %vm6584, %v6567, %v5488
  %v6601 = vsel %vm6584, %v6568, %v5490
  %v6602 = vsel %vm6584, %v6569, %v5492
  %v6603 = vsel %vm6584, %v6570, %v5494
  %v6604 = vsel %vm6584, %v6571, %v5496
  %v6605 = vsel %vm6584, %v6572, %v5498
  %v6606 = vsel %vm6584, %v6573, %v5500
  %v6607 = vsel %vm6584, %v6574, %v5502
  %v6608 = vsel %vm6584, %v6575, %v5504
  %v6609 = vsel %vm6584, %v6576, %v5506
  %v6610 = vsel %vm6584, %v6577, %v5508
  %v6611 = vsel %vm6584, %v6578, %v5510
  %v6612 = vsel %vm6584, %v6579, %v5512
  %v6613 = vsel %vm6584, %v6580, %v5514
  %v6614 = vsel %vm6584, %v6581, %v5516
  %v6615 = vsel %vm6584, %v6582, %v5518
  %v6616 = vsel %vm6584, %v6583, %v5520
  %vm6617 = vcmask 441344
  %v6618 = vsel %vm6617, %v6585, %v5554
  %v6619 = vsel %vm6617, %v6586, %v5556
  %v6620 = vsel %vm6617, %v6587, %v5558
  %v6621 = vsel %vm6617, %v6588, %v5560
  %v6622 = vsel %vm6617, %v6589, %v5562
  %v6623 = vsel %vm6617, %v6590, %v5564
  %v6624 = vsel %vm6617, %v6591, %v5566
  %v6625 = vsel %vm6617, %v6592, %v5568
  %v6626 = vsel %vm6617, %v6593, %v5570
  %v6627 = vsel %vm6617, %v6594, %v5572
  %v6628 = vsel %vm6617, %v6595, %v5574
  %v6629 = vsel %vm6617, %v6596, %v5576
  %v6630 = vsel %vm6617, %v6597, %v5578
  %v6631 = vsel %vm6617, %v6598, %v5580
  %v6632 = vsel %vm6617, %v6599, %v5582
  %v6633 = vsel %vm6617, %v6600, %v5584
  %v6634 = vsel %vm6617, %v6601, %v5586
  %v6635 = vsel %vm6617, %v6602, %v5588
  %v6636 = vsel %vm6617, %v6603, %v5590
  %v6637 = vsel %vm6617, %v6604, %v5592
  %v6638 = vsel %vm6617, %v6605, %v5594
  %v6639 = vsel %vm6617, %v6606, %v5596
  %v6640 = vsel %vm6617, %v6607, %v5598
  %v6641 = vsel %vm6617, %v6608, %v5600
  %v6642 = vsel %vm6617, %v6609, %v5602
  %v6643 = vsel %vm6617, %v6610, %v5604
  %v6644 = vsel %vm6617, %v6611, %v5606
  %v6645 = vsel %vm6617, %v6612, %v5608
  %v6646 = vsel %vm6617, %v6613, %v5610
  %v6647 = vsel %vm6617, %v6614, %v5612
  %v6648 = vsel %vm6617, %v6615, %v5614
  %v6649 = vsel %vm6617, %v6616, %v5616
  %vm6650 = vcmask 490496
  %v6651 = vsel %vm6650, %v6618, %v5730
  %v6652 = vsel %vm6650, %v6619, %v5732
  %v6653 = vsel %vm6650, %v6620, %v5734
  %v6654 = vsel %vm6650, %v6621, %v5736
  %v6655 = vsel %vm6650, %v6622, %v5738
  %v6656 = vsel %vm6650, %v6623, %v5740
  %v6657 = vsel %vm6650, %v6624, %v5742
  %v6658 = vsel %vm6650, %v6625, %v5744
  %v6659 = vsel %vm6650, %v6626, %v5746
  %v6660 = vsel %vm6650, %v6627, %v5748
  %v6661 = vsel %vm6650, %v6628, %v5750
  %v6662 = vsel %vm6650, %v6629, %v5752
  %v6663 = vsel %vm6650, %v6630, %v5754
  %v6664 = vsel %vm6650, %v6631, %v5756
  %v6665 = vsel %vm6650, %v6632, %v5758
  %v6666 = vsel %vm6650, %v6633, %v5760
  %v6667 = vsel %vm6650, %v6634, %v5762
  %v6668 = vsel %vm6650, %v6635, %v5764
  %v6669 = vsel %vm6650, %v6636, %v5766
  %v6670 = vsel %vm6650, %v6637, %v5768
  %v6671 = vsel %vm6650, %v6638, %v5770
  %v6672 = vsel %vm6650, %v6639, %v5772
  %v6673 = vsel %vm6650, %v6640, %v5774
  %v6674 = vsel %vm6650, %v6641, %v5776
  %v6675 = vsel %vm6650, %v6642, %v5778
  %v6676 = vsel %vm6650, %v6643, %v5780
  %v6677 = vsel %vm6650, %v6644, %v5782
  %v6678 = vsel %vm6650, %v6645, %v5784
  %v6679 = vsel %vm6650, %v6646, %v5786
  %v6680 = vsel %vm6650, %v6647, %v5788
  %v6681 = vsel %vm6650, %v6648, %v5790
  %v6682 = vsel %vm6650, %v6649, %v5792
  %vm6683 = vcmask 539648
  %v6684 = vsel %vm6683, %v6651, %v5906
  %v6685 = vsel %vm6683, %v6652, %v5908
  %v6686 = vsel %vm6683, %v6653, %v5910
  %v6687 = vsel %vm6683, %v6654, %v5912
  %v6688 = vsel %vm6683, %v6655, %v5914
  %v6689 = vsel %vm6683, %v6656, %v5916
  %v6690 = vsel %vm6683, %v6657, %v5918
  %v6691 = vsel %vm6683, %v6658, %v5920
  %v6692 = vsel %vm6683, %v6659, %v5922
  %v6693 = vsel %vm6683, %v6660, %v5924
  %v6694 = vsel %vm6683, %v6661, %v5926
  %v6695 = vsel %vm6683, %v6662, %v5928
  %v6696 = vsel %vm6683, %v6663, %v5930
  %v6697 = vsel %vm6683, %v6664, %v5932
  %v6698 = vsel %vm6683, %v6665, %v5934
  %v6699 = vsel %vm6683, %v6666, %v5936
  %v6700 = vsel %vm6683, %v6667, %v5938
  %v6701 = vsel %vm6683, %v6668, %v5940
  %v6702 = vsel %vm6683, %v6669, %v5942
  %v6703 = vsel %vm6683, %v6670, %v5944
  %v6704 = vsel %vm6683, %v6671, %v5946
  %v6705 = vsel %vm6683, %v6672, %v5948
  %v6706 = vsel %vm6683, %v6673, %v5950
  %v6707 = vsel %vm6683, %v6674, %v5952
  %v6708 = vsel %vm6683, %v6675, %v5954
  %v6709 = vsel %vm6683, %v6676, %v5956
  %v6710 = vsel %vm6683, %v6677, %v5958
  %v6711 = vsel %vm6683, %v6678, %v5960
  %v6712 = vsel %vm6683, %v6679, %v5962
  %v6713 = vsel %vm6683, %v6680, %v5964
  %v6714 = vsel %vm6683, %v6681, %v5966
  %v6715 = vsel %vm6683, %v6682, %v5968
  %vm6716 = vcmask 588800
  %v6717 = vsel %vm6716, %v6684, %v6082
  %v6718 = vsel %vm6716, %v6685, %v6084
  %v6719 = vsel %vm6716, %v6686, %v6086
  %v6720 = vsel %vm6716, %v6687, %v6088
  %v6721 = vsel %vm6716, %v6688, %v6090
  %v6722 = vsel %vm6716, %v6689, %v6092
  %v6723 = vsel %vm6716, %v6690, %v6094
  %v6724 = vsel %vm6716, %v6691, %v6096
  %v6725 = vsel %vm6716, %v6692, %v6098
  %v6726 = vsel %vm6716, %v6693, %v6100
  %v6727 = vsel %vm6716, %v6694, %v6102
  %v6728 = vsel %vm6716, %v6695, %v6104
  %v6729 = vsel %vm6716, %v6696, %v6106
  %v6730 = vsel %vm6716, %v6697, %v6108
  %v6731 = vsel %vm6716, %v6698, %v6110
  %v6732 = vsel %vm6716, %v6699, %v6112
  %v6733 = vsel %vm6716, %v6700, %v6114
  %v6734 = vsel %vm6716, %v6701, %v6116
  %v6735 = vsel %vm6716, %v6702, %v6118
  %v6736 = vsel %vm6716, %v6703, %v6120
  %v6737 = vsel %vm6716, %v6704, %v6122
  %v6738 = vsel %vm6716, %v6705, %v6124
  %v6739 = vsel %vm6716, %v6706, %v6126
  %v6740 = vsel %vm6716, %v6707, %v6128
  %v6741 = vsel %vm6716, %v6708, %v6130
  %v6742 = vsel %vm6716, %v6709, %v6132
  %v6743 = vsel %vm6716, %v6710, %v6134
  %v6744 = vsel %vm6716, %v6711, %v6136
  %v6745 = vsel %vm6716, %v6712, %v6138
  %v6746 = vsel %vm6716, %v6713, %v6140
  %v6747 = vsel %vm6716, %v6714, %v6142
  %v6748 = vsel %vm6716, %v6715, %v6144
  %vm6749 = vcmask 637952
  %v6750 = vsel %vm6749, %v6717, %v6258
  %v6751 = vsel %vm6749, %v6718, %v6260
  %v6752 = vsel %vm6749, %v6719, %v6262
  %v6753 = vsel %vm6749, %v6720, %v6264
  %v6754 = vsel %vm6749, %v6721, %v6266
  %v6755 = vsel %vm6749, %v6722, %v6268
  %v6756 = vsel %vm6749, %v6723, %v6270
  %v6757 = vsel %vm6749, %v6724, %v6272
  %v6758 = vsel %vm6749, %v6725, %v6274
  %v6759 = vsel %vm6749, %v6726, %v6276
  %v6760 = vsel %vm6749, %v6727, %v6278
  %v6761 = vsel %vm6749, %v6728, %v6280
  %v6762 = vsel %vm6749, %v6729, %v6282
  %v6763 = vsel %vm6749, %v6730, %v6284
  %v6764 = vsel %vm6749, %v6731, %v6286
  %v6765 = vsel %vm6749, %v6732, %v6288
  %v6766 = vsel %vm6749, %v6733, %v6290
  %v6767 = vsel %vm6749, %v6734, %v6292
  %v6768 = vsel %vm6749, %v6735, %v6294
  %v6769 = vsel %vm6749, %v6736, %v6296
  %v6770 = vsel %vm6749, %v6737, %v6298
  %v6771 = vsel %vm6749, %v6738, %v6300
  %v6772 = vsel %vm6749, %v6739, %v6302
  %v6773 = vsel %vm6749, %v6740, %v6304
  %v6774 = vsel %vm6749, %v6741, %v6306
  %v6775 = vsel %vm6749, %v6742, %v6308
  %v6776 = vsel %vm6749, %v6743, %v6310
  %v6777 = vsel %vm6749, %v6744, %v6312
  %v6778 = vsel %vm6749, %v6745, %v6314
  %v6779 = vsel %vm6749, %v6746, %v6316
  %v6780 = vsel %vm6749, %v6747, %v6318
  %v6781 = vsel %vm6749, %v6748, %v6320
  %v6790 = vrot.slane %v6750, 1
  %v6791 = vrot.slane %v6754, 1
  %v6792 = vrot.slane %v6758, 1
  %v6793 = vrot.slane %v6762, 1
  %v6794 = vrot.slane %v6766, 1
  %v6795 = vrot.slane %v6770, 1
  %v6796 = vrot.slane %v6774, 1
  %v6797 = vrot.slane %v6778, 1
  %v6806 = vmax.f32 %v6750, %v6790
  %v6807 = vmax.f32 %v6754, %v6791
  %v6808 = vmax.f32 %v6758, %v6792
  %v6809 = vmax.f32 %v6762, %v6793
  %v6810 = vmax.f32 %v6766, %v6794
  %v6811 = vmax.f32 %v6770, %v6795
  %v6812 = vmax.f32 %v6774, %v6796
  %v6813 = vmax.f32 %v6778, %v6797
  %v6814 = vpack.c.bf16 %v6806, %v6806
  %v6815 = vpack.c.bf16 %v6807, %v6807
  %v6816 = vpack.c.bf16 %v6808, %v6808
  %v6817 = vpack.c.bf16 %v6809, %v6809
  %v6818 = vpack.c.bf16 %v6810, %v6810
  %v6819 = vpack.c.bf16 %v6811, %v6811
  %v6820 = vpack.c.bf16 %v6812, %v6812
  %v6821 = vpack.c.bf16 %v6813, %v6813
  %vm6822 = vcmask 679936
  %vm6823 = vsmask.f32 256
  %vm6824 = vmand %vm6822, %vm6823
  %v6825 = vld [vmem:[#allocation2] sm:$0x1]
  %v6826 = vsel %vm6824, %v6814, %v6825
  %6827 = vst [vmem:[#allocation2] sm:$0x1] %v6826
  %v6828 = vld [vmem:[#allocation2 + $0x8] sm:$0x1]
  %v6829 = vsel %vm6824, %v6815, %v6828
  %6830 = vst [vmem:[#allocation2 + $0x8] sm:$0x1] %v6829
  %v6831 = vld [vmem:[#allocation2 + $0x10] sm:$0x1]
  %v6832 = vsel %vm6824, %v6816, %v6831
  %6833 = vst [vmem:[#allocation2 + $0x10] sm:$0x1] %v6832
  %v6834 = vld [vmem:[#allocation2 + $0x18] sm:$0x1]
  %v6835 = vsel %vm6824, %v6817, %v6834
  %6836 = vst [vmem:[#allocation2 + $0x18] sm:$0x1] %v6835
  %v6837 = vld [vmem:[#allocation2 + $0x20] sm:$0x1]
  %v6838 = vsel %vm6824, %v6818, %v6837
  %6839 = vst [vmem:[#allocation2 + $0x20] sm:$0x1] %v6838
  %v6840 = vld [vmem:[#allocation2 + $0x28] sm:$0x1]
  %v6841 = vsel %vm6824, %v6819, %v6840
  %6842 = vst [vmem:[#allocation2 + $0x28] sm:$0x1] %v6841
  %v6843 = vld [vmem:[#allocation2 + $0x30] sm:$0x1]
  %v6844 = vsel %vm6824, %v6820, %v6843
  %6845 = vst [vmem:[#allocation2 + $0x30] sm:$0x1] %v6844
  %v6846 = vld [vmem:[#allocation2 + $0x38] sm:$0x1]
  %v6847 = vsel %vm6824, %v6821, %v6846
  %6848 = vst [vmem:[#allocation2 + $0x38] sm:$0x1] %v6847
  %v6857 = vunpack.c.l.b16 %v6814
  %v6858 = vunpack.c.l.b16 %v6815
  %v6859 = vunpack.c.l.b16 %v6816
  %v6860 = vunpack.c.l.b16 %v6817
  %v6861 = vunpack.c.l.b16 %v6818
  %v6862 = vunpack.c.l.b16 %v6819
  %v6863 = vunpack.c.l.b16 %v6820
  %v6864 = vunpack.c.l.b16 %v6821
  %v6865 = vpack.c.b16 %v6857, %v6857
  %v6866 = vpack.c.b16 %v6858, %v6858
  %v6867 = vpack.c.b16 %v6859, %v6859
  %v6868 = vpack.c.b16 %v6860, %v6860
  %v6869 = vpack.c.b16 %v6861, %v6861
  %v6870 = vpack.c.b16 %v6862, %v6862
  %v6871 = vpack.c.b16 %v6863, %v6863
  %v6872 = vpack.c.b16 %v6864, %v6864
  %v6874 = vshll.u32 %v6865, 16
  %v6876 = vrot.slane %v6874, 5
  %v6877 = vrot.slane %v6876, 4
  %v6879 = vshll.u32 %v6866, 16
  %v6881 = vrot.slane %v6879, 5
  %v6882 = vrot.slane %v6881, 4
  %v6884 = vshll.u32 %v6867, 16
  %v6886 = vrot.slane %v6884, 5
  %v6887 = vrot.slane %v6886, 4
  %v6889 = vshll.u32 %v6868, 16
  %v6891 = vrot.slane %v6889, 5
  %v6892 = vrot.slane %v6891, 4
  %v6894 = vshll.u32 %v6869, 16
  %v6896 = vrot.slane %v6894, 5
  %v6897 = vrot.slane %v6896, 4
  %v6899 = vshll.u32 %v6870, 16
  %v6901 = vrot.slane %v6899, 5
  %v6902 = vrot.slane %v6901, 4
  %v6904 = vshll.u32 %v6871, 16
  %v6906 = vrot.slane %v6904, 5
  %v6907 = vrot.slane %v6906, 4
  %v6909 = vshll.u32 %v6872, 16
  %v6911 = vrot.slane %v6909, 5
  %v6912 = vrot.slane %v6911, 4
  %vm6921 = vsmask.f32 7938
  %vm6922 = vmand %vm6822, %vm6921
  %v6923 = vld [vmem:[#allocation2] sm:$0x1]
  %v6924 = vsel %vm6922, %v6877, %v6923
  %6925 = vst [vmem:[#allocation2] sm:$0x1] %v6924
  %v6926 = vld [vmem:[#allocation2 + $0x8] sm:$0x1]
  %v6927 = vsel %vm6922, %v6882, %v6926
  %6928 = vst [vmem:[#allocation2 + $0x8] sm:$0x1] %v6927
  %v6929 = vld [vmem:[#allocation2 + $0x10] sm:$0x1]
  %v6930 = vsel %vm6922, %v6887, %v6929
  %6931 = vst [vmem:[#allocation2 + $0x10] sm:$0x1] %v6930
  %v6932 = vld [vmem:[#allocation2 + $0x18] sm:$0x1]
  %v6933 = vsel %vm6922, %v6892, %v6932
  %6934 = vst [vmem:[#allocation2 + $0x18] sm:$0x1] %v6933
  %v6935 = vld [vmem:[#allocation2 + $0x20] sm:$0x1]
  %v6936 = vsel %vm6922, %v6897, %v6935
  %6937 = vst [vmem:[#allocation2 + $0x20] sm:$0x1] %v6936
  %v6938 = vld [vmem:[#allocation2 + $0x28] sm:$0x1]
  %v6939 = vsel %vm6922, %v6902, %v6938
  %6940 = vst [vmem:[#allocation2 + $0x28] sm:$0x1] %v6939
  %v6941 = vld [vmem:[#allocation2 + $0x30] sm:$0x1]
  %v6942 = vsel %vm6922, %v6907, %v6941
  %6943 = vst [vmem:[#allocation2 + $0x30] sm:$0x1] %v6942
  %v6944 = vld [vmem:[#allocation2 + $0x38] sm:$0x1]
  %v6945 = vsel %vm6922, %v6912, %v6944
  %6946 = vst [vmem:[#allocation2 + $0x38] sm:$0x1] %v6945
  %v6947 = vrot.slane %v6865, 5
  %v6948 = vrot.slane %v6947, 4
  %v6949 = vrot.slane %v6866, 5
  %v6950 = vrot.slane %v6949, 4
  %v6951 = vrot.slane %v6867, 5
  %v6952 = vrot.slane %v6951, 4
  %v6953 = vrot.slane %v6868, 5
  %v6954 = vrot.slane %v6953, 4
  %v6955 = vrot.slane %v6869, 5
  %v6956 = vrot.slane %v6955, 4
  %v6957 = vrot.slane %v6870, 5
  %v6958 = vrot.slane %v6957, 4
  %v6959 = vrot.slane %v6871, 5
  %v6960 = vrot.slane %v6959, 4
  %v6961 = vrot.slane %v6872, 5
  %v6962 = vrot.slane %v6961, 4
  %vm6971 = vcmask 680961
  %vm6972 = vsmask.f32 1280
  %vm6973 = vmand %vm6971, %vm6972
  %v6974 = vld [vmem:[#allocation2] sm:$0x2]
  %v6975 = vsel %vm6973, %v6948, %v6974
  %6976 = vst [vmem:[#allocation2] sm:$0x2] %v6975
  %v6977 = vld [vmem:[#allocation2 + $0x8] sm:$0x2]
  %v6978 = vsel %vm6973, %v6950, %v6977
  %6979 = vst [vmem:[#allocation2 + $0x8] sm:$0x2] %v6978
  %v6980 = vld [vmem:[#allocation2 + $0x10] sm:$0x2]
  %v6981 = vsel %vm6973, %v6952, %v6980
  %6982 = vst [vmem:[#allocation2 + $0x10] sm:$0x2] %v6981
  %v6983 = vld [vmem:[#allocation2 + $0x18] sm:$0x2]
  %v6984 = vsel %vm6973, %v6954, %v6983
  %6985 = vst [vmem:[#allocation2 + $0x18] sm:$0x2] %v6984
  %v6986 = vld [vmem:[#allocation2 + $0x20] sm:$0x2]
  %v6987 = vsel %vm6973, %v6956, %v6986
  %6988 = vst [vmem:[#allocation2 + $0x20] sm:$0x2] %v6987
  %v6989 = vld [vmem:[#allocation2 + $0x28] sm:$0x2]
  %v6990 = vsel %vm6973, %v6958, %v6989
  %6991 = vst [vmem:[#allocation2 + $0x28] sm:$0x2] %v6990
  %v6992 = vld [vmem:[#allocation2 + $0x30] sm:$0x2]
  %v6993 = vsel %vm6973, %v6960, %v6992
  %6994 = vst [vmem:[#allocation2 + $0x30] sm:$0x2] %v6993
  %v6995 = vld [vmem:[#allocation2 + $0x38] sm:$0x2]
  %v6996 = vsel %vm6973, %v6962, %v6995
  %6997 = vst [vmem:[#allocation2 + $0x38] sm:$0x2] %v6996
  %v6998 = vrot.slane %v6874, 6
  %v6999 = vrot.slane %v6998, 4
  %v7000 = vrot.slane %v6879, 6
  %v7001 = vrot.slane %v7000, 4
  %v7002 = vrot.slane %v6884, 6
  %v7003 = vrot.slane %v7002, 4
  %v7004 = vrot.slane %v6889, 6
  %v7005 = vrot.slane %v7004, 4
  %v7006 = vrot.slane %v6894, 6
  %v7007 = vrot.slane %v7006, 4
  %v7008 = vrot.slane %v6899, 6
  %v7009 = vrot.slane %v7008, 4
  %v7010 = vrot.slane %v6904, 6
  %v7011 = vrot.slane %v7010, 4
  %v7012 = vrot.slane %v6909, 6
  %v7013 = vrot.slane %v7012, 4
  %vm7022 = vsmask.f32 7942
  %vm7023 = vmand %vm6971, %vm7022
  %v7024 = vld [vmem:[#allocation2] sm:$0x2]
  %v7025 = vsel %vm7023, %v6999, %v7024
  %7026 = vst [vmem:[#allocation2] sm:$0x2] %v7025
  %v7027 = vld [vmem:[#allocation2 + $0x8] sm:$0x2]
  %v7028 = vsel %vm7023, %v7001, %v7027
  %7029 = vst [vmem:[#allocation2 + $0x8] sm:$0x2] %v7028
  %v7030 = vld [vmem:[#allocation2 + $0x10] sm:$0x2]
  %v7031 = vsel %vm7023, %v7003, %v7030
  %7032 = vst [vmem:[#allocation2 + $0x10] sm:$0x2] %v7031
  %v7033 = vld [vmem:[#allocation2 + $0x18] sm:$0x2]
  %v7034 = vsel %vm7023, %v7005, %v7033
  %7035 = vst [vmem:[#allocation2 + $0x18] sm:$0x2] %v7034
  %v7036 = vld [vmem:[#allocation2 + $0x20] sm:$0x2]
  %v7037 = vsel %vm7023, %v7007, %v7036
  %7038 = vst [vmem:[#allocation2 + $0x20] sm:$0x2] %v7037
  %v7039 = vld [vmem:[#allocation2 + $0x28] sm:$0x2]
  %v7040 = vsel %vm7023, %v7009, %v7039
  %7041 = vst [vmem:[#allocation2 + $0x28] sm:$0x2] %v7040
  %v7042 = vld [vmem:[#allocation2 + $0x30] sm:$0x2]
  %v7043 = vsel %vm7023, %v7011, %v7042
  %7044 = vst [vmem:[#allocation2 + $0x30] sm:$0x2] %v7043
  %v7045 = vld [vmem:[#allocation2 + $0x38] sm:$0x2]
  %v7046 = vsel %vm7023, %v7013, %v7045
  %7047 = vst [vmem:[#allocation2 + $0x38] sm:$0x2] %v7046
  %v7056 = vrot.slane %v6751, 1
  %v7057 = vrot.slane %v6755, 1
  %v7058 = vrot.slane %v6759, 1
  %v7059 = vrot.slane %v6763, 1
  %v7060 = vrot.slane %v6767, 1
  %v7061 = vrot.slane %v6771, 1
  %v7062 = vrot.slane %v6775, 1
  %v7063 = vrot.slane %v6779, 1
  %v7072 = vmax.f32 %v6751, %v7056
  %v7073 = vmax.f32 %v6755, %v7057
  %v7074 = vmax.f32 %v6759, %v7058
  %v7075 = vmax.f32 %v6763, %v7059
  %v7076 = vmax.f32 %v6767, %v7060
  %v7077 = vmax.f32 %v6771, %v7061
  %v7078 = vmax.f32 %v6775, %v7062
  %v7079 = vmax.f32 %v6779, %v7063
  %v7080 = vpack.c.bf16 %v7072, %v7072
  %v7081 = vpack.c.bf16 %v7073, %v7073
  %v7082 = vpack.c.bf16 %v7074, %v7074
  %v7083 = vpack.c.bf16 %v7075, %v7075
  %v7084 = vpack.c.bf16 %v7076, %v7076
  %v7085 = vpack.c.bf16 %v7077, %v7077
  %v7086 = vpack.c.bf16 %v7078, %v7078
  %v7087 = vpack.c.bf16 %v7079, %v7079
  %v7096 = vunpack.c.l.b16 %v7080
  %v7097 = vunpack.c.l.b16 %v7081
  %v7098 = vunpack.c.l.b16 %v7082
  %v7099 = vunpack.c.l.b16 %v7083
  %v7100 = vunpack.c.l.b16 %v7084
  %v7101 = vunpack.c.l.b16 %v7085
  %v7102 = vunpack.c.l.b16 %v7086
  %v7103 = vunpack.c.l.b16 %v7087
  %v7104 = vpack.c.b16 %v7096, %v7096
  %v7105 = vpack.c.b16 %v7097, %v7097
  %v7106 = vpack.c.b16 %v7098, %v7098
  %v7107 = vpack.c.b16 %v7099, %v7099
  %v7108 = vpack.c.b16 %v7100, %v7100
  %v7109 = vpack.c.b16 %v7101, %v7101
  %v7110 = vpack.c.b16 %v7102, %v7102
  %v7111 = vpack.c.b16 %v7103, %v7103
  %v7112 = vrot.slane %v7104, 6
  %v7113 = vrot.slane %v7105, 6
  %v7114 = vrot.slane %v7106, 6
  %v7115 = vrot.slane %v7107, 6
  %v7116 = vrot.slane %v7108, 6
  %v7117 = vrot.slane %v7109, 6
  %v7118 = vrot.slane %v7110, 6
  %v7119 = vrot.slane %v7111, 6
  %vm7128 = vcmask 681986
  %vm7129 = vsmask.f32 2304
  %vm7130 = vmand %vm7128, %vm7129
  %v7131 = vld [vmem:[#allocation2] sm:$0x4]
  %v7132 = vsel %vm7130, %v7112, %v7131
  %7133 = vst [vmem:[#allocation2] sm:$0x4] %v7132
  %v7134 = vld [vmem:[#allocation2 + $0x8] sm:$0x4]
  %v7135 = vsel %vm7130, %v7113, %v7134
  %7136 = vst [vmem:[#allocation2 + $0x8] sm:$0x4] %v7135
  %v7137 = vld [vmem:[#allocation2 + $0x10] sm:$0x4]
  %v7138 = vsel %vm7130, %v7114, %v7137
  %7139 = vst [vmem:[#allocation2 + $0x10] sm:$0x4] %v7138
  %v7140 = vld [vmem:[#allocation2 + $0x18] sm:$0x4]
  %v7141 = vsel %vm7130, %v7115, %v7140
  %7142 = vst [vmem:[#allocation2 + $0x18] sm:$0x4] %v7141
  %v7143 = vld [vmem:[#allocation2 + $0x20] sm:$0x4]
  %v7144 = vsel %vm7130, %v7116, %v7143
  %7145 = vst [vmem:[#allocation2 + $0x20] sm:$0x4] %v7144
  %v7146 = vld [vmem:[#allocation2 + $0x28] sm:$0x4]
  %v7147 = vsel %vm7130, %v7117, %v7146
  %7148 = vst [vmem:[#allocation2 + $0x28] sm:$0x4] %v7147
  %v7149 = vld [vmem:[#allocation2 + $0x30] sm:$0x4]
  %v7150 = vsel %vm7130, %v7118, %v7149
  %7151 = vst [vmem:[#allocation2 + $0x30] sm:$0x4] %v7150
  %v7152 = vld [vmem:[#allocation2 + $0x38] sm:$0x4]
  %v7153 = vsel %vm7130, %v7119, %v7152
  %7154 = vst [vmem:[#allocation2 + $0x38] sm:$0x4] %v7153
  %v7156 = vshll.u32 %v7104, 16
  %v7158 = vrot.slane %v7156, 7
  %v7160 = vshll.u32 %v7105, 16
  %v7162 = vrot.slane %v7160, 7
  %v7164 = vshll.u32 %v7106, 16
  %v7166 = vrot.slane %v7164, 7
  %v7168 = vshll.u32 %v7107, 16
  %v7170 = vrot.slane %v7168, 7
  %v7172 = vshll.u32 %v7108, 16
  %v7174 = vrot.slane %v7172, 7
  %v7176 = vshll.u32 %v7109, 16
  %v7178 = vrot.slane %v7176, 7
  %v7180 = vshll.u32 %v7110, 16
  %v7182 = vrot.slane %v7180, 7
  %v7184 = vshll.u32 %v7111, 16
  %v7186 = vrot.slane %v7184, 7
  %vm7195 = vsmask.f32 7946
  %vm7196 = vmand %vm7128, %vm7195
  %v7197 = vld [vmem:[#allocation2] sm:$0x4]
  %v7198 = vsel %vm7196, %v7158, %v7197
  %7199 = vst [vmem:[#allocation2] sm:$0x4] %v7198
  %v7200 = vld [vmem:[#allocation2 + $0x8] sm:$0x4]
  %v7201 = vsel %vm7196, %v7162, %v7200
  %7202 = vst [vmem:[#allocation2 + $0x8] sm:$0x4] %v7201
  %v7203 = vld [vmem:[#allocation2 + $0x10] sm:$0x4]
  %v7204 = vsel %vm7196, %v7166, %v7203
  %7205 = vst [vmem:[#allocation2 + $0x10] sm:$0x4] %v7204
  %v7206 = vld [vmem:[#allocation2 + $0x18] sm:$0x4]
  %v7207 = vsel %vm7196, %v7170, %v7206
  %7208 = vst [vmem:[#allocation2 + $0x18] sm:$0x4] %v7207
  %v7209 = vld [vmem:[#allocation2 + $0x20] sm:$0x4]
  %v7210 = vsel %vm7196, %v7174, %v7209
  %7211 = vst [vmem:[#allocation2 + $0x20] sm:$0x4] %v7210
  %v7212 = vld [vmem:[#allocation2 + $0x28] sm:$0x4]
  %v7213 = vsel %vm7196, %v7178, %v7212
  %7214 = vst [vmem:[#allocation2 + $0x28] sm:$0x4] %v7213
  %v7215 = vld [vmem:[#allocation2 + $0x30] sm:$0x4]
  %v7216 = vsel %vm7196, %v7182, %v7215
  %7217 = vst [vmem:[#allocation2 + $0x30] sm:$0x4] %v7216
  %v7218 = vld [vmem:[#allocation2 + $0x38] sm:$0x4]
  %v7219 = vsel %vm7196, %v7186, %v7218
  %7220 = vst [vmem:[#allocation2 + $0x38] sm:$0x4] %v7219
  %v7221 = vrot.slane %v7104, 7
  %v7222 = vrot.slane %v7105, 7
  %v7223 = vrot.slane %v7106, 7
  %v7224 = vrot.slane %v7107, 7
  %v7225 = vrot.slane %v7108, 7
  %v7226 = vrot.slane %v7109, 7
  %v7227 = vrot.slane %v7110, 7
  %v7228 = vrot.slane %v7111, 7
  %vm7237 = vcmask 683011
  %vm7238 = vsmask.f32 3328
  %vm7239 = vmand %vm7237, %vm7238
  %v7240 = vld [vmem:[#allocation2] sm:$0x8]
  %v7241 = vsel %vm7239, %v7221, %v7240
  %7242 = vst [vmem:[#allocation2] sm:$0x8] %v7241
  %v7243 = vld [vmem:[#allocation2 + $0x8] sm:$0x8]
  %v7244 = vsel %vm7239, %v7222, %v7243
  %7245 = vst [vmem:[#allocation2 + $0x8] sm:$0x8] %v7244
  %v7246 = vld [vmem:[#allocation2 + $0x10] sm:$0x8]
  %v7247 = vsel %vm7239, %v7223, %v7246
  %7248 = vst [vmem:[#allocation2 + $0x10] sm:$0x8] %v7247
  %v7249 = vld [vmem:[#allocation2 + $0x18] sm:$0x8]
  %v7250 = vsel %vm7239, %v7224, %v7249
  %7251 = vst [vmem:[#allocation2 + $0x18] sm:$0x8] %v7250
  %v7252 = vld [vmem:[#allocation2 + $0x20] sm:$0x8]
  %v7253 = vsel %vm7239, %v7225, %v7252
  %7254 = vst [vmem:[#allocation2 + $0x20] sm:$0x8] %v7253
  %v7255 = vld [vmem:[#allocation2 + $0x28] sm:$0x8]
  %v7256 = vsel %vm7239, %v7226, %v7255
  %7257 = vst [vmem:[#allocation2 + $0x28] sm:$0x8] %v7256
  %v7258 = vld [vmem:[#allocation2 + $0x30] sm:$0x8]
  %v7259 = vsel %vm7239, %v7227, %v7258
  %7260 = vst [vmem:[#allocation2 + $0x30] sm:$0x8] %v7259
  %v7261 = vld [vmem:[#allocation2 + $0x38] sm:$0x8]
  %v7262 = vsel %vm7239, %v7228, %v7261
  %7263 = vst [vmem:[#allocation2 + $0x38] sm:$0x8] %v7262
  %vm7272 = vsmask.f32 7950
  %vm7273 = vmand %vm7237, %vm7272
  %v7274 = vld [vmem:[#allocation2] sm:$0x8]
  %v7275 = vsel %vm7273, %v7156, %v7274
  %7276 = vst [vmem:[#allocation2] sm:$0x8] %v7275
  %v7277 = vld [vmem:[#allocation2 + $0x8] sm:$0x8]
  %v7278 = vsel %vm7273, %v7160, %v7277
  %7279 = vst [vmem:[#allocation2 + $0x8] sm:$0x8] %v7278
  %v7280 = vld [vmem:[#allocation2 + $0x10] sm:$0x8]
  %v7281 = vsel %vm7273, %v7164, %v7280
  %7282 = vst [vmem:[#allocation2 + $0x10] sm:$0x8] %v7281
  %v7283 = vld [vmem:[#allocation2 + $0x18] sm:$0x8]
  %v7284 = vsel %vm7273, %v7168, %v7283
  %7285 = vst [vmem:[#allocation2 + $0x18] sm:$0x8] %v7284
  %v7286 = vld [vmem:[#allocation2 + $0x20] sm:$0x8]
  %v7287 = vsel %vm7273, %v7172, %v7286
  %7288 = vst [vmem:[#allocation2 + $0x20] sm:$0x8] %v7287
  %v7289 = vld [vmem:[#allocation2 + $0x28] sm:$0x8]
  %v7290 = vsel %vm7273, %v7176, %v7289
  %7291 = vst [vmem:[#allocation2 + $0x28] sm:$0x8] %v7290
  %v7292 = vld [vmem:[#allocation2 + $0x30] sm:$0x8]
  %v7293 = vsel %vm7273, %v7180, %v7292
  %7294 = vst [vmem:[#allocation2 + $0x30] sm:$0x8] %v7293
  %v7295 = vld [vmem:[#allocation2 + $0x38] sm:$0x8]
  %v7296 = vsel %vm7273, %v7184, %v7295
  %7297 = vst [vmem:[#allocation2 + $0x38] sm:$0x8] %v7296
  %v7306 = vrot.slane %v6752, 1
  %v7307 = vrot.slane %v6756, 1
  %v7308 = vrot.slane %v6760, 1
  %v7309 = vrot.slane %v6764, 1
  %v7310 = vrot.slane %v6768, 1
  %v7311 = vrot.slane %v6772, 1
  %v7312 = vrot.slane %v6776, 1
  %v7313 = vrot.slane %v6780, 1
  %v7322 = vmax.f32 %v6752, %v7306
  %v7323 = vmax.f32 %v6756, %v7307
  %v7324 = vmax.f32 %v6760, %v7308
  %v7325 = vmax.f32 %v6764, %v7309
  %v7326 = vmax.f32 %v6768, %v7310
  %v7327 = vmax.f32 %v6772, %v7311
  %v7328 = vmax.f32 %v6776, %v7312
  %v7329 = vmax.f32 %v6780, %v7313
  %v7330 = vpack.c.bf16 %v7322, %v7322
  %v7331 = vpack.c.bf16 %v7323, %v7323
  %v7332 = vpack.c.bf16 %v7324, %v7324
  %v7333 = vpack.c.bf16 %v7325, %v7325
  %v7334 = vpack.c.bf16 %v7326, %v7326
  %v7335 = vpack.c.bf16 %v7327, %v7327
  %v7336 = vpack.c.bf16 %v7328, %v7328
  %v7337 = vpack.c.bf16 %v7329, %v7329
  %v7338 = vld [vmem:[#allocation2 + $0x4] sm:$0x1]
  %v7339 = vsel %vm6824, %v7330, %v7338
  %7340 = vst [vmem:[#allocation2 + $0x4] sm:$0x1] %v7339
  %v7341 = vld [vmem:[#allocation2 + $0xc] sm:$0x1]
  %v7342 = vsel %vm6824, %v7331, %v7341
  %7343 = vst [vmem:[#allocation2 + $0xc] sm:$0x1] %v7342
  %v7344 = vld [vmem:[#allocation2 + $0x14] sm:$0x1]
  %v7345 = vsel %vm6824, %v7332, %v7344
  %7346 = vst [vmem:[#allocation2 + $0x14] sm:$0x1] %v7345
  %v7347 = vld [vmem:[#allocation2 + $0x1c] sm:$0x1]
  %v7348 = vsel %vm6824, %v7333, %v7347
  %7349 = vst [vmem:[#allocation2 + $0x1c] sm:$0x1] %v7348
  %v7350 = vld [vmem:[#allocation2 + $0x24] sm:$0x1]
  %v7351 = vsel %vm6824, %v7334, %v7350
  %7352 = vst [vmem:[#allocation2 + $0x24] sm:$0x1] %v7351
  %v7353 = vld [vmem:[#allocation2 + $0x2c] sm:$0x1]
  %v7354 = vsel %vm6824, %v7335, %v7353
  %7355 = vst [vmem:[#allocation2 + $0x2c] sm:$0x1] %v7354
  %v7356 = vld [vmem:[#allocation2 + $0x34] sm:$0x1]
  %v7357 = vsel %vm6824, %v7336, %v7356
  %7358 = vst [vmem:[#allocation2 + $0x34] sm:$0x1] %v7357
  %v7359 = vld [vmem:[#allocation2 + $0x3c] sm:$0x1]
  %v7360 = vsel %vm6824, %v7337, %v7359
  %7361 = vst [vmem:[#allocation2 + $0x3c] sm:$0x1] %v7360
  %v7370 = vunpack.c.l.b16 %v7330
  %v7371 = vunpack.c.l.b16 %v7331
  %v7372 = vunpack.c.l.b16 %v7332
  %v7373 = vunpack.c.l.b16 %v7333
  %v7374 = vunpack.c.l.b16 %v7334
  %v7375 = vunpack.c.l.b16 %v7335
  %v7376 = vunpack.c.l.b16 %v7336
  %v7377 = vunpack.c.l.b16 %v7337
  %v7378 = vpack.c.b16 %v7370, %v7370
  %v7379 = vpack.c.b16 %v7371, %v7371
  %v7380 = vpack.c.b16 %v7372, %v7372
  %v7381 = vpack.c.b16 %v7373, %v7373
  %v7382 = vpack.c.b16 %v7374, %v7374
  %v7383 = vpack.c.b16 %v7375, %v7375
  %v7384 = vpack.c.b16 %v7376, %v7376
  %v7385 = vpack.c.b16 %v7377, %v7377
  %v7387 = vshll.u32 %v7378, 16
  %v7389 = vrot.slane %v7387, 5
  %v7390 = vrot.slane %v7389, 4
  %v7392 = vshll.u32 %v7379, 16
  %v7394 = vrot.slane %v7392, 5
  %v7395 = vrot.slane %v7394, 4
  %v7397 = vshll.u32 %v7380, 16
  %v7399 = vrot.slane %v7397, 5
  %v7400 = vrot.slane %v7399, 4
  %v7402 = vshll.u32 %v7381, 16
  %v7404 = vrot.slane %v7402, 5
  %v7405 = vrot.slane %v7404, 4
  %v7407 = vshll.u32 %v7382, 16
  %v7409 = vrot.slane %v7407, 5
  %v7410 = vrot.slane %v7409, 4
  %v7412 = vshll.u32 %v7383, 16
  %v7414 = vrot.slane %v7412, 5
  %v7415 = vrot.slane %v7414, 4
  %v7417 = vshll.u32 %v7384, 16
  %v7419 = vrot.slane %v7417, 5
  %v7420 = vrot.slane %v7419, 4
  %v7422 = vshll.u32 %v7385, 16
  %v7424 = vrot.slane %v7422, 5
  %v7425 = vrot.slane %v7424, 4
  %v7434 = vld [vmem:[#allocation2 + $0x4] sm:$0x1]
  %v7435 = vsel %vm6922, %v7390, %v7434
  %7436 = vst [vmem:[#allocation2 + $0x4] sm:$0x1] %v7435
  %v7437 = vld [vmem:[#allocation2 + $0xc] sm:$0x1]
  %v7438 = vsel %vm6922, %v7395, %v7437
  %7439 = vst [vmem:[#allocation2 + $0xc] sm:$0x1] %v7438
  %v7440 = vld [vmem:[#allocation2 + $0x14] sm:$0x1]
  %v7441 = vsel %vm6922, %v7400, %v7440
  %7442 = vst [vmem:[#allocation2 + $0x14] sm:$0x1] %v7441
  %v7443 = vld [vmem:[#allocation2 + $0x1c] sm:$0x1]
  %v7444 = vsel %vm6922, %v7405, %v7443
  %7445 = vst [vmem:[#allocation2 + $0x1c] sm:$0x1] %v7444
  %v7446 = vld [vmem:[#allocation2 + $0x24] sm:$0x1]
  %v7447 = vsel %vm6922, %v7410, %v7446
  %7448 = vst [vmem:[#allocation2 + $0x24] sm:$0x1] %v7447
  %v7449 = vld [vmem:[#allocation2 + $0x2c] sm:$0x1]
  %v7450 = vsel %vm6922, %v7415, %v7449
  %7451 = vst [vmem:[#allocation2 + $0x2c] sm:$0x1] %v7450
  %v7452 = vld [vmem:[#allocation2 + $0x34] sm:$0x1]
  %v7453 = vsel %vm6922, %v7420, %v7452
  %7454 = vst [vmem:[#allocation2 + $0x34] sm:$0x1] %v7453
  %v7455 = vld [vmem:[#allocation2 + $0x3c] sm:$0x1]
  %v7456 = vsel %vm6922, %v7425, %v7455
  %7457 = vst [vmem:[#allocation2 + $0x3c] sm:$0x1] %v7456
  %v7458 = vrot.slane %v7378, 5
  %v7459 = vrot.slane %v7458, 4
  %v7460 = vrot.slane %v7379, 5
  %v7461 = vrot.slane %v7460, 4
  %v7462 = vrot.slane %v7380, 5
  %v7463 = vrot.slane %v7462, 4
  %v7464 = vrot.slane %v7381, 5
  %v7465 = vrot.slane %v7464, 4
  %v7466 = vrot.slane %v7382, 5
  %v7467 = vrot.slane %v7466, 4
  %v7468 = vrot.slane %v7383, 5
  %v7469 = vrot.slane %v7468, 4
  %v7470 = vrot.slane %v7384, 5
  %v7471 = vrot.slane %v7470, 4
  %v7472 = vrot.slane %v7385, 5
  %v7473 = vrot.slane %v7472, 4
  %v7482 = vld [vmem:[#allocation2 + $0x4] sm:$0x2]
  %v7483 = vsel %vm6973, %v7459, %v7482
  %7484 = vst [vmem:[#allocation2 + $0x4] sm:$0x2] %v7483
  %v7485 = vld [vmem:[#allocation2 + $0xc] sm:$0x2]
  %v7486 = vsel %vm6973, %v7461, %v7485
  %7487 = vst [vmem:[#allocation2 + $0xc] sm:$0x2] %v7486
  %v7488 = vld [vmem:[#allocation2 + $0x14] sm:$0x2]
  %v7489 = vsel %vm6973, %v7463, %v7488
  %7490 = vst [vmem:[#allocation2 + $0x14] sm:$0x2] %v7489
  %v7491 = vld [vmem:[#allocation2 + $0x1c] sm:$0x2]
  %v7492 = vsel %vm6973, %v7465, %v7491
  %7493 = vst [vmem:[#allocation2 + $0x1c] sm:$0x2] %v7492
  %v7494 = vld [vmem:[#allocation2 + $0x24] sm:$0x2]
  %v7495 = vsel %vm6973, %v7467, %v7494
  %7496 = vst [vmem:[#allocation2 + $0x24] sm:$0x2] %v7495
  %v7497 = vld [vmem:[#allocation2 + $0x2c] sm:$0x2]
  %v7498 = vsel %vm6973, %v7469, %v7497
  %7499 = vst [vmem:[#allocation2 + $0x2c] sm:$0x2] %v7498
  %v7500 = vld [vmem:[#allocation2 + $0x34] sm:$0x2]
  %v7501 = vsel %vm6973, %v7471, %v7500
  %7502 = vst [vmem:[#allocation2 + $0x34] sm:$0x2] %v7501
  %v7503 = vld [vmem:[#allocation2 + $0x3c] sm:$0x2]
  %v7504 = vsel %vm6973, %v7473, %v7503
  %7505 = vst [vmem:[#allocation2 + $0x3c] sm:$0x2] %v7504
  %v7506 = vrot.slane %v7387, 6
  %v7507 = vrot.slane %v7506, 4
  %v7508 = vrot.slane %v7392, 6
  %v7509 = vrot.slane %v7508, 4
  %v7510 = vrot.slane %v7397, 6
  %v7511 = vrot.slane %v7510, 4
  %v7512 = vrot.slane %v7402, 6
  %v7513 = vrot.slane %v7512, 4
  %v7514 = vrot.slane %v7407, 6
  %v7515 = vrot.slane %v7514, 4
  %v7516 = vrot.slane %v7412, 6
  %v7517 = vrot.slane %v7516, 4
  %v7518 = vrot.slane %v7417, 6
  %v7519 = vrot.slane %v7518, 4
  %v7520 = vrot.slane %v7422, 6
  %v7521 = vrot.slane %v7520, 4
  %v7530 = vld [vmem:[#allocation2 + $0x4] sm:$0x2]
  %v7531 = vsel %vm7023, %v7507, %v7530
  %7532 = vst [vmem:[#allocation2 + $0x4] sm:$0x2] %v7531
  %v7533 = vld [vmem:[#allocation2 + $0xc] sm:$0x2]
  %v7534 = vsel %vm7023, %v7509, %v7533
  %7535 = vst [vmem:[#allocation2 + $0xc] sm:$0x2] %v7534
  %v7536 = vld [vmem:[#allocation2 + $0x14] sm:$0x2]
  %v7537 = vsel %vm7023, %v7511, %v7536
  %7538 = vst [vmem:[#allocation2 + $0x14] sm:$0x2] %v7537
  %v7539 = vld [vmem:[#allocation2 + $0x1c] sm:$0x2]
  %v7540 = vsel %vm7023, %v7513, %v7539
  %7541 = vst [vmem:[#allocation2 + $0x1c] sm:$0x2] %v7540
  %v7542 = vld [vmem:[#allocation2 + $0x24] sm:$0x2]
  %v7543 = vsel %vm7023, %v7515, %v7542
  %7544 = vst [vmem:[#allocation2 + $0x24] sm:$0x2] %v7543
  %v7545 = vld [vmem:[#allocation2 + $0x2c] sm:$0x2]
  %v7546 = vsel %vm7023, %v7517, %v7545
  %7547 = vst [vmem:[#allocation2 + $0x2c] sm:$0x2] %v7546
  %v7548 = vld [vmem:[#allocation2 + $0x34] sm:$0x2]
  %v7549 = vsel %vm7023, %v7519, %v7548
  %7550 = vst [vmem:[#allocation2 + $0x34] sm:$0x2] %v7549
  %v7551 = vld [vmem:[#allocation2 + $0x3c] sm:$0x2]
  %v7552 = vsel %vm7023, %v7521, %v7551
  %7553 = vst [vmem:[#allocation2 + $0x3c] sm:$0x2] %v7552
  %v7562 = vrot.slane %v6753, 1
  %v7563 = vrot.slane %v6757, 1
  %v7564 = vrot.slane %v6761, 1
  %v7565 = vrot.slane %v6765, 1
  %v7566 = vrot.slane %v6769, 1
  %v7567 = vrot.slane %v6773, 1
  %v7568 = vrot.slane %v6777, 1
  %v7569 = vrot.slane %v6781, 1
  %v7578 = vmax.f32 %v6753, %v7562
  %v7579 = vmax.f32 %v6757, %v7563
  %v7580 = vmax.f32 %v6761, %v7564
  %v7581 = vmax.f32 %v6765, %v7565
  %v7582 = vmax.f32 %v6769, %v7566
  %v7583 = vmax.f32 %v6773, %v7567
  %v7584 = vmax.f32 %v6777, %v7568
  %v7585 = vmax.f32 %v6781, %v7569
  %v7586 = vpack.c.bf16 %v7578, %v7578
  %v7587 = vpack.c.bf16 %v7579, %v7579
  %v7588 = vpack.c.bf16 %v7580, %v7580
  %v7589 = vpack.c.bf16 %v7581, %v7581
  %v7590 = vpack.c.bf16 %v7582, %v7582
  %v7591 = vpack.c.bf16 %v7583, %v7583
  %v7592 = vpack.c.bf16 %v7584, %v7584
  %v7593 = vpack.c.bf16 %v7585, %v7585
  %v7602 = vunpack.c.l.b16 %v7586
  %v7603 = vunpack.c.l.b16 %v7587
  %v7604 = vunpack.c.l.b16 %v7588
  %v7605 = vunpack.c.l.b16 %v7589
  %v7606 = vunpack.c.l.b16 %v7590
  %v7607 = vunpack.c.l.b16 %v7591
  %v7608 = vunpack.c.l.b16 %v7592
  %v7609 = vunpack.c.l.b16 %v7593
  %v7610 = vpack.c.b16 %v7602, %v7602
  %v7611 = vpack.c.b16 %v7603, %v7603
  %v7612 = vpack.c.b16 %v7604, %v7604
  %v7613 = vpack.c.b16 %v7605, %v7605
  %v7614 = vpack.c.b16 %v7606, %v7606
  %v7615 = vpack.c.b16 %v7607, %v7607
  %v7616 = vpack.c.b16 %v7608, %v7608
  %v7617 = vpack.c.b16 %v7609, %v7609
  %v7618 = vrot.slane %v7610, 6
  %v7619 = vrot.slane %v7611, 6
  %v7620 = vrot.slane %v7612, 6
  %v7621 = vrot.slane %v7613, 6
  %v7622 = vrot.slane %v7614, 6
  %v7623 = vrot.slane %v7615, 6
  %v7624 = vrot.slane %v7616, 6
  %v7625 = vrot.slane %v7617, 6
  %v7634 = vld [vmem:[#allocation2 + $0x4] sm:$0x4]
  %v7635 = vsel %vm7130, %v7618, %v7634
  %7636 = vst [vmem:[#allocation2 + $0x4] sm:$0x4] %v7635
  %v7637 = vld [vmem:[#allocation2 + $0xc] sm:$0x4]
  %v7638 = vsel %vm7130, %v7619, %v7637
  %7639 = vst [vmem:[#allocation2 + $0xc] sm:$0x4] %v7638
  %v7640 = vld [vmem:[#allocation2 + $0x14] sm:$0x4]
  %v7641 = vsel %vm7130, %v7620, %v7640
  %7642 = vst [vmem:[#allocation2 + $0x14] sm:$0x4] %v7641
  %v7643 = vld [vmem:[#allocation2 + $0x1c] sm:$0x4]
  %v7644 = vsel %vm7130, %v7621, %v7643
  %7645 = vst [vmem:[#allocation2 + $0x1c] sm:$0x4] %v7644
  %v7646 = vld [vmem:[#allocation2 + $0x24] sm:$0x4]
  %v7647 = vsel %vm7130, %v7622, %v7646
  %7648 = vst [vmem:[#allocation2 + $0x24] sm:$0x4] %v7647
  %v7649 = vld [vmem:[#allocation2 + $0x2c] sm:$0x4]
  %v7650 = vsel %vm7130, %v7623, %v7649
  %7651 = vst [vmem:[#allocation2 + $0x2c] sm:$0x4] %v7650
  %v7652 = vld [vmem:[#allocation2 + $0x34] sm:$0x4]
  %v7653 = vsel %vm7130, %v7624, %v7652
  %7654 = vst [vmem:[#allocation2 + $0x34] sm:$0x4] %v7653
  %v7655 = vld [vmem:[#allocation2 + $0x3c] sm:$0x4]
  %v7656 = vsel %vm7130, %v7625, %v7655
  %7657 = vst [vmem:[#allocation2 + $0x3c] sm:$0x4] %v7656
  %v7659 = vshll.u32 %v7610, 16
  %v7661 = vrot.slane %v7659, 7
  %v7663 = vshll.u32 %v7611, 16
  %v7665 = vrot.slane %v7663, 7
  %v7667 = vshll.u32 %v7612, 16
  %v7669 = vrot.slane %v7667, 7
  %v7671 = vshll.u32 %v7613, 16
  %v7673 = vrot.slane %v7671, 7
  %v7675 = vshll.u32 %v7614, 16
  %v7677 = vrot.slane %v7675, 7
  %v7679 = vshll.u32 %v7615, 16
  %v7681 = vrot.slane %v7679, 7
  %v7683 = vshll.u32 %v7616, 16
  %v7685 = vrot.slane %v7683, 7
  %v7687 = vshll.u32 %v7617, 16
  %v7689 = vrot.slane %v7687, 7
  %v7698 = vld [vmem:[#allocation2 + $0x4] sm:$0x4]
  %v7699 = vsel %vm7196, %v7661, %v7698
  %7700 = vst [vmem:[#allocation2 + $0x4] sm:$0x4] %v7699
  %v7701 = vld [vmem:[#allocation2 + $0xc] sm:$0x4]
  %v7702 = vsel %vm7196, %v7665, %v7701
  %7703 = vst [vmem:[#allocation2 + $0xc] sm:$0x4] %v7702
  %v7704 = vld [vmem:[#allocation2 + $0x14] sm:$0x4]
  %v7705 = vsel %vm7196, %v7669, %v7704
  %7706 = vst [vmem:[#allocation2 + $0x14] sm:$0x4] %v7705
  %v7707 = vld [vmem:[#allocation2 + $0x1c] sm:$0x4]
  %v7708 = vsel %vm7196, %v7673, %v7707
  %7709 = vst [vmem:[#allocation2 + $0x1c] sm:$0x4] %v7708
  %v7710 = vld [vmem:[#allocation2 + $0x24] sm:$0x4]
  %v7711 = vsel %vm7196, %v7677, %v7710
  %7712 = vst [vmem:[#allocation2 + $0x24] sm:$0x4] %v7711
  %v7713 = vld [vmem:[#allocation2 + $0x2c] sm:$0x4]
  %v7714 = vsel %vm7196, %v7681, %v7713
  %7715 = vst [vmem:[#allocation2 + $0x2c] sm:$0x4] %v7714
  %v7716 = vld [vmem:[#allocation2 + $0x34] sm:$0x4]
  %v7717 = vsel %vm7196, %v7685, %v7716
  %7718 = vst [vmem:[#allocation2 + $0x34] sm:$0x4] %v7717
  %v7719 = vld [vmem:[#allocation2 + $0x3c] sm:$0x4]
  %v7720 = vsel %vm7196, %v7689, %v7719
  %7721 = vst [vmem:[#allocation2 + $0x3c] sm:$0x4] %v7720
  %v7722 = vld [vmem:[#allocation2] sm:$0xf]
  %v7723 = vld [vmem:[#allocation2 + $0x4] sm:$0x1]
  %v7724 = vld [vmem:[#allocation2 + $0x8] sm:$0xf]
  %v7725 = vld [vmem:[#allocation2 + $0xc] sm:$0x1]
  %v7726 = vld [vmem:[#allocation2 + $0x10] sm:$0xf]
  %v7727 = vld [vmem:[#allocation2 + $0x14] sm:$0x1]
  %v7728 = vld [vmem:[#allocation2 + $0x18] sm:$0xf]
  %v7729 = vld [vmem:[#allocation2 + $0x1c] sm:$0x1]
  %v7730 = vld [vmem:[#allocation2 + $0x20] sm:$0xf]
  %v7731 = vld [vmem:[#allocation2 + $0x24] sm:$0x1]
  %v7732 = vld [vmem:[#allocation2 + $0x28] sm:$0xf]
  %v7733 = vld [vmem:[#allocation2 + $0x2c] sm:$0x1]
  %v7734 = vld [vmem:[#allocation2 + $0x30] sm:$0xf]
  %v7735 = vld [vmem:[#allocation2 + $0x34] sm:$0x1]
  %v7736 = vld [vmem:[#allocation2 + $0x38] sm:$0xf]
  %v7737 = vld [vmem:[#allocation2 + $0x3c] sm:$0x1]
  %v7738 = vld [vmem:[#allocation2 + $0x4] sm:$0x3]
  %v7739 = vld [vmem:[#allocation2 + $0xc] sm:$0x3]
  %v7740 = vld [vmem:[#allocation2 + $0x14] sm:$0x3]
  %v7741 = vld [vmem:[#allocation2 + $0x1c] sm:$0x3]
  %v7742 = vld [vmem:[#allocation2 + $0x24] sm:$0x3]
  %v7743 = vld [vmem:[#allocation2 + $0x2c] sm:$0x3]
  %v7744 = vld [vmem:[#allocation2 + $0x34] sm:$0x3]
  %v7745 = vld [vmem:[#allocation2 + $0x3c] sm:$0x3]
  %v7746 = vld [vmem:[#allocation2] sm:$0xe]
  %v7747 = vld [vmem:[#allocation2 + $0x8] sm:$0xe]
  %v7748 = vld [vmem:[#allocation2 + $0x10] sm:$0xe]
  %v7749 = vld [vmem:[#allocation2 + $0x18] sm:$0xe]
  %v7750 = vld [vmem:[#allocation2 + $0x20] sm:$0xe]
  %v7751 = vld [vmem:[#allocation2 + $0x28] sm:$0xe]
  %v7752 = vld [vmem:[#allocation2 + $0x30] sm:$0xe]
  %v7753 = vld [vmem:[#allocation2 + $0x38] sm:$0xe]
  %v7754 = vld [vmem:[#allocation2 + $0x4] sm:$0x7]
  %v7755 = vld [vmem:[#allocation2 + $0xc] sm:$0x7]
  %v7756 = vld [vmem:[#allocation2 + $0x14] sm:$0x7]
  %v7757 = vld [vmem:[#allocation2 + $0x1c] sm:$0x7]
  %v7758 = vld [vmem:[#allocation2 + $0x24] sm:$0x7]
  %v7759 = vld [vmem:[#allocation2 + $0x2c] sm:$0x7]
  %v7760 = vld [vmem:[#allocation2 + $0x34] sm:$0x7]
  %v7761 = vld [vmem:[#allocation2 + $0x3c] sm:$0x7]
  %v7762 = vld [vmem:[#allocation2] sm:$0xc]
  %v7763 = vld [vmem:[#allocation2 + $0x8] sm:$0xc]
  %v7764 = vld [vmem:[#allocation2 + $0x10] sm:$0xc]
  %v7765 = vld [vmem:[#allocation2 + $0x18] sm:$0xc]
  %v7766 = vld [vmem:[#allocation2 + $0x20] sm:$0xc]
  %v7767 = vld [vmem:[#allocation2 + $0x28] sm:$0xc]
  %v7768 = vld [vmem:[#allocation2 + $0x30] sm:$0xc]
  %v7769 = vld [vmem:[#allocation2 + $0x38] sm:$0xc]
  %v7786 = vunpack.c.l.b16 %v7722
  %v7787 = vunpack.c.l.b16 %v7723
  %v7788 = vunpack.c.l.b16 %v7724
  %v7789 = vunpack.c.l.b16 %v7725
  %v7790 = vunpack.c.l.b16 %v7726
  %v7791 = vunpack.c.l.b16 %v7727
  %v7792 = vunpack.c.l.b16 %v7728
  %v7793 = vunpack.c.l.b16 %v7729
  %v7794 = vunpack.c.l.b16 %v7730
  %v7795 = vunpack.c.l.b16 %v7731
  %v7796 = vunpack.c.l.b16 %v7732
  %v7797 = vunpack.c.l.b16 %v7733
  %v7798 = vunpack.c.l.b16 %v7734
  %v7799 = vunpack.c.l.b16 %v7735
  %v7800 = vunpack.c.l.b16 %v7736
  %v7801 = vunpack.c.l.b16 %v7737
  %v7802 = vpack.c.b16 %v7787, %v7786
  %v7803 = vpack.c.b16 %v7789, %v7788
  %v7804 = vpack.c.b16 %v7791, %v7790
  %v7805 = vpack.c.b16 %v7793, %v7792
  %v7806 = vpack.c.b16 %v7795, %v7794
  %v7807 = vpack.c.b16 %v7797, %v7796
  %v7808 = vpack.c.b16 %v7799, %v7798
  %v7809 = vpack.c.b16 %v7801, %v7800
  %v7818 = vunpack.c.l.b16 %v7738
  %v7819 = vunpack.c.l.b16 %v7739
  %v7820 = vunpack.c.l.b16 %v7740
  %v7821 = vunpack.c.l.b16 %v7741
  %v7822 = vunpack.c.l.b16 %v7742
  %v7823 = vunpack.c.l.b16 %v7743
  %v7824 = vunpack.c.l.b16 %v7744
  %v7825 = vunpack.c.l.b16 %v7745
  %v7826 = vpack.c.b16 %v7818, %v7786
  %v7827 = vpack.c.b16 %v7819, %v7788
  %v7828 = vpack.c.b16 %v7820, %v7790
  %v7829 = vpack.c.b16 %v7821, %v7792
  %v7830 = vpack.c.b16 %v7822, %v7794
  %v7831 = vpack.c.b16 %v7823, %v7796
  %v7832 = vpack.c.b16 %v7824, %v7798
  %v7833 = vpack.c.b16 %v7825, %v7800
  %v7835 = vshrl.u32 %v7826, 16
  %v7837 = vshll.u32 %v7826, 16
  %v7839 = vrot.slane %v7837, 1
  %v7840 = vor.u32 %v7835, %v7839
  %v7842 = vshrl.u32 %v7827, 16
  %v7844 = vshll.u32 %v7827, 16
  %v7846 = vrot.slane %v7844, 1
  %v7847 = vor.u32 %v7842, %v7846
  %v7849 = vshrl.u32 %v7828, 16
  %v7851 = vshll.u32 %v7828, 16
  %v7853 = vrot.slane %v7851, 1
  %v7854 = vor.u32 %v7849, %v7853
  %v7856 = vshrl.u32 %v7829, 16
  %v7858 = vshll.u32 %v7829, 16
  %v7860 = vrot.slane %v7858, 1
  %v7861 = vor.u32 %v7856, %v7860
  %v7863 = vshrl.u32 %v7830, 16
  %v7865 = vshll.u32 %v7830, 16
  %v7867 = vrot.slane %v7865, 1
  %v7868 = vor.u32 %v7863, %v7867
  %v7870 = vshrl.u32 %v7831, 16
  %v7872 = vshll.u32 %v7831, 16
  %v7874 = vrot.slane %v7872, 1
  %v7875 = vor.u32 %v7870, %v7874
  %v7877 = vshrl.u32 %v7832, 16
  %v7879 = vshll.u32 %v7832, 16
  %v7881 = vrot.slane %v7879, 1
  %v7882 = vor.u32 %v7877, %v7881
  %v7884 = vshrl.u32 %v7833, 16
  %v7886 = vshll.u32 %v7833, 16
  %v7888 = vrot.slane %v7886, 1
  %v7889 = vor.u32 %v7884, %v7888
  %7890 = vrot.lane.b32.xlu0 %v7840, 84
  %v7891 = vpop.permute.xlu0 %7890
  %7892 = vrot.lane.b32.xlu0 %v7847, 84
  %v7893 = vpop.permute.xlu0 %7892
  %7894 = vrot.lane.b32.xlu0 %v7854, 84
  %v7895 = vpop.permute.xlu0 %7894
  %7896 = vrot.lane.b32.xlu0 %v7861, 84
  %v7897 = vpop.permute.xlu0 %7896
  %7898 = vrot.lane.b32.xlu0 %v7868, 84
  %v7899 = vpop.permute.xlu0 %7898
  %7900 = vrot.lane.b32.xlu0 %v7875, 84
  %v7901 = vpop.permute.xlu0 %7900
  %7902 = vrot.lane.b32.xlu0 %v7882, 84
  %v7903 = vpop.permute.xlu0 %7902
  %7904 = vrot.lane.b32.xlu0 %v7889, 84
  %v7905 = vpop.permute.xlu0 %7904
  %v7914 = vunpack.c.l.b16 %v7746
  %v7915 = vunpack.c.l.b16 %v7747
  %v7916 = vunpack.c.l.b16 %v7748
  %v7917 = vunpack.c.l.b16 %v7749
  %v7918 = vunpack.c.l.b16 %v7750
  %v7919 = vunpack.c.l.b16 %v7751
  %v7920 = vunpack.c.l.b16 %v7752
  %v7921 = vunpack.c.l.b16 %v7753
  %v7922 = vpack.c.b16 %v7818, %v7914
  %v7923 = vpack.c.b16 %v7819, %v7915
  %v7924 = vpack.c.b16 %v7820, %v7916
  %v7925 = vpack.c.b16 %v7821, %v7917
  %v7926 = vpack.c.b16 %v7822, %v7918
  %v7927 = vpack.c.b16 %v7823, %v7919
  %v7928 = vpack.c.b16 %v7824, %v7920
  %v7929 = vpack.c.b16 %v7825, %v7921
  %v7930 = vrot.slane %v7922, 1
  %v7931 = vrot.slane %v7923, 1
  %v7932 = vrot.slane %v7924, 1
  %v7933 = vrot.slane %v7925, 1
  %v7934 = vrot.slane %v7926, 1
  %v7935 = vrot.slane %v7927, 1
  %v7936 = vrot.slane %v7928, 1
  %v7937 = vrot.slane %v7929, 1
  %7938 = vrot.lane.b32.xlu0 %v7930, 40
  %v7939 = vpop.permute.xlu0 %7938
  %7940 = vrot.lane.b32.xlu0 %v7931, 40
  %v7941 = vpop.permute.xlu0 %7940
  %7942 = vrot.lane.b32.xlu0 %v7932, 40
  %v7943 = vpop.permute.xlu0 %7942
  %7944 = vrot.lane.b32.xlu0 %v7933, 40
  %v7945 = vpop.permute.xlu0 %7944
  %7946 = vrot.lane.b32.xlu0 %v7934, 40
  %v7947 = vpop.permute.xlu0 %7946
  %7948 = vrot.lane.b32.xlu0 %v7935, 40
  %v7949 = vpop.permute.xlu0 %7948
  %7950 = vrot.lane.b32.xlu0 %v7936, 40
  %v7951 = vpop.permute.xlu0 %7950
  %7952 = vrot.lane.b32.xlu0 %v7937, 40
  %v7953 = vpop.permute.xlu0 %7952
  %v7962 = vunpack.c.l.b16 %v7754
  %v7963 = vunpack.c.l.b16 %v7755
  %v7964 = vunpack.c.l.b16 %v7756
  %v7965 = vunpack.c.l.b16 %v7757
  %v7966 = vunpack.c.l.b16 %v7758
  %v7967 = vunpack.c.l.b16 %v7759
  %v7968 = vunpack.c.l.b16 %v7760
  %v7969 = vunpack.c.l.b16 %v7761
  %v7970 = vpack.c.b16 %v7962, %v7914
  %v7971 = vpack.c.b16 %v7963, %v7915
  %v7972 = vpack.c.b16 %v7964, %v7916
  %v7973 = vpack.c.b16 %v7965, %v7917
  %v7974 = vpack.c.b16 %v7966, %v7918
  %v7975 = vpack.c.b16 %v7967, %v7919
  %v7976 = vpack.c.b16 %v7968, %v7920
  %v7977 = vpack.c.b16 %v7969, %v7921
  %v7979 = vshrl.u32 %v7970, 16
  %v7981 = vrot.slane %v7979, 1
  %v7982 = vshll.u32 %v7970, 16
  %v7984 = vrot.slane %v7982, 2
  %v7985 = vor.u32 %v7981, %v7984
  %v7987 = vshrl.u32 %v7971, 16
  %v7989 = vrot.slane %v7987, 1
  %v7990 = vshll.u32 %v7971, 16
  %v7992 = vrot.slane %v7990, 2
  %v7993 = vor.u32 %v7989, %v7992
  %v7995 = vshrl.u32 %v7972, 16
  %v7997 = vrot.slane %v7995, 1
  %v7998 = vshll.u32 %v7972, 16
  %v8000 = vrot.slane %v7998, 2
  %v8001 = vor.u32 %v7997, %v8000
  %v8003 = vshrl.u32 %v7973, 16
  %v8005 = vrot.slane %v8003, 1
  %v8006 = vshll.u32 %v7973, 16
  %v8008 = vrot.slane %v8006, 2
  %v8009 = vor.u32 %v8005, %v8008
  %v8011 = vshrl.u32 %v7974, 16
  %v8013 = vrot.slane %v8011, 1
  %v8014 = vshll.u32 %v7974, 16
  %v8016 = vrot.slane %v8014, 2
  %v8017 = vor.u32 %v8013, %v8016
  %v8019 = vshrl.u32 %v7975, 16
  %v8021 = vrot.slane %v8019, 1
  %v8022 = vshll.u32 %v7975, 16
  %v8024 = vrot.slane %v8022, 2
  %v8025 = vor.u32 %v8021, %v8024
  %v8027 = vshrl.u32 %v7976, 16
  %v8029 = vrot.slane %v8027, 1
  %v8030 = vshll.u32 %v7976, 16
  %v8032 = vrot.slane %v8030, 2
  %v8033 = vor.u32 %v8029, %v8032
  %v8035 = vshrl.u32 %v7977, 16
  %v8037 = vrot.slane %v8035, 1
  %v8038 = vshll.u32 %v7977, 16
  %v8040 = vrot.slane %v8038, 2
  %v8041 = vor.u32 %v8037, %v8040
  %8042 = vrot.lane.b32.xlu0 %v7985, 124
  %v8043 = vpop.permute.xlu0 %8042
  %8044 = vrot.lane.b32.xlu0 %v7993, 124
  %v8045 = vpop.permute.xlu0 %8044
  %8046 = vrot.lane.b32.xlu0 %v8001, 124
  %v8047 = vpop.permute.xlu0 %8046
  %8048 = vrot.lane.b32.xlu0 %v8009, 124
  %v8049 = vpop.permute.xlu0 %8048
  %8050 = vrot.lane.b32.xlu0 %v8017, 124
  %v8051 = vpop.permute.xlu0 %8050
  %8052 = vrot.lane.b32.xlu0 %v8025, 124
  %v8053 = vpop.permute.xlu0 %8052
  %8054 = vrot.lane.b32.xlu0 %v8033, 124
  %v8055 = vpop.permute.xlu0 %8054
  %8056 = vrot.lane.b32.xlu0 %v8041, 124
  %v8057 = vpop.permute.xlu0 %8056
  %v8066 = vunpack.c.l.b16 %v7762
  %v8067 = vunpack.c.l.b16 %v7763
  %v8068 = vunpack.c.l.b16 %v7764
  %v8069 = vunpack.c.l.b16 %v7765
  %v8070 = vunpack.c.l.b16 %v7766
  %v8071 = vunpack.c.l.b16 %v7767
  %v8072 = vunpack.c.l.b16 %v7768
  %v8073 = vunpack.c.l.b16 %v7769
  %v8074 = vpack.c.b16 %v7962, %v8066
  %v8075 = vpack.c.b16 %v7963, %v8067
  %v8076 = vpack.c.b16 %v7964, %v8068
  %v8077 = vpack.c.b16 %v7965, %v8069
  %v8078 = vpack.c.b16 %v7966, %v8070
  %v8079 = vpack.c.b16 %v7967, %v8071
  %v8080 = vpack.c.b16 %v7968, %v8072
  %v8081 = vpack.c.b16 %v7969, %v8073
  %v8082 = vrot.slane %v8074, 2
  %v8083 = vrot.slane %v8075, 2
  %v8084 = vrot.slane %v8076, 2
  %v8085 = vrot.slane %v8077, 2
  %v8086 = vrot.slane %v8078, 2
  %v8087 = vrot.slane %v8079, 2
  %v8088 = vrot.slane %v8080, 2
  %v8089 = vrot.slane %v8081, 2
  %8090 = vrot.lane.b32.xlu0 %v8082, 80
  %v8091 = vpop.permute.xlu0 %8090
  %8092 = vrot.lane.b32.xlu0 %v8083, 80
  %v8093 = vpop.permute.xlu0 %8092
  %8094 = vrot.lane.b32.xlu0 %v8084, 80
  %v8095 = vpop.permute.xlu0 %8094
  %8096 = vrot.lane.b32.xlu0 %v8085, 80
  %v8097 = vpop.permute.xlu0 %8096
  %8098 = vrot.lane.b32.xlu0 %v8086, 80
  %v8099 = vpop.permute.xlu0 %8098
  %8100 = vrot.lane.b32.xlu0 %v8087, 80
  %v8101 = vpop.permute.xlu0 %8100
  %8102 = vrot.lane.b32.xlu0 %v8088, 80
  %v8103 = vpop.permute.xlu0 %8102
  %8104 = vrot.lane.b32.xlu0 %v8089, 80
  %v8105 = vpop.permute.xlu0 %8104
  %vm8106 = vcmask 687104
  %v8109 = vsel %vm8106, %v7802, %v7891
  %v8112 = vsel %vm8106, %v7803, %v7893
  %v8115 = vsel %vm8106, %v7804, %v7895
  %v8118 = vsel %vm8106, %v7805, %v7897
  %v8121 = vsel %vm8106, %v7806, %v7899
  %v8124 = vsel %vm8106, %v7807, %v7901
  %v8127 = vsel %vm8106, %v7808, %v7903
  %v8130 = vsel %vm8106, %v7809, %v7905
  %vm8131 = vcmask 326656
  %v8133 = vsel %vm8131, %v7891, %v7939
  %v8135 = vsel %vm8131, %v7893, %v7941
  %v8137 = vsel %vm8131, %v7895, %v7943
  %v8139 = vsel %vm8131, %v7897, %v7945
  %v8141 = vsel %vm8131, %v7899, %v7947
  %v8143 = vsel %vm8131, %v7901, %v7949
  %v8145 = vsel %vm8131, %v7903, %v7951
  %v8147 = vsel %vm8131, %v7905, %v7953
  %vm8148 = vcmask 1014784
  %v8150 = vsel %vm8148, %v8133, %v8043
  %v8152 = vsel %vm8148, %v8135, %v8045
  %v8154 = vsel %vm8148, %v8137, %v8047
  %v8156 = vsel %vm8148, %v8139, %v8049
  %v8158 = vsel %vm8148, %v8141, %v8051
  %v8160 = vsel %vm8148, %v8143, %v8053
  %v8162 = vsel %vm8148, %v8145, %v8055
  %v8164 = vsel %vm8148, %v8147, %v8057
  %vm8165 = vcmask 654336
  %v8167 = vsel %vm8165, %v8043, %v8091
  %v8169 = vsel %vm8165, %v8045, %v8093
  %v8171 = vsel %vm8165, %v8047, %v8095
  %v8173 = vsel %vm8165, %v8049, %v8097
  %v8175 = vsel %vm8165, %v8051, %v8099
  %v8177 = vsel %vm8165, %v8053, %v8101
  %v8179 = vsel %vm8165, %v8055, %v8103
  %v8181 = vsel %vm8165, %v8057, %v8105
  %v8206 = vcombine.low %v8109, %v8150
  %v8207 = vcombine.high %v8109, %v8150
  %v8208 = vcombine.low %v8167, %v8091
  %v8209 = vcombine.high %v8167, %v8091
  %v8211 = vunpack.c.l.s4 1966171168
  %v8212 = vunpack.c.0.s8 %v8211
  %v8213 = vlaneseq
  %v8214 = vshrl.u32 %v8213, 7
  %v8215 = vsub.s32 %v8212, %v8214
  %v8216 = vrot.slane %v8206, %v8215
  %v8218 = vunpack.c.l.s4 1966171168
  %v8219 = vunpack.c.0.s8 %v8218
  %v8220 = vlaneseq
  %v8221 = vshrl.u32 %v8220, 7
  %v8222 = vsub.s32 %v8219, %v8221
  %v8223 = vrot.slane %v8207, %v8222
  %v8225 = vunpack.c.l.s4 1966171168
  %v8226 = vunpack.c.0.s8 %v8225
  %v8227 = vlaneseq
  %v8228 = vshrl.u32 %v8227, 7
  %v8229 = vsub.s32 %v8226, %v8228
  %v8230 = vrot.slane %v8208, %v8229
  %v8232 = vunpack.c.l.s4 1966171168
  %v8233 = vunpack.c.0.s8 %v8232
  %v8234 = vlaneseq
  %v8235 = vshrl.u32 %v8234, 7
  %v8236 = vsub.s32 %v8233, %v8235
  %v8237 = vrot.slane %v8209, %v8236
  %v8238 = vcombine.low %v8216, %v8230
  %v8239 = vcombine.high %v8216, %v8230
  %v8240 = vcombine.low %v8223, %v8237
  %v8242 = vunpack.c.l.s4 1966171168
  %v8243 = vunpack.c.0.s8 %v8242
  %v8244 = vlaneseq
  %v8245 = vshrl.u32 %v8244, 7
  %v8246 = vsub.s32 %v8243, %v8245
  %v8247 = vrot.slane %v8238, %v8246
  %v8249 = vunpack.c.l.s4 1966171168
  %v8250 = vunpack.c.0.s8 %v8249
  %v8251 = vlaneseq
  %v8252 = vshrl.u32 %v8251, 7
  %v8253 = vsub.s32 %v8250, %v8252
  %v8254 = vrot.slane %v8240, %v8253
  %v8256 = vunpack.c.l.s4 1966171168
  %v8257 = vunpack.c.0.s8 %v8256
  %v8258 = vlaneseq
  %v8259 = vshrl.u32 %v8258, 7
  %v8260 = vsub.s32 %v8257, %v8259
  %v8261 = vrot.slane %v8239, %v8260
  %v8262 = vcombine.high %v8247, %v8247
  %v8263 = vcombine.high %v8261, %v8261
  %v8264 = vcombine.low %v8112, %v8152
  %v8265 = vcombine.high %v8112, %v8152
  %v8266 = vcombine.low %v8169, %v8093
  %v8267 = vcombine.high %v8169, %v8093
  %v8269 = vunpack.c.l.s4 1966171168
  %v8270 = vunpack.c.0.s8 %v8269
  %v8271 = vlaneseq
  %v8272 = vshrl.u32 %v8271, 7
  %v8273 = vsub.s32 %v8270, %v8272
  %v8274 = vrot.slane %v8264, %v8273
  %v8276 = vunpack.c.l.s4 1966171168
  %v8277 = vunpack.c.0.s8 %v8276
  %v8278 = vlaneseq
  %v8279 = vshrl.u32 %v8278, 7
  %v8280 = vsub.s32 %v8277, %v8279
  %v8281 = vrot.slane %v8265, %v8280
  %v8283 = vunpack.c.l.s4 1966171168
  %v8284 = vunpack.c.0.s8 %v8283
  %v8285 = vlaneseq
  %v8286 = vshrl.u32 %v8285, 7
  %v8287 = vsub.s32 %v8284, %v8286
  %v8288 = vrot.slane %v8266, %v8287
  %v8290 = vunpack.c.l.s4 1966171168
  %v8291 = vunpack.c.0.s8 %v8290
  %v8292 = vlaneseq
  %v8293 = vshrl.u32 %v8292, 7
  %v8294 = vsub.s32 %v8291, %v8293
  %v8295 = vrot.slane %v8267, %v8294
  %v8296 = vcombine.low %v8274, %v8288
  %v8297 = vcombine.high %v8274, %v8288
  %v8298 = vcombine.low %v8281, %v8295
  %v8300 = vunpack.c.l.s4 1966171168
  %v8301 = vunpack.c.0.s8 %v8300
  %v8302 = vlaneseq
  %v8303 = vshrl.u32 %v8302, 7
  %v8304 = vsub.s32 %v8301, %v8303
  %v8305 = vrot.slane %v8296, %v8304
  %v8307 = vunpack.c.l.s4 1966171168
  %v8308 = vunpack.c.0.s8 %v8307
  %v8309 = vlaneseq
  %v8310 = vshrl.u32 %v8309, 7
  %v8311 = vsub.s32 %v8308, %v8310
  %v8312 = vrot.slane %v8298, %v8311
  %v8314 = vunpack.c.l.s4 1966171168
  %v8315 = vunpack.c.0.s8 %v8314
  %v8316 = vlaneseq
  %v8317 = vshrl.u32 %v8316, 7
  %v8318 = vsub.s32 %v8315, %v8317
  %v8319 = vrot.slane %v8297, %v8318
  %v8320 = vcombine.high %v8305, %v8305
  %v8321 = vcombine.high %v8319, %v8319
  %v8322 = vcombine.low %v8115, %v8154
  %v8323 = vcombine.high %v8115, %v8154
  %v8324 = vcombine.low %v8171, %v8095
  %v8325 = vcombine.high %v8171, %v8095
  %v8327 = vunpack.c.l.s4 1966171168
  %v8328 = vunpack.c.0.s8 %v8327
  %v8329 = vlaneseq
  %v8330 = vshrl.u32 %v8329, 7
  %v8331 = vsub.s32 %v8328, %v8330
  %v8332 = vrot.slane %v8322, %v8331
  %v8334 = vunpack.c.l.s4 1966171168
  %v8335 = vunpack.c.0.s8 %v8334
  %v8336 = vlaneseq
  %v8337 = vshrl.u32 %v8336, 7
  %v8338 = vsub.s32 %v8335, %v8337
  %v8339 = vrot.slane %v8323, %v8338
  %v8341 = vunpack.c.l.s4 1966171168
  %v8342 = vunpack.c.0.s8 %v8341
  %v8343 = vlaneseq
  %v8344 = vshrl.u32 %v8343, 7
  %v8345 = vsub.s32 %v8342, %v8344
  %v8346 = vrot.slane %v8324, %v8345
  %v8348 = vunpack.c.l.s4 1966171168
  %v8349 = vunpack.c.0.s8 %v8348
  %v8350 = vlaneseq
  %v8351 = vshrl.u32 %v8350, 7
  %v8352 = vsub.s32 %v8349, %v8351
  %v8353 = vrot.slane %v8325, %v8352
  %v8354 = vcombine.low %v8332, %v8346
  %v8355 = vcombine.high %v8332, %v8346
  %v8356 = vcombine.low %v8339, %v8353
  %v8358 = vunpack.c.l.s4 1966171168
  %v8359 = vunpack.c.0.s8 %v8358
  %v8360 = vlaneseq
  %v8361 = vshrl.u32 %v8360, 7
  %v8362 = vsub.s32 %v8359, %v8361
  %v8363 = vrot.slane %v8354, %v8362
  %v8365 = vunpack.c.l.s4 1966171168
  %v8366 = vunpack.c.0.s8 %v8365
  %v8367 = vlaneseq
  %v8368 = vshrl.u32 %v8367, 7
  %v8369 = vsub.s32 %v8366, %v8368
  %v8370 = vrot.slane %v8356, %v8369
  %v8372 = vunpack.c.l.s4 1966171168
  %v8373 = vunpack.c.0.s8 %v8372
  %v8374 = vlaneseq
  %v8375 = vshrl.u32 %v8374, 7
  %v8376 = vsub.s32 %v8373, %v8375
  %v8377 = vrot.slane %v8355, %v8376
  %v8378 = vcombine.high %v8363, %v8363
  %v8379 = vcombine.high %v8377, %v8377
  %v8380 = vcombine.low %v8118, %v8156
  %v8381 = vcombine.high %v8118, %v8156
  %v8382 = vcombine.low %v8173, %v8097
  %v8383 = vcombine.high %v8173, %v8097
  %v8385 = vunpack.c.l.s4 1966171168
  %v8386 = vunpack.c.0.s8 %v8385
  %v8387 = vlaneseq
  %v8388 = vshrl.u32 %v8387, 7
  %v8389 = vsub.s32 %v8386, %v8388
  %v8390 = vrot.slane %v8380, %v8389
  %v8392 = vunpack.c.l.s4 1966171168
  %v8393 = vunpack.c.0.s8 %v8392
  %v8394 = vlaneseq
  %v8395 = vshrl.u32 %v8394, 7
  %v8396 = vsub.s32 %v8393, %v8395
  %v8397 = vrot.slane %v8381, %v8396
  %v8399 = vunpack.c.l.s4 1966171168
  %v8400 = vunpack.c.0.s8 %v8399
  %v8401 = vlaneseq
  %v8402 = vshrl.u32 %v8401, 7
  %v8403 = vsub.s32 %v8400, %v8402
  %v8404 = vrot.slane %v8382, %v8403
  %v8406 = vunpack.c.l.s4 1966171168
  %v8407 = vunpack.c.0.s8 %v8406
  %v8408 = vlaneseq
  %v8409 = vshrl.u32 %v8408, 7
  %v8410 = vsub.s32 %v8407, %v8409
  %v8411 = vrot.slane %v8383, %v8410
  %v8412 = vcombine.low %v8390, %v8404
  %v8413 = vcombine.high %v8390, %v8404
  %v8414 = vcombine.low %v8397, %v8411
  %v8416 = vunpack.c.l.s4 1966171168
  %v8417 = vunpack.c.0.s8 %v8416
  %v8418 = vlaneseq
  %v8419 = vshrl.u32 %v8418, 7
  %v8420 = vsub.s32 %v8417, %v8419
  %v8421 = vrot.slane %v8412, %v8420
  %v8423 = vunpack.c.l.s4 1966171168
  %v8424 = vunpack.c.0.s8 %v8423
  %v8425 = vlaneseq
  %v8426 = vshrl.u32 %v8425, 7
  %v8427 = vsub.s32 %v8424, %v8426
  %v8428 = vrot.slane %v8414, %v8427
  %v8430 = vunpack.c.l.s4 1966171168
  %v8431 = vunpack.c.0.s8 %v8430
  %v8432 = vlaneseq
  %v8433 = vshrl.u32 %v8432, 7
  %v8434 = vsub.s32 %v8431, %v8433
  %v8435 = vrot.slane %v8413, %v8434
  %v8436 = vcombine.high %v8421, %v8421
  %v8437 = vcombine.high %v8435, %v8435
  %v8438 = vcombine.low %v8121, %v8158
  %v8439 = vcombine.high %v8121, %v8158
  %v8440 = vcombine.low %v8175, %v8099
  %v8441 = vcombine.high %v8175, %v8099
  %v8443 = vunpack.c.l.s4 1966171168
  %v8444 = vunpack.c.0.s8 %v8443
  %v8445 = vlaneseq
  %v8446 = vshrl.u32 %v8445, 7
  %v8447 = vsub.s32 %v8444, %v8446
  %v8448 = vrot.slane %v8438, %v8447
  %v8450 = vunpack.c.l.s4 1966171168
  %v8451 = vunpack.c.0.s8 %v8450
  %v8452 = vlaneseq
  %v8453 = vshrl.u32 %v8452, 7
  %v8454 = vsub.s32 %v8451, %v8453
  %v8455 = vrot.slane %v8439, %v8454
  %v8457 = vunpack.c.l.s4 1966171168
  %v8458 = vunpack.c.0.s8 %v8457
  %v8459 = vlaneseq
  %v8460 = vshrl.u32 %v8459, 7
  %v8461 = vsub.s32 %v8458, %v8460
  %v8462 = vrot.slane %v8440, %v8461
  %v8464 = vunpack.c.l.s4 1966171168
  %v8465 = vunpack.c.0.s8 %v8464
  %v8466 = vlaneseq
  %v8467 = vshrl.u32 %v8466, 7
  %v8468 = vsub.s32 %v8465, %v8467
  %v8469 = vrot.slane %v8441, %v8468
  %v8470 = vcombine.low %v8448, %v8462
  %v8471 = vcombine.high %v8448, %v8462
  %v8472 = vcombine.low %v8455, %v8469
  %v8474 = vunpack.c.l.s4 1966171168
  %v8475 = vunpack.c.0.s8 %v8474
  %v8476 = vlaneseq
  %v8477 = vshrl.u32 %v8476, 7
  %v8478 = vsub.s32 %v8475, %v8477
  %v8479 = vrot.slane %v8470, %v8478
  %v8481 = vunpack.c.l.s4 1966171168
  %v8482 = vunpack.c.0.s8 %v8481
  %v8483 = vlaneseq
  %v8484 = vshrl.u32 %v8483, 7
  %v8485 = vsub.s32 %v8482, %v8484
  %v8486 = vrot.slane %v8472, %v8485
  %v8488 = vunpack.c.l.s4 1966171168
  %v8489 = vunpack.c.0.s8 %v8488
  %v8490 = vlaneseq
  %v8491 = vshrl.u32 %v8490, 7
  %v8492 = vsub.s32 %v8489, %v8491
  %v8493 = vrot.slane %v8471, %v8492
  %v8494 = vcombine.high %v8479, %v8479
  %v8495 = vcombine.high %v8493, %v8493
  %v8496 = vcombine.low %v8124, %v8160
  %v8497 = vcombine.high %v8124, %v8160
  %v8498 = vcombine.low %v8177, %v8101
  %v8499 = vcombine.high %v8177, %v8101
  %v8501 = vunpack.c.l.s4 1966171168
  %v8502 = vunpack.c.0.s8 %v8501
  %v8503 = vlaneseq
  %v8504 = vshrl.u32 %v8503, 7
  %v8505 = vsub.s32 %v8502, %v8504
  %v8506 = vrot.slane %v8496, %v8505
  %v8508 = vunpack.c.l.s4 1966171168
  %v8509 = vunpack.c.0.s8 %v8508
  %v8510 = vlaneseq
  %v8511 = vshrl.u32 %v8510, 7
  %v8512 = vsub.s32 %v8509, %v8511
  %v8513 = vrot.slane %v8497, %v8512
  %v8515 = vunpack.c.l.s4 1966171168
  %v8516 = vunpack.c.0.s8 %v8515
  %v8517 = vlaneseq
  %v8518 = vshrl.u32 %v8517, 7
  %v8519 = vsub.s32 %v8516, %v8518
  %v8520 = vrot.slane %v8498, %v8519
  %v8522 = vunpack.c.l.s4 1966171168
  %v8523 = vunpack.c.0.s8 %v8522
  %v8524 = vlaneseq
  %v8525 = vshrl.u32 %v8524, 7
  %v8526 = vsub.s32 %v8523, %v8525
  %v8527 = vrot.slane %v8499, %v8526
  %v8528 = vcombine.low %v8506, %v8520
  %v8529 = vcombine.high %v8506, %v8520
  %v8530 = vcombine.low %v8513, %v8527
  %v8532 = vunpack.c.l.s4 1966171168
  %v8533 = vunpack.c.0.s8 %v8532
  %v8534 = vlaneseq
  %v8535 = vshrl.u32 %v8534, 7
  %v8536 = vsub.s32 %v8533, %v8535
  %v8537 = vrot.slane %v8528, %v8536
  %v8539 = vunpack.c.l.s4 1966171168
  %v8540 = vunpack.c.0.s8 %v8539
  %v8541 = vlaneseq
  %v8542 = vshrl.u32 %v8541, 7
  %v8543 = vsub.s32 %v8540, %v8542
  %v8544 = vrot.slane %v8530, %v8543
  %v8546 = vunpack.c.l.s4 1966171168
  %v8547 = vunpack.c.0.s8 %v8546
  %v8548 = vlaneseq
  %v8549 = vshrl.u32 %v8548, 7
  %v8550 = vsub.s32 %v8547, %v8549
  %v8551 = vrot.slane %v8529, %v8550
  %v8552 = vcombine.high %v8537, %v8537
  %v8553 = vcombine.high %v8551, %v8551
  %v8554 = vcombine.low %v8127, %v8162
  %v8555 = vcombine.high %v8127, %v8162
  %v8556 = vcombine.low %v8179, %v8103
  %v8557 = vcombine.high %v8179, %v8103
  %v8559 = vunpack.c.l.s4 1966171168
  %v8560 = vunpack.c.0.s8 %v8559
  %v8561 = vlaneseq
  %v8562 = vshrl.u32 %v8561, 7
  %v8563 = vsub.s32 %v8560, %v8562
  %v8564 = vrot.slane %v8554, %v8563
  %v8566 = vunpack.c.l.s4 1966171168
  %v8567 = vunpack.c.0.s8 %v8566
  %v8568 = vlaneseq
  %v8569 = vshrl.u32 %v8568, 7
  %v8570 = vsub.s32 %v8567, %v8569
  %v8571 = vrot.slane %v8555, %v8570
  %v8573 = vunpack.c.l.s4 1966171168
  %v8574 = vunpack.c.0.s8 %v8573
  %v8575 = vlaneseq
  %v8576 = vshrl.u32 %v8575, 7
  %v8577 = vsub.s32 %v8574, %v8576
  %v8578 = vrot.slane %v8556, %v8577
  %v8580 = vunpack.c.l.s4 1966171168
  %v8581 = vunpack.c.0.s8 %v8580
  %v8582 = vlaneseq
  %v8583 = vshrl.u32 %v8582, 7
  %v8584 = vsub.s32 %v8581, %v8583
  %v8585 = vrot.slane %v8557, %v8584
  %v8586 = vcombine.low %v8564, %v8578
  %v8587 = vcombine.high %v8564, %v8578
  %v8588 = vcombine.low %v8571, %v8585
  %v8590 = vunpack.c.l.s4 1966171168
  %v8591 = vunpack.c.0.s8 %v8590
  %v8592 = vlaneseq
  %v8593 = vshrl.u32 %v8592, 7
  %v8594 = vsub.s32 %v8591, %v8593
  %v8595 = vrot.slane %v8586, %v8594
  %v8597 = vunpack.c.l.s4 1966171168
  %v8598 = vunpack.c.0.s8 %v8597
  %v8599 = vlaneseq
  %v8600 = vshrl.u32 %v8599, 7
  %v8601 = vsub.s32 %v8598, %v8600
  %v8602 = vrot.slane %v8588, %v8601
  %v8604 = vunpack.c.l.s4 1966171168
  %v8605 = vunpack.c.0.s8 %v8604
  %v8606 = vlaneseq
  %v8607 = vshrl.u32 %v8606, 7
  %v8608 = vsub.s32 %v8605, %v8607
  %v8609 = vrot.slane %v8587, %v8608
  %v8610 = vcombine.high %v8595, %v8595
  %v8611 = vcombine.high %v8609, %v8609
  %v8612 = vcombine.low %v8130, %v8164
  %v8613 = vcombine.high %v8130, %v8164
  %v8614 = vcombine.low %v8181, %v8105
  %v8615 = vcombine.high %v8181, %v8105
  %v8617 = vunpack.c.l.s4 1966171168
  %v8618 = vunpack.c.0.s8 %v8617
  %v8619 = vlaneseq
  %v8620 = vshrl.u32 %v8619, 7
  %v8621 = vsub.s32 %v8618, %v8620
  %v8622 = vrot.slane %v8612, %v8621
  %v8624 = vunpack.c.l.s4 1966171168
  %v8625 = vunpack.c.0.s8 %v8624
  %v8626 = vlaneseq
  %v8627 = vshrl.u32 %v8626, 7
  %v8628 = vsub.s32 %v8625, %v8627
  %v8629 = vrot.slane %v8613, %v8628
  %v8631 = vunpack.c.l.s4 1966171168
  %v8632 = vunpack.c.0.s8 %v8631
  %v8633 = vlaneseq
  %v8634 = vshrl.u32 %v8633, 7
  %v8635 = vsub.s32 %v8632, %v8634
  %v8636 = vrot.slane %v8614, %v8635
  %v8638 = vunpack.c.l.s4 1966171168
  %v8639 = vunpack.c.0.s8 %v8638
  %v8640 = vlaneseq
  %v8641 = vshrl.u32 %v8640, 7
  %v8642 = vsub.s32 %v8639, %v8641
  %v8643 = vrot.slane %v8615, %v8642
  %v8644 = vcombine.low %v8622, %v8636
  %v8645 = vcombine.high %v8622, %v8636
  %v8646 = vcombine.low %v8629, %v8643
  %v8648 = vunpack.c.l.s4 1966171168
  %v8649 = vunpack.c.0.s8 %v8648
  %v8650 = vlaneseq
  %v8651 = vshrl.u32 %v8650, 7
  %v8652 = vsub.s32 %v8649, %v8651
  %v8653 = vrot.slane %v8644, %v8652
  %v8655 = vunpack.c.l.s4 1966171168
  %v8656 = vunpack.c.0.s8 %v8655
  %v8657 = vlaneseq
  %v8658 = vshrl.u32 %v8657, 7
  %v8659 = vsub.s32 %v8656, %v8658
  %v8660 = vrot.slane %v8646, %v8659
  %v8662 = vunpack.c.l.s4 1966171168
  %v8663 = vunpack.c.0.s8 %v8662
  %v8664 = vlaneseq
  %v8665 = vshrl.u32 %v8664, 7
  %v8666 = vsub.s32 %v8663, %v8665
  %v8667 = vrot.slane %v8645, %v8666
  %v8668 = vcombine.high %v8653, %v8653
  %v8669 = vcombine.high %v8667, %v8667
  %v8670 = vld [vmem:[%s3] sm:$0xff]
  %v8671 = vld [vmem:[%s3 + $0x8] sm:$0xff]
  %v8672 = vld [vmem:[%s3 + $0x10] sm:$0xff]
  %v8673 = vld [vmem:[%s3 + $0x18] sm:$0xff]
  %v8674 = vld [vmem:[%s3 + $0x20] sm:$0xff]
  %v8675 = vld [vmem:[%s3 + $0x28] sm:$0xff]
  %v8676 = vld [vmem:[%s3 + $0x30] sm:$0xff]
  %v8677 = vld [vmem:[%s3 + $0x38] sm:$0xff]
  %v8678 = vld [vmem:[%s3 + $0x40] sm:$0xff]
  %v8679 = vld [vmem:[%s3 + $0x48] sm:$0xff]
  %v8680 = vld [vmem:[%s3 + $0x50] sm:$0xff]
  %v8681 = vld [vmem:[%s3 + $0x58] sm:$0xff]
  %v8682 = vld [vmem:[%s3 + $0x60] sm:$0xff]
  %v8683 = vld [vmem:[%s3 + $0x68] sm:$0xff]
  %v8684 = vld [vmem:[%s3 + $0x70] sm:$0xff]
  %v8685 = vld [vmem:[%s3 + $0x78] sm:$0xff]
  %v8686 = vld [vmem:[%s3 + $0x80] sm:$0xff]
  %v8687 = vld [vmem:[%s3 + $0x88] sm:$0xff]
  %v8688 = vld [vmem:[%s3 + $0x90] sm:$0xff]
  %v8689 = vld [vmem:[%s3 + $0x98] sm:$0xff]
  %v8690 = vld [vmem:[%s3 + $0xa0] sm:$0xff]
  %v8691 = vld [vmem:[%s3 + $0xa8] sm:$0xff]
  %v8692 = vld [vmem:[%s3 + $0xb0] sm:$0xff]
  %v8693 = vld [vmem:[%s3 + $0xb8] sm:$0xff]
  %v8694 = vld [vmem:[%s3 + $0xc0] sm:$0xff]
  %v8695 = vld [vmem:[%s3 + $0xc8] sm:$0xff]
  %v8696 = vld [vmem:[%s3 + $0xd0] sm:$0xff]
  %v8697 = vld [vmem:[%s3 + $0xd8] sm:$0xff]
  %v8698 = vld [vmem:[%s3 + $0xe0] sm:$0xff]
  %v8699 = vld [vmem:[%s3 + $0xe8] sm:$0xff]
  %v8700 = vld [vmem:[%s3 + $0xf0] sm:$0xff]
  %v8701 = vld [vmem:[%s3 + $0xf8] sm:$0xff]
  %v8702 = vld [vmem:[%s3 + $0x100] sm:$0xff]
  %v8703 = vld [vmem:[%s3 + $0x108] sm:$0xff]
  %v8704 = vld [vmem:[%s3 + $0x110] sm:$0xff]
  %v8705 = vld [vmem:[%s3 + $0x118] sm:$0xff]
  %v8706 = vld [vmem:[%s3 + $0x120] sm:$0xff]
  %v8707 = vld [vmem:[%s3 + $0x128] sm:$0xff]
  %v8708 = vld [vmem:[%s3 + $0x130] sm:$0xff]
  %v8709 = vld [vmem:[%s3 + $0x138] sm:$0xff]
  %v8710 = vld [vmem:[%s3 + $0x140] sm:$0xff]
  %v8711 = vld [vmem:[%s3 + $0x148] sm:$0xff]
  %v8712 = vld [vmem:[%s3 + $0x150] sm:$0xff]
  %v8713 = vld [vmem:[%s3 + $0x158] sm:$0xff]
  %v8714 = vld [vmem:[%s3 + $0x160] sm:$0xff]
  %v8715 = vld [vmem:[%s3 + $0x168] sm:$0xff]
  %v8716 = vld [vmem:[%s3 + $0x170] sm:$0xff]
  %v8717 = vld [vmem:[%s3 + $0x178] sm:$0xff]
  %v8718 = vld [vmem:[%s3 + $0x180] sm:$0xff]
  %v8719 = vld [vmem:[%s3 + $0x188] sm:$0xff]
  %v8720 = vld [vmem:[%s3 + $0x190] sm:$0xff]
  %v8721 = vld [vmem:[%s3 + $0x198] sm:$0xff]
  %v8722 = vld [vmem:[%s3 + $0x1a0] sm:$0x33]
  %v8723 = vld [vmem:[%s4] sm:$0x3]
  %v8725 = vlaneseq
  %v8726 = vshrl.u32 %v8725, 7
  %v8727 = vsub.s32 0, %v8726
  %v8728 = vrot.slane %v8723, %v8727
  %v8729 = vlaneseq
  %v8730 = vshrl.u32 %v8729, 7
  %v8731 = vsub.s32 1, %v8730
  %v8732 = vrot.slane %v8723, %v8731
  %v8735 = vcombine.low %v8247, %v8261
  %v8736 = vcombine.low %v8262, %v8263
  %v8737 = vcombine.low %v8254, %v8305
  %v8738 = vcombine.low %v8319, %v8320
  %v8740 = vunpack.c.l.s4 1966171168
  %v8741 = vunpack.c.0.s8 %v8740
  %v8742 = vlaneseq
  %v8743 = vshrl.u32 %v8742, 7
  %v8744 = vsub.s32 %v8741, %v8743
  %v8745 = vrot.slane %v8735, %v8744
  %v8747 = vunpack.c.l.s4 1966171168
  %v8748 = vunpack.c.0.s8 %v8747
  %v8749 = vlaneseq
  %v8750 = vshrl.u32 %v8749, 7
  %v8751 = vsub.s32 %v8748, %v8750
  %v8752 = vrot.slane %v8736, %v8751
  %v8754 = vunpack.c.l.s4 1966171168
  %v8755 = vunpack.c.0.s8 %v8754
  %v8756 = vlaneseq
  %v8757 = vshrl.u32 %v8756, 7
  %v8758 = vsub.s32 %v8755, %v8757
  %v8759 = vrot.slane %v8737, %v8758
  %v8761 = vunpack.c.l.s4 1966171168
  %v8762 = vunpack.c.0.s8 %v8761
  %v8763 = vlaneseq
  %v8764 = vshrl.u32 %v8763, 7
  %v8765 = vsub.s32 %v8762, %v8764
  %v8766 = vrot.slane %v8738, %v8765
  %v8767 = vcombine.low %v8745, %v8752
  %v8768 = vcombine.high %v8745, %v8752
  %v8769 = vcombine.low %v8759, %v8766
  %v8770 = vcombine.high %v8759, %v8766
  %v8772 = vunpack.c.l.s4 1966171168
  %v8773 = vunpack.c.0.s8 %v8772
  %v8774 = vlaneseq
  %v8775 = vshrl.u32 %v8774, 7
  %v8776 = vsub.s32 %v8773, %v8775
  %v8777 = vrot.slane %v8767, %v8776
  %v8779 = vunpack.c.l.s4 1966171168
  %v8780 = vunpack.c.0.s8 %v8779
  %v8781 = vlaneseq
  %v8782 = vshrl.u32 %v8781, 7
  %v8783 = vsub.s32 %v8780, %v8782
  %v8784 = vrot.slane %v8768, %v8783
  %v8786 = vunpack.c.l.s4 1966171168
  %v8787 = vunpack.c.0.s8 %v8786
  %v8788 = vlaneseq
  %v8789 = vshrl.u32 %v8788, 7
  %v8790 = vsub.s32 %v8787, %v8789
  %v8791 = vrot.slane %v8769, %v8790
  %v8793 = vunpack.c.l.s4 1966171168
  %v8794 = vunpack.c.0.s8 %v8793
  %v8795 = vlaneseq
  %v8796 = vshrl.u32 %v8795, 7
  %v8797 = vsub.s32 %v8794, %v8796
  %v8798 = vrot.slane %v8770, %v8797
  %v8799 = vcombine.low %v8777, %v8791
  %v8800 = vcombine.high %v8777, %v8791
  %v8801 = vcombine.low %v8784, %v8798
  %v8802 = vcombine.high %v8784, %v8798
  %v8803 = vcombine.low %v8321, %v8312
  %v8804 = vcombine.low %v8363, %v8377
  %v8805 = vcombine.low %v8378, %v8379
  %v8806 = vcombine.low %v8370, %v8421
  %v8808 = vunpack.c.l.s4 1966171168
  %v8809 = vunpack.c.0.s8 %v8808
  %v8810 = vlaneseq
  %v8811 = vshrl.u32 %v8810, 7
  %v8812 = vsub.s32 %v8809, %v8811
  %v8813 = vrot.slane %v8803, %v8812
  %v8815 = vunpack.c.l.s4 1966171168
  %v8816 = vunpack.c.0.s8 %v8815
  %v8817 = vlaneseq
  %v8818 = vshrl.u32 %v8817, 7
  %v8819 = vsub.s32 %v8816, %v8818
  %v8820 = vrot.slane %v8804, %v8819
  %v8822 = vunpack.c.l.s4 1966171168
  %v8823 = vunpack.c.0.s8 %v8822
  %v8824 = vlaneseq
  %v8825 = vshrl.u32 %v8824, 7
  %v8826 = vsub.s32 %v8823, %v8825
  %v8827 = vrot.slane %v8805, %v8826
  %v8829 = vunpack.c.l.s4 1966171168
  %v8830 = vunpack.c.0.s8 %v8829
  %v8831 = vlaneseq
  %v8832 = vshrl.u32 %v8831, 7
  %v8833 = vsub.s32 %v8830, %v8832
  %v8834 = vrot.slane %v8806, %v8833
  %v8835 = vcombine.low %v8813, %v8820
  %v8836 = vcombine.high %v8813, %v8820
  %v8837 = vcombine.low %v8827, %v8834
  %v8838 = vcombine.high %v8827, %v8834
  %v8840 = vunpack.c.l.s4 1966171168
  %v8841 = vunpack.c.0.s8 %v8840
  %v8842 = vlaneseq
  %v8843 = vshrl.u32 %v8842, 7
  %v8844 = vsub.s32 %v8841, %v8843
  %v8845 = vrot.slane %v8835, %v8844
  %v8847 = vunpack.c.l.s4 1966171168
  %v8848 = vunpack.c.0.s8 %v8847
  %v8849 = vlaneseq
  %v8850 = vshrl.u32 %v8849, 7
  %v8851 = vsub.s32 %v8848, %v8850
  %v8852 = vrot.slane %v8836, %v8851
  %v8854 = vunpack.c.l.s4 1966171168
  %v8855 = vunpack.c.0.s8 %v8854
  %v8856 = vlaneseq
  %v8857 = vshrl.u32 %v8856, 7
  %v8858 = vsub.s32 %v8855, %v8857
  %v8859 = vrot.slane %v8837, %v8858
  %v8861 = vunpack.c.l.s4 1966171168
  %v8862 = vunpack.c.0.s8 %v8861
  %v8863 = vlaneseq
  %v8864 = vshrl.u32 %v8863, 7
  %v8865 = vsub.s32 %v8862, %v8864
  %v8866 = vrot.slane %v8838, %v8865
  %v8867 = vcombine.low %v8845, %v8859
  %v8868 = vcombine.high %v8845, %v8859
  %v8869 = vcombine.low %v8852, %v8866
  %v8870 = vcombine.high %v8852, %v8866
  %v8871 = vcombine.low %v8435, %v8436
  %v8872 = vcombine.low %v8437, %v8428
  %v8873 = vcombine.low %v8479, %v8493
  %v8874 = vcombine.low %v8494, %v8495
  %v8876 = vunpack.c.l.s4 1966171168
  %v8877 = vunpack.c.0.s8 %v8876
  %v8878 = vlaneseq
  %v8879 = vshrl.u32 %v8878, 7
  %v8880 = vsub.s32 %v8877, %v8879
  %v8881 = vrot.slane %v8871, %v8880
  %v8883 = vunpack.c.l.s4 1966171168
  %v8884 = vunpack.c.0.s8 %v8883
  %v8885 = vlaneseq
  %v8886 = vshrl.u32 %v8885, 7
  %v8887 = vsub.s32 %v8884, %v8886
  %v8888 = vrot.slane %v8872, %v8887
  %v8890 = vunpack.c.l.s4 1966171168
  %v8891 = vunpack.c.0.s8 %v8890
  %v8892 = vlaneseq
  %v8893 = vshrl.u32 %v8892, 7
  %v8894 = vsub.s32 %v8891, %v8893
  %v8895 = vrot.slane %v8873, %v8894
  %v8897 = vunpack.c.l.s4 1966171168
  %v8898 = vunpack.c.0.s8 %v8897
  %v8899 = vlaneseq
  %v8900 = vshrl.u32 %v8899, 7
  %v8901 = vsub.s32 %v8898, %v8900
  %v8902 = vrot.slane %v8874, %v8901
  %v8903 = vcombine.low %v8881, %v8888
  %v8904 = vcombine.high %v8881, %v8888
  %v8905 = vcombine.low %v8895, %v8902
  %v8906 = vcombine.high %v8895, %v8902
  %v8908 = vunpack.c.l.s4 1966171168
  %v8909 = vunpack.c.0.s8 %v8908
  %v8910 = vlaneseq
  %v8911 = vshrl.u32 %v8910, 7
  %v8912 = vsub.s32 %v8909, %v8911
  %v8913 = vrot.slane %v8903, %v8912
  %v8915 = vunpack.c.l.s4 1966171168
  %v8916 = vunpack.c.0.s8 %v8915
  %v8917 = vlaneseq
  %v8918 = vshrl.u32 %v8917, 7
  %v8919 = vsub.s32 %v8916, %v8918
  %v8920 = vrot.slane %v8904, %v8919
  %v8922 = vunpack.c.l.s4 1966171168
  %v8923 = vunpack.c.0.s8 %v8922
  %v8924 = vlaneseq
  %v8925 = vshrl.u32 %v8924, 7
  %v8926 = vsub.s32 %v8923, %v8925
  %v8927 = vrot.slane %v8905, %v8926
  %v8929 = vunpack.c.l.s4 1966171168
  %v8930 = vunpack.c.0.s8 %v8929
  %v8931 = vlaneseq
  %v8932 = vshrl.u32 %v8931, 7
  %v8933 = vsub.s32 %v8930, %v8932
  %v8934 = vrot.slane %v8906, %v8933
  %v8935 = vcombine.low %v8913, %v8927
  %v8936 = vcombine.high %v8913, %v8927
  %v8937 = vcombine.low %v8920, %v8934
  %v8938 = vcombine.high %v8920, %v8934
  %v8939 = vcombine.low %v8486, %v8537
  %v8940 = vcombine.low %v8551, %v8552
  %v8941 = vcombine.low %v8553, %v8544
  %v8942 = vcombine.low %v8595, %v8609
  %v8944 = vunpack.c.l.s4 1966171168
  %v8945 = vunpack.c.0.s8 %v8944
  %v8946 = vlaneseq
  %v8947 = vshrl.u32 %v8946, 7
  %v8948 = vsub.s32 %v8945, %v8947
  %v8949 = vrot.slane %v8939, %v8948
  %v8951 = vunpack.c.l.s4 1966171168
  %v8952 = vunpack.c.0.s8 %v8951
  %v8953 = vlaneseq
  %v8954 = vshrl.u32 %v8953, 7
  %v8955 = vsub.s32 %v8952, %v8954
  %v8956 = vrot.slane %v8940, %v8955
  %v8958 = vunpack.c.l.s4 1966171168
  %v8959 = vunpack.c.0.s8 %v8958
  %v8960 = vlaneseq
  %v8961 = vshrl.u32 %v8960, 7
  %v8962 = vsub.s32 %v8959, %v8961
  %v8963 = vrot.slane %v8941, %v8962
  %v8965 = vunpack.c.l.s4 1966171168
  %v8966 = vunpack.c.0.s8 %v8965
  %v8967 = vlaneseq
  %v8968 = vshrl.u32 %v8967, 7
  %v8969 = vsub.s32 %v8966, %v8968
  %v8970 = vrot.slane %v8942, %v8969
  %v8971 = vcombine.low %v8949, %v8956
  %v8972 = vcombine.high %v8949, %v8956
  %v8973 = vcombine.low %v8963, %v8970
  %v8974 = vcombine.high %v8963, %v8970
  %v8976 = vunpack.c.l.s4 1966171168
  %v8977 = vunpack.c.0.s8 %v8976
  %v8978 = vlaneseq
  %v8979 = vshrl.u32 %v8978, 7
  %v8980 = vsub.s32 %v8977, %v8979
  %v8981 = vrot.slane %v8971, %v8980
  %v8983 = vunpack.c.l.s4 1966171168
  %v8984 = vunpack.c.0.s8 %v8983
  %v8985 = vlaneseq
  %v8986 = vshrl.u32 %v8985, 7
  %v8987 = vsub.s32 %v8984, %v8986
  %v8988 = vrot.slane %v8972, %v8987
  %v8990 = vunpack.c.l.s4 1966171168
  %v8991 = vunpack.c.0.s8 %v8990
  %v8992 = vlaneseq
  %v8993 = vshrl.u32 %v8992, 7
  %v8994 = vsub.s32 %v8991, %v8993
  %v8995 = vrot.slane %v8973, %v8994
  %v8997 = vunpack.c.l.s4 1966171168
  %v8998 = vunpack.c.0.s8 %v8997
  %v8999 = vlaneseq
  %v9000 = vshrl.u32 %v8999, 7
  %v9001 = vsub.s32 %v8998, %v9000
  %v9002 = vrot.slane %v8974, %v9001
  %v9003 = vcombine.low %v8981, %v8995
  %v9004 = vcombine.high %v8981, %v8995
  %v9005 = vcombine.low %v8988, %v9002
  %v9006 = vcombine.high %v8988, %v9002
  %v9007 = vcombine.low %v8610, %v8611
  %v9008 = vcombine.low %v8602, %v8653
  %v9009 = vcombine.low %v8667, %v8668
  %v9010 = vcombine.low %v8669, %v8660
  %v9012 = vunpack.c.l.s4 1966171168
  %v9013 = vunpack.c.0.s8 %v9012
  %v9014 = vlaneseq
  %v9015 = vshrl.u32 %v9014, 7
  %v9016 = vsub.s32 %v9013, %v9015
  %v9017 = vrot.slane %v9007, %v9016
  %v9019 = vunpack.c.l.s4 1966171168
  %v9020 = vunpack.c.0.s8 %v9019
  %v9021 = vlaneseq
  %v9022 = vshrl.u32 %v9021, 7
  %v9023 = vsub.s32 %v9020, %v9022
  %v9024 = vrot.slane %v9008, %v9023
  %v9026 = vunpack.c.l.s4 1966171168
  %v9027 = vunpack.c.0.s8 %v9026
  %v9028 = vlaneseq
  %v9029 = vshrl.u32 %v9028, 7
  %v9030 = vsub.s32 %v9027, %v9029
  %v9031 = vrot.slane %v9009, %v9030
  %v9033 = vunpack.c.l.s4 1966171168
  %v9034 = vunpack.c.0.s8 %v9033
  %v9035 = vlaneseq
  %v9036 = vshrl.u32 %v9035, 7
  %v9037 = vsub.s32 %v9034, %v9036
  %v9038 = vrot.slane %v9010, %v9037
  %v9039 = vcombine.low %v9017, %v9024
  %v9040 = vcombine.high %v9017, %v9024
  %v9041 = vcombine.low %v9031, %v9038
  %v9042 = vcombine.high %v9031, %v9038
  %v9044 = vunpack.c.l.s4 1966171168
  %v9045 = vunpack.c.0.s8 %v9044
  %v9046 = vlaneseq
  %v9047 = vshrl.u32 %v9046, 7
  %v9048 = vsub.s32 %v9045, %v9047
  %v9049 = vrot.slane %v9039, %v9048
  %v9051 = vunpack.c.l.s4 1966171168
  %v9052 = vunpack.c.0.s8 %v9051
  %v9053 = vlaneseq
  %v9054 = vshrl.u32 %v9053, 7
  %v9055 = vsub.s32 %v9052, %v9054
  %v9056 = vrot.slane %v9040, %v9055
  %v9058 = vunpack.c.l.s4 1966171168
  %v9059 = vunpack.c.0.s8 %v9058
  %v9060 = vlaneseq
  %v9061 = vshrl.u32 %v9060, 7
  %v9062 = vsub.s32 %v9059, %v9061
  %v9063 = vrot.slane %v9041, %v9062
  %v9065 = vunpack.c.l.s4 1966171168
  %v9066 = vunpack.c.0.s8 %v9065
  %v9067 = vlaneseq
  %v9068 = vshrl.u32 %v9067, 7
  %v9069 = vsub.s32 %v9066, %v9068
  %v9070 = vrot.slane %v9042, %v9069
  %v9071 = vcombine.low %v9049, %v9063
  %v9072 = vcombine.high %v9049, %v9063
  %v9073 = vcombine.low %v9056, %v9070
  %v9074 = vcombine.high %v9056, %v9070
  %v9143 = vunpack.c.l.b16 %v8670
  %v9144 = vunpack.c.h.b16 %v8670
  %v9145 = vunpack.c.l.b16 %v8671
  %v9146 = vunpack.c.h.b16 %v8671
  %v9147 = vunpack.c.l.b16 %v8672
  %v9148 = vunpack.c.h.b16 %v8672
  %v9149 = vunpack.c.l.b16 %v8673
  %v9150 = vunpack.c.h.b16 %v8673
  %v9151 = vunpack.c.l.b16 %v8674
  %v9152 = vunpack.c.h.b16 %v8674
  %v9153 = vunpack.c.l.b16 %v8675
  %v9154 = vunpack.c.h.b16 %v8675
  %v9155 = vunpack.c.l.b16 %v8676
  %v9156 = vunpack.c.h.b16 %v8676
  %v9157 = vunpack.c.l.b16 %v8677
  %v9158 = vunpack.c.h.b16 %v8677
  %v9159 = vunpack.c.l.b16 %v8678
  %v9160 = vunpack.c.h.b16 %v8678
  %v9161 = vunpack.c.l.b16 %v8679
  %v9162 = vunpack.c.h.b16 %v8679
  %v9163 = vunpack.c.l.b16 %v8680
  %v9164 = vunpack.c.h.b16 %v8680
  %v9165 = vunpack.c.l.b16 %v8681
  %v9166 = vunpack.c.h.b16 %v8681
  %v9167 = vunpack.c.l.b16 %v8682
  %v9168 = vunpack.c.h.b16 %v8682
  %v9169 = vunpack.c.l.b16 %v8683
  %v9170 = vunpack.c.h.b16 %v8683
  %v9171 = vunpack.c.l.b16 %v8684
  %v9172 = vunpack.c.h.b16 %v8684
  %v9173 = vunpack.c.l.b16 %v8685
  %v9174 = vunpack.c.h.b16 %v8685
  %v9175 = vunpack.c.l.b16 %v8686
  %v9176 = vunpack.c.h.b16 %v8686
  %v9177 = vunpack.c.l.b16 %v8687
  %v9178 = vunpack.c.h.b16 %v8687
  %v9179 = vunpack.c.l.b16 %v8688
  %v9180 = vunpack.c.h.b16 %v8688
  %v9181 = vunpack.c.l.b16 %v8689
  %v9182 = vunpack.c.h.b16 %v8689
  %v9183 = vunpack.c.l.b16 %v8690
  %v9184 = vunpack.c.h.b16 %v8690
  %v9185 = vunpack.c.l.b16 %v8691
  %v9186 = vunpack.c.h.b16 %v8691
  %v9187 = vunpack.c.l.b16 %v8692
  %v9188 = vunpack.c.h.b16 %v8692
  %v9189 = vunpack.c.l.b16 %v8693
  %v9190 = vunpack.c.h.b16 %v8693
  %v9191 = vunpack.c.l.b16 %v8694
  %v9192 = vunpack.c.h.b16 %v8694
  %v9193 = vunpack.c.l.b16 %v8695
  %v9194 = vunpack.c.h.b16 %v8695
  %v9195 = vunpack.c.l.b16 %v8696
  %v9196 = vunpack.c.h.b16 %v8696
  %v9197 = vunpack.c.l.b16 %v8697
  %v9198 = vunpack.c.h.b16 %v8697
  %v9199 = vunpack.c.l.b16 %v8698
  %v9200 = vunpack.c.h.b16 %v8698
  %v9201 = vunpack.c.l.b16 %v8699
  %v9202 = vunpack.c.h.b16 %v8699
  %v9203 = vunpack.c.l.b16 %v8700
  %v9204 = vunpack.c.h.b16 %v8700
  %v9205 = vunpack.c.l.b16 %v8701
  %v9206 = vunpack.c.h.b16 %v8701
  %v9207 = vunpack.c.l.b16 %v8702
  %v9208 = vunpack.c.h.b16 %v8702
  %v9209 = vunpack.c.l.b16 %v8703
  %v9210 = vunpack.c.h.b16 %v8703
  %v9211 = vunpack.c.l.b16 %v8704
  %v9212 = vunpack.c.h.b16 %v8704
  %v9213 = vunpack.c.l.b16 %v8705
  %v9214 = vunpack.c.h.b16 %v8705
  %v9215 = vunpack.c.l.b16 %v8706
  %v9216 = vunpack.c.h.b16 %v8706
  %v9217 = vunpack.c.l.b16 %v8707
  %v9218 = vunpack.c.h.b16 %v8707
  %v9219 = vunpack.c.l.b16 %v8708
  %v9220 = vunpack.c.h.b16 %v8708
  %v9221 = vunpack.c.l.b16 %v8709
  %v9222 = vunpack.c.h.b16 %v8709
  %v9223 = vunpack.c.l.b16 %v8710
  %v9224 = vunpack.c.h.b16 %v8710
  %v9225 = vunpack.c.l.b16 %v8711
  %v9226 = vunpack.c.h.b16 %v8711
  %v9227 = vunpack.c.l.b16 %v8712
  %v9228 = vunpack.c.h.b16 %v8712
  %v9229 = vunpack.c.l.b16 %v8713
  %v9230 = vunpack.c.h.b16 %v8713
  %v9231 = vunpack.c.l.b16 %v8714
  %v9232 = vunpack.c.h.b16 %v8714
  %v9233 = vunpack.c.l.b16 %v8715
  %v9234 = vunpack.c.h.b16 %v8715
  %v9235 = vunpack.c.l.b16 %v8716
  %v9236 = vunpack.c.h.b16 %v8716
  %v9237 = vunpack.c.l.b16 %v8717
  %v9238 = vunpack.c.h.b16 %v8717
  %v9239 = vunpack.c.l.b16 %v8718
  %v9240 = vunpack.c.h.b16 %v8718
  %v9241 = vunpack.c.l.b16 %v8719
  %v9242 = vunpack.c.h.b16 %v8719
  %v9243 = vunpack.c.l.b16 %v8720
  %v9244 = vunpack.c.h.b16 %v8720
  %v9245 = vunpack.c.l.b16 %v8721
  %v9246 = vunpack.c.h.b16 %v8721
  %v9247 = vunpack.c.l.b16 %v8722
  %v9248 = vunpack.c.h.b16 %v8722
  %v9249 = vpack.c.b16 %v9145, %v9143
  %v9250 = vpack.c.b16 %v9146, %v9144
  %v9251 = vpack.c.b16 %v9149, %v9147
  %v9252 = vpack.c.b16 %v9150, %v9148
  %v9253 = vpack.c.b16 %v9153, %v9151
  %v9254 = vpack.c.b16 %v9154, %v9152
  %v9255 = vpack.c.b16 %v9157, %v9155
  %v9256 = vpack.c.b16 %v9158, %v9156
  %v9257 = vpack.c.b16 %v9161, %v9159
  %v9258 = vpack.c.b16 %v9162, %v9160
  %v9259 = vpack.c.b16 %v9165, %v9163
  %v9260 = vpack.c.b16 %v9166, %v9164
  %v9261 = vpack.c.b16 %v9169, %v9167
  %v9262 = vpack.c.b16 %v9170, %v9168
  %v9263 = vpack.c.b16 %v9173, %v9171
  %v9264 = vpack.c.b16 %v9174, %v9172
  %v9265 = vpack.c.b16 %v9177, %v9175
  %v9266 = vpack.c.b16 %v9178, %v9176
  %v9267 = vpack.c.b16 %v9181, %v9179
  %v9268 = vpack.c.b16 %v9182, %v9180
  %v9269 = vpack.c.b16 %v9185, %v9183
  %v9270 = vpack.c.b16 %v9186, %v9184
  %v9271 = vpack.c.b16 %v9189, %v9187
  %v9272 = vpack.c.b16 %v9190, %v9188
  %v9273 = vpack.c.b16 %v9193, %v9191
  %v9274 = vpack.c.b16 %v9194, %v9192
  %v9275 = vpack.c.b16 %v9197, %v9195
  %v9276 = vpack.c.b16 %v9198, %v9196
  %v9277 = vpack.c.b16 %v9201, %v9199
  %v9278 = vpack.c.b16 %v9202, %v9200
  %v9279 = vpack.c.b16 %v9205, %v9203
  %v9280 = vpack.c.b16 %v9206, %v9204
  %v9281 = vpack.c.b16 %v9209, %v9207
  %v9282 = vpack.c.b16 %v9210, %v9208
  %v9283 = vpack.c.b16 %v9213, %v9211
  %v9284 = vpack.c.b16 %v9214, %v9212
  %v9285 = vpack.c.b16 %v9217, %v9215
  %v9286 = vpack.c.b16 %v9218, %v9216
  %v9287 = vpack.c.b16 %v9221, %v9219
  %v9288 = vpack.c.b16 %v9222, %v9220
  %v9289 = vpack.c.b16 %v9225, %v9223
  %v9290 = vpack.c.b16 %v9226, %v9224
  %v9291 = vpack.c.b16 %v9229, %v9227
  %v9292 = vpack.c.b16 %v9230, %v9228
  %v9293 = vpack.c.b16 %v9233, %v9231
  %v9294 = vpack.c.b16 %v9234, %v9232
  %v9295 = vpack.c.b16 %v9237, %v9235
  %v9296 = vpack.c.b16 %v9238, %v9236
  %v9297 = vpack.c.b16 %v9241, %v9239
  %v9298 = vpack.c.b16 %v9242, %v9240
  %v9299 = vpack.c.b16 %v9245, %v9243
  %v9300 = vpack.c.b16 %v9246, %v9244
  %v9301 = vpack.c.b16 %v9247, %v9247
  %v9302 = vpack.c.b16 %v9248, %v9248
  %v9356 = vsel %vm6518, %v8802, 0
  %v9359 = vsel %vm6518, %v8870, 0
  %v9362 = vsel %vm6518, %v8938, 0
  %v9365 = vsel %vm6518, %v9006, 0
  %v9368 = vsel %vm6518, %v9074, 0
  %vm9370 = vcmask 1041408
  %v9372 = vsel %vm9370, %v9301, 0
  %v9375 = vsel %vm9370, %v9302, 0
  %9377 = vmatprep.subr.bf16.mxu0 %v9250
  %9378 = vmatpush1.bf16.msra.mxu0 %v9249
  %9379 = vmatprep.subr.bf16.mxu0 %v9252
  %9380 = vmatpush1.bf16.msra.mxu0 %v9251
  %9381 = vmatprep.subr.bf16.mxu0 %v9254
  %9382 = vmatpush1.bf16.msra.mxu0 %v9253
  %9383 = vmatprep.subr.bf16.mxu0 %v9256
  %9384 = vmatpush1.bf16.msra.mxu0 %v9255
  %9385 = vmatprep.subr.bf16.mxu0 %v9258
  %9386 = vmatpush1.bf16.msra.mxu0 %v9257
  %9387 = vmatprep.subr.bf16.mxu0 %v9260
  %9388 = vmatpush1.bf16.msra.mxu0 %v9259
  %9389 = vmatprep.subr.bf16.mxu0 %v9262
  %9390 = vmatpush1.bf16.msra.mxu0 %v9261
  %9391 = vmatprep.subr.bf16.mxu0 %v9264
  %9392 = vmatpush1.bf16.msra.mxu0 %v9263
  %9393 = vmatprep.subr.bf16.mxu0 %v9266
  %9394 = vmatpush1.bf16.msra.mxu0 %v9265
  %9395 = vmatprep.subr.bf16.mxu0 %v9268
  %9396 = vmatpush1.bf16.msra.mxu0 %v9267
  %9397 = vmatprep.subr.bf16.mxu0 %v9270
  %9398 = vmatpush1.bf16.msra.mxu0 %v9269
  %9399 = vmatprep.subr.bf16.mxu0 %v9272
  %9400 = vmatpush1.bf16.msra.mxu0 %v9271
  %9401 = vmatprep.subr.bf16.mxu0 %v9274
  %9402 = vmatpush1.bf16.msra.mxu0 %v9273
  %9403 = vmatprep.subr.bf16.mxu0 %v9276
  %9404 = vmatpush1.bf16.msra.mxu0 %v9275
  %9405 = vmatprep.subr.bf16.mxu0 %v9278
  %9406 = vmatpush1.bf16.msra.mxu0 %v9277
  %9407 = vmatprep.subr.bf16.mxu0 %v9280
  %9408 = vmatpush1.bf16.msra.mxu0 %v9279
  %9409 = vmatprep.mubr.bf16.mxu0 %v8801
  %9410 = vmatmul.mubr.bf16.gmra.mrb[0].mxu0 %v8799
  %v9411 = vpop.f32.mrb[0].mxu0
  %v9412 = vadd.f32 %v8728, %v9411
  %v9413 = vpop.f32.mrb[0].mxu0
  %v9414 = vadd.f32 %v8732, %v9413
  %v9415 = vpop.f32.mrb[0].mxu0
  %v9416 = vadd.f32 %v8728, %v9415
  %v9417 = vpop.f32.mrb[0].mxu0
  %v9418 = vadd.f32 %v8732, %v9417
  %9419 = vmatprep.mubr.bf16.mxu0 %v8869
  %9420 = vmatmul.mubr.bf16.gmra.mrb[0].mxu0 %v8867
  %v9421 = vpop.f32.mrb[0].mxu0
  %v9422 = vadd.f32 %v8728, %v9421
  %v9423 = vpop.f32.mrb[0].mxu0
  %v9424 = vadd.f32 %v8732, %v9423
  %v9425 = vpop.f32.mrb[0].mxu0
  %v9426 = vadd.f32 %v8728, %v9425
  %v9427 = vpop.f32.mrb[0].mxu0
  %v9428 = vadd.f32 %v8732, %v9427
  %9429 = vmatprep.mubr.bf16.mxu0 %v8937
  %9430 = vmatmul.mubr.bf16.gmra.mrb[0].mxu0 %v8935
  %v9431 = vpop.f32.mrb[0].mxu0
  %v9432 = vadd.f32 %v8728, %v9431
  %v9433 = vpop.f32.mrb[0].mxu0
  %v9434 = vadd.f32 %v8732, %v9433
  %v9435 = vpop.f32.mrb[0].mxu0
  %v9436 = vadd.f32 %v8728, %v9435
  %v9437 = vpop.f32.mrb[0].mxu0
  %v9438 = vadd.f32 %v8732, %v9437
  %9439 = vmatprep.mubr.bf16.mxu0 %v9005
  %9440 = vmatmul.mubr.bf16.gmra.mrb[0].mxu0 %v9003
  %v9441 = vpop.f32.mrb[0].mxu0
  %v9442 = vadd.f32 %v8728, %v9441
  %v9443 = vpop.f32.mrb[0].mxu0
  %v9444 = vadd.f32 %v8732, %v9443
  %v9445 = vpop.f32.mrb[0].mxu0
  %v9446 = vadd.f32 %v8728, %v9445
  %v9447 = vpop.f32.mrb[0].mxu0
  %v9448 = vadd.f32 %v8732, %v9447
  %9449 = vmatprep.mubr.bf16.mxu0 %v9073
  %9450 = vmatmul.mubr.bf16.gmra.mrb[0].mxu0 %v9071
  %v9451 = vpop.f32.mrb[0].mxu0
  %v9452 = vadd.f32 %v8728, %v9451
  %v9453 = vpop.f32.mrb[0].mxu0
  %v9454 = vadd.f32 %v8732, %v9453
  %v9455 = vpop.f32.mrb[0].mxu0
  %v9456 = vadd.f32 %v8728, %v9455
  %v9457 = vpop.f32.mrb[0].mxu0
  %v9458 = vadd.f32 %v8732, %v9457
  %9459 = vdwg.mxu0
  %9460 = vmatprep.subr.bf16.mxu0 %v9282
  %9461 = vmatpush1.bf16.msra.mxu0 %v9281
  %9462 = vmatprep.subr.bf16.mxu0 %v9284
  %9463 = vmatpush1.bf16.msra.mxu0 %v9283
  %9464 = vmatprep.subr.bf16.mxu0 %v9286
  %9465 = vmatpush1.bf16.msra.mxu0 %v9285
  %9466 = vmatprep.subr.bf16.mxu0 %v9288
  %9467 = vmatpush1.bf16.msra.mxu0 %v9287
  %9468 = vmatprep.subr.bf16.mxu0 %v9290
  %9469 = vmatpush1.bf16.msra.mxu0 %v9289
  %9470 = vmatprep.subr.bf16.mxu0 %v9292
  %9471 = vmatpush1.bf16.msra.mxu0 %v9291
  %9472 = vmatprep.subr.bf16.mxu0 %v9294
  %9473 = vmatpush1.bf16.msra.mxu0 %v9293
  %9474 = vmatprep.subr.bf16.mxu0 %v9296
  %9475 = vmatpush1.bf16.msra.mxu0 %v9295
  %9476 = vmatprep.subr.bf16.mxu0 %v9298
  %9477 = vmatpush1.bf16.msra.mxu0 %v9297
  %9478 = vmatprep.subr.bf16.mxu0 %v9300
  %9479 = vmatpush1.bf16.msra.mxu0 %v9299
  %9480 = vmatprep.subr.bf16.mxu0 %v9375
  %9481 = vmatpush1.bf16.msra.mxu0 %v9372
  %9482 = vmatprep.subr.bf16.mxu0 0
  %9483 = vmatpush1.bf16.msra.mxu0 0
  %9484 = vmatprep.subr.bf16.mxu0 0
  %9485 = vmatpush1.bf16.msra.mxu0 0
  %9486 = vmatprep.subr.bf16.mxu0 0
  %9487 = vmatpush1.bf16.msra.mxu0 0
  %9488 = vmatprep.subr.bf16.mxu0 0
  %9489 = vmatpush1.bf16.msra.mxu0 0
  %9490 = vmatprep.subr.bf16.mxu0 0
  %9491 = vmatpush1.bf16.msra.mxu0 0
  %9492 = vmatprep.mubr.bf16.mxu0 %v9356
  %9493 = vmatmul.mubr.bf16.gmra.mrb[0].mxu0 %v8800
  %v9494 = vpop.f32.mrb[0].mxu0
  %v9495 = vadd.f32 %v9412, %v9494
  %v9496 = vpop.f32.mrb[0].mxu0
  %v9497 = vadd.f32 %v9414, %v9496
  %v9498 = vpop.f32.mrb[0].mxu0
  %v9499 = vadd.f32 %v9416, %v9498
  %v9500 = vpop.f32.mrb[0].mxu0
  %v9501 = vadd.f32 %v9418, %v9500
  %9502 = vmatprep.mubr.bf16.mxu0 %v9359
  %9503 = vmatmul.mubr.bf16.gmra.mrb[0].mxu0 %v8868
  %v9504 = vpop.f32.mrb[0].mxu0
  %v9505 = vadd.f32 %v9422, %v9504
  %v9506 = vpop.f32.mrb[0].mxu0
  %v9507 = vadd.f32 %v9424, %v9506
  %v9508 = vpop.f32.mrb[0].mxu0
  %v9509 = vadd.f32 %v9426, %v9508
  %v9510 = vpop.f32.mrb[0].mxu0
  %v9511 = vadd.f32 %v9428, %v9510
  %9512 = vmatprep.mubr.bf16.mxu0 %v9362
  %9513 = vmatmul.mubr.bf16.gmra.mrb[0].mxu0 %v8936
  %v9514 = vpop.f32.mrb[0].mxu0
  %v9515 = vadd.f32 %v9432, %v9514
  %v9516 = vpop.f32.mrb[0].mxu0
  %v9517 = vadd.f32 %v9434, %v9516
  %v9518 = vpop.f32.mrb[0].mxu0
  %v9519 = vadd.f32 %v9436, %v9518
  %v9520 = vpop.f32.mrb[0].mxu0
  %v9521 = vadd.f32 %v9438, %v9520
  %9522 = vmatprep.mubr.bf16.mxu0 %v9365
  %9523 = vmatmul.mubr.bf16.gmra.mrb[0].mxu0 %v9004
  %v9524 = vpop.f32.mrb[0].mxu0
  %v9525 = vadd.f32 %v9442, %v9524
  %v9526 = vpop.f32.mrb[0].mxu0
  %v9527 = vadd.f32 %v9444, %v9526
  %v9528 = vpop.f32.mrb[0].mxu0
  %v9529 = vadd.f32 %v9446, %v9528
  %v9530 = vpop.f32.mrb[0].mxu0
  %v9531 = vadd.f32 %v9448, %v9530
  %9532 = vmatprep.mubr.bf16.mxu0 %v9368
  %9533 = vmatmul.mubr.bf16.gmra.mrb[0].mxu0 %v9072
  %v9534 = vpop.f32.mrb[0].mxu0
  %v9535 = vadd.f32 %v9452, %v9534
  %v9536 = vpop.f32.mrb[0].mxu0
  %v9537 = vadd.f32 %v9454, %v9536
  %v9538 = vpop.f32.mrb[0].mxu0
  %v9539 = vadd.f32 %v9456, %v9538
  %v9540 = vpop.f32.mrb[0].mxu0
  %v9541 = vadd.f32 %v9458, %v9540
  %9542 = vdwg.mxu0
  %v9543 = vmax.f32 %v9495, 0.0
  %v9544 = vmax.f32 %v9497, 0.0
  %v9545 = vmax.f32 %v9499, 0.0
  %v9546 = vmax.f32 %v9501, 0.0
  %v9547 = vmax.f32 %v9505, 0.0
  %v9548 = vmax.f32 %v9507, 0.0
  %v9549 = vmax.f32 %v9509, 0.0
  %v9550 = vmax.f32 %v9511, 0.0
  %v9551 = vmax.f32 %v9515, 0.0
  %v9552 = vmax.f32 %v9517, 0.0
  %v9553 = vmax.f32 %v9519, 0.0
  %v9554 = vmax.f32 %v9521, 0.0
  %v9555 = vmax.f32 %v9525, 0.0
  %v9556 = vmax.f32 %v9527, 0.0
  %v9557 = vmax.f32 %v9529, 0.0
  %v9558 = vmax.f32 %v9531, 0.0
  %v9559 = vmax.f32 %v9535, 0.0
  %v9560 = vmax.f32 %v9537, 0.0
  %v9561 = vmax.f32 %v9539, 0.0
  %v9562 = vmax.f32 %v9541, 0.0
  %v9583 = vcombine.low %v9543, %v9544
  %v9584 = vcombine.high %v9543, %v9544
  %v9586 = vunpack.c.l.s4 1983009808
  %v9587 = vunpack.c.0.s8 %v9586
  %v9588 = vlaneseq
  %v9589 = vshrl.u32 %v9588, 7
  %v9590 = vsub.s32 %v9587, %v9589
  %v9591 = vrot.slane %v9583, %v9590
  %v9593 = vunpack.c.l.s4 1983009808
  %v9594 = vunpack.c.0.s8 %v9593
  %v9595 = vlaneseq
  %v9596 = vshrl.u32 %v9595, 7
  %v9597 = vsub.s32 %v9594, %v9596
  %v9598 = vrot.slane %v9584, %v9597
  %v9599 = vcombine.high %v9591, %v9591
  %v9600 = vcombine.high %v9598, %v9598
  %v9601 = vcombine.low %v9545, %v9546
  %v9602 = vcombine.high %v9545, %v9546
  %v9604 = vunpack.c.l.s4 1983009808
  %v9605 = vunpack.c.0.s8 %v9604
  %v9606 = vlaneseq
  %v9607 = vshrl.u32 %v9606, 7
  %v9608 = vsub.s32 %v9605, %v9607
  %v9609 = vrot.slane %v9601, %v9608
  %v9611 = vunpack.c.l.s4 1983009808
  %v9612 = vunpack.c.0.s8 %v9611
  %v9613 = vlaneseq
  %v9614 = vshrl.u32 %v9613, 7
  %v9615 = vsub.s32 %v9612, %v9614
  %v9616 = vrot.slane %v9602, %v9615
  %v9617 = vcombine.high %v9609, %v9609
  %v9618 = vcombine.high %v9616, %v9616
  %v9619 = vcombine.low %v9547, %v9548
  %v9620 = vcombine.high %v9547, %v9548
  %v9622 = vunpack.c.l.s4 1983009808
  %v9623 = vunpack.c.0.s8 %v9622
  %v9624 = vlaneseq
  %v9625 = vshrl.u32 %v9624, 7
  %v9626 = vsub.s32 %v9623, %v9625
  %v9627 = vrot.slane %v9619, %v9626
  %v9629 = vunpack.c.l.s4 1983009808
  %v9630 = vunpack.c.0.s8 %v9629
  %v9631 = vlaneseq
  %v9632 = vshrl.u32 %v9631, 7
  %v9633 = vsub.s32 %v9630, %v9632
  %v9634 = vrot.slane %v9620, %v9633
  %v9635 = vcombine.high %v9627, %v9627
  %v9636 = vcombine.high %v9634, %v9634
  %v9637 = vcombine.low %v9549, %v9550
  %v9638 = vcombine.high %v9549, %v9550
  %v9640 = vunpack.c.l.s4 1983009808
  %v9641 = vunpack.c.0.s8 %v9640
  %v9642 = vlaneseq
  %v9643 = vshrl.u32 %v9642, 7
  %v9644 = vsub.s32 %v9641, %v9643
  %v9645 = vrot.slane %v9637, %v9644
  %v9647 = vunpack.c.l.s4 1983009808
  %v9648 = vunpack.c.0.s8 %v9647
  %v9649 = vlaneseq
  %v9650 = vshrl.u32 %v9649, 7
  %v9651 = vsub.s32 %v9648, %v9650
  %v9652 = vrot.slane %v9638, %v9651
  %v9653 = vcombine.high %v9645, %v9645
  %v9654 = vcombine.high %v9652, %v9652
  %v9655 = vcombine.low %v9551, %v9552
  %v9656 = vcombine.high %v9551, %v9552
  %v9658 = vunpack.c.l.s4 1983009808
  %v9659 = vunpack.c.0.s8 %v9658
  %v9660 = vlaneseq
  %v9661 = vshrl.u32 %v9660, 7
  %v9662 = vsub.s32 %v9659, %v9661
  %v9663 = vrot.slane %v9655, %v9662
  %v9665 = vunpack.c.l.s4 1983009808
  %v9666 = vunpack.c.0.s8 %v9665
  %v9667 = vlaneseq
  %v9668 = vshrl.u32 %v9667, 7
  %v9669 = vsub.s32 %v9666, %v9668
  %v9670 = vrot.slane %v9656, %v9669
  %v9671 = vcombine.high %v9663, %v9663
  %v9672 = vcombine.high %v9670, %v9670
  %v9673 = vcombine.low %v9553, %v9554
  %v9674 = vcombine.high %v9553, %v9554
  %v9676 = vunpack.c.l.s4 1983009808
  %v9677 = vunpack.c.0.s8 %v9676
  %v9678 = vlaneseq
  %v9679 = vshrl.u32 %v9678, 7
  %v9680 = vsub.s32 %v9677, %v9679
  %v9681 = vrot.slane %v9673, %v9680
  %v9683 = vunpack.c.l.s4 1983009808
  %v9684 = vunpack.c.0.s8 %v9683
  %v9685 = vlaneseq
  %v9686 = vshrl.u32 %v9685, 7
  %v9687 = vsub.s32 %v9684, %v9686
  %v9688 = vrot.slane %v9674, %v9687
  %v9689 = vcombine.high %v9681, %v9681
  %v9690 = vcombine.high %v9688, %v9688
  %v9691 = vcombine.low %v9555, %v9556
  %v9692 = vcombine.high %v9555, %v9556
  %v9694 = vunpack.c.l.s4 1983009808
  %v9695 = vunpack.c.0.s8 %v9694
  %v9696 = vlaneseq
  %v9697 = vshrl.u32 %v9696, 7
  %v9698 = vsub.s32 %v9695, %v9697
  %v9699 = vrot.slane %v9691, %v9698
  %v9701 = vunpack.c.l.s4 1983009808
  %v9702 = vunpack.c.0.s8 %v9701
  %v9703 = vlaneseq
  %v9704 = vshrl.u32 %v9703, 7
  %v9705 = vsub.s32 %v9702, %v9704
  %v9706 = vrot.slane %v9692, %v9705
  %v9707 = vcombine.high %v9699, %v9699
  %v9708 = vcombine.high %v9706, %v9706
  %v9709 = vcombine.low %v9557, %v9558
  %v9710 = vcombine.high %v9557, %v9558
  %v9712 = vunpack.c.l.s4 1983009808
  %v9713 = vunpack.c.0.s8 %v9712
  %v9714 = vlaneseq
  %v9715 = vshrl.u32 %v9714, 7
  %v9716 = vsub.s32 %v9713, %v9715
  %v9717 = vrot.slane %v9709, %v9716
  %v9719 = vunpack.c.l.s4 1983009808
  %v9720 = vunpack.c.0.s8 %v9719
  %v9721 = vlaneseq
  %v9722 = vshrl.u32 %v9721, 7
  %v9723 = vsub.s32 %v9720, %v9722
  %v9724 = vrot.slane %v9710, %v9723
  %v9725 = vcombine.high %v9717, %v9717
  %v9726 = vcombine.high %v9724, %v9724
  %v9727 = vcombine.low %v9559, %v9560
  %v9728 = vcombine.high %v9559, %v9560
  %v9730 = vunpack.c.l.s4 1983009808
  %v9731 = vunpack.c.0.s8 %v9730
  %v9732 = vlaneseq
  %v9733 = vshrl.u32 %v9732, 7
  %v9734 = vsub.s32 %v9731, %v9733
  %v9735 = vrot.slane %v9727, %v9734
  %v9737 = vunpack.c.l.s4 1983009808
  %v9738 = vunpack.c.0.s8 %v9737
  %v9739 = vlaneseq
  %v9740 = vshrl.u32 %v9739, 7
  %v9741 = vsub.s32 %v9738, %v9740
  %v9742 = vrot.slane %v9728, %v9741
  %v9743 = vcombine.high %v9735, %v9735
  %v9744 = vcombine.high %v9742, %v9742
  %v9745 = vcombine.low %v9561, %v9562
  %v9746 = vcombine.high %v9561, %v9562
  %v9748 = vunpack.c.l.s4 1983009808
  %v9749 = vunpack.c.0.s8 %v9748
  %v9750 = vlaneseq
  %v9751 = vshrl.u32 %v9750, 7
  %v9752 = vsub.s32 %v9749, %v9751
  %v9753 = vrot.slane %v9745, %v9752
  %v9755 = vunpack.c.l.s4 1983009808
  %v9756 = vunpack.c.0.s8 %v9755
  %v9757 = vlaneseq
  %v9758 = vshrl.u32 %v9757, 7
  %v9759 = vsub.s32 %v9756, %v9758
  %v9760 = vrot.slane %v9746, %v9759
  %v9761 = vcombine.high %v9753, %v9753
  %v9762 = vcombine.high %v9760, %v9760
  %9803 = vrot.lane.b32.xlu0 %v9591, 112
  %v9804 = vpop.permute.xlu0 %9803
  %9805 = vrot.lane.b32.xlu0 %v9599, 112
  %v9806 = vpop.permute.xlu0 %9805
  %9807 = vrot.lane.b32.xlu0 %v9598, 112
  %v9808 = vpop.permute.xlu0 %9807
  %9809 = vrot.lane.b32.xlu0 %v9600, 112
  %v9810 = vpop.permute.xlu0 %9809
  %9811 = vrot.lane.b32.xlu0 %v9609, 112
  %v9812 = vpop.permute.xlu0 %9811
  %9813 = vrot.lane.b32.xlu0 %v9617, 112
  %v9814 = vpop.permute.xlu0 %9813
  %9815 = vrot.lane.b32.xlu0 %v9616, 112
  %v9816 = vpop.permute.xlu0 %9815
  %9817 = vrot.lane.b32.xlu0 %v9618, 112
  %v9818 = vpop.permute.xlu0 %9817
  %9819 = vrot.lane.b32.xlu0 %v9627, 112
  %v9820 = vpop.permute.xlu0 %9819
  %9821 = vrot.lane.b32.xlu0 %v9635, 112
  %v9822 = vpop.permute.xlu0 %9821
  %9823 = vrot.lane.b32.xlu0 %v9634, 112
  %v9824 = vpop.permute.xlu0 %9823
  %9825 = vrot.lane.b32.xlu0 %v9636, 112
  %v9826 = vpop.permute.xlu0 %9825
  %9827 = vrot.lane.b32.xlu0 %v9645, 112
  %v9828 = vpop.permute.xlu0 %9827
  %9829 = vrot.lane.b32.xlu0 %v9653, 112
  %v9830 = vpop.permute.xlu0 %9829
  %9831 = vrot.lane.b32.xlu0 %v9652, 112
  %v9832 = vpop.permute.xlu0 %9831
  %9833 = vrot.lane.b32.xlu0 %v9654, 112
  %v9834 = vpop.permute.xlu0 %9833
  %9835 = vrot.lane.b32.xlu0 %v9663, 112
  %v9836 = vpop.permute.xlu0 %9835
  %9837 = vrot.lane.b32.xlu0 %v9671, 112
  %v9838 = vpop.permute.xlu0 %9837
  %9839 = vrot.lane.b32.xlu0 %v9670, 112
  %v9840 = vpop.permute.xlu0 %9839
  %9841 = vrot.lane.b32.xlu0 %v9672, 112
  %v9842 = vpop.permute.xlu0 %9841
  %9843 = vrot.lane.b32.xlu0 %v9681, 112
  %v9844 = vpop.permute.xlu0 %9843
  %9845 = vrot.lane.b32.xlu0 %v9689, 112
  %v9846 = vpop.permute.xlu0 %9845
  %9847 = vrot.lane.b32.xlu0 %v9688, 112
  %v9848 = vpop.permute.xlu0 %9847
  %9849 = vrot.lane.b32.xlu0 %v9690, 112
  %v9850 = vpop.permute.xlu0 %9849
  %9851 = vrot.lane.b32.xlu0 %v9699, 112
  %v9852 = vpop.permute.xlu0 %9851
  %9853 = vrot.lane.b32.xlu0 %v9707, 112
  %v9854 = vpop.permute.xlu0 %9853
  %9855 = vrot.lane.b32.xlu0 %v9706, 112
  %v9856 = vpop.permute.xlu0 %9855
  %9857 = vrot.lane.b32.xlu0 %v9708, 112
  %v9858 = vpop.permute.xlu0 %9857
  %9859 = vrot.lane.b32.xlu0 %v9717, 112
  %v9860 = vpop.permute.xlu0 %9859
  %9861 = vrot.lane.b32.xlu0 %v9725, 112
  %v9862 = vpop.permute.xlu0 %9861
  %9863 = vrot.lane.b32.xlu0 %v9724, 112
  %v9864 = vpop.permute.xlu0 %9863
  %9865 = vrot.lane.b32.xlu0 %v9726, 112
  %v9866 = vpop.permute.xlu0 %9865
  %9867 = vrot.lane.b32.xlu0 %v9735, 112
  %v9868 = vpop.permute.xlu0 %9867
  %9869 = vrot.lane.b32.xlu0 %v9743, 112
  %v9870 = vpop.permute.xlu0 %9869
  %9871 = vrot.lane.b32.xlu0 %v9742, 112
  %v9872 = vpop.permute.xlu0 %9871
  %9873 = vrot.lane.b32.xlu0 %v9744, 112
  %v9874 = vpop.permute.xlu0 %9873
  %9875 = vrot.lane.b32.xlu0 %v9753, 112
  %v9876 = vpop.permute.xlu0 %9875
  %9877 = vrot.lane.b32.xlu0 %v9761, 112
  %v9878 = vpop.permute.xlu0 %9877
  %9879 = vrot.lane.b32.xlu0 %v9760, 112
  %v9880 = vpop.permute.xlu0 %9879
  %9881 = vrot.lane.b32.xlu0 %v9762, 112
  %v9882 = vpop.permute.xlu0 %9881
  %v9923 = vmax.f32 %v9591, %v9804
  %v9924 = vmax.f32 %v9599, %v9806
  %v9925 = vmax.f32 %v9598, %v9808
  %v9926 = vmax.f32 %v9600, %v9810
  %v9927 = vmax.f32 %v9609, %v9812
  %v9928 = vmax.f32 %v9617, %v9814
  %v9929 = vmax.f32 %v9616, %v9816
  %v9930 = vmax.f32 %v9618, %v9818
  %v9931 = vmax.f32 %v9627, %v9820
  %v9932 = vmax.f32 %v9635, %v9822
  %v9933 = vmax.f32 %v9634, %v9824
  %v9934 = vmax.f32 %v9636, %v9826
  %v9935 = vmax.f32 %v9645, %v9828
  %v9936 = vmax.f32 %v9653, %v9830
  %v9937 = vmax.f32 %v9652, %v9832
  %v9938 = vmax.f32 %v9654, %v9834
  %v9939 = vmax.f32 %v9663, %v9836
  %v9940 = vmax.f32 %v9671, %v9838
  %v9941 = vmax.f32 %v9670, %v9840
  %v9942 = vmax.f32 %v9672, %v9842
  %v9943 = vmax.f32 %v9681, %v9844
  %v9944 = vmax.f32 %v9689, %v9846
  %v9945 = vmax.f32 %v9688, %v9848
  %v9946 = vmax.f32 %v9690, %v9850
  %v9947 = vmax.f32 %v9699, %v9852
  %v9948 = vmax.f32 %v9707, %v9854
  %v9949 = vmax.f32 %v9706, %v9856
  %v9950 = vmax.f32 %v9708, %v9858
  %v9951 = vmax.f32 %v9717, %v9860
  %v9952 = vmax.f32 %v9725, %v9862
  %v9953 = vmax.f32 %v9724, %v9864
  %v9954 = vmax.f32 %v9726, %v9866
  %v9955 = vmax.f32 %v9735, %v9868
  %v9956 = vmax.f32 %v9743, %v9870
  %v9957 = vmax.f32 %v9742, %v9872
  %v9958 = vmax.f32 %v9744, %v9874
  %v9959 = vmax.f32 %v9753, %v9876
  %v9960 = vmax.f32 %v9761, %v9878
  %v9961 = vmax.f32 %v9760, %v9880
  %v9962 = vmax.f32 %v9762, %v9882
  %v9963 = vrot.slane %v9591, 2
  %v9964 = vrot.slane %v9599, 2
  %v9965 = vrot.slane %v9598, 2
  %v9966 = vrot.slane %v9600, 2
  %v9967 = vrot.slane %v9609, 2
  %v9968 = vrot.slane %v9617, 2
  %v9969 = vrot.slane %v9616, 2
  %v9970 = vrot.slane %v9618, 2
  %v9971 = vrot.slane %v9627, 2
  %v9972 = vrot.slane %v9635, 2
  %v9973 = vrot.slane %v9634, 2
  %v9974 = vrot.slane %v9636, 2
  %v9975 = vrot.slane %v9645, 2
  %v9976 = vrot.slane %v9653, 2
  %v9977 = vrot.slane %v9652, 2
  %v9978 = vrot.slane %v9654, 2
  %v9979 = vrot.slane %v9663, 2
  %v9980 = vrot.slane %v9671, 2
  %v9981 = vrot.slane %v9670, 2
  %v9982 = vrot.slane %v9672, 2
  %v9983 = vrot.slane %v9681, 2
  %v9984 = vrot.slane %v9689, 2
  %v9985 = vrot.slane %v9688, 2
  %v9986 = vrot.slane %v9690, 2
  %v9987 = vrot.slane %v9699, 2
  %v9988 = vrot.slane %v9707, 2
  %v9989 = vrot.slane %v9706, 2
  %v9990 = vrot.slane %v9708, 2
  %v9991 = vrot.slane %v9717, 2
  %v9992 = vrot.slane %v9725, 2
  %v9993 = vrot.slane %v9724, 2
  %v9994 = vrot.slane %v9726, 2
  %v9995 = vrot.slane %v9735, 2
  %v9996 = vrot.slane %v9743, 2
  %v9997 = vrot.slane %v9742, 2
  %v9998 = vrot.slane %v9744, 2
  %v9999 = vrot.slane %v9753, 2
  %v10000 = vrot.slane %v9761, 2
  %v10001 = vrot.slane %v9760, 2
  %v10002 = vrot.slane %v9762, 2
  %v10043 = vrot.slane %v9804, 2
  %v10044 = vrot.slane %v9806, 2
  %v10045 = vrot.slane %v9808, 2
  %v10046 = vrot.slane %v9810, 2
  %v10047 = vrot.slane %v9812, 2
  %v10048 = vrot.slane %v9814, 2
  %v10049 = vrot.slane %v9816, 2
  %v10050 = vrot.slane %v9818, 2
  %v10051 = vrot.slane %v9820, 2
  %v10052 = vrot.slane %v9822, 2
  %v10053 = vrot.slane %v9824, 2
  %v10054 = vrot.slane %v9826, 2
  %v10055 = vrot.slane %v9828, 2
  %v10056 = vrot.slane %v9830, 2
  %v10057 = vrot.slane %v9832, 2
  %v10058 = vrot.slane %v9834, 2
  %v10059 = vrot.slane %v9836, 2
  %v10060 = vrot.slane %v9838, 2
  %v10061 = vrot.slane %v9840, 2
  %v10062 = vrot.slane %v9842, 2
  %v10063 = vrot.slane %v9844, 2
  %v10064 = vrot.slane %v9846, 2
  %v10065 = vrot.slane %v9848, 2
  %v10066 = vrot.slane %v9850, 2
  %v10067 = vrot.slane %v9852, 2
  %v10068 = vrot.slane %v9854, 2
  %v10069 = vrot.slane %v9856, 2
  %v10070 = vrot.slane %v9858, 2
  %v10071 = vrot.slane %v9860, 2
  %v10072 = vrot.slane %v9862, 2
  %v10073 = vrot.slane %v9864, 2
  %v10074 = vrot.slane %v9866, 2
  %v10075 = vrot.slane %v9868, 2
  %v10076 = vrot.slane %v9870, 2
  %v10077 = vrot.slane %v9872, 2
  %v10078 = vrot.slane %v9874, 2
  %v10079 = vrot.slane %v9876, 2
  %v10080 = vrot.slane %v9878, 2
  %v10081 = vrot.slane %v9880, 2
  %v10082 = vrot.slane %v9882, 2
  %v10123 = vmax.f32 %v9963, %v10043
  %v10124 = vmax.f32 %v9964, %v10044
  %v10125 = vmax.f32 %v9965, %v10045
  %v10126 = vmax.f32 %v9966, %v10046
  %v10127 = vmax.f32 %v9967, %v10047
  %v10128 = vmax.f32 %v9968, %v10048
  %v10129 = vmax.f32 %v9969, %v10049
  %v10130 = vmax.f32 %v9970, %v10050
  %v10131 = vmax.f32 %v9971, %v10051
  %v10132 = vmax.f32 %v9972, %v10052
  %v10133 = vmax.f32 %v9973, %v10053
  %v10134 = vmax.f32 %v9974, %v10054
  %v10135 = vmax.f32 %v9975, %v10055
  %v10136 = vmax.f32 %v9976, %v10056
  %v10137 = vmax.f32 %v9977, %v10057
  %v10138 = vmax.f32 %v9978, %v10058
  %v10139 = vmax.f32 %v9979, %v10059
  %v10140 = vmax.f32 %v9980, %v10060
  %v10141 = vmax.f32 %v9981, %v10061
  %v10142 = vmax.f32 %v9982, %v10062
  %v10143 = vmax.f32 %v9983, %v10063
  %v10144 = vmax.f32 %v9984, %v10064
  %v10145 = vmax.f32 %v9985, %v10065
  %v10146 = vmax.f32 %v9986, %v10066
  %v10147 = vmax.f32 %v9987, %v10067
  %v10148 = vmax.f32 %v9988, %v10068
  %v10149 = vmax.f32 %v9989, %v10069
  %v10150 = vmax.f32 %v9990, %v10070
  %v10151 = vmax.f32 %v9991, %v10071
  %v10152 = vmax.f32 %v9992, %v10072
  %v10153 = vmax.f32 %v9993, %v10073
  %v10154 = vmax.f32 %v9994, %v10074
  %v10155 = vmax.f32 %v9995, %v10075
  %v10156 = vmax.f32 %v9996, %v10076
  %v10157 = vmax.f32 %v9997, %v10077
  %v10158 = vmax.f32 %v9998, %v10078
  %v10159 = vmax.f32 %v9999, %v10079
  %v10160 = vmax.f32 %v10000, %v10080
  %v10161 = vmax.f32 %v10001, %v10081
  %v10162 = vmax.f32 %v10002, %v10082
  %v10203 = vcombine.low %v9923, %v9924
  %v10204 = vcombine.low %v9925, %v9926
  %v10206 = vunpack.c.l.s4 1983009808
  %v10207 = vunpack.c.0.s8 %v10206
  %v10208 = vlaneseq
  %v10209 = vshrl.u32 %v10208, 7
  %v10210 = vsub.s32 %v10207, %v10209
  %v10211 = vrot.slane %v10203, %v10210
  %v10213 = vunpack.c.l.s4 1983009808
  %v10214 = vunpack.c.0.s8 %v10213
  %v10215 = vlaneseq
  %v10216 = vshrl.u32 %v10215, 7
  %v10217 = vsub.s32 %v10214, %v10216
  %v10218 = vrot.slane %v10204, %v10217
  %v10219 = vcombine.low %v10211, %v10218
  %v10221 = vunpack.c.l.s4 1983009808
  %v10222 = vunpack.c.0.s8 %v10221
  %v10223 = vlaneseq
  %v10224 = vshrl.u32 %v10223, 7
  %v10225 = vsub.s32 %v10222, %v10224
  %v10226 = vrot.slane %v9927, %v10225
  %v10227 = vcombine.low %v9928, %v9929
  %v10228 = vcombine.low %v9930, %v9931
  %v10230 = vunpack.c.l.s4 1983009808
  %v10231 = vunpack.c.0.s8 %v10230
  %v10232 = vlaneseq
  %v10233 = vshrl.u32 %v10232, 7
  %v10234 = vsub.s32 %v10231, %v10233
  %v10235 = vrot.slane %v10227, %v10234
  %v10237 = vunpack.c.l.s4 1983009808
  %v10238 = vunpack.c.0.s8 %v10237
  %v10239 = vlaneseq
  %v10240 = vshrl.u32 %v10239, 7
  %v10241 = vsub.s32 %v10238, %v10240
  %v10242 = vrot.slane %v10228, %v10241
  %v10243 = vcombine.low %v10235, %v10242
  %v10245 = vunpack.c.l.s4 1983009808
  %v10246 = vunpack.c.0.s8 %v10245
  %v10247 = vlaneseq
  %v10248 = vshrl.u32 %v10247, 7
  %v10249 = vsub.s32 %v10246, %v10248
  %v10250 = vrot.slane %v9932, %v10249
  %v10251 = vcombine.low %v9933, %v9934
  %v10252 = vcombine.low %v9935, %v9936
  %v10254 = vunpack.c.l.s4 1983009808
  %v10255 = vunpack.c.0.s8 %v10254
  %v10256 = vlaneseq
  %v10257 = vshrl.u32 %v10256, 7
  %v10258 = vsub.s32 %v10255, %v10257
  %v10259 = vrot.slane %v10251, %v10258
  %v10261 = vunpack.c.l.s4 1983009808
  %v10262 = vunpack.c.0.s8 %v10261
  %v10263 = vlaneseq
  %v10264 = vshrl.u32 %v10263, 7
  %v10265 = vsub.s32 %v10262, %v10264
  %v10266 = vrot.slane %v10252, %v10265
  %v10267 = vcombine.low %v10259, %v10266
  %v10269 = vunpack.c.l.s4 1983009808
  %v10270 = vunpack.c.0.s8 %v10269
  %v10271 = vlaneseq
  %v10272 = vshrl.u32 %v10271, 7
  %v10273 = vsub.s32 %v10270, %v10272
  %v10274 = vrot.slane %v9937, %v10273
  %v10275 = vcombine.low %v9938, %v9939
  %v10276 = vcombine.low %v9940, %v9941
  %v10278 = vunpack.c.l.s4 1983009808
  %v10279 = vunpack.c.0.s8 %v10278
  %v10280 = vlaneseq
  %v10281 = vshrl.u32 %v10280, 7
  %v10282 = vsub.s32 %v10279, %v10281
  %v10283 = vrot.slane %v10275, %v10282
  %v10285 = vunpack.c.l.s4 1983009808
  %v10286 = vunpack.c.0.s8 %v10285
  %v10287 = vlaneseq
  %v10288 = vshrl.u32 %v10287, 7
  %v10289 = vsub.s32 %v10286, %v10288
  %v10290 = vrot.slane %v10276, %v10289
  %v10291 = vcombine.low %v10283, %v10290
  %v10293 = vunpack.c.l.s4 1983009808
  %v10294 = vunpack.c.0.s8 %v10293
  %v10295 = vlaneseq
  %v10296 = vshrl.u32 %v10295, 7
  %v10297 = vsub.s32 %v10294, %v10296
  %v10298 = vrot.slane %v9942, %v10297
  %v10299 = vcombine.low %v9943, %v9944
  %v10300 = vcombine.low %v9945, %v9946
  %v10302 = vunpack.c.l.s4 1983009808
  %v10303 = vunpack.c.0.s8 %v10302
  %v10304 = vlaneseq
  %v10305 = vshrl.u32 %v10304, 7
  %v10306 = vsub.s32 %v10303, %v10305
  %v10307 = vrot.slane %v10299, %v10306
  %v10309 = vunpack.c.l.s4 1983009808
  %v10310 = vunpack.c.0.s8 %v10309
  %v10311 = vlaneseq
  %v10312 = vshrl.u32 %v10311, 7
  %v10313 = vsub.s32 %v10310, %v10312
  %v10314 = vrot.slane %v10300, %v10313
  %v10315 = vcombine.low %v10307, %v10314
  %v10317 = vunpack.c.l.s4 1983009808
  %v10318 = vunpack.c.0.s8 %v10317
  %v10319 = vlaneseq
  %v10320 = vshrl.u32 %v10319, 7
  %v10321 = vsub.s32 %v10318, %v10320
  %v10322 = vrot.slane %v9947, %v10321
  %v10323 = vcombine.low %v9948, %v9949
  %v10324 = vcombine.low %v9950, %v9951
  %v10326 = vunpack.c.l.s4 1983009808
  %v10327 = vunpack.c.0.s8 %v10326
  %v10328 = vlaneseq
  %v10329 = vshrl.u32 %v10328, 7
  %v10330 = vsub.s32 %v10327, %v10329
  %v10331 = vrot.slane %v10323, %v10330
  %v10333 = vunpack.c.l.s4 1983009808
  %v10334 = vunpack.c.0.s8 %v10333
  %v10335 = vlaneseq
  %v10336 = vshrl.u32 %v10335, 7
  %v10337 = vsub.s32 %v10334, %v10336
  %v10338 = vrot.slane %v10324, %v10337
  %v10339 = vcombine.low %v10331, %v10338
  %v10341 = vunpack.c.l.s4 1983009808
  %v10342 = vunpack.c.0.s8 %v10341
  %v10343 = vlaneseq
  %v10344 = vshrl.u32 %v10343, 7
  %v10345 = vsub.s32 %v10342, %v10344
  %v10346 = vrot.slane %v9952, %v10345
  %v10347 = vcombine.low %v9953, %v9954
  %v10348 = vcombine.low %v9955, %v9956
  %v10350 = vunpack.c.l.s4 1983009808
  %v10351 = vunpack.c.0.s8 %v10350
  %v10352 = vlaneseq
  %v10353 = vshrl.u32 %v10352, 7
  %v10354 = vsub.s32 %v10351, %v10353
  %v10355 = vrot.slane %v10347, %v10354
  %v10357 = vunpack.c.l.s4 1983009808
  %v10358 = vunpack.c.0.s8 %v10357
  %v10359 = vlaneseq
  %v10360 = vshrl.u32 %v10359, 7
  %v10361 = vsub.s32 %v10358, %v10360
  %v10362 = vrot.slane %v10348, %v10361
  %v10363 = vcombine.low %v10355, %v10362
  %v10365 = vunpack.c.l.s4 1983009808
  %v10366 = vunpack.c.0.s8 %v10365
  %v10367 = vlaneseq
  %v10368 = vshrl.u32 %v10367, 7
  %v10369 = vsub.s32 %v10366, %v10368
  %v10370 = vrot.slane %v9957, %v10369
  %v10371 = vcombine.low %v9958, %v9959
  %v10372 = vcombine.low %v9960, %v9961
  %v10374 = vunpack.c.l.s4 1983009808
  %v10375 = vunpack.c.0.s8 %v10374
  %v10376 = vlaneseq
  %v10377 = vshrl.u32 %v10376, 7
  %v10378 = vsub.s32 %v10375, %v10377
  %v10379 = vrot.slane %v10371, %v10378
  %v10381 = vunpack.c.l.s4 1983009808
  %v10382 = vunpack.c.0.s8 %v10381
  %v10383 = vlaneseq
  %v10384 = vshrl.u32 %v10383, 7
  %v10385 = vsub.s32 %v10382, %v10384
  %v10386 = vrot.slane %v10372, %v10385
  %v10387 = vcombine.low %v10379, %v10386
  %v10389 = vunpack.c.l.s4 1983009808
  %v10390 = vunpack.c.0.s8 %v10389
  %v10391 = vlaneseq
  %v10392 = vshrl.u32 %v10391, 7
  %v10393 = vsub.s32 %v10390, %v10392
  %v10394 = vrot.slane %v9962, %v10393
  %10411 = vrot.lane.b32.xlu0 %v10219, 112
  %v10412 = vpop.permute.xlu0 %10411
  %10413 = vrot.lane.b32.xlu0 %v10226, 112
  %v10414 = vpop.permute.xlu0 %10413
  %10415 = vrot.lane.b32.xlu0 %v10243, 112
  %v10416 = vpop.permute.xlu0 %10415
  %10417 = vrot.lane.b32.xlu0 %v10250, 112
  %v10418 = vpop.permute.xlu0 %10417
  %10419 = vrot.lane.b32.xlu0 %v10267, 112
  %v10420 = vpop.permute.xlu0 %10419
  %10421 = vrot.lane.b32.xlu0 %v10274, 112
  %v10422 = vpop.permute.xlu0 %10421
  %10423 = vrot.lane.b32.xlu0 %v10291, 112
  %v10424 = vpop.permute.xlu0 %10423
  %10425 = vrot.lane.b32.xlu0 %v10298, 112
  %v10426 = vpop.permute.xlu0 %10425
  %10427 = vrot.lane.b32.xlu0 %v10315, 112
  %v10428 = vpop.permute.xlu0 %10427
  %10429 = vrot.lane.b32.xlu0 %v10322, 112
  %v10430 = vpop.permute.xlu0 %10429
  %10431 = vrot.lane.b32.xlu0 %v10339, 112
  %v10432 = vpop.permute.xlu0 %10431
  %10433 = vrot.lane.b32.xlu0 %v10346, 112
  %v10434 = vpop.permute.xlu0 %10433
  %10435 = vrot.lane.b32.xlu0 %v10363, 112
  %v10436 = vpop.permute.xlu0 %10435
  %10437 = vrot.lane.b32.xlu0 %v10370, 112
  %v10438 = vpop.permute.xlu0 %10437
  %10439 = vrot.lane.b32.xlu0 %v10387, 112
  %v10440 = vpop.permute.xlu0 %10439
  %10441 = vrot.lane.b32.xlu0 %v10394, 112
  %v10442 = vpop.permute.xlu0 %10441
  %10459 = vrot.lane.b32.xlu0 %v10219, 96
  %v10460 = vpop.permute.xlu0 %10459
  %10461 = vrot.lane.b32.xlu0 %v10226, 96
  %v10462 = vpop.permute.xlu0 %10461
  %10463 = vrot.lane.b32.xlu0 %v10243, 96
  %v10464 = vpop.permute.xlu0 %10463
  %10465 = vrot.lane.b32.xlu0 %v10250, 96
  %v10466 = vpop.permute.xlu0 %10465
  %10467 = vrot.lane.b32.xlu0 %v10267, 96
  %v10468 = vpop.permute.xlu0 %10467
  %10469 = vrot.lane.b32.xlu0 %v10274, 96
  %v10470 = vpop.permute.xlu0 %10469
  %10471 = vrot.lane.b32.xlu0 %v10291, 96
  %v10472 = vpop.permute.xlu0 %10471
  %10473 = vrot.lane.b32.xlu0 %v10298, 96
  %v10474 = vpop.permute.xlu0 %10473
  %10475 = vrot.lane.b32.xlu0 %v10315, 96
  %v10476 = vpop.permute.xlu0 %10475
  %10477 = vrot.lane.b32.xlu0 %v10322, 96
  %v10478 = vpop.permute.xlu0 %10477
  %10479 = vrot.lane.b32.xlu0 %v10339, 96
  %v10480 = vpop.permute.xlu0 %10479
  %10481 = vrot.lane.b32.xlu0 %v10346, 96
  %v10482 = vpop.permute.xlu0 %10481
  %10483 = vrot.lane.b32.xlu0 %v10363, 96
  %v10484 = vpop.permute.xlu0 %10483
  %10485 = vrot.lane.b32.xlu0 %v10370, 96
  %v10486 = vpop.permute.xlu0 %10485
  %10487 = vrot.lane.b32.xlu0 %v10387, 96
  %v10488 = vpop.permute.xlu0 %10487
  %10489 = vrot.lane.b32.xlu0 %v10394, 96
  %v10490 = vpop.permute.xlu0 %10489
  %10507 = vrot.lane.b32.xlu0 %v10219, 80
  %v10508 = vpop.permute.xlu0 %10507
  %10509 = vrot.lane.b32.xlu0 %v10226, 80
  %v10510 = vpop.permute.xlu0 %10509
  %10511 = vrot.lane.b32.xlu0 %v10243, 80
  %v10512 = vpop.permute.xlu0 %10511
  %10513 = vrot.lane.b32.xlu0 %v10250, 80
  %v10514 = vpop.permute.xlu0 %10513
  %10515 = vrot.lane.b32.xlu0 %v10267, 80
  %v10516 = vpop.permute.xlu0 %10515
  %10517 = vrot.lane.b32.xlu0 %v10274, 80
  %v10518 = vpop.permute.xlu0 %10517
  %10519 = vrot.lane.b32.xlu0 %v10291, 80
  %v10520 = vpop.permute.xlu0 %10519
  %10521 = vrot.lane.b32.xlu0 %v10298, 80
  %v10522 = vpop.permute.xlu0 %10521
  %10523 = vrot.lane.b32.xlu0 %v10315, 80
  %v10524 = vpop.permute.xlu0 %10523
  %10525 = vrot.lane.b32.xlu0 %v10322, 80
  %v10526 = vpop.permute.xlu0 %10525
  %10527 = vrot.lane.b32.xlu0 %v10339, 80
  %v10528 = vpop.permute.xlu0 %10527
  %10529 = vrot.lane.b32.xlu0 %v10346, 80
  %v10530 = vpop.permute.xlu0 %10529
  %10531 = vrot.lane.b32.xlu0 %v10363, 80
  %v10532 = vpop.permute.xlu0 %10531
  %10533 = vrot.lane.b32.xlu0 %v10370, 80
  %v10534 = vpop.permute.xlu0 %10533
  %10535 = vrot.lane.b32.xlu0 %v10387, 80
  %v10536 = vpop.permute.xlu0 %10535
  %10537 = vrot.lane.b32.xlu0 %v10394, 80
  %v10538 = vpop.permute.xlu0 %10537
  %v10595 = vcombine.low %v10123, %v10124
  %v10596 = vcombine.low %v10125, %v10126
  %v10598 = vunpack.c.l.s4 1983009808
  %v10599 = vunpack.c.0.s8 %v10598
  %v10600 = vlaneseq
  %v10601 = vshrl.u32 %v10600, 7
  %v10602 = vsub.s32 %v10599, %v10601
  %v10603 = vrot.slane %v10595, %v10602
  %v10605 = vunpack.c.l.s4 1983009808
  %v10606 = vunpack.c.0.s8 %v10605
  %v10607 = vlaneseq
  %v10608 = vshrl.u32 %v10607, 7
  %v10609 = vsub.s32 %v10606, %v10608
  %v10610 = vrot.slane %v10596, %v10609
  %v10611 = vcombine.low %v10603, %v10610
  %v10613 = vunpack.c.l.s4 1983009808
  %v10614 = vunpack.c.0.s8 %v10613
  %v10615 = vlaneseq
  %v10616 = vshrl.u32 %v10615, 7
  %v10617 = vsub.s32 %v10614, %v10616
  %v10618 = vrot.slane %v10127, %v10617
  %v10619 = vcombine.low %v10128, %v10129
  %v10620 = vcombine.low %v10130, %v10131
  %v10622 = vunpack.c.l.s4 1983009808
  %v10623 = vunpack.c.0.s8 %v10622
  %v10624 = vlaneseq
  %v10625 = vshrl.u32 %v10624, 7
  %v10626 = vsub.s32 %v10623, %v10625
  %v10627 = vrot.slane %v10619, %v10626
  %v10629 = vunpack.c.l.s4 1983009808
  %v10630 = vunpack.c.0.s8 %v10629
  %v10631 = vlaneseq
  %v10632 = vshrl.u32 %v10631, 7
  %v10633 = vsub.s32 %v10630, %v10632
  %v10634 = vrot.slane %v10620, %v10633
  %v10635 = vcombine.low %v10627, %v10634
  %v10637 = vunpack.c.l.s4 1983009808
  %v10638 = vunpack.c.0.s8 %v10637
  %v10639 = vlaneseq
  %v10640 = vshrl.u32 %v10639, 7
  %v10641 = vsub.s32 %v10638, %v10640
  %v10642 = vrot.slane %v10132, %v10641
  %v10643 = vcombine.low %v10133, %v10134
  %v10644 = vcombine.low %v10135, %v10136
  %v10646 = vunpack.c.l.s4 1983009808
  %v10647 = vunpack.c.0.s8 %v10646
  %v10648 = vlaneseq
  %v10649 = vshrl.u32 %v10648, 7
  %v10650 = vsub.s32 %v10647, %v10649
  %v10651 = vrot.slane %v10643, %v10650
  %v10653 = vunpack.c.l.s4 1983009808
  %v10654 = vunpack.c.0.s8 %v10653
  %v10655 = vlaneseq
  %v10656 = vshrl.u32 %v10655, 7
  %v10657 = vsub.s32 %v10654, %v10656
  %v10658 = vrot.slane %v10644, %v10657
  %v10659 = vcombine.low %v10651, %v10658
  %v10661 = vunpack.c.l.s4 1983009808
  %v10662 = vunpack.c.0.s8 %v10661
  %v10663 = vlaneseq
  %v10664 = vshrl.u32 %v10663, 7
  %v10665 = vsub.s32 %v10662, %v10664
  %v10666 = vrot.slane %v10137, %v10665
  %v10667 = vcombine.low %v10138, %v10139
  %v10668 = vcombine.low %v10140, %v10141
  %v10670 = vunpack.c.l.s4 1983009808
  %v10671 = vunpack.c.0.s8 %v10670
  %v10672 = vlaneseq
  %v10673 = vshrl.u32 %v10672, 7
  %v10674 = vsub.s32 %v10671, %v10673
  %v10675 = vrot.slane %v10667, %v10674
  %v10677 = vunpack.c.l.s4 1983009808
  %v10678 = vunpack.c.0.s8 %v10677
  %v10679 = vlaneseq
  %v10680 = vshrl.u32 %v10679, 7
  %v10681 = vsub.s32 %v10678, %v10680
  %v10682 = vrot.slane %v10668, %v10681
  %v10683 = vcombine.low %v10675, %v10682
  %v10685 = vunpack.c.l.s4 1983009808
  %v10686 = vunpack.c.0.s8 %v10685
  %v10687 = vlaneseq
  %v10688 = vshrl.u32 %v10687, 7
  %v10689 = vsub.s32 %v10686, %v10688
  %v10690 = vrot.slane %v10142, %v10689
  %v10691 = vcombine.low %v10143, %v10144
  %v10692 = vcombine.low %v10145, %v10146
  %v10694 = vunpack.c.l.s4 1983009808
  %v10695 = vunpack.c.0.s8 %v10694
  %v10696 = vlaneseq
  %v10697 = vshrl.u32 %v10696, 7
  %v10698 = vsub.s32 %v10695, %v10697
  %v10699 = vrot.slane %v10691, %v10698
  %v10701 = vunpack.c.l.s4 1983009808
  %v10702 = vunpack.c.0.s8 %v10701
  %v10703 = vlaneseq
  %v10704 = vshrl.u32 %v10703, 7
  %v10705 = vsub.s32 %v10702, %v10704
  %v10706 = vrot.slane %v10692, %v10705
  %v10707 = vcombine.low %v10699, %v10706
  %v10709 = vunpack.c.l.s4 1983009808
  %v10710 = vunpack.c.0.s8 %v10709
  %v10711 = vlaneseq
  %v10712 = vshrl.u32 %v10711, 7
  %v10713 = vsub.s32 %v10710, %v10712
  %v10714 = vrot.slane %v10147, %v10713
  %v10715 = vcombine.low %v10148, %v10149
  %v10716 = vcombine.low %v10150, %v10151
  %v10718 = vunpack.c.l.s4 1983009808
  %v10719 = vunpack.c.0.s8 %v10718
  %v10720 = vlaneseq
  %v10721 = vshrl.u32 %v10720, 7
  %v10722 = vsub.s32 %v10719, %v10721
  %v10723 = vrot.slane %v10715, %v10722
  %v10725 = vunpack.c.l.s4 1983009808
  %v10726 = vunpack.c.0.s8 %v10725
  %v10727 = vlaneseq
  %v10728 = vshrl.u32 %v10727, 7
  %v10729 = vsub.s32 %v10726, %v10728
  %v10730 = vrot.slane %v10716, %v10729
  %v10731 = vcombine.low %v10723, %v10730
  %v10733 = vunpack.c.l.s4 1983009808
  %v10734 = vunpack.c.0.s8 %v10733
  %v10735 = vlaneseq
  %v10736 = vshrl.u32 %v10735, 7
  %v10737 = vsub.s32 %v10734, %v10736
  %v10738 = vrot.slane %v10152, %v10737
  %v10739 = vcombine.low %v10153, %v10154
  %v10740 = vcombine.low %v10155, %v10156
  %v10742 = vunpack.c.l.s4 1983009808
  %v10743 = vunpack.c.0.s8 %v10742
  %v10744 = vlaneseq
  %v10745 = vshrl.u32 %v10744, 7
  %v10746 = vsub.s32 %v10743, %v10745
  %v10747 = vrot.slane %v10739, %v10746
  %v10749 = vunpack.c.l.s4 1983009808
  %v10750 = vunpack.c.0.s8 %v10749
  %v10751 = vlaneseq
  %v10752 = vshrl.u32 %v10751, 7
  %v10753 = vsub.s32 %v10750, %v10752
  %v10754 = vrot.slane %v10740, %v10753
  %v10755 = vcombine.low %v10747, %v10754
  %v10757 = vunpack.c.l.s4 1983009808
  %v10758 = vunpack.c.0.s8 %v10757
  %v10759 = vlaneseq
  %v10760 = vshrl.u32 %v10759, 7
  %v10761 = vsub.s32 %v10758, %v10760
  %v10762 = vrot.slane %v10157, %v10761
  %v10763 = vcombine.low %v10158, %v10159
  %v10764 = vcombine.low %v10160, %v10161
  %v10766 = vunpack.c.l.s4 1983009808
  %v10767 = vunpack.c.0.s8 %v10766
  %v10768 = vlaneseq
  %v10769 = vshrl.u32 %v10768, 7
  %v10770 = vsub.s32 %v10767, %v10769
  %v10771 = vrot.slane %v10763, %v10770
  %v10773 = vunpack.c.l.s4 1983009808
  %v10774 = vunpack.c.0.s8 %v10773
  %v10775 = vlaneseq
  %v10776 = vshrl.u32 %v10775, 7
  %v10777 = vsub.s32 %v10774, %v10776
  %v10778 = vrot.slane %v10764, %v10777
  %v10779 = vcombine.low %v10771, %v10778
  %v10781 = vunpack.c.l.s4 1983009808
  %v10782 = vunpack.c.0.s8 %v10781
  %v10783 = vlaneseq
  %v10784 = vshrl.u32 %v10783, 7
  %v10785 = vsub.s32 %v10782, %v10784
  %v10786 = vrot.slane %v10162, %v10785
  %10787 = vrot.lane.b32.xlu0 %v10611, 64
  %v10788 = vpop.permute.xlu0 %10787
  %10789 = vrot.lane.b32.xlu0 %v10618, 64
  %v10790 = vpop.permute.xlu0 %10789
  %10791 = vrot.lane.b32.xlu0 %v10635, 64
  %v10792 = vpop.permute.xlu0 %10791
  %10793 = vrot.lane.b32.xlu0 %v10642, 64
  %v10794 = vpop.permute.xlu0 %10793
  %10795 = vrot.lane.b32.xlu0 %v10659, 64
  %v10796 = vpop.permute.xlu0 %10795
  %10797 = vrot.lane.b32.xlu0 %v10666, 64
  %v10798 = vpop.permute.xlu0 %10797
  %10799 = vrot.lane.b32.xlu0 %v10683, 64
  %v10800 = vpop.permute.xlu0 %10799
  %10801 = vrot.lane.b32.xlu0 %v10690, 64
  %v10802 = vpop.permute.xlu0 %10801
  %10803 = vrot.lane.b32.xlu0 %v10707, 64
  %v10804 = vpop.permute.xlu0 %10803
  %10805 = vrot.lane.b32.xlu0 %v10714, 64
  %v10806 = vpop.permute.xlu0 %10805
  %10807 = vrot.lane.b32.xlu0 %v10731, 64
  %v10808 = vpop.permute.xlu0 %10807
  %10809 = vrot.lane.b32.xlu0 %v10738, 64
  %v10810 = vpop.permute.xlu0 %10809
  %10811 = vrot.lane.b32.xlu0 %v10755, 64
  %v10812 = vpop.permute.xlu0 %10811
  %10813 = vrot.lane.b32.xlu0 %v10762, 64
  %v10814 = vpop.permute.xlu0 %10813
  %10815 = vrot.lane.b32.xlu0 %v10779, 64
  %v10816 = vpop.permute.xlu0 %10815
  %10817 = vrot.lane.b32.xlu0 %v10786, 64
  %v10818 = vpop.permute.xlu0 %10817
  %vm10835 = vcmask 130048
  %v10836 = vsel %vm10835, %v10219, %v10412
  %v10837 = vsel %vm10835, %v10226, %v10414
  %v10838 = vsel %vm10835, %v10243, %v10416
  %v10839 = vsel %vm10835, %v10250, %v10418
  %v10840 = vsel %vm10835, %v10267, %v10420
  %v10841 = vsel %vm10835, %v10274, %v10422
  %v10842 = vsel %vm10835, %v10291, %v10424
  %v10843 = vsel %vm10835, %v10298, %v10426
  %v10844 = vsel %vm10835, %v10315, %v10428
  %v10845 = vsel %vm10835, %v10322, %v10430
  %v10846 = vsel %vm10835, %v10339, %v10432
  %v10847 = vsel %vm10835, %v10346, %v10434
  %v10848 = vsel %vm10835, %v10363, %v10436
  %v10849 = vsel %vm10835, %v10370, %v10438
  %v10850 = vsel %vm10835, %v10387, %v10440
  %v10851 = vsel %vm10835, %v10394, %v10442
  %v10852 = vsel %vm541, %v10836, %v10460
  %v10853 = vsel %vm541, %v10837, %v10462
  %v10854 = vsel %vm541, %v10838, %v10464
  %v10855 = vsel %vm541, %v10839, %v10466
  %v10856 = vsel %vm541, %v10840, %v10468
  %v10857 = vsel %vm541, %v10841, %v10470
  %v10858 = vsel %vm541, %v10842, %v10472
  %v10859 = vsel %vm541, %v10843, %v10474
  %v10860 = vsel %vm541, %v10844, %v10476
  %v10861 = vsel %vm541, %v10845, %v10478
  %v10862 = vsel %vm541, %v10846, %v10480
  %v10863 = vsel %vm541, %v10847, %v10482
  %v10864 = vsel %vm541, %v10848, %v10484
  %v10865 = vsel %vm541, %v10849, %v10486
  %v10866 = vsel %vm541, %v10850, %v10488
  %v10867 = vsel %vm541, %v10851, %v10490
  %v10868 = vsel %vm6584, %v10852, %v10508
  %v10869 = vsel %vm6584, %v10853, %v10510
  %v10870 = vsel %vm6584, %v10854, %v10512
  %v10871 = vsel %vm6584, %v10855, %v10514
  %v10872 = vsel %vm6584, %v10856, %v10516
  %v10873 = vsel %vm6584, %v10857, %v10518
  %v10874 = vsel %vm6584, %v10858, %v10520
  %v10875 = vsel %vm6584, %v10859, %v10522
  %v10876 = vsel %vm6584, %v10860, %v10524
  %v10877 = vsel %vm6584, %v10861, %v10526
  %v10878 = vsel %vm6584, %v10862, %v10528
  %v10879 = vsel %vm6584, %v10863, %v10530
  %v10880 = vsel %vm6584, %v10864, %v10532
  %v10881 = vsel %vm6584, %v10865, %v10534
  %v10882 = vsel %vm6584, %v10866, %v10536
  %v10883 = vsel %vm6584, %v10867, %v10538
  %v10884 = vsel %vm508, %v10868, %v10788
  %v10885 = vsel %vm508, %v10869, %v10790
  %v10886 = vsel %vm508, %v10870, %v10792
  %v10887 = vsel %vm508, %v10871, %v10794
  %v10888 = vsel %vm508, %v10872, %v10796
  %v10889 = vsel %vm508, %v10873, %v10798
  %v10890 = vsel %vm508, %v10874, %v10800
  %v10891 = vsel %vm508, %v10875, %v10802
  %v10892 = vsel %vm508, %v10876, %v10804
  %v10893 = vsel %vm508, %v10877, %v10806
  %v10894 = vsel %vm508, %v10878, %v10808
  %v10895 = vsel %vm508, %v10879, %v10810
  %v10896 = vsel %vm508, %v10880, %v10812
  %v10897 = vsel %vm508, %v10881, %v10814
  %v10898 = vsel %vm508, %v10882, %v10816
  %v10899 = vsel %vm508, %v10883, %v10818
  %v10908 = vrot.slane %v10884, 1
  %v10909 = vrot.slane %v10886, 1
  %v10910 = vrot.slane %v10888, 1
  %v10911 = vrot.slane %v10890, 1
  %v10912 = vrot.slane %v10892, 1
  %v10913 = vrot.slane %v10894, 1
  %v10914 = vrot.slane %v10896, 1
  %v10915 = vrot.slane %v10898, 1
  %v10924 = vmax.f32 %v10884, %v10908
  %v10925 = vmax.f32 %v10886, %v10909
  %v10926 = vmax.f32 %v10888, %v10910
  %v10927 = vmax.f32 %v10890, %v10911
  %v10928 = vmax.f32 %v10892, %v10912
  %v10929 = vmax.f32 %v10894, %v10913
  %v10930 = vmax.f32 %v10896, %v10914
  %v10931 = vmax.f32 %v10898, %v10915
  %v10940 = vrot.slane %v10885, 1
  %v10941 = vrot.slane %v10887, 1
  %v10942 = vrot.slane %v10889, 1
  %v10943 = vrot.slane %v10891, 1
  %v10944 = vrot.slane %v10893, 1
  %v10945 = vrot.slane %v10895, 1
  %v10946 = vrot.slane %v10897, 1
  %v10947 = vrot.slane %v10899, 1
  %v10956 = vmax.f32 %v10885, %v10940
  %v10957 = vmax.f32 %v10887, %v10941
  %v10958 = vmax.f32 %v10889, %v10942
  %v10959 = vmax.f32 %v10891, %v10943
  %v10960 = vmax.f32 %v10893, %v10944
  %v10961 = vmax.f32 %v10895, %v10945
  %v10962 = vmax.f32 %v10897, %v10946
  %v10963 = vmax.f32 %v10899, %v10947
  %v10972 = vrot.slane %v10924, 2
  %v10973 = vrot.slane %v10925, 2
  %v10974 = vrot.slane %v10926, 2
  %v10975 = vrot.slane %v10927, 2
  %v10976 = vrot.slane %v10928, 2
  %v10977 = vrot.slane %v10929, 2
  %v10978 = vrot.slane %v10930, 2
  %v10979 = vrot.slane %v10931, 2
  %10980 = vrot.lane.b32.xlu0 %v10972, 80
  %v10981 = vpop.permute.xlu0 %10980
  %10982 = vrot.lane.b32.xlu0 %v10973, 80
  %v10983 = vpop.permute.xlu0 %10982
  %10984 = vrot.lane.b32.xlu0 %v10974, 80
  %v10985 = vpop.permute.xlu0 %10984
  %10986 = vrot.lane.b32.xlu0 %v10975, 80
  %v10987 = vpop.permute.xlu0 %10986
  %10988 = vrot.lane.b32.xlu0 %v10976, 80
  %v10989 = vpop.permute.xlu0 %10988
  %10990 = vrot.lane.b32.xlu0 %v10977, 80
  %v10991 = vpop.permute.xlu0 %10990
  %10992 = vrot.lane.b32.xlu0 %v10978, 80
  %v10993 = vpop.permute.xlu0 %10992
  %10994 = vrot.lane.b32.xlu0 %v10979, 80
  %v10995 = vpop.permute.xlu0 %10994
  %v11004 = vrot.slane %v10924, 4
  %v11005 = vrot.slane %v10925, 4
  %v11006 = vrot.slane %v10926, 4
  %v11007 = vrot.slane %v10927, 4
  %v11008 = vrot.slane %v10928, 4
  %v11009 = vrot.slane %v10929, 4
  %v11010 = vrot.slane %v10930, 4
  %v11011 = vrot.slane %v10931, 4
  %11012 = vrot.lane.b32.xlu0 %v11004, 32
  %v11013 = vpop.permute.xlu0 %11012
  %11014 = vrot.lane.b32.xlu0 %v11005, 32
  %v11015 = vpop.permute.xlu0 %11014
  %11016 = vrot.lane.b32.xlu0 %v11006, 32
  %v11017 = vpop.permute.xlu0 %11016
  %11018 = vrot.lane.b32.xlu0 %v11007, 32
  %v11019 = vpop.permute.xlu0 %11018
  %11020 = vrot.lane.b32.xlu0 %v11008, 32
  %v11021 = vpop.permute.xlu0 %11020
  %11022 = vrot.lane.b32.xlu0 %v11009, 32
  %v11023 = vpop.permute.xlu0 %11022
  %11024 = vrot.lane.b32.xlu0 %v11010, 32
  %v11025 = vpop.permute.xlu0 %11024
  %11026 = vrot.lane.b32.xlu0 %v11011, 32
  %v11027 = vpop.permute.xlu0 %11026
  %v11036 = vrot.slane %v10924, 6
  %v11037 = vrot.slane %v10925, 6
  %v11038 = vrot.slane %v10926, 6
  %v11039 = vrot.slane %v10927, 6
  %v11040 = vrot.slane %v10928, 6
  %v11041 = vrot.slane %v10929, 6
  %v11042 = vrot.slane %v10930, 6
  %v11043 = vrot.slane %v10931, 6
  %11044 = vrot.lane.b32.xlu0 %v11036, 112
  %v11045 = vpop.permute.xlu0 %11044
  %11046 = vrot.lane.b32.xlu0 %v11037, 112
  %v11047 = vpop.permute.xlu0 %11046
  %11048 = vrot.lane.b32.xlu0 %v11038, 112
  %v11049 = vpop.permute.xlu0 %11048
  %11050 = vrot.lane.b32.xlu0 %v11039, 112
  %v11051 = vpop.permute.xlu0 %11050
  %11052 = vrot.lane.b32.xlu0 %v11040, 112
  %v11053 = vpop.permute.xlu0 %11052
  %11054 = vrot.lane.b32.xlu0 %v11041, 112
  %v11055 = vpop.permute.xlu0 %11054
  %11056 = vrot.lane.b32.xlu0 %v11042, 112
  %v11057 = vpop.permute.xlu0 %11056
  %11058 = vrot.lane.b32.xlu0 %v11043, 112
  %v11059 = vpop.permute.xlu0 %11058
  %11076 = vrot.lane.b32.xlu0 %v10956, 64
  %v11077 = vpop.permute.xlu0 %11076
  %11078 = vrot.lane.b32.xlu0 %v10957, 64
  %v11079 = vpop.permute.xlu0 %11078
  %11080 = vrot.lane.b32.xlu0 %v10958, 64
  %v11081 = vpop.permute.xlu0 %11080
  %11082 = vrot.lane.b32.xlu0 %v10959, 64
  %v11083 = vpop.permute.xlu0 %11082
  %11084 = vrot.lane.b32.xlu0 %v10960, 64
  %v11085 = vpop.permute.xlu0 %11084
  %11086 = vrot.lane.b32.xlu0 %v10961, 64
  %v11087 = vpop.permute.xlu0 %11086
  %11088 = vrot.lane.b32.xlu0 %v10962, 64
  %v11089 = vpop.permute.xlu0 %11088
  %11090 = vrot.lane.b32.xlu0 %v10963, 64
  %v11091 = vpop.permute.xlu0 %11090
  %v11100 = vsel %vm8165, %v10924, %v10981
  %v11101 = vsel %vm8165, %v10925, %v10983
  %v11102 = vsel %vm8165, %v10926, %v10985
  %v11103 = vsel %vm8165, %v10927, %v10987
  %v11104 = vsel %vm8165, %v10928, %v10989
  %v11105 = vsel %vm8165, %v10929, %v10991
  %v11106 = vsel %vm8165, %v10930, %v10993
  %v11107 = vsel %vm8165, %v10931, %v10995
  %v11108 = vsel %vm541, %v10981, %v11013
  %v11109 = vsel %vm541, %v10983, %v11015
  %v11110 = vsel %vm541, %v10985, %v11017
  %v11111 = vsel %vm541, %v10987, %v11019
  %v11112 = vsel %vm541, %v10989, %v11021
  %v11113 = vsel %vm541, %v10991, %v11023
  %v11114 = vsel %vm541, %v10993, %v11025
  %v11115 = vsel %vm541, %v10995, %v11027
  %vm11116 = vcmask 916480
  %v11117 = vsel %vm11116, %v11108, %v11045
  %v11118 = vsel %vm11116, %v11109, %v11047
  %v11119 = vsel %vm11116, %v11110, %v11049
  %v11120 = vsel %vm11116, %v11111, %v11051
  %v11121 = vsel %vm11116, %v11112, %v11053
  %v11122 = vsel %vm11116, %v11113, %v11055
  %v11123 = vsel %vm11116, %v11114, %v11057
  %v11124 = vsel %vm11116, %v11115, %v11059
  %v11125 = vsel %vm508, %v11045, %v11077
  %v11126 = vsel %vm508, %v11047, %v11079
  %v11127 = vsel %vm508, %v11049, %v11081
  %v11128 = vsel %vm508, %v11051, %v11083
  %v11129 = vsel %vm508, %v11053, %v11085
  %v11130 = vsel %vm508, %v11055, %v11087
  %v11131 = vsel %vm508, %v11057, %v11089
  %v11132 = vsel %vm508, %v11059, %v11091
  %v11133 = vpack.c.bf16 %v11100, %v11100
  %v11134 = vpack.c.bf16 %v11117, %v11117
  %v11135 = vpack.c.bf16 %v11125, %v11125
  %v11136 = vpack.c.bf16 %v11077, %v11077
  %v11137 = vpack.c.bf16 %v11101, %v11101
  %v11138 = vpack.c.bf16 %v11118, %v11118
  %v11139 = vpack.c.bf16 %v11126, %v11126
  %v11140 = vpack.c.bf16 %v11079, %v11079
  %v11141 = vpack.c.bf16 %v11102, %v11102
  %v11142 = vpack.c.bf16 %v11119, %v11119
  %v11143 = vpack.c.bf16 %v11127, %v11127
  %v11144 = vpack.c.bf16 %v11081, %v11081
  %v11145 = vpack.c.bf16 %v11103, %v11103
  %v11146 = vpack.c.bf16 %v11120, %v11120
  %v11147 = vpack.c.bf16 %v11128, %v11128
  %v11148 = vpack.c.bf16 %v11083, %v11083
  %v11149 = vpack.c.bf16 %v11104, %v11104
  %v11150 = vpack.c.bf16 %v11121, %v11121
  %v11151 = vpack.c.bf16 %v11129, %v11129
  %v11152 = vpack.c.bf16 %v11085, %v11085
  %v11153 = vpack.c.bf16 %v11105, %v11105
  %v11154 = vpack.c.bf16 %v11122, %v11122
  %v11155 = vpack.c.bf16 %v11130, %v11130
  %v11156 = vpack.c.bf16 %v11087, %v11087
  %v11157 = vpack.c.bf16 %v11106, %v11106
  %v11158 = vpack.c.bf16 %v11123, %v11123
  %v11159 = vpack.c.bf16 %v11131, %v11131
  %v11160 = vpack.c.bf16 %v11089, %v11089
  %v11161 = vpack.c.bf16 %v11107, %v11107
  %v11162 = vpack.c.bf16 %v11124, %v11124
  %v11163 = vpack.c.bf16 %v11132, %v11132
  %v11164 = vpack.c.bf16 %v11091, %v11091
  %v11165 = vld [vmem:[%s5] sm:$0xf]
  %v11166 = vld [vmem:[%s5 + $0x4] sm:$0xf]
  %v11167 = vld [vmem:[%s5 + $0x8] sm:$0xf]
  %v11168 = vld [vmem:[%s5 + $0xc] sm:$0xf]
  %v11169 = vld [vmem:[%s5 + $0x10] sm:$0xf]
  %v11170 = vld [vmem:[%s5 + $0x14] sm:$0xf]
  %v11171 = vld [vmem:[%s5 + $0x18] sm:$0xf]
  %v11172 = vld [vmem:[%s5 + $0x1c] sm:$0xf]
  %v11173 = vld [vmem:[%s5 + $0x20] sm:$0xf]
  %v11174 = vld [vmem:[%s5 + $0x24] sm:$0xf]
  %v11175 = vld [vmem:[%s5 + $0x28] sm:$0xf]
  %v11176 = vld [vmem:[%s5 + $0x2c] sm:$0xf]
  %v11177 = vld [vmem:[%s5 + $0x30] sm:$0xf]
  %v11178 = vld [vmem:[%s5 + $0x34] sm:$0xf]
  %v11179 = vld [vmem:[%s5 + $0x38] sm:$0xf]
  %v11180 = vld [vmem:[%s5 + $0x3c] sm:$0xf]
  %v11181 = vld [vmem:[%s5 + $0x40] sm:$0xf]
  %v11182 = vld [vmem:[%s5 + $0x44] sm:$0xf]
  %v11183 = vld [vmem:[%s5 + $0x48] sm:$0xf]
  %v11184 = vld [vmem:[%s5 + $0x4c] sm:$0xf]
  %v11185 = vld [vmem:[%s5 + $0x50] sm:$0xf]
  %v11186 = vld [vmem:[%s5 + $0x54] sm:$0xf]
  %v11187 = vld [vmem:[%s5 + $0x58] sm:$0xf]
  %v11188 = vld [vmem:[%s5 + $0x5c] sm:$0xf]
  %v11189 = vld [vmem:[%s5 + $0x60] sm:$0xf]
  %v11190 = vld [vmem:[%s5 + $0x64] sm:$0xf]
  %v11191 = vld [vmem:[%s5 + $0x68] sm:$0xf]
  %v11192 = vld [vmem:[%s5 + $0x6c] sm:$0xf]
  %v11193 = vld [vmem:[%s5 + $0x70] sm:$0xf]
  %v11194 = vld [vmem:[%s5 + $0x74] sm:$0xf]
  %v11195 = vld [vmem:[%s5 + $0x78] sm:$0xf]
  %v11196 = vld [vmem:[%s5 + $0x7c] sm:$0xf]
  %v11197 = vld [vmem:[%s5 + $0x80] sm:$0xf]
  %v11198 = vld [vmem:[%s5 + $0x84] sm:$0xf]
  %v11199 = vld [vmem:[%s5 + $0x88] sm:$0xf]
  %v11200 = vld [vmem:[%s5 + $0x8c] sm:$0xf]
  %v11201 = vld [vmem:[%s5 + $0x90] sm:$0xf]
  %v11202 = vld [vmem:[%s5 + $0x94] sm:$0xf]
  %v11203 = vld [vmem:[%s5 + $0x98] sm:$0xf]
  %v11204 = vld [vmem:[%s5 + $0x9c] sm:$0xf]
  %v11205 = vld [vmem:[%s5 + $0xa0] sm:$0xf]
  %v11206 = vld [vmem:[%s5 + $0xa4] sm:$0xf]
  %v11207 = vld [vmem:[%s5 + $0xa8] sm:$0xf]
  %v11208 = vld [vmem:[%s5 + $0xac] sm:$0xf]
  %v11209 = vld [vmem:[%s5 + $0xb0] sm:$0xf]
  %v11210 = vld [vmem:[%s5 + $0xb4] sm:$0xf]
  %v11211 = vld [vmem:[%s5 + $0xb8] sm:$0xf]
  %v11212 = vld [vmem:[%s5 + $0xbc] sm:$0xf]
  %v11213 = vld [vmem:[%s5 + $0xc0] sm:$0xf]
  %v11214 = vld [vmem:[%s5 + $0xc4] sm:$0xf]
  %v11215 = vld [vmem:[%s6] sm:$0x1]
  %v11217 = vlaneseq
  %v11218 = vshrl.u32 %v11217, 7
  %v11219 = vsub.s32 0, %v11218
  %v11220 = vrot.slane %v11215, %v11219
  %v11254 = vunpack.c.l.b16 %v11133
  %v11255 = vunpack.c.l.b16 %v11134
  %v11256 = vunpack.c.l.b16 %v11135
  %v11257 = vunpack.c.l.b16 %v11136
  %v11258 = vunpack.c.l.b16 %v11137
  %v11259 = vunpack.c.l.b16 %v11138
  %v11260 = vunpack.c.l.b16 %v11139
  %v11261 = vunpack.c.l.b16 %v11140
  %v11262 = vunpack.c.l.b16 %v11141
  %v11263 = vunpack.c.l.b16 %v11142
  %v11264 = vunpack.c.l.b16 %v11143
  %v11265 = vunpack.c.l.b16 %v11144
  %v11266 = vunpack.c.l.b16 %v11145
  %v11267 = vunpack.c.l.b16 %v11146
  %v11268 = vunpack.c.l.b16 %v11147
  %v11269 = vunpack.c.l.b16 %v11148
  %v11270 = vunpack.c.l.b16 %v11149
  %v11271 = vunpack.c.l.b16 %v11150
  %v11272 = vunpack.c.l.b16 %v11151
  %v11273 = vunpack.c.l.b16 %v11152
  %v11274 = vunpack.c.l.b16 %v11153
  %v11275 = vunpack.c.l.b16 %v11154
  %v11276 = vunpack.c.l.b16 %v11155
  %v11277 = vunpack.c.l.b16 %v11156
  %v11278 = vunpack.c.l.b16 %v11157
  %v11279 = vunpack.c.l.b16 %v11158
  %v11280 = vunpack.c.l.b16 %v11159
  %v11281 = vunpack.c.l.b16 %v11160
  %v11282 = vunpack.c.l.b16 %v11161
  %v11283 = vunpack.c.l.b16 %v11162
  %v11284 = vunpack.c.l.b16 %v11163
  %v11285 = vunpack.c.l.b16 %v11164
  %v11286 = vrot.slane %v11258, 7
  %vm11287 = vcmask 1041409
  %v11288 = vsel %vm11287, %v11286, %v11254
  %v11289 = vrot.slane %v11262, 6
  %vm11290 = vcmask 1042434
  %v11291 = vsel %vm11290, %v11289, %v11288
  %v11292 = vrot.slane %v11266, 5
  %vm11293 = vcmask 1043459
  %v11294 = vsel %vm11293, %v11292, %v11291
  %v11295 = vrot.slane %v11270, 4
  %vm11296 = vcmask 1044484
  %v11297 = vsel %vm11296, %v11295, %v11294
  %v11298 = vrot.slane %v11274, 3
  %vm11299 = vcmask 1045509
  %v11300 = vsel %vm11299, %v11298, %v11297
  %v11301 = vrot.slane %v11278, 2
  %vm11302 = vcmask 1046534
  %v11303 = vsel %vm11302, %v11301, %v11300
  %v11304 = vrot.slane %v11282, 1
  %vm11305 = vcmask 1047559
  %v11306 = vsel %vm11305, %v11304, %v11303
  %v11307 = vrot.slane %v11259, 7
  %v11308 = vsel %vm11287, %v11307, %v11255
  %v11309 = vrot.slane %v11263, 6
  %v11310 = vsel %vm11290, %v11309, %v11308
  %v11311 = vrot.slane %v11267, 5
  %v11312 = vsel %vm11293, %v11311, %v11310
  %v11313 = vrot.slane %v11271, 4
  %v11314 = vsel %vm11296, %v11313, %v11312
  %v11315 = vrot.slane %v11275, 3
  %v11316 = vsel %vm11299, %v11315, %v11314
  %v11317 = vrot.slane %v11279, 2
  %v11318 = vsel %vm11302, %v11317, %v11316
  %v11319 = vrot.slane %v11283, 1
  %v11320 = vsel %vm11305, %v11319, %v11318
  %v11321 = vrot.slane %v11260, 7
  %v11322 = vsel %vm11287, %v11321, %v11256
  %v11323 = vrot.slane %v11264, 6
  %v11324 = vsel %vm11290, %v11323, %v11322
  %v11325 = vrot.slane %v11268, 5
  %v11326 = vsel %vm11293, %v11325, %v11324
  %v11327 = vrot.slane %v11272, 4
  %v11328 = vsel %vm11296, %v11327, %v11326
  %v11329 = vrot.slane %v11276, 3
  %v11330 = vsel %vm11299, %v11329, %v11328
  %v11331 = vrot.slane %v11280, 2
  %v11332 = vsel %vm11302, %v11331, %v11330
  %v11333 = vrot.slane %v11284, 1
  %v11334 = vsel %vm11305, %v11333, %v11332
  %v11335 = vrot.slane %v11261, 7
  %v11336 = vsel %vm11287, %v11335, %v11257
  %v11337 = vrot.slane %v11265, 6
  %v11338 = vsel %vm11290, %v11337, %v11336
  %v11339 = vrot.slane %v11269, 5
  %v11340 = vsel %vm11293, %v11339, %v11338
  %v11341 = vrot.slane %v11273, 4
  %v11342 = vsel %vm11296, %v11341, %v11340
  %v11343 = vrot.slane %v11277, 3
  %v11344 = vsel %vm11299, %v11343, %v11342
  %v11345 = vrot.slane %v11281, 2
  %v11346 = vsel %vm11302, %v11345, %v11344
  %v11347 = vrot.slane %v11285, 1
  %v11348 = vsel %vm11305, %v11347, %v11346
  %v11349 = vpack.c.b16 %v11306, %v11306
  %v11350 = vpack.c.b16 %v11320, %v11320
  %v11351 = vpack.c.b16 %v11334, %v11334
  %v11352 = vpack.c.b16 %v11348, %v11348
  %v11406 = vunpack.c.l.b16 %v11165
  %v11407 = vunpack.c.l.b16 %v11166
  %v11408 = vunpack.c.l.b16 %v11167
  %v11409 = vunpack.c.l.b16 %v11168
  %v11410 = vunpack.c.l.b16 %v11169
  %v11411 = vunpack.c.l.b16 %v11170
  %v11412 = vunpack.c.l.b16 %v11171
  %v11413 = vunpack.c.l.b16 %v11172
  %v11414 = vunpack.c.l.b16 %v11173
  %v11415 = vunpack.c.l.b16 %v11174
  %v11416 = vunpack.c.l.b16 %v11175
  %v11417 = vunpack.c.l.b16 %v11176
  %v11418 = vunpack.c.l.b16 %v11177
  %v11419 = vunpack.c.l.b16 %v11178
  %v11420 = vunpack.c.l.b16 %v11179
  %v11421 = vunpack.c.l.b16 %v11180
  %v11422 = vunpack.c.l.b16 %v11181
  %v11423 = vunpack.c.l.b16 %v11182
  %v11424 = vunpack.c.l.b16 %v11183
  %v11425 = vunpack.c.l.b16 %v11184
  %v11426 = vunpack.c.l.b16 %v11185
  %v11427 = vunpack.c.l.b16 %v11186
  %v11428 = vunpack.c.l.b16 %v11187
  %v11429 = vunpack.c.l.b16 %v11188
  %v11430 = vunpack.c.l.b16 %v11189
  %v11431 = vunpack.c.l.b16 %v11190
  %v11432 = vunpack.c.l.b16 %v11191
  %v11433 = vunpack.c.l.b16 %v11192
  %v11434 = vunpack.c.l.b16 %v11193
  %v11435 = vunpack.c.l.b16 %v11194
  %v11436 = vunpack.c.l.b16 %v11195
  %v11437 = vunpack.c.l.b16 %v11196
  %v11438 = vunpack.c.l.b16 %v11197
  %v11439 = vunpack.c.l.b16 %v11198
  %v11440 = vunpack.c.l.b16 %v11199
  %v11441 = vunpack.c.l.b16 %v11200
  %v11442 = vunpack.c.l.b16 %v11201
  %v11443 = vunpack.c.l.b16 %v11202
  %v11444 = vunpack.c.l.b16 %v11203
  %v11445 = vunpack.c.l.b16 %v11204
  %v11446 = vunpack.c.l.b16 %v11205
  %v11447 = vunpack.c.l.b16 %v11206
  %v11448 = vunpack.c.l.b16 %v11207
  %v11449 = vunpack.c.l.b16 %v11208
  %v11450 = vunpack.c.l.b16 %v11209
  %v11451 = vunpack.c.l.b16 %v11210
  %v11452 = vunpack.c.l.b16 %v11211
  %v11453 = vunpack.c.l.b16 %v11212
  %v11454 = vunpack.c.l.b16 %v11213
  %v11455 = vunpack.c.l.b16 %v11214
  %v11456 = vpack.c.b16 %v11407, %v11406
  %v11457 = vpack.c.b16 %v11409, %v11408
  %v11458 = vpack.c.b16 %v11411, %v11410
  %v11459 = vpack.c.b16 %v11413, %v11412
  %v11460 = vpack.c.b16 %v11415, %v11414
  %v11461 = vpack.c.b16 %v11417, %v11416
  %v11462 = vpack.c.b16 %v11419, %v11418
  %v11463 = vpack.c.b16 %v11421, %v11420
  %v11464 = vpack.c.b16 %v11423, %v11422
  %v11465 = vpack.c.b16 %v11425, %v11424
  %v11466 = vpack.c.b16 %v11427, %v11426
  %v11467 = vpack.c.b16 %v11429, %v11428
  %v11468 = vpack.c.b16 %v11431, %v11430
  %v11469 = vpack.c.b16 %v11433, %v11432
  %v11470 = vpack.c.b16 %v11435, %v11434
  %v11471 = vpack.c.b16 %v11437, %v11436
  %v11472 = vpack.c.b16 %v11439, %v11438
  %v11473 = vpack.c.b16 %v11441, %v11440
  %v11474 = vpack.c.b16 %v11443, %v11442
  %v11475 = vpack.c.b16 %v11445, %v11444
  %v11476 = vpack.c.b16 %v11447, %v11446
  %v11477 = vpack.c.b16 %v11449, %v11448
  %v11478 = vpack.c.b16 %v11451, %v11450
  %v11479 = vpack.c.b16 %v11453, %v11452
  %v11480 = vpack.c.b16 %v11455, %v11454
  %v11507 = vsel %vm10835, %v11352, 0
  %11509 = vmatprep.subr.bf16.mxu0 0
  %11510 = vmatpush1.bf16.msra.mxu0 %v11456
  %11511 = vmatprep.subr.bf16.mxu0 0
  %11512 = vmatpush1.bf16.msra.mxu0 %v11457
  %11513 = vmatprep.subr.bf16.mxu0 0
  %11514 = vmatpush1.bf16.msra.mxu0 %v11458
  %11515 = vmatprep.subr.bf16.mxu0 0
  %11516 = vmatpush1.bf16.msra.mxu0 %v11459
  %11517 = vmatprep.subr.bf16.mxu0 0
  %11518 = vmatpush1.bf16.msra.mxu0 %v11460
  %11519 = vmatprep.subr.bf16.mxu0 0
  %11520 = vmatpush1.bf16.msra.mxu0 %v11461
  %11521 = vmatprep.subr.bf16.mxu0 0
  %11522 = vmatpush1.bf16.msra.mxu0 %v11462
  %11523 = vmatprep.subr.bf16.mxu0 0
  %11524 = vmatpush1.bf16.msra.mxu0 %v11463
  %11525 = vmatprep.subr.bf16.mxu0 0
  %11526 = vmatpush1.bf16.msra.mxu0 %v11464
  %11527 = vmatprep.subr.bf16.mxu0 0
  %11528 = vmatpush1.bf16.msra.mxu0 %v11465
  %11529 = vmatprep.subr.bf16.mxu0 0
  %11530 = vmatpush1.bf16.msra.mxu0 %v11466
  %11531 = vmatprep.subr.bf16.mxu0 0
  %11532 = vmatpush1.bf16.msra.mxu0 %v11467
  %11533 = vmatprep.subr.bf16.mxu0 0
  %11534 = vmatpush1.bf16.msra.mxu0 %v11468
  %11535 = vmatprep.subr.bf16.mxu0 0
  %11536 = vmatpush1.bf16.msra.mxu0 %v11469
  %11537 = vmatprep.subr.bf16.mxu0 0
  %11538 = vmatpush1.bf16.msra.mxu0 %v11470
  %11539 = vmatprep.subr.bf16.mxu0 0
  %11540 = vmatpush1.bf16.msra.mxu0 %v11471
  %11541 = vmatprep.mubr.bf16.mxu0 %v11350
  %11542 = vmatmul.mubr.bf16.gmra.mrb[0].mxu0 %v11349
  %v11543 = vpop.f32.mrb[0].mxu0
  %v11544 = vadd.f32 %v11220, %v11543
  %v11545 = vpop.f32.mrb[0].mxu0
  %v11546 = vpop.f32.mrb[0].mxu0
  %v11547 = vpop.f32.mrb[0].mxu0
  %11548 = vdwg.mxu0
  %11549 = vmatprep.subr.bf16.mxu0 0
  %11550 = vmatpush1.bf16.msra.mxu0 %v11472
  %11551 = vmatprep.subr.bf16.mxu0 0
  %11552 = vmatpush1.bf16.msra.mxu0 %v11473
  %11553 = vmatprep.subr.bf16.mxu0 0
  %11554 = vmatpush1.bf16.msra.mxu0 %v11474
  %11555 = vmatprep.subr.bf16.mxu0 0
  %11556 = vmatpush1.bf16.msra.mxu0 %v11475
  %11557 = vmatprep.subr.bf16.mxu0 0
  %11558 = vmatpush1.bf16.msra.mxu0 %v11476
  %11559 = vmatprep.subr.bf16.mxu0 0
  %11560 = vmatpush1.bf16.msra.mxu0 %v11477
  %11561 = vmatprep.subr.bf16.mxu0 0
  %11562 = vmatpush1.bf16.msra.mxu0 %v11478
  %11563 = vmatprep.subr.bf16.mxu0 0
  %11564 = vmatpush1.bf16.msra.mxu0 %v11479
  %11565 = vmatprep.subr.bf16.mxu0 0
  %11566 = vmatpush1.bf16.msra.mxu0 %v11480
  %11567 = vmatprep.subr.bf16.mxu0 0
  %11568 = vmatpush1.bf16.msra.mxu0 0
  %11569 = vmatprep.subr.bf16.mxu0 0
  %11570 = vmatpush1.bf16.msra.mxu0 0
  %11571 = vmatprep.subr.bf16.mxu0 0
  %11572 = vmatpush1.bf16.msra.mxu0 0
  %11573 = vmatprep.subr.bf16.mxu0 0
  %11574 = vmatpush1.bf16.msra.mxu0 0
  %11575 = vmatprep.subr.bf16.mxu0 0
  %11576 = vmatpush1.bf16.msra.mxu0 0
  %11577 = vmatprep.subr.bf16.mxu0 0
  %11578 = vmatpush1.bf16.msra.mxu0 0
  %11579 = vmatprep.subr.bf16.mxu0 0
  %11580 = vmatpush1.bf16.msra.mxu0 0
  %11581 = vmatprep.mubr.bf16.mxu0 %v11507
  %11582 = vmatmul.mubr.bf16.gmra.mrb[0].mxu0 %v11351
  %v11583 = vpop.f32.mrb[0].mxu0
  %v11584 = vadd.f32 %v11544, %v11583
  %v11585 = vpop.f32.mrb[0].mxu0
  %v11586 = vpop.f32.mrb[0].mxu0
  %v11587 = vpop.f32.mrb[0].mxu0
  %11588 = vdwg.mxu0
  %v11589 = vmax.f32 %v11584, 0.0
  %v11590 = vpack.c.bf16 %v11589, %v11589
  %v11591 = vld [vmem:[%s7] sm:$0xf]
  %v11592 = vld [vmem:[%s7 + $0x4] sm:$0xf]
  %v11593 = vld [vmem:[%s7 + $0x8] sm:$0xf]
  %v11594 = vld [vmem:[%s7 + $0xc] sm:$0xf]
  %v11595 = vld [vmem:[%s7 + $0x10] sm:$0xf]
  %v11596 = vld [vmem:[%s7 + $0x14] sm:$0xf]
  %v11597 = vld [vmem:[%s7 + $0x18] sm:$0xf]
  %v11598 = vld [vmem:[%s7 + $0x1c] sm:$0xf]
  %v11599 = vld [vmem:[%s7 + $0x20] sm:$0xf]
  %v11600 = vld [vmem:[%s7 + $0x24] sm:$0xf]
  %v11601 = vld [vmem:[%s7 + $0x28] sm:$0xf]
  %v11602 = vld [vmem:[%s7 + $0x2c] sm:$0xf]
  %v11603 = vld [vmem:[%s7 + $0x30] sm:$0xf]
  %v11604 = vld [vmem:[%s7 + $0x34] sm:$0xf]
  %v11605 = vld [vmem:[%s7 + $0x38] sm:$0xf]
  %v11606 = vld [vmem:[%s7 + $0x3c] sm:$0xf]
  %v11607 = vld [vmem:[%s8] sm:$0x1]
  %v11609 = vlaneseq
  %v11610 = vshrl.u32 %v11609, 7
  %v11611 = vsub.s32 0, %v11610
  %v11612 = vrot.slane %v11607, %v11611
  %v11630 = vunpack.c.l.b16 %v11591
  %v11631 = vunpack.c.l.b16 %v11592
  %v11632 = vunpack.c.l.b16 %v11593
  %v11633 = vunpack.c.l.b16 %v11594
  %v11634 = vunpack.c.l.b16 %v11595
  %v11635 = vunpack.c.l.b16 %v11596
  %v11636 = vunpack.c.l.b16 %v11597
  %v11637 = vunpack.c.l.b16 %v11598
  %v11638 = vunpack.c.l.b16 %v11599
  %v11639 = vunpack.c.l.b16 %v11600
  %v11640 = vunpack.c.l.b16 %v11601
  %v11641 = vunpack.c.l.b16 %v11602
  %v11642 = vunpack.c.l.b16 %v11603
  %v11643 = vunpack.c.l.b16 %v11604
  %v11644 = vunpack.c.l.b16 %v11605
  %v11645 = vunpack.c.l.b16 %v11606
  %v11646 = vpack.c.b16 %v11631, %v11630
  %v11647 = vpack.c.b16 %v11633, %v11632
  %v11648 = vpack.c.b16 %v11635, %v11634
  %v11649 = vpack.c.b16 %v11637, %v11636
  %v11650 = vpack.c.b16 %v11639, %v11638
  %v11651 = vpack.c.b16 %v11641, %v11640
  %v11652 = vpack.c.b16 %v11643, %v11642
  %v11653 = vpack.c.b16 %v11645, %v11644
  %11662 = vmatprep.subr.bf16.mxu0 0
  %11663 = vmatpush1.bf16.msra.mxu0 %v11646
  %11664 = vmatprep.subr.bf16.mxu0 0
  %11665 = vmatpush1.bf16.msra.mxu0 %v11647
  %11666 = vmatprep.subr.bf16.mxu0 0
  %11667 = vmatpush1.bf16.msra.mxu0 %v11648
  %11668 = vmatprep.subr.bf16.mxu0 0
  %11669 = vmatpush1.bf16.msra.mxu0 %v11649
  %11670 = vmatprep.subr.bf16.mxu0 0
  %11671 = vmatpush1.bf16.msra.mxu0 %v11650
  %11672 = vmatprep.subr.bf16.mxu0 0
  %11673 = vmatpush1.bf16.msra.mxu0 %v11651
  %11674 = vmatprep.subr.bf16.mxu0 0
  %11675 = vmatpush1.bf16.msra.mxu0 %v11652
  %11676 = vmatprep.subr.bf16.mxu0 0
  %11677 = vmatpush1.bf16.msra.mxu0 %v11653
  %11678 = vmatprep.subr.bf16.mxu0 0
  %11679 = vmatpush1.bf16.msra.mxu0 0
  %11680 = vmatprep.subr.bf16.mxu0 0
  %11681 = vmatpush1.bf16.msra.mxu0 0
  %11682 = vmatprep.subr.bf16.mxu0 0
  %11683 = vmatpush1.bf16.msra.mxu0 0
  %11684 = vmatprep.subr.bf16.mxu0 0
  %11685 = vmatpush1.bf16.msra.mxu0 0
  %11686 = vmatprep.subr.bf16.mxu0 0
  %11687 = vmatpush1.bf16.msra.mxu0 0
  %11688 = vmatprep.subr.bf16.mxu0 0
  %11689 = vmatpush1.bf16.msra.mxu0 0
  %11690 = vmatprep.subr.bf16.mxu0 0
  %11691 = vmatpush1.bf16.msra.mxu0 0
  %11692 = vmatprep.subr.bf16.mxu0 0
  %11693 = vmatpush1.bf16.msra.mxu0 0
  %11694 = vmatprep.mubr.bf16.mxu0 0
  %11695 = vmatmul.mubr.bf16.gmra.mrb[0].mxu0 %v11590
  %v11696 = vpop.f32.mrb[0].mxu0
  %v11697 = vadd.f32 %v11612, %v11696
  %v11698 = vpop.f32.mrb[0].mxu0
  %v11699 = vpop.f32.mrb[0].mxu0
  %v11700 = vpop.f32.mrb[0].mxu0
  %11701 = vdwg.mxu0
  %v11702 = vmax.f32 %v11697, 0.0
  %v11703 = vpack.c.bf16 %v11702, %v11702
  %v11704 = vld [vmem:[%s9] sm:$0xf]
  %v11705 = vld [vmem:[%s9 + $0x4] sm:$0xf]
  %v11706 = vld [vmem:[%s9 + $0x8] sm:$0xf]
  %v11707 = vld [vmem:[%s9 + $0xc] sm:$0xf]
  %v11708 = vld [vmem:[%s9 + $0x10] sm:$0xf]
  %v11709 = vld [vmem:[%s9 + $0x14] sm:$0xf]
  %v11710 = vld [vmem:[%s9 + $0x18] sm:$0xf]
  %v11711 = vld [vmem:[%s9 + $0x1c] sm:$0xf]
  %v11712 = vld [vmem:[%s9 + $0x20] sm:$0xf]
  %v11713 = vld [vmem:[%s9 + $0x24] sm:$0xf]
  %v11714 = vld [vmem:[%s9 + $0x28] sm:$0xf]
  %v11715 = vld [vmem:[%s9 + $0x2c] sm:$0xf]
  %v11716 = vld [vmem:[%s9 + $0x30] sm:$0xf]
  %v11717 = vld [vmem:[%s9 + $0x34] sm:$0xf]
  %v11718 = vld [vmem:[%s9 + $0x38] sm:$0xf]
  %v11719 = vld [vmem:[%s9 + $0x3c] sm:$0xf]
  %v11720 = vld [vmem:[%s10] sm:$0x1]
  %v11722 = vlaneseq
  %v11723 = vshrl.u32 %v11722, 7
  %v11724 = vsub.s32 0, %v11723
  %v11725 = vrot.slane %v11720, %v11724
  %v11743 = vunpack.c.l.b16 %v11704
  %v11744 = vunpack.c.l.b16 %v11705
  %v11745 = vunpack.c.l.b16 %v11706
  %v11746 = vunpack.c.l.b16 %v11707
  %v11747 = vunpack.c.l.b16 %v11708
  %v11748 = vunpack.c.l.b16 %v11709
  %v11749 = vunpack.c.l.b16 %v11710
  %v11750 = vunpack.c.l.b16 %v11711
  %v11751 = vunpack.c.l.b16 %v11712
  %v11752 = vunpack.c.l.b16 %v11713
  %v11753 = vunpack.c.l.b16 %v11714
  %v11754 = vunpack.c.l.b16 %v11715
  %v11755 = vunpack.c.l.b16 %v11716
  %v11756 = vunpack.c.l.b16 %v11717
  %v11757 = vunpack.c.l.b16 %v11718
  %v11758 = vunpack.c.l.b16 %v11719
  %v11759 = vpack.c.b16 %v11744, %v11743
  %v11760 = vpack.c.b16 %v11746, %v11745
  %v11761 = vpack.c.b16 %v11748, %v11747
  %v11762 = vpack.c.b16 %v11750, %v11749
  %v11763 = vpack.c.b16 %v11752, %v11751
  %v11764 = vpack.c.b16 %v11754, %v11753
  %v11765 = vpack.c.b16 %v11756, %v11755
  %v11766 = vpack.c.b16 %v11758, %v11757
  %11775 = vmatprep.subr.bf16.mxu0 0
  %11776 = vmatpush1.bf16.msra.mxu0 %v11759
  %11777 = vmatprep.subr.bf16.mxu0 0
  %11778 = vmatpush1.bf16.msra.mxu0 %v11760
  %11779 = vmatprep.subr.bf16.mxu0 0
  %11780 = vmatpush1.bf16.msra.mxu0 %v11761
  %11781 = vmatprep.subr.bf16.mxu0 0
  %11782 = vmatpush1.bf16.msra.mxu0 %v11762
  %11783 = vmatprep.subr.bf16.mxu0 0
  %11784 = vmatpush1.bf16.msra.mxu0 %v11763
  %11785 = vmatprep.subr.bf16.mxu0 0
  %11786 = vmatpush1.bf16.msra.mxu0 %v11764
  %11787 = vmatprep.subr.bf16.mxu0 0
  %11788 = vmatpush1.bf16.msra.mxu0 %v11765
  %11789 = vmatprep.subr.bf16.mxu0 0
  %11790 = vmatpush1.bf16.msra.mxu0 %v11766
  %11791 = vmatprep.subr.bf16.mxu0 0
  %11792 = vmatpush1.bf16.msra.mxu0 0
  %11793 = vmatprep.subr.bf16.mxu0 0
  %11794 = vmatpush1.bf16.msra.mxu0 0
  %11795 = vmatprep.subr.bf16.mxu0 0
  %11796 = vmatpush1.bf16.msra.mxu0 0
  %11797 = vmatprep.subr.bf16.mxu0 0
  %11798 = vmatpush1.bf16.msra.mxu0 0
  %11799 = vmatprep.subr.bf16.mxu0 0
  %11800 = vmatpush1.bf16.msra.mxu0 0
  %11801 = vmatprep.subr.bf16.mxu0 0
  %11802 = vmatpush1.bf16.msra.mxu0 0
  %11803 = vmatprep.subr.bf16.mxu0 0
  %11804 = vmatpush1.bf16.msra.mxu0 0
  %11805 = vmatprep.subr.bf16.mxu0 0
  %11806 = vmatpush1.bf16.msra.mxu0 0
  %11807 = vmatprep.mubr.bf16.mxu0 0
  %11808 = vmatmul.mubr.bf16.gmra.mrb[0].mxu0 %v11703
  %v11809 = vpop.f32.mrb[0].mxu0
  %v11810 = vadd.f32 %v11725, %v11809
  %v11811 = vpop.f32.mrb[0].mxu0
  %v11812 = vpop.f32.mrb[0].mxu0
  %v11813 = vpop.f32.mrb[0].mxu0
  %11814 = vdwg.mxu0
  %11815 = vst [vmem:[%s11] sm:$0xff] %v11810
  // Predicated region
  $region46: #{net_forward.1} parent=0 // pred_check
    _
  $region47: #{net_forward.1} parent=0 // pred_check_branch
    %11817 = sbr.rel (0) target = $region49
  $region48: #{net_forward.1} parent=0 // pred_region
    _
  $region49: #{net_forward.1} parent=0 // pred_fallthru
    _
  // Predicated region
  $region50: #{net_forward.1} parent=0 // pred_check
    _
  $region51: #{net_forward.1} parent=0 // pred_check_branch
    %11819 = sbr.rel (0) target = $region53
  $region52: #{net_forward.1} parent=0 // pred_region
    _
  $region53: #{net_forward.1} parent=0 // pred_fallthru
    _

</llo_original>
